<compile_context>
chip_gen: v6e
topology: v6e:2x2x1
jax: 0.10.0
libtpu: 0.0.40
codegen_flags: <defaults>
</compile_context>

<pallas_src>
import math
import functools

import jax
import jax.numpy as jnp
from jax.experimental import pallas as pl
from jax.experimental.pallas import tpu as pltpu


# ----------------------------- Pallas kernels ------------------------------

def _conv1_kernel(p_ref, w_ref, b_ref, o_ref):
    # o = relu(p @ w + b); everything 128-lane aligned (K and N padded at init).
    y = jnp.dot(p_ref[...], w_ref[...], preferred_element_type=jnp.float32)
    o_ref[...] = jnp.maximum(y + b_ref[...], 0.0).astype(o_ref.dtype)


def conv1_matmul(p, w, b, tile_m=256):
    """relu(p @ w + b). p:[M,K] w:[K,N] b:[1,N] -> [M,N]; row grid marked parallel."""
    M, K = p.shape
    Kw, N = w.shape
    assert K == Kw and b.shape == (1, N)
    if M % tile_m != 0:
        tile_m = M
    return pl.pallas_call(
        _conv1_kernel,
        out_shape=jax.ShapeDtypeStruct((M, N), jnp.float32),
        grid=(M // tile_m,),
        in_specs=[pl.BlockSpec((tile_m, K), lambda i: (i, 0)),
                  pl.BlockSpec((K, N), lambda i: (0, 0)),
                  pl.BlockSpec((1, N), lambda i: (0, 0))],
        out_specs=pl.BlockSpec((tile_m, N), lambda i: (i, 0)),
        compiler_params=pltpu.CompilerParams(dimension_semantics=("parallel",)),
    )(p, w, b)


def _fused_head_kernel(p2_ref, w2_ref, b2_ref, w0_ref, b0_ref,
                       wv1_ref, bv1_ref, wa1_ref, ba1_ref, o_ref,
                       *, n_patches, n_actions, hidden, log):
    """conv2 + fc_v/fc_a (fc0 fused) + heads + outer ReLU + dueling + (log-)softmax."""
    B = p2_ref.shape[1]
    f32 = jnp.float32

    # conv2 (ReLU) + fused fc0, accumulated patch-by-patch: the 576-wide flatten is never
    # materialized; each conv2 output position multiplies its own row-slab of fc0.
    acc = jnp.zeros((B, 2 * hidden), f32)
    for pidx in range(n_patches):
        y = jnp.dot(p2_ref[pidx], w2_ref[...], preferred_element_type=f32) + b2_ref[...]
        y = jnp.maximum(y, 0.0)                                    # conv2 ReLU, [B, 64]
        acc = acc + jnp.dot(y, w0_ref[pidx], preferred_element_type=f32)
    h = jnp.maximum(acc + b0_ref[...], 0.0)                        # fc0 ReLU, [B, 2*hidden]
    hv = h[:, :hidden]                                             # value-stream hidden
    ha = h[:, hidden:]                                             # advantage-stream hidden

    # Heads (+ the module's outer F.relu applied to both streams).
    v = jnp.maximum(jnp.dot(hv, wv1_ref[...], preferred_element_type=f32) + bv1_ref[...],
                    0.0)                                           # [B, atoms]
    a_list = []
    for i in range(n_actions):
        ai = jnp.dot(ha, wa1_ref[i], preferred_element_type=f32) + ba1_ref[i]
        a_list.append(jnp.maximum(ai, 0.0))                        # [B, atoms]
    a_mean = sum(a_list) * (1.0 / n_actions)

    # Dueling combine + numerically-stable (log-)softmax over atoms (pure 2-D lane math).
    for i in range(n_actions):
        q = v + a_list[i] - a_mean
        q = q - jnp.max(q, axis=-1, keepdims=True)
        e = jnp.exp(q)
        s = jnp.sum(e, axis=-1, keepdims=True)
        if log:
            o_ref[i] = (q - jnp.log(s)).astype(o_ref.dtype)
        else:
            o_ref[i] = (e / s).astype(o_ref.dtype)


def fused_head(p2, params, atoms, action_space, log=False):
    """p2:[P,B,25*128] conv2 patches -> q:[A,B,atoms] ((log-)softmax over atoms)."""
    P, B, _ = p2.shape
    hidden = params["fc0_b"].shape[1] // 2
    vmem = pl.BlockSpec(memory_space=pltpu.MemorySpace.VMEM)
    kernel = functools.partial(_fused_head_kernel, n_patches=P,
                               n_actions=action_space, hidden=hidden, log=log)
    return pl.pallas_call(
        kernel,
        out_shape=jax.ShapeDtypeStruct((action_space, B, atoms), jnp.float32),
        in_specs=[vmem] * 9,
        out_specs=vmem,
    )(p2, params["conv2_w"], params["conv2_b"], params["fc0_w"], params["fc0_b"],
      params["v_head_w"], params["v_head_b"], params["a_head_w"], params["a_head_b"])


# ------------------------------ JAX glue -----------------------------------

def _patchify_nchw(x, k):
    """Non-overlapping kxk patches from NCHW; rows=(b,oh,ow), cols=(c,kh,kw)."""
    B, C, H, W = x.shape
    Ho, Wo = (H - k) // k + 1, (W - k) // k + 1
    x = x[:, :, :Ho * k, :Wo * k].reshape(B, C, Ho, k, Wo, k)
    x = x.transpose(0, 2, 4, 1, 3, 5)            # [B, Ho, Wo, C, k, k]
    return x.reshape(B * Ho * Wo, C * k * k), Ho, Wo


def _patchify_nhwc_pfirst(y, k):
    """y:[B,H,W,Cp] -> patches [Ho*Wo, B, k*k*Cp]; cols=(kh,kw,c); patch index = oh*Wo+ow."""
    B, H, W, Cp = y.shape
    Ho, Wo = (H - k) // k + 1, (W - k) // k + 1
    y = y[:, :Ho * k, :Wo * k, :].reshape(B, Ho, k, Wo, k, Cp)
    y = y.transpose(1, 3, 0, 2, 4, 5)            # [Ho, Wo, B, kh, kw, Cp]
    return y.reshape(Ho * Wo, B, k * k * Cp), Ho, Wo


def _scale_noise(key, n):
    x = jax.random.normal(key, (n,), dtype=jnp.float32)
    return jnp.sign(x) * jnp.sqrt(jnp.abs(x))


def noisy_linear_params(key, in_f, out_f, std_init=0.5):
    """Effective (training-mode) NoisyLinear weights.  Returns w:[in,out], b:[1,out]."""
    k1, k2, k3, k4 = jax.random.split(key, 4)
    mu_range = 1.0 / math.sqrt(in_f)
    w_mu = jax.random.uniform(k1, (out_f, in_f), jnp.float32, -mu_range, mu_range)
    b_mu = jax.random.uniform(k2, (out_f,), jnp.float32, -mu_range, mu_range)
    w_sigma = jnp.full((out_f, in_f), std_init / math.sqrt(in_f), jnp.float32)
    b_sigma = jnp.full((out_f,), std_init / math.sqrt(out_f), jnp.float32)
    eps_in = _scale_noise(k3, in_f)
    eps_out = _scale_noise(k4, out_f)
    w_eff = w_mu + w_sigma * jnp.outer(eps_out, eps_in)
    b_eff = b_mu + b_sigma * eps_out
    return w_eff.T, b_eff.reshape(1, -1)


def init_dqn_params(key, history_length, atoms, action_space, hidden=128,
                    noisy_std=0.5, n_patches=9):
    """All weights packed/permuted/padded once at init for the TPU-friendly layouts."""
    assert hidden % 128 == 0, "packed fc0/head layout assumes a 128-aligned hidden size"
    C1_IN, C1_OUT, C2_OUT, K = history_length, 32, 64, 5
    C1_PAD = 128                                   # conv1 out channels padded -> lane-dense
    conv_output_size = n_patches * C2_OUT          # 576 for 84x84, matches PyTorch module
    ks = jax.random.split(key, 6)
    p = {}

    # conv1: PyTorch [32, C, 5, 5] -> [C*25 (pad->128), 128]; padded rows/cols are zero.
    kin = C1_IN * K * K
    kin_pad = ((kin + 127) // 128) * 128
    bound = 1.0 / math.sqrt(kin)
    ka, kb = jax.random.split(ks[0])
    w1 = jax.random.uniform(ka, (C1_OUT, C1_IN, K, K), jnp.float32, -bound, bound)
    b1 = jax.random.uniform(kb, (C1_OUT,), jnp.float32, -bound, bound)
    p["conv1_w"] = jnp.zeros((kin_pad, C1_PAD), jnp.float32).at[:kin, :C1_OUT].set(
        w1.reshape(C1_OUT, kin).T)
    p["conv1_b"] = jnp.zeros((1, C1_PAD), jnp.float32).at[0, :C1_OUT].set(b1)

    # conv2: PyTorch [64, 32, 5, 5] -> rows in (kh, kw, cin padded->128) order: [3200, 64].
    bound = 1.0 / math.sqrt(C1_OUT * K * K)
    ka, kb = jax.random.split(ks[1])
    w2 = jax.random.uniform(ka, (C2_OUT, C1_OUT, K, K), jnp.float32, -bound, bound)
    b2 = jax.random.uniform(kb, (C2_OUT,), jnp.float32, -bound, bound)
    w2p = jnp.zeros((K, K, C1_PAD, C2_OUT), jnp.float32).at[:, :, :C1_OUT, :].set(
        jnp.transpose(w2, (2, 3, 1, 0)))
    p["conv2_w"] = w2p.reshape(K * K * C1_PAD, C2_OUT)
    p["conv2_b"] = b2.reshape(1, C2_OUT)

    # fc0 (NoisyLinear, training mode): v & a streams fused column-wise; rows permuted
    # from PyTorch NCHW-flatten index (c*P + p) to the in-kernel (patch p, channel c) order.
    wv0, bv0 = noisy_linear_params(ks[2], conv_output_size, hidden, noisy_std)  # [576, H]
    wa0, ba0 = noisy_linear_params(ks[3], conv_output_size, hidden, noisy_std)
    def to_pc(w):                                   # [c*P + p, H] -> [p, c, H]
        return jnp.transpose(w.reshape(C2_OUT, n_patches, hidden), (1, 0, 2))
    p["fc0_w"] = jnp.concatenate([to_pc(wv0), to_pc(wa0)], axis=-1)   # [P, 64, 2H]
    p["fc0_b"] = jnp.concatenate([bv0, ba0], axis=-1)                 # [1, 2H]

    # Heads (NoisyLinear): v -> atoms ; a -> action_space*atoms, split per action.
    wv1, bv1 = noisy_linear_params(ks[4], hidden, atoms, noisy_std)              # [H, atoms]
    wa1, ba1 = noisy_linear_params(ks[5], hidden, action_space * atoms, noisy_std)
    p["v_head_w"], p["v_head_b"] = wv1, bv1
    p["a_head_w"] = jnp.transpose(wa1.reshape(hidden, action_space, atoms), (1, 0, 2))  # [A,H,Z]
    p["a_head_b"] = jnp.transpose(ba1.reshape(1, action_space, atoms), (1, 0, 2))       # [A,1,Z]
    return p


def dqn_forward(x, params, atoms, action_space, log=False):
    # layout: x is NCHW [B, C, H, W] float32 (same as the PyTorch module).
    if x.ndim == 5:                                # 'b 1 c h w -> (b 1) c h w'
        x = x.reshape((-1,) + x.shape[2:])
    B = x.shape[0]

    # conv1 (5x5 stride 5) + ReLU: lane-aligned patch matmul (Pallas kernel 1).
    p1, h1, w1 = _patchify_nchw(x, 5)                               # [B*h1*w1, C*25]
    p1 = jnp.pad(p1, ((0, 0), (0, params["conv1_w"].shape[0] - p1.shape[1])))
    y1 = conv1_matmul(p1, params["conv1_w"], params["conv1_b"])     # [B*h1*w1, 128]
    y1 = y1.reshape(B, h1, w1, y1.shape[-1])                        # NHWC (channels padded)

    # conv2 + fc0 + heads + dueling + softmax: one fused Pallas kernel.
    p2, h2, w2 = _patchify_nhwc_pfirst(y1, 5)                       # [P, B, 25*128]
    # conv_output_size consistency check (the module hard-codes 576 for 84x84 input).
    assert h2 * w2 == params["fc0_w"].shape[0], (
        "input spatial size inconsistent with conv_output_size used at init")
    q = fused_head(p2, params, atoms, action_space, log=log)        # [A, B, atoms]
    return q.transpose(1, 0, 2)                                     # [B, A, atoms]


# ------------------------------- main ---------------------------------------

if __name__ == "__main__":
    HISTORY = 4
    ATOMS = 51
    ACTIONS = 4
    HIDDEN = 128
    B = 2

    key = jax.random.PRNGKey(0)
    k_params, k_x = jax.random.split(key)
    # data-efficient encoder expects 84x84 Atari frames (conv_output_size = 64*3*3 = 576)
    params = init_dqn_params(k_params, HISTORY, ATOMS, ACTIONS, HIDDEN, n_patches=9)
    x = jax.random.uniform(k_x, (B, HISTORY, 84, 84), jnp.float32)

    fwd = jax.jit(functools.partial(dqn_forward, atoms=ATOMS,
                                    action_space=ACTIONS, log=False))
    q = jax.block_until_ready(fwd(x, params))

    assert q.shape == (B, ACTIONS, ATOMS)
    # softmax over atoms must sum to 1
    assert bool(jnp.allclose(jnp.sum(q, axis=-1), 1.0, atol=1e-5))

    print("KERNEL_OK")
</pallas_src>

<mosaic_0001>
module attributes {stable_mosaic.version = 11 : i64} {
  func.func @_conv1_kernel(%arg0: i32, %arg1: memref<256x128xf32, #tpu.memory_space<vmem>>, %arg2: memref<128x128xf32, #tpu.memory_space<vmem>>, %arg3: memref<1x128xf32, #tpu.memory_space<vmem>>, %arg4: memref<256x128xf32, #tpu.memory_space<vmem>>) attributes {dimension_semantics = [#tpu.dimension_semantics<parallel>], iteration_bounds = array<i64: 2>, scalar_prefetch = 0 : i64, scratch_operands = 0 : i64, tpu.core_type = #tpu.core_type<tc>, window_params = [{transform_indices = @transform_0, window_bounds = array<i64: 256, 128>}, {pipeline_mode = #tpu.pipeline_mode<synchronous>, transform_indices = @transform_1, window_bounds = array<i64: 128, 128>}, {pipeline_mode = #tpu.pipeline_mode<synchronous>, transform_indices = @transform_2, window_bounds = array<i64: 1, 128>}, {transform_indices = @transform_3, window_bounds = array<i64: 256, 128>}]} {
    %c0 = arith.constant 0 : index
    %c0_0 = arith.constant 0 : index
    %0 = vector.load %arg1[%c0, %c0_0] : memref<256x128xf32, #tpu.memory_space<vmem>>, vector<256x128xf32>
    %c0_1 = arith.constant 0 : index
    %c0_2 = arith.constant 0 : index
    %1 = vector.load %arg2[%c0_1, %c0_2] : memref<128x128xf32, #tpu.memory_space<vmem>>, vector<128x128xf32>
    %cst = arith.constant dense<0.000000e+00> : vector<256x128xf32>
    %2 = tpu.matmul %0, %1, %cst {dimension_numbers = #tpu.dot_dimension_numbers<[1], [0], [0], [1], [0, 0, 1, 1], [], []>} : vector<256x128xf32>, vector<128x128xf32>, vector<256x128xf32> -> vector<256x128xf32>
    %c0_3 = arith.constant 0 : index
    %c0_4 = arith.constant 0 : index
    %3 = vector.load %arg3[%c0_3, %c0_4] : memref<1x128xf32, #tpu.memory_space<vmem>>, vector<1x128xf32>
    %4 = vector.broadcast %3 : vector<1x128xf32> to vector<256x128xf32>
    %5 = arith.addf %2, %4 : vector<256x128xf32>
    %cst_5 = arith.constant 0.000000e+00 : f32
    %6 = vector.broadcast %cst_5 : f32 to vector<256x128xf32>
    %7 = arith.maximumf %5, %6 : vector<256x128xf32>
    %c0_6 = arith.constant 0 : index
    %c0_7 = arith.constant 0 : index
    %8 = vector.load %arg4[%c0_6, %c0_7] : memref<256x128xf32, #tpu.memory_space<vmem>>, vector<256x128xf32>
    tpu.vector_store %arg4[%c0_6, %c0_7], %7 {strides = array<i32>} : memref<256x128xf32, #tpu.memory_space<vmem>>, vector<256x128xf32>,
    return
  }
  func.func @transform_0(%arg0: i32) -> (i32, i32) {
    %c0_i32 = arith.constant 0 : i32
    %c0_i32_0 = arith.constant 0 : i32
    return %arg0, %c0_i32 : i32, i32
  }
  func.func @transform_1(%arg0: i32) -> (i32, i32) {
    %c0_i32 = arith.constant 0 : i32
    %c0_i32_0 = arith.constant 0 : i32
    %c0_i32_1 = arith.constant 0 : i32
    return %c0_i32, %c0_i32_0 : i32, i32
  }
  func.func @transform_2(%arg0: i32) -> (i32, i32) {
    %c0_i32 = arith.constant 0 : i32
    %c0_i32_0 = arith.constant 0 : i32
    %c0_i32_1 = arith.constant 0 : i32
    return %c0_i32, %c0_i32_0 : i32, i32
  }
  func.func @transform_3(%arg0: i32) -> (i32, i32) {
    %c0_i32 = arith.constant 0 : i32
    %c0_i32_0 = arith.constant 0 : i32
    return %arg0, %c0_i32 : i32, i32
  }
}

module attributes {stable_mosaic.version = 11 : i64} {
  func.func @_fused_head_kernel(%arg0: memref<9x2x3200xf32, #tpu.memory_space<vmem>>, %arg1: memref<3200x64xf32, #tpu.memory_space<vmem>>, %arg2: memref<1x64xf32, #tpu.memory_space<vmem>>, %arg3: memref<9x64x256xf32, #tpu.memory_space<vmem>>, %arg4: memref<1x256xf32, #tpu.memory_space<vmem>>, %arg5: memref<128x51xf32, #tpu.memory_space<vmem>>, %arg6: memref<1x51xf32, #tpu.memory_space<vmem>>, %arg7: memref<4x128x51xf32, #tpu.memory_space<vmem>>, %arg8: memref<4x1x51xf32, #tpu.memory_space<vmem>>, %arg9: memref<4x2x51xf32, #tpu.memory_space<vmem>>) attributes {dimension_semantics = [], scalar_prefetch = 0 : i64, scratch_operands = 0 : i64, tpu.core_type = #tpu.core_type<tc>} {
    %cst = arith.constant 0.000000e+00 : f32
    %0 = vector.broadcast %cst : f32 to vector<2x256xf32>
    %c0 = arith.constant 0 : index
    %c0_0 = arith.constant 0 : index
    %c0_1 = arith.constant 0 : index
    %1 = vector.load %arg0[%c0, %c0_0, %c0_1] : memref<9x2x3200xf32, #tpu.memory_space<vmem>>, vector<1x2x3200xf32>
    %2 = vector.shape_cast %1 : vector<1x2x3200xf32> to vector<2x3200xf32>
    %c0_2 = arith.constant 0 : index
    %c0_3 = arith.constant 0 : index
    %3 = vector.load %arg1[%c0_2, %c0_3] : memref<3200x64xf32, #tpu.memory_space<vmem>>, vector<3200x64xf32>
    %cst_4 = arith.constant dense<0.000000e+00> : vector<2x64xf32>
    %4 = tpu.matmul %2, %3, %cst_4 {dimension_numbers = #tpu.dot_dimension_numbers<[1], [0], [0], [1], [0, 0, 1, 1], [], []>} : vector<2x3200xf32>, vector<3200x64xf32>, vector<2x64xf32> -> vector<2x64xf32>
    %c0_5 = arith.constant 0 : index
    %c0_6 = arith.constant 0 : index
    %5 = vector.load %arg2[%c0_5, %c0_6] : memref<1x64xf32, #tpu.memory_space<vmem>>, vector<1x64xf32>
    %6 = vector.broadcast %5 : vector<1x64xf32> to vector<2x64xf32>
    %7 = arith.addf %4, %6 : vector<2x64xf32>
    %cst_7 = arith.constant 0.000000e+00 : f32
    %8 = vector.broadcast %cst_7 : f32 to vector<2x64xf32>
    %9 = arith.maximumf %7, %8 : vector<2x64xf32>
    %c0_8 = arith.constant 0 : index
    %c0_9 = arith.constant 0 : index
    %c0_10 = arith.constant 0 : index
    %10 = vector.load %arg3[%c0_8, %c0_9, %c0_10] : memref<9x64x256xf32, #tpu.memory_space<vmem>>, vector<1x64x256xf32>
    %11 = vector.shape_cast %10 : vector<1x64x256xf32> to vector<64x256xf32>
    %cst_11 = arith.constant dense<0.000000e+00> : vector<2x256xf32>
    %12 = tpu.matmul %9, %11, %cst_11 {dimension_numbers = #tpu.dot_dimension_numbers<[1], [0], [0], [1], [0, 0, 1, 1], [], []>} : vector<2x64xf32>, vector<64x256xf32>, vector<2x256xf32> -> vector<2x256xf32>
    %13 = arith.addf %0, %12 : vector<2x256xf32>
    %c1 = arith.constant 1 : index
    %c0_12 = arith.constant 0 : index
    %c0_13 = arith.constant 0 : index
    %14 = vector.load %arg0[%c1, %c0_12, %c0_13] : memref<9x2x3200xf32, #tpu.memory_space<vmem>>, vector<1x2x3200xf32>
    %15 = vector.shape_cast %14 : vector<1x2x3200xf32> to vector<2x3200xf32>
    %c0_14 = arith.constant 0 : index
    %c0_15 = arith.constant 0 : index
    %16 = vector.load %arg1[%c0_14, %c0_15] : memref<3200x64xf32, #tpu.memory_space<vmem>>, vector<3200x64xf32>
    %cst_16 = arith.constant dense<0.000000e+00> : vector<2x64xf32>
    %17 = tpu.matmul %15, %16, %cst_16 {dimension_numbers = #tpu.dot_dimension_numbers<[1], [0], [0], [1], [0, 0, 1, 1], [], []>} : vector<2x3200xf32>, vector<3200x64xf32>, vector<2x64xf32> -> vector<2x64xf32>
    %c0_17 = arith.constant 0 : index
    %c0_18 = arith.constant 0 : index
    %18 = vector.load %arg2[%c0_17, %c0_18] : memref<1x64xf32, #tpu.memory_space<vmem>>, vector<1x64xf32>
    %19 = vector.broadcast %18 : vector<1x64xf32> to vector<2x64xf32>
    %20 = arith.addf %17, %19 : vector<2x64xf32>
    %cst_19 = arith.constant 0.000000e+00 : f32
    %21 = vector.broadcast %cst_19 : f32 to vector<2x64xf32>
    %22 = arith.maximumf %20, %21 : vector<2x64xf32>
    %c1_20 = arith.constant 1 : index
    %c0_21 = arith.constant 0 : index
    %c0_22 = arith.constant 0 : index
    %23 = vector.load %arg3[%c1_20, %c0_21, %c0_22] : memref<9x64x256xf32, #tpu.memory_space<vmem>>, vector<1x64x256xf32>
    %24 = vector.shape_cast %23 : vector<1x64x256xf32> to vector<64x256xf32>
    %cst_23 = arith.constant dense<0.000000e+00> : vector<2x256xf32>
    %25 = tpu.matmul %22, %24, %cst_23 {dimension_numbers = #tpu.dot_dimension_numbers<[1], [0], [0], [1], [0, 0, 1, 1], [], []>} : vector<2x64xf32>, vector<64x256xf32>, vector<2x256xf32> -> vector<2x256xf32>
    %26 = arith.addf %13, %25 : vector<2x256xf32>
    %c2 = arith.constant 2 : index
    %c0_24 = arith.constant 0 : index
    %c0_25 = arith.constant 0 : index
    %27 = vector.load %arg0[%c2, %c0_24, %c0_25] : memref<9x2x3200xf32, #tpu.memory_space<vmem>>, vector<1x2x3200xf32>
    %28 = vector.shape_cast %27 : vector<1x2x3200xf32> to vector<2x3200xf32>
    %c0_26 = arith.constant 0 : index
    %c0_27 = arith.constant 0 : index
    %29 = vector.load %arg1[%c0_26, %c0_27] : memref<3200x64xf32, #tpu.memory_space<vmem>>, vector<3200x64xf32>
    %cst_28 = arith.constant dense<0.000000e+00> : vector<2x64xf32>
    %30 = tpu.matmul %28, %29, %cst_28 {dimension_numbers = #tpu.dot_dimension_numbers<[1], [0], [0], [1], [0, 0, 1, 1], [], []>} : vector<2x3200xf32>, vector<3200x64xf32>, vector<2x64xf32> -> vector<2x64xf32>
    %c0_29 = arith.constant 0 : index
    %c0_30 = arith.constant 0 : index
    %31 = vector.load %arg2[%c0_29, %c0_30] : memref<1x64xf32, #tpu.memory_space<vmem>>, vector<1x64xf32>
    %32 = vector.broadcast %31 : vector<1x64xf32> to vector<2x64xf32>
    %33 = arith.addf %30, %32 : vector<2x64xf32>
    %cst_31 = arith.constant 0.000000e+00 : f32
    %34 = vector.broadcast %cst_31 : f32 to vector<2x64xf32>
    %35 = arith.maximumf %33, %34 : vector<2x64xf32>
    %c2_32 = arith.constant 2 : index
    %c0_33 = arith.constant 0 : index
    %c0_34 = arith.constant 0 : index
    %36 = vector.load %arg3[%c2_32, %c0_33, %c0_34] : memref<9x64x256xf32, #tpu.memory_space<vmem>>, vector<1x64x256xf32>
    %37 = vector.shape_cast %36 : vector<1x64x256xf32> to vector<64x256xf32>
    %cst_35 = arith.constant dense<0.000000e+00> : vector<2x256xf32>
    %38 = tpu.matmul %35, %37, %cst_35 {dimension_numbers = #tpu.dot_dimension_numbers<[1], [0], [0], [1], [0, 0, 1, 1], [], []>} : vector<2x64xf32>, vector<64x256xf32>, vector<2x256xf32> -> vector<2x256xf32>
    %39 = arith.addf %26, %38 : vector<2x256xf32>
    %c3 = arith.constant 3 : index
    %c0_36 = arith.constant 0 : index
    %c0_37 = arith.constant 0 : index
    %40 = vector.load %arg0[%c3, %c0_36, %c0_37] : memref<9x2x3200xf32, #tpu.memory_space<vmem>>, vector<1x2x3200xf32>
    %41 = vector.shape_cast %40 : vector<1x2x3200xf32> to vector<2x3200xf32>
    %c0_38 = arith.constant 0 : index
    %c0_39 = arith.constant 0 : index
    %42 = vector.load %arg1[%c0_38, %c0_39] : memref<3200x64xf32, #tpu.memory_space<vmem>>, vector<3200x64xf32>
    %cst_40 = arith.constant dense<0.000000e+00> : vector<2x64xf32>
    %43 = tpu.matmul %41, %42, %cst_40 {dimension_numbers = #tpu.dot_dimension_numbers<[1], [0], [0], [1], [0, 0, 1, 1], [], []>} : vector<2x3200xf32>, vector<3200x64xf32>, vector<2x64xf32> -> vector<2x64xf32>
    %c0_41 = arith.constant 0 : index
    %c0_42 = arith.constant 0 : index
    %44 = vector.load %arg2[%c0_41, %c0_42] : memref<1x64xf32, #tpu.memory_space<vmem>>, vector<1x64xf32>
    %45 = vector.broadcast %44 : vector<1x64xf32> to vector<2x64xf32>
    %46 = arith.addf %43, %45 : vector<2x64xf32>
    %cst_43 = arith.constant 0.000000e+00 : f32
    %47 = vector.broadcast %cst_43 : f32 to vector<2x64xf32>
    %48 = arith.maximumf %46, %47 : vector<2x64xf32>
    %c3_44 = arith.constant 3 : index
    %c0_45 = arith.constant 0 : index
    %c0_46 = arith.constant 0 : index
    %49 = vector.load %arg3[%c3_44, %c0_45, %c0_46] : memref<9x64x256xf32, #tpu.memory_space<vmem>>, vector<1x64x256xf32>
    %50 = vector.shape_cast %49 : vector<1x64x256xf32> to vector<64x256xf32>
    %cst_47 = arith.constant dense<0.000000e+00> : vector<2x256xf32>
    %51 = tpu.matmul %48, %50, %cst_47 {dimension_numbers = #tpu.dot_dimension_numbers<[1], [0], [0], [1], [0, 0, 1, 1], [], []>} : vector<2x64xf32>, vector<64x256xf32>, vector<2x256xf32> -> vector<2x256xf32>
    %52 = arith.addf %39, %51 : vector<2x256xf32>
    %c4 = arith.constant 4 : index
    %c0_48 = arith.constant 0 : index
    %c0_49 = arith.constant 0 : index
    %53 = vector.load %arg0[%c4, %c0_48, %c0_49] : memref<9x2x3200xf32, #tpu.memory_space<vmem>>, vector<1x2x3200xf32>
    %54 = vector.shape_cast %53 : vector<1x2x3200xf32> to vector<2x3200xf32>
    %c0_50 = arith.constant 0 : index
    %c0_51 = arith.constant 0 : index
    %55 = vector.load %arg1[%c0_50, %c0_51] : memref<3200x64xf32, #tpu.memory_space<vmem>>, vector<3200x64xf32>
    %cst_52 = arith.constant dense<0.000000e+00> : vector<2x64xf32>
    %56 = tpu.matmul %54, %55, %cst_52 {dimension_numbers = #tpu.dot_dimension_numbers<[1], [0], [0], [1], [0, 0, 1, 1], [], []>} : vector<2x3200xf32>, vector<3200x64xf32>, vector<2x64xf32> -> vector<2x64xf32>
    %c0_53 = arith.constant 0 : index
    %c0_54 = arith.constant 0 : index
    %57 = vector.load %arg2[%c0_53, %c0_54] : memref<1x64xf32, #tpu.memory_space<vmem>>, vector<1x64xf32>
    %58 = vector.broadcast %57 : vector<1x64xf32> to vector<2x64xf32>
    %59 = arith.addf %56, %58 : vector<2x64xf32>
    %cst_55 = arith.constant 0.000000e+00 : f32
    %60 = vector.broadcast %cst_55 : f32 to vector<2x64xf32>
    %61 = arith.maximumf %59, %60 : vector<2x64xf32>
    %c4_56 = arith.constant 4 : index
    %c0_57 = arith.constant 0 : index
    %c0_58 = arith.constant 0 : index
    %62 = vector.load %arg3[%c4_56, %c0_57, %c0_58] : memref<9x64x256xf32, #tpu.memory_space<vmem>>, vector<1x64x256xf32>
    %63 = vector.shape_cast %62 : vector<1x64x256xf32> to vector<64x256xf32>
    %cst_59 = arith.constant dense<0.000000e+00> : vector<2x256xf32>
    %64 = tpu.matmul %61, %63, %cst_59 {dimension_numbers = #tpu.dot_dimension_numbers<[1], [0], [0], [1], [0, 0, 1, 1], [], []>} : vector<2x64xf32>, vector<64x256xf32>, vector<2x256xf32> -> vector<2x256xf32>
    %65 = arith.addf %52, %64 : vector<2x256xf32>
    %c5 = arith.constant 5 : index
    %c0_60 = arith.constant 0 : index
    %c0_61 = arith.constant 0 : index
    %66 = vector.load %arg0[%c5, %c0_60, %c0_61] : memref<9x2x3200xf32, #tpu.memory_space<vmem>>, vector<1x2x3200xf32>
    %67 = vector.shape_cast %66 : vector<1x2x3200xf32> to vector<2x3200xf32>
    %c0_62 = arith.constant 0 : index
    %c0_63 = arith.constant 0 : index
    %68 = vector.load %arg1[%c0_62, %c0_63] : memref<3200x64xf32, #tpu.memory_space<vmem>>, vector<3200x64xf32>
    %cst_64 = arith.constant dense<0.000000e+00> : vector<2x64xf32>
    %69 = tpu.matmul %67, %68, %cst_64 {dimension_numbers = #tpu.dot_dimension_numbers<[1], [0], [0], [1], [0, 0, 1, 1], [], []>} : vector<2x3200xf32>, vector<3200x64xf32>, vector<2x64xf32> -> vector<2x64xf32>
    %c0_65 = arith.constant 0 : index
    %c0_66 = arith.constant 0 : index
    %70 = vector.load %arg2[%c0_65, %c0_66] : memref<1x64xf32, #tpu.memory_space<vmem>>, vector<1x64xf32>
    %71 = vector.broadcast %70 : vector<1x64xf32> to vector<2x64xf32>
    %72 = arith.addf %69, %71 : vector<2x64xf32>
    %cst_67 = arith.constant 0.000000e+00 : f32
    %73 = vector.broadcast %cst_67 : f32 to vector<2x64xf32>
    %74 = arith.maximumf %72, %73 : vector<2x64xf32>
    %c5_68 = arith.constant 5 : index
    %c0_69 = arith.constant 0 : index
    %c0_70 = arith.constant 0 : index
    %75 = vector.load %arg3[%c5_68, %c0_69, %c0_70] : memref<9x64x256xf32, #tpu.memory_space<vmem>>, vector<1x64x256xf32>
    %76 = vector.shape_cast %75 : vector<1x64x256xf32> to vector<64x256xf32>
    %cst_71 = arith.constant dense<0.000000e+00> : vector<2x256xf32>
    %77 = tpu.matmul %74, %76, %cst_71 {dimension_numbers = #tpu.dot_dimension_numbers<[1], [0], [0], [1], [0, 0, 1, 1], [], []>} : vector<2x64xf32>, vector<64x256xf32>, vector<2x256xf32> -> vector<2x256xf32>
    %78 = arith.addf %65, %77 : vector<2x256xf32>
    %c6 = arith.constant 6 : index
    %c0_72 = arith.constant 0 : index
    %c0_73 = arith.constant 0 : index
    %79 = vector.load %arg0[%c6, %c0_72, %c0_73] : memref<9x2x3200xf32, #tpu.memory_space<vmem>>, vector<1x2x3200xf32>
    %80 = vector.shape_cast %79 : vector<1x2x3200xf32> to vector<2x3200xf32>
    %c0_74 = arith.constant 0 : index
    %c0_75 = arith.constant 0 : index
    %81 = vector.load %arg1[%c0_74, %c0_75] : memref<3200x64xf32, #tpu.memory_space<vmem>>, vector<3200x64xf32>
    %cst_76 = arith.constant dense<0.000000e+00> : vector<2x64xf32>
    %82 = tpu.matmul %80, %81, %cst_76 {dimension_numbers = #tpu.dot_dimension_numbers<[1], [0], [0], [1], [0, 0, 1, 1], [], []>} : vector<2x3200xf32>, vector<3200x64xf32>, vector<2x64xf32> -> vector<2x64xf32>
    %c0_77 = arith.constant 0 : index
    %c0_78 = arith.constant 0 : index
    %83 = vector.load %arg2[%c0_77, %c0_78] : memref<1x64xf32, #tpu.memory_space<vmem>>, vector<1x64xf32>
    %84 = vector.broadcast %83 : vector<1x64xf32> to vector<2x64xf32>
    %85 = arith.addf %82, %84 : vector<2x64xf32>
    %cst_79 = arith.constant 0.000000e+00 : f32
    %86 = vector.broadcast %cst_79 : f32 to vector<2x64xf32>
    %87 = arith.maximumf %85, %86 : vector<2x64xf32>
    %c6_80 = arith.constant 6 : index
    %c0_81 = arith.constant 0 : index
    %c0_82 = arith.constant 0 : index
    %88 = vector.load %arg3[%c6_80, %c0_81, %c0_82] : memref<9x64x256xf32, #tpu.memory_space<vmem>>, vector<1x64x256xf32>
    %89 = vector.shape_cast %88 : vector<1x64x256xf32> to vector<64x256xf32>
    %cst_83 = arith.constant dense<0.000000e+00> : vector<2x256xf32>
    %90 = tpu.matmul %87, %89, %cst_83 {dimension_numbers = #tpu.dot_dimension_numbers<[1], [0], [0], [1], [0, 0, 1, 1], [], []>} : vector<2x64xf32>, vector<64x256xf32>, vector<2x256xf32> -> vector<2x256xf32>
    %91 = arith.addf %78, %90 : vector<2x256xf32>
    %c7 = arith.constant 7 : index
    %c0_84 = arith.constant 0 : index
    %c0_85 = arith.constant 0 : index
    %92 = vector.load %arg0[%c7, %c0_84, %c0_85] : memref<9x2x3200xf32, #tpu.memory_space<vmem>>, vector<1x2x3200xf32>
    %93 = vector.shape_cast %92 : vector<1x2x3200xf32> to vector<2x3200xf32>
    %c0_86 = arith.constant 0 : index
    %c0_87 = arith.constant 0 : index
    %94 = vector.load %arg1[%c0_86, %c0_87] : memref<3200x64xf32, #tpu.memory_space<vmem>>, vector<3200x64xf32>
    %cst_88 = arith.constant dense<0.000000e+00> : vector<2x64xf32>
    %95 = tpu.matmul %93, %94, %cst_88 {dimension_numbers = #tpu.dot_dimension_numbers<[1], [0], [0], [1], [0, 0, 1, 1], [], []>} : vector<2x3200xf32>, vector<3200x64xf32>, vector<2x64xf32> -> vector<2x64xf32>
    %c0_89 = arith.constant 0 : index
    %c0_90 = arith.constant 0 : index
    %96 = vector.load %arg2[%c0_89, %c0_90] : memref<1x64xf32, #tpu.memory_space<vmem>>, vector<1x64xf32>
    %97 = vector.broadcast %96 : vector<1x64xf32> to vector<2x64xf32>
    %98 = arith.addf %95, %97 : vector<2x64xf32>
    %cst_91 = arith.constant 0.000000e+00 : f32
    %99 = vector.broadcast %cst_91 : f32 to vector<2x64xf32>
    %100 = arith.maximumf %98, %99 : vector<2x64xf32>
    %c7_92 = arith.constant 7 : index
    %c0_93 = arith.constant 0 : index
    %c0_94 = arith.constant 0 : index
    %101 = vector.load %arg3[%c7_92, %c0_93, %c0_94] : memref<9x64x256xf32, #tpu.memory_space<vmem>>, vector<1x64x256xf32>
    %102 = vector.shape_cast %101 : vector<1x64x256xf32> to vector<64x256xf32>
    %cst_95 = arith.constant dense<0.000000e+00> : vector<2x256xf32>
    %103 = tpu.matmul %100, %102, %cst_95 {dimension_numbers = #tpu.dot_dimension_numbers<[1], [0], [0], [1], [0, 0, 1, 1], [], []>} : vector<2x64xf32>, vector<64x256xf32>, vector<2x256xf32> -> vector<2x256xf32>
    %104 = arith.addf %91, %103 : vector<2x256xf32>
    %c8 = arith.constant 8 : index
    %c0_96 = arith.constant 0 : index
    %c0_97 = arith.constant 0 : index
    %105 = vector.load %arg0[%c8, %c0_96, %c0_97] : memref<9x2x3200xf32, #tpu.memory_space<vmem>>, vector<1x2x3200xf32>
    %106 = vector.shape_cast %105 : vector<1x2x3200xf32> to vector<2x3200xf32>
    %c0_98 = arith.constant 0 : index
    %c0_99 = arith.constant 0 : index
    %107 = vector.load %arg1[%c0_98, %c0_99] : memref<3200x64xf32, #tpu.memory_space<vmem>>, vector<3200x64xf32>
    %cst_100 = arith.constant dense<0.000000e+00> : vector<2x64xf32>
    %108 = tpu.matmul %106, %107, %cst_100 {dimension_numbers = #tpu.dot_dimension_numbers<[1], [0], [0], [1], [0, 0, 1, 1], [], []>} : vector<2x3200xf32>, vector<3200x64xf32>, vector<2x64xf32> -> vector<2x64xf32>
    %c0_101 = arith.constant 0 : index
    %c0_102 = arith.constant 0 : index
    %109 = vector.load %arg2[%c0_101, %c0_102] : memref<1x64xf32, #tpu.memory_space<vmem>>, vector<1x64xf32>
    %110 = vector.broadcast %109 : vector<1x64xf32> to vector<2x64xf32>
    %111 = arith.addf %108, %110 : vector<2x64xf32>
    %cst_103 = arith.constant 0.000000e+00 : f32
    %112 = vector.broadcast %cst_103 : f32 to vector<2x64xf32>
    %113 = arith.maximumf %111, %112 : vector<2x64xf32>
    %c8_104 = arith.constant 8 : index
    %c0_105 = arith.constant 0 : index
    %c0_106 = arith.constant 0 : index
    %114 = vector.load %arg3[%c8_104, %c0_105, %c0_106] : memref<9x64x256xf32, #tpu.memory_space<vmem>>, vector<1x64x256xf32>
    %115 = vector.shape_cast %114 : vector<1x64x256xf32> to vector<64x256xf32>
    %cst_107 = arith.constant dense<0.000000e+00> : vector<2x256xf32>
    %116 = tpu.matmul %113, %115, %cst_107 {dimension_numbers = #tpu.dot_dimension_numbers<[1], [0], [0], [1], [0, 0, 1, 1], [], []>} : vector<2x64xf32>, vector<64x256xf32>, vector<2x256xf32> -> vector<2x256xf32>
    %117 = arith.addf %104, %116 : vector<2x256xf32>
    %c0_108 = arith.constant 0 : index
    %c0_109 = arith.constant 0 : index
    %118 = vector.load %arg4[%c0_108, %c0_109] : memref<1x256xf32, #tpu.memory_space<vmem>>, vector<1x256xf32>
    %119 = vector.broadcast %118 : vector<1x256xf32> to vector<2x256xf32>
    %120 = arith.addf %117, %119 : vector<2x256xf32>
    %cst_110 = arith.constant 0.000000e+00 : f32
    %121 = vector.broadcast %cst_110 : f32 to vector<2x256xf32>
    %122 = arith.maximumf %120, %121 : vector<2x256xf32>
    %123 = vector.extract_strided_slice %122 {offsets = [0, 0], sizes = [2, 128], strides = [1, 1]} : vector<2x256xf32> to vector<2x128xf32>
    %124 = vector.extract_strided_slice %122 {offsets = [0, 128], sizes = [2, 128], strides = [1, 1]} : vector<2x256xf32> to vector<2x128xf32>
    %c0_111 = arith.constant 0 : index
    %c0_112 = arith.constant 0 : index
    %125 = vector.load %arg5[%c0_111, %c0_112] : memref<128x51xf32, #tpu.memory_space<vmem>>, vector<128x51xf32>
    %cst_113 = arith.constant dense<0.000000e+00> : vector<2x51xf32>
    %126 = tpu.matmul %123, %125, %cst_113 {dimension_numbers = #tpu.dot_dimension_numbers<[1], [0], [0], [1], [0, 0, 1, 1], [], []>} : vector<2x128xf32>, vector<128x51xf32>, vector<2x51xf32> -> vector<2x51xf32>
    %c0_114 = arith.constant 0 : index
    %c0_115 = arith.constant 0 : index
    %127 = vector.load %arg6[%c0_114, %c0_115] : memref<1x51xf32, #tpu.memory_space<vmem>>, vector<1x51xf32>
    %128 = vector.broadcast %127 : vector<1x51xf32> to vector<2x51xf32>
    %129 = arith.addf %126, %128 : vector<2x51xf32>
    %cst_116 = arith.constant 0.000000e+00 : f32
    %130 = vector.broadcast %cst_116 : f32 to vector<2x51xf32>
    %131 = arith.maximumf %129, %130 : vector<2x51xf32>
    %c0_117 = arith.constant 0 : index
    %c0_118 = arith.constant 0 : index
    %c0_119 = arith.constant 0 : index
    %132 = vector.load %arg7[%c0_117, %c0_118, %c0_119] : memref<4x128x51xf32, #tpu.memory_space<vmem>>, vector<1x128x51xf32>
    %133 = vector.shape_cast %132 : vector<1x128x51xf32> to vector<128x51xf32>
    %cst_120 = arith.constant dense<0.000000e+00> : vector<2x51xf32>
    %134 = tpu.matmul %124, %133, %cst_120 {dimension_numbers = #tpu.dot_dimension_numbers<[1], [0], [0], [1], [0, 0, 1, 1], [], []>} : vector<2x128xf32>, vector<128x51xf32>, vector<2x51xf32> -> vector<2x51xf32>
    %c0_121 = arith.constant 0 : index
    %c0_122 = arith.constant 0 : index
    %c0_123 = arith.constant 0 : index
    %135 = vector.load %arg8[%c0_121, %c0_122, %c0_123] : memref<4x1x51xf32, #tpu.memory_space<vmem>>, vector<1x1x51xf32>
    %136 = vector.shape_cast %135 : vector<1x1x51xf32> to vector<1x51xf32>
    %137 = vector.broadcast %136 : vector<1x51xf32> to vector<2x51xf32>
    %138 = arith.addf %134, %137 : vector<2x51xf32>
    %cst_124 = arith.constant 0.000000e+00 : f32
    %139 = vector.broadcast %cst_124 : f32 to vector<2x51xf32>
    %140 = arith.maximumf %138, %139 : vector<2x51xf32>
    %c1_125 = arith.constant 1 : index
    %c0_126 = arith.constant 0 : index
    %c0_127 = arith.constant 0 : index
    %141 = vector.load %arg7[%c1_125, %c0_126, %c0_127] : memref<4x128x51xf32, #tpu.memory_space<vmem>>, vector<1x128x51xf32>
    %142 = vector.shape_cast %141 : vector<1x128x51xf32> to vector<128x51xf32>
    %cst_128 = arith.constant dense<0.000000e+00> : vector<2x51xf32>
    %143 = tpu.matmul %124, %142, %cst_128 {dimension_numbers = #tpu.dot_dimension_numbers<[1], [0], [0], [1], [0, 0, 1, 1], [], []>} : vector<2x128xf32>, vector<128x51xf32>, vector<2x51xf32> -> vector<2x51xf32>
    %c1_129 = arith.constant 1 : index
    %c0_130 = arith.constant 0 : index
    %c0_131 = arith.constant 0 : index
    %144 = vector.load %arg8[%c1_129, %c0_130, %c0_131] : memref<4x1x51xf32, #tpu.memory_space<vmem>>, vector<1x1x51xf32>
    %145 = vector.shape_cast %144 : vector<1x1x51xf32> to vector<1x51xf32>
    %146 = vector.broadcast %145 : vector<1x51xf32> to vector<2x51xf32>
    %147 = arith.addf %143, %146 : vector<2x51xf32>
    %cst_132 = arith.constant 0.000000e+00 : f32
    %148 = vector.broadcast %cst_132 : f32 to vector<2x51xf32>
    %149 = arith.maximumf %147, %148 : vector<2x51xf32>
    %c2_133 = arith.constant 2 : index
    %c0_134 = arith.constant 0 : index
    %c0_135 = arith.constant 0 : index
    %150 = vector.load %arg7[%c2_133, %c0_134, %c0_135] : memref<4x128x51xf32, #tpu.memory_space<vmem>>, vector<1x128x51xf32>
    %151 = vector.shape_cast %150 : vector<1x128x51xf32> to vector<128x51xf32>
    %cst_136 = arith.constant dense<0.000000e+00> : vector<2x51xf32>
    %152 = tpu.matmul %124, %151, %cst_136 {dimension_numbers = #tpu.dot_dimension_numbers<[1], [0], [0], [1], [0, 0, 1, 1], [], []>} : vector<2x128xf32>, vector<128x51xf32>, vector<2x51xf32> -> vector<2x51xf32>
    %c2_137 = arith.constant 2 : index
    %c0_138 = arith.constant 0 : index
    %c0_139 = arith.constant 0 : index
    %153 = vector.load %arg8[%c2_137, %c0_138, %c0_139] : memref<4x1x51xf32, #tpu.memory_space<vmem>>, vector<1x1x51xf32>
    %154 = vector.shape_cast %153 : vector<1x1x51xf32> to vector<1x51xf32>
    %155 = vector.broadcast %154 : vector<1x51xf32> to vector<2x51xf32>
    %156 = arith.addf %152, %155 : vector<2x51xf32>
    %cst_140 = arith.constant 0.000000e+00 : f32
    %157 = vector.broadcast %cst_140 : f32 to vector<2x51xf32>
    %158 = arith.maximumf %156, %157 : vector<2x51xf32>
    %c3_141 = arith.constant 3 : index
    %c0_142 = arith.constant 0 : index
    %c0_143 = arith.constant 0 : index
    %159 = vector.load %arg7[%c3_141, %c0_142, %c0_143] : memref<4x128x51xf32, #tpu.memory_space<vmem>>, vector<1x128x51xf32>
    %160 = vector.shape_cast %159 : vector<1x128x51xf32> to vector<128x51xf32>
    %cst_144 = arith.constant dense<0.000000e+00> : vector<2x51xf32>
    %161 = tpu.matmul %124, %160, %cst_144 {dimension_numbers = #tpu.dot_dimension_numbers<[1], [0], [0], [1], [0, 0, 1, 1], [], []>} : vector<2x128xf32>, vector<128x51xf32>, vector<2x51xf32> -> vector<2x51xf32>
    %c3_145 = arith.constant 3 : index
    %c0_146 = arith.constant 0 : index
    %c0_147 = arith.constant 0 : index
    %162 = vector.load %arg8[%c3_145, %c0_146, %c0_147] : memref<4x1x51xf32, #tpu.memory_space<vmem>>, vector<1x1x51xf32>
    %163 = vector.shape_cast %162 : vector<1x1x51xf32> to vector<1x51xf32>
    %164 = vector.broadcast %163 : vector<1x51xf32> to vector<2x51xf32>
    %165 = arith.addf %161, %164 : vector<2x51xf32>
    %cst_148 = arith.constant 0.000000e+00 : f32
    %166 = vector.broadcast %cst_148 : f32 to vector<2x51xf32>
    %167 = arith.maximumf %165, %166 : vector<2x51xf32>
    %cst_149 = arith.constant 0.000000e+00 : f32
    %168 = vector.broadcast %cst_149 : f32 to vector<2x51xf32>
    %169 = arith.addf %168, %140 : vector<2x51xf32>
    %170 = arith.addf %169, %149 : vector<2x51xf32>
    %171 = arith.addf %170, %158 : vector<2x51xf32>
    %172 = arith.addf %171, %167 : vector<2x51xf32>
    %cst_150 = arith.constant 2.500000e-01 : f32
    %173 = vector.broadcast %cst_150 : f32 to vector<2x51xf32>
    %174 = arith.mulf %172, %173 : vector<2x51xf32>
    %175 = arith.addf %131, %140 : vector<2x51xf32>
    %176 = arith.subf %175, %174 : vector<2x51xf32>
    %cst_151 = arith.constant dense<0xFF800000> : vector<2xf32>
    %177 = vector.multi_reduction <maximumf>, %176, %cst_151 [1] : vector<2x51xf32> to vector<2xf32>
    %178 = vector.shape_cast %177 : vector<2xf32> to vector<2x1xf32>
    %179 = vector.broadcast %178 : vector<2x1xf32> to vector<2x51xf32>
    %180 = arith.subf %176, %179 : vector<2x51xf32>
    %181 = math.exp %180 : vector<2x51xf32>
    %cst_152 = arith.constant dense<0.000000e+00> : vector<2xf32>
    %182 = vector.multi_reduction <add>, %181, %cst_152 [1] : vector<2x51xf32> to vector<2xf32>
    %183 = vector.shape_cast %182 : vector<2xf32> to vector<2x1xf32>
    %184 = vector.broadcast %183 : vector<2x1xf32> to vector<2x51xf32>
    %185 = arith.divf %181, %184 : vector<2x51xf32>
    %c0_153 = arith.constant 0 : index
    %c0_154 = arith.constant 0 : index
    %c0_155 = arith.constant 0 : index
    %186 = vector.load %arg9[%c0_153, %c0_154, %c0_155] : memref<4x2x51xf32, #tpu.memory_space<vmem>>, vector<1x2x51xf32>
    %187 = vector.shape_cast %186 : vector<1x2x51xf32> to vector<2x51xf32>
    %188 = vector.shape_cast %185 : vector<2x51xf32> to vector<1x2x51xf32>
    tpu.vector_store %arg9[%c0_153, %c0_154, %c0_155], %188 {strides = array<i32>} : memref<4x2x51xf32, #tpu.memory_space<vmem>>, vector<1x2x51xf32>,
    %189 = arith.addf %131, %149 : vector<2x51xf32>
    %190 = arith.subf %189, %174 : vector<2x51xf32>
    %cst_156 = arith.constant dense<0xFF800000> : vector<2xf32>
    %191 = vector.multi_reduction <maximumf>, %190, %cst_156 [1] : vector<2x51xf32> to vector<2xf32>
    %192 = vector.shape_cast %191 : vector<2xf32> to vector<2x1xf32>
    %193 = vector.broadcast %192 : vector<2x1xf32> to vector<2x51xf32>
    %194 = arith.subf %190, %193 : vector<2x51xf32>
    %195 = math.exp %194 : vector<2x51xf32>
    %cst_157 = arith.constant dense<0.000000e+00> : vector<2xf32>
    %196 = vector.multi_reduction <add>, %195, %cst_157 [1] : vector<2x51xf32> to vector<2xf32>
    %197 = vector.shape_cast %196 : vector<2xf32> to vector<2x1xf32>
    %198 = vector.broadcast %197 : vector<2x1xf32> to vector<2x51xf32>
    %199 = arith.divf %195, %198 : vector<2x51xf32>
    %c1_158 = arith.constant 1 : index
    %c0_159 = arith.constant 0 : index
    %c0_160 = arith.constant 0 : index
    %200 = vector.load %arg9[%c1_158, %c0_159, %c0_160] : memref<4x2x51xf32, #tpu.memory_space<vmem>>, vector<1x2x51xf32>
    %201 = vector.shape_cast %200 : vector<1x2x51xf32> to vector<2x51xf32>
    %202 = vector.shape_cast %199 : vector<2x51xf32> to vector<1x2x51xf32>
    tpu.vector_store %arg9[%c1_158, %c0_159, %c0_160], %202 {strides = array<i32>} : memref<4x2x51xf32, #tpu.memory_space<vmem>>, vector<1x2x51xf32>,
    %203 = arith.addf %131, %158 : vector<2x51xf32>
    %204 = arith.subf %203, %174 : vector<2x51xf32>
    %cst_161 = arith.constant dense<0xFF800000> : vector<2xf32>
    %205 = vector.multi_reduction <maximumf>, %204, %cst_161 [1] : vector<2x51xf32> to vector<2xf32>
    %206 = vector.shape_cast %205 : vector<2xf32> to vector<2x1xf32>
    %207 = vector.broadcast %206 : vector<2x1xf32> to vector<2x51xf32>
    %208 = arith.subf %204, %207 : vector<2x51xf32>
    %209 = math.exp %208 : vector<2x51xf32>
    %cst_162 = arith.constant dense<0.000000e+00> : vector<2xf32>
    %210 = vector.multi_reduction <add>, %209, %cst_162 [1] : vector<2x51xf32> to vector<2xf32>
    %211 = vector.shape_cast %210 : vector<2xf32> to vector<2x1xf32>
    %212 = vector.broadcast %211 : vector<2x1xf32> to vector<2x51xf32>
    %213 = arith.divf %209, %212 : vector<2x51xf32>
    %c2_163 = arith.constant 2 : index
    %c0_164 = arith.constant 0 : index
    %c0_165 = arith.constant 0 : index
    %214 = vector.load %arg9[%c2_163, %c0_164, %c0_165] : memref<4x2x51xf32, #tpu.memory_space<vmem>>, vector<1x2x51xf32>
    %215 = vector.shape_cast %214 : vector<1x2x51xf32> to vector<2x51xf32>
    %216 = vector.shape_cast %213 : vector<2x51xf32> to vector<1x2x51xf32>
    tpu.vector_store %arg9[%c2_163, %c0_164, %c0_165], %216 {strides = array<i32>} : memref<4x2x51xf32, #tpu.memory_space<vmem>>, vector<1x2x51xf32>,
    %217 = arith.addf %131, %167 : vector<2x51xf32>
    %218 = arith.subf %217, %174 : vector<2x51xf32>
    %cst_166 = arith.constant dense<0xFF800000> : vector<2xf32>
    %219 = vector.multi_reduction <maximumf>, %218, %cst_166 [1] : vector<2x51xf32> to vector<2xf32>
    %220 = vector.shape_cast %219 : vector<2xf32> to vector<2x1xf32>
    %221 = vector.broadcast %220 : vector<2x1xf32> to vector<2x51xf32>
    %222 = arith.subf %218, %221 : vector<2x51xf32>
    %223 = math.exp %222 : vector<2x51xf32>
    %cst_167 = arith.constant dense<0.000000e+00> : vector<2xf32>
    %224 = vector.multi_reduction <add>, %223, %cst_167 [1] : vector<2x51xf32> to vector<2xf32>
    %225 = vector.shape_cast %224 : vector<2xf32> to vector<2x1xf32>
    %226 = vector.broadcast %225 : vector<2x1xf32> to vector<2x51xf32>
    %227 = arith.divf %223, %226 : vector<2x51xf32>
    %c3_168 = arith.constant 3 : index
    %c0_169 = arith.constant 0 : index
    %c0_170 = arith.constant 0 : index
    %228 = vector.load %arg9[%c3_168, %c0_169, %c0_170] : memref<4x2x51xf32, #tpu.memory_space<vmem>>, vector<1x2x51xf32>
    %229 = vector.shape_cast %228 : vector<1x2x51xf32> to vector<2x51xf32>
    %230 = vector.shape_cast %227 : vector<2x51xf32> to vector<1x2x51xf32>
    tpu.vector_store %arg9[%c3_168, %c0_169, %c0_170], %230 {strides = array<i32>} : memref<4x2x51xf32, #tpu.memory_space<vmem>>, vector<1x2x51xf32>,
    return
  }
}

</mosaic_0001>

<llo_original>
// kernel: dqn_forward.2
$region0: #{dqn_forward.2}
  #allocation0 [shape = 'u32[]', space=smem, size = 0x4, offset = 0x4, fixed_abs, tag = 'smem constant byte address 0x4 - core index']
  #allocation1 [shape = 'u32[144,128]{1,0:T(1,128)}', space=vmem, size = 0x12000, scoped, tag = 'internal scratch']
  %s0 = inlined_call_operand.vmem [shape: f32[512,128], index: 0, kind: input, shape index: {}]
  %s1 = inlined_call_operand.vmem [shape: f32[128,128], index: 1, kind: input, shape index: {}]
  %s2 = inlined_call_operand.vmem [shape: f32[1,128], index: 2, kind: input, shape index: {}]
  %s3 = inlined_call_operand.vmem [shape: f32[512,128], index: 3, kind: output, shape index: {}]
  %s4 = sld [smem:[#allocation0]]
  $region45: #{dqn_forward.2} parent=0
    _
  %s6 = ssub.s32 1, %s4
  %s7 = scalar_select 0, %s6, %s4
  loop: start=0, step=1, limit=4
  $region2: #{dqn_forward.2} parent=0 // loop_pre_header
    _
  $region3: #{dqn_forward.2} parent=0 // loop_header
    %s9 = sphi 0, %s13
    %p10 = scmp.ge.s32.totalorder %s9, 4
    %s19 = sphi 0, %s21
    %s22 = sphi 0, %s19
    %s23 = sphi 0, %s22
    %s39 = sphi 0, %s23
    %s43 = sphi 0, %s43
    %s45 = sphi 0, %s43
    %s46 = sphi 0, %s45
    %s60 = sphi 0, %s46
    %s64 = sphi 0, %s64
    %s66 = sphi 0, %s64
    %s67 = sphi 0, %s66
    %s81 = sphi 0, %s67
    %s87 = sphi 0, %s89
    %s90 = sphi 0, %s87
    %s91 = sphi 0, %s90
    %s107 = sphi 0, %s91
  $region4: #{dqn_forward.2} parent=0 // loop_header_branch
    %12 = sbr.rel (%p10) target = $region8
  $region5: #{dqn_forward.2} parent=0 // loop_body
    %s14 = ssub.s32 %s9, 1
    %s15 = ssub.s32 %s9, 2
    %s16 = sadd.s32 %s9, 1
    %s17 = ssub.s32 %s9, %s16
    %p18 = scmp.eq.s32.totalorder %s17, 0
    %s20 = sadd.s32 %s19, 1
    %s21 = scalar_select %p18, %s19, %s20
    %p24 = pneg %p18
    %p25 = scmp.eq.s32.totalorder %s9, 1
    %p26 = por %p24, %p25
    %p27 = scmp.ne.s32.totalorder %s19, %s22
    %p28 = scmp.eq.s32.totalorder %s9, 0
    %p29 = por %p27, %p28
    %p30 = scmp.ne.s32.totalorder %s19, %s22
    %p31 = scmp.eq.s32.totalorder %s14, 1
    %p32 = por %p30, %p31
    %p33 = scmp.ne.s32.totalorder %s22, %s23
    %p34 = scmp.eq.s32.totalorder %s14, 0
    %p35 = por %p33, %p34
    %p36 = scmp.ne.s32.totalorder %s22, %s23
    %p37 = scmp.eq.s32.totalorder %s15, 1
    %p38 = por %p36, %p37
    %p40 = scmp.ne.s32.totalorder %s23, %s39
    %p41 = scmp.eq.s32.totalorder %s15, 0
    %p42 = por %p40, %p41
    %s44 = sadd.s32 %s43, 1
    %p47 = scmp.eq.s32.totalorder %s9, 1
    %p48 = scmp.ne.s32.totalorder %s43, %s45
    %p49 = scmp.eq.s32.totalorder %s9, 0
    %p50 = por %p48, %p49
    %p51 = scmp.ne.s32.totalorder %s43, %s45
    %p52 = scmp.eq.s32.totalorder %s14, 1
    %p53 = por %p51, %p52
    %p54 = scmp.ne.s32.totalorder %s45, %s46
    %p55 = scmp.eq.s32.totalorder %s14, 0
    %p56 = por %p54, %p55
    %p57 = scmp.ne.s32.totalorder %s45, %s46
    %p58 = scmp.eq.s32.totalorder %s15, 1
    %p59 = por %p57, %p58
    %p61 = scmp.ne.s32.totalorder %s46, %s60
    %p62 = scmp.eq.s32.totalorder %s15, 0
    %p63 = por %p61, %p62
    %s65 = sadd.s32 %s64, 1
    %p68 = scmp.eq.s32.totalorder %s9, 1
    %p69 = scmp.ne.s32.totalorder %s64, %s66
    %p70 = scmp.eq.s32.totalorder %s9, 0
    %p71 = por %p69, %p70
    %p72 = scmp.ne.s32.totalorder %s64, %s66
    %p73 = scmp.eq.s32.totalorder %s14, 1
    %p74 = por %p72, %p73
    %p75 = scmp.ne.s32.totalorder %s66, %s67
    %p76 = scmp.eq.s32.totalorder %s14, 0
    %p77 = por %p75, %p76
    %p78 = scmp.ne.s32.totalorder %s66, %s67
    %p79 = scmp.eq.s32.totalorder %s15, 1
    %p80 = por %p78, %p79
    %p82 = scmp.ne.s32.totalorder %s67, %s81
    %p83 = scmp.eq.s32.totalorder %s15, 0
    %p84 = por %p82, %p83
    %s85 = ssub.s32 %s9, %s16
    %p86 = scmp.eq.s32.totalorder %s85, 0
    %s88 = sadd.s32 %s87, 1
    %s89 = scalar_select %p86, %s87, %s88
    %p92 = pneg %p86
    %p93 = scmp.eq.s32.totalorder %s9, 1
    %p94 = por %p92, %p93
    %p95 = scmp.ne.s32.totalorder %s87, %s90
    %p96 = scmp.eq.s32.totalorder %s9, 0
    %p97 = por %p95, %p96
    %p98 = scmp.ne.s32.totalorder %s87, %s90
    %p99 = scmp.eq.s32.totalorder %s14, 1
    %p100 = por %p98, %p99
    %p101 = scmp.ne.s32.totalorder %s90, %s91
    %p102 = scmp.eq.s32.totalorder %s14, 0
    %p103 = por %p101, %p102
    %p104 = scmp.ne.s32.totalorder %s90, %s91
    %p105 = scmp.eq.s32.totalorder %s15, 1
    %p106 = por %p104, %p105
    %p108 = scmp.ne.s32.totalorder %s91, %s107
    %p109 = scmp.eq.s32.totalorder %s15, 0
    %p110 = por %p108, %p109
    %p111 = scmp.le.s32.totalorder 1, %s9
    %p112 = scmp.lt.s32.totalorder %s9, 3
    %p113 = pnand %p111, %p112
    %p114 = pneg %p113
    // Predicated region
    $region9: #{dqn_forward.2} parent=5 // pred_check
      _
    $region10: #{dqn_forward.2} parent=5 // pred_check_branch
      %116 = sbr.rel (%p113) target = $region12
    $region11: #{dqn_forward.2} parent=5 // pred_region
      %s117 = ssub.s32 %s9, 1
      // Predicated region
      $region13: #{dqn_forward.2} parent=11 // pred_check
        %p118 = pneg %p56
      $region14: #{dqn_forward.2} parent=11 // pred_check_branch
        %120 = sbr.rel (%p118) target = $region16
      $region15: #{dqn_forward.2} parent=11 // pred_region
        _
      $region16: #{dqn_forward.2} parent=11 // pred_fallthru
        _
      // Predicated region
      $region17: #{dqn_forward.2} parent=11 // pred_check
        %p121 = pneg %p77
      $region18: #{dqn_forward.2} parent=11 // pred_check_branch
        %123 = sbr.rel (%p121) target = $region20
      $region19: #{dqn_forward.2} parent=11 // pred_region
        _
      $region20: #{dqn_forward.2} parent=11 // pred_fallthru
        _
    $region12: #{dqn_forward.2} parent=5 // pred_fallthru
      _
    %p124 = scmp.lt.s32.totalorder %s9, 2
    // Predicated region
    $region21: #{dqn_forward.2} parent=5 // pred_check
      %p125 = pneg %p124
    $region22: #{dqn_forward.2} parent=5 // pred_check_branch
      %127 = sbr.rel (%p125) target = $region24
    $region23: #{dqn_forward.2} parent=5 // pred_region
      // Predicated region
      $region25: #{dqn_forward.2} parent=23 // pred_check
        %p128 = pneg %p29
      $region26: #{dqn_forward.2} parent=23 // pred_check_branch
        %130 = sbr.rel (%p128) target = $region28
      $region27: #{dqn_forward.2} parent=23 // pred_region
        %s131 = smul.u32 32, %s9
        %p132 = scmp.lt.s32.totalorder %s131, 63
        %s133 = scalar_select %p132, %s131, 63
        %s134 = smul.addr %s133, 8
        %s135 = scalar_lea.vmem %s0, %s134
        %s136 = smul.u32 32, %s9
      $region28: #{dqn_forward.2} parent=23 // pred_fallthru
        _
    $region24: #{dqn_forward.2} parent=5 // pred_fallthru
      _
    %p137 = scmp.le.s32.totalorder 1, %s9
    %p138 = scmp.lt.s32.totalorder %s9, 3
    %p139 = pnand %p137, %p138
    %p140 = pneg %p139
    // Predicated region
    $region29: #{dqn_forward.2} parent=5 // pred_check
      _
    $region30: #{dqn_forward.2} parent=5 // pred_check_branch
      %142 = sbr.rel (%p139) target = $region32
    $region31: #{dqn_forward.2} parent=5 // pred_region
      %s143 = ssub.s32 %s9, 1
      %s144 = smul.u32 32, %s14
      %p145 = scmp.lt.s32.totalorder %s144, 63
      %s146 = scalar_select %p145, %s144, 63
      %s147 = smul.addr %s146, 8
      %s148 = scalar_lea.vmem %s0, %s147
      %p149 = pneg %p35
      %p150 = pneg %p32
      %p151 = pneg %p56
      %p152 = pneg %p53
      %p153 = pneg %p77
      %p154 = pneg %p74
      %p155 = pneg %p103
      %p156 = pneg %p100
      %s157 = smul.u32 32, %s14
      %p158 = scmp.lt.s32.totalorder %s157, 63
      %s159 = scalar_select %p158, %s157, 63
      %s160 = smul.addr %s159, 8
      %s161 = scalar_lea.vmem %s3, %s160
      %s162 = smul.u32 32, %s14
      %p163 = scmp.lt.s32.totalorder %s162, 63
      %s164 = scalar_select %p163, %s162, 63
      %s165 = smul.addr %s164, 8
      %s166 = scalar_lea.vmem %s0, %s165
      %s167 = smul.u32 32, %s14
      %s168 = smul.u32 32, %s14
      %p169 = scmp.lt.s32.totalorder %s168, 63
      %s170 = scalar_select %p169, %s168, 63
      %s171 = smul.addr %s170, 8
      %s172 = scalar_lea.vmem %s3, %s171
      %s173 = smul.u32 32, %s14
      %v174 = vld [vmem:[%s166] sm:$0xff]
      %v175 = vld [vmem:[%s166 + $0x8] sm:$0xff]
      %v176 = vld [vmem:[%s166 + $0x10] sm:$0xff]
      %v177 = vld [vmem:[%s166 + $0x18] sm:$0xff]
      %v178 = vld [vmem:[%s166 + $0x20] sm:$0xff]
      %v179 = vld [vmem:[%s166 + $0x28] sm:$0xff]
      %v180 = vld [vmem:[%s166 + $0x30] sm:$0xff]
      %v181 = vld [vmem:[%s166 + $0x38] sm:$0xff]
      %v182 = vld [vmem:[%s166 + $0x40] sm:$0xff]
      %v183 = vld [vmem:[%s166 + $0x48] sm:$0xff]
      %v184 = vld [vmem:[%s166 + $0x50] sm:$0xff]
      %v185 = vld [vmem:[%s166 + $0x58] sm:$0xff]
      %v186 = vld [vmem:[%s166 + $0x60] sm:$0xff]
      %v187 = vld [vmem:[%s166 + $0x68] sm:$0xff]
      %v188 = vld [vmem:[%s166 + $0x70] sm:$0xff]
      %v189 = vld [vmem:[%s166 + $0x78] sm:$0xff]
      %v190 = vld [vmem:[%s166 + $0x80] sm:$0xff]
      %v191 = vld [vmem:[%s166 + $0x88] sm:$0xff]
      %v192 = vld [vmem:[%s166 + $0x90] sm:$0xff]
      %v193 = vld [vmem:[%s166 + $0x98] sm:$0xff]
      %v194 = vld [vmem:[%s166 + $0xa0] sm:$0xff]
      %v195 = vld [vmem:[%s166 + $0xa8] sm:$0xff]
      %v196 = vld [vmem:[%s166 + $0xb0] sm:$0xff]
      %v197 = vld [vmem:[%s166 + $0xb8] sm:$0xff]
      %v198 = vld [vmem:[%s166 + $0xc0] sm:$0xff]
      %v199 = vld [vmem:[%s166 + $0xc8] sm:$0xff]
      %v200 = vld [vmem:[%s166 + $0xd0] sm:$0xff]
      %v201 = vld [vmem:[%s166 + $0xd8] sm:$0xff]
      %v202 = vld [vmem:[%s166 + $0xe0] sm:$0xff]
      %v203 = vld [vmem:[%s166 + $0xe8] sm:$0xff]
      %v204 = vld [vmem:[%s166 + $0xf0] sm:$0xff]
      %v205 = vld [vmem:[%s166 + $0xf8] sm:$0xff]
      %v206 = vld [vmem:[%s1] sm:$0xff]
      %v207 = vld [vmem:[%s1 + $0x8] sm:$0xff]
      %v208 = vld [vmem:[%s1 + $0x10] sm:$0xff]
      %v209 = vld [vmem:[%s1 + $0x18] sm:$0xff]
      %v210 = vld [vmem:[%s1 + $0x20] sm:$0xff]
      %v211 = vld [vmem:[%s1 + $0x28] sm:$0xff]
      %v212 = vld [vmem:[%s1 + $0x30] sm:$0xff]
      %v213 = vld [vmem:[%s1 + $0x38] sm:$0xff]
      %v214 = vld [vmem:[%s1 + $0x40] sm:$0xff]
      %v215 = vld [vmem:[%s1 + $0x48] sm:$0xff]
      %v216 = vld [vmem:[%s1 + $0x50] sm:$0xff]
      %v217 = vld [vmem:[%s1 + $0x58] sm:$0xff]
      %v218 = vld [vmem:[%s1 + $0x60] sm:$0xff]
      %v219 = vld [vmem:[%s1 + $0x68] sm:$0xff]
      %v220 = vld [vmem:[%s1 + $0x70] sm:$0xff]
      %v221 = vld [vmem:[%s1 + $0x78] sm:$0xff]
      %v222 = vld [vmem:[%s2] sm:$0x1]
      %v224 = vlaneseq
      %v225 = vshrl.u32 %v224, 7
      %v226 = vsub.s32 0, %v225
      %v227 = vrot.slane %v222, %v226
      %229 = vmatprep.subr.mxu0 0.0
      %230 = vmatpush1.msra.mxu0 %v221
      %231 = vmatprep.subr.mxu0 0.0
      %232 = vmatpush1.msra.mxu0 %v220
      %233 = vmatprep.subr.mxu0 0.0
      %234 = vmatpush1.msra.mxu0 %v219
      %235 = vmatprep.subr.mxu0 0.0
      %236 = vmatpush1.msra.mxu0 %v218
      %237 = vmatprep.subr.mxu0 0.0
      %238 = vmatpush1.msra.mxu0 %v217
      %239 = vmatprep.subr.mxu0 0.0
      %240 = vmatpush1.msra.mxu0 %v216
      %241 = vmatprep.subr.mxu0 0.0
      %242 = vmatpush1.msra.mxu0 %v215
      %243 = vmatprep.subr.mxu0 0.0
      %244 = vmatpush1.msra.mxu0 %v214
      %245 = vmatprep.subr.mxu0 0.0
      %246 = vmatpush1.msra.mxu0 %v213
      %247 = vmatprep.subr.mxu0 0.0
      %248 = vmatpush1.msra.mxu0 %v212
      %249 = vmatprep.subr.mxu0 0.0
      %250 = vmatpush1.msra.mxu0 %v211
      %251 = vmatprep.subr.mxu0 0.0
      %252 = vmatpush1.msra.mxu0 %v210
      %253 = vmatprep.subr.mxu0 0.0
      %254 = vmatpush1.msra.mxu0 %v209
      %255 = vmatprep.subr.mxu0 0.0
      %256 = vmatpush1.msra.mxu0 %v208
      %257 = vmatprep.subr.mxu0 0.0
      %258 = vmatpush1.msra.mxu0 %v207
      %259 = vmatprep.subr.mxu0 0.0
      %260 = vmatpush1.msra.mxu0 %v206
      %261 = vmatprep.subr.mxu0 0.0
      %262 = vmatpush2.msra.mxu0 0.0
      %263 = vmatprep.subr.mxu0 0.0
      %264 = vmatpush2.msra.mxu0 0.0
      %265 = vmatprep.subr.mxu0 0.0
      %266 = vmatpush2.msra.mxu0 0.0
      %267 = vmatprep.subr.mxu0 0.0
      %268 = vmatpush2.msra.mxu0 0.0
      %269 = vmatprep.subr.mxu0 0.0
      %270 = vmatpush2.msra.mxu0 0.0
      %271 = vmatprep.subr.mxu0 0.0
      %272 = vmatpush2.msra.mxu0 0.0
      %273 = vmatprep.subr.mxu0 0.0
      %274 = vmatpush2.msra.mxu0 0.0
      %275 = vmatprep.subr.mxu0 0.0
      %276 = vmatpush2.msra.mxu0 0.0
      %277 = vmatprep.subr.mxu0 0.0
      %278 = vmatpush2.msra.mxu0 0.0
      %279 = vmatprep.subr.mxu0 0.0
      %280 = vmatpush2.msra.mxu0 0.0
      %281 = vmatprep.subr.mxu0 0.0
      %282 = vmatpush2.msra.mxu0 0.0
      %283 = vmatprep.subr.mxu0 0.0
      %284 = vmatpush2.msra.mxu0 0.0
      %285 = vmatprep.subr.mxu0 0.0
      %286 = vmatpush2.msra.mxu0 0.0
      %287 = vmatprep.subr.mxu0 0.0
      %288 = vmatpush2.msra.mxu0 0.0
      %289 = vmatprep.subr.mxu0 0.0
      %290 = vmatpush2.msra.mxu0 0.0
      %291 = vmatprep.subr.mxu0 0.0
      %292 = vmatpush2.msra.mxu0 0.0
      %293 = vmatprep.mubr.f32.mxu0 0.0
      %294 = vmatmul.mubr.f32.gmra.mxu0 %v174
      %v295 = vpop.f32.mrf.mxu0
      %v296 = vadd.f32 %v227, %v295
      %v297 = vpop.f32.mrf.mxu0
      %298 = vmatprep.mubr.f32.mxu0 0.0
      %299 = vmatmul.mubr.f32.gmra.mxu0 %v175
      %v300 = vpop.f32.mrf.mxu0
      %v301 = vadd.f32 %v227, %v300
      %v302 = vpop.f32.mrf.mxu0
      %303 = vmatprep.mubr.f32.mxu0 0.0
      %304 = vmatmul.mubr.f32.gmra.mxu0 %v176
      %v305 = vpop.f32.mrf.mxu0
      %v306 = vadd.f32 %v227, %v305
      %v307 = vpop.f32.mrf.mxu0
      %308 = vmatprep.mubr.f32.mxu0 0.0
      %309 = vmatmul.mubr.f32.gmra.mxu0 %v177
      %v310 = vpop.f32.mrf.mxu0
      %v311 = vadd.f32 %v227, %v310
      %v312 = vpop.f32.mrf.mxu0
      %313 = vmatprep.mubr.f32.mxu0 0.0
      %314 = vmatmul.mubr.f32.gmra.mxu0 %v178
      %v315 = vpop.f32.mrf.mxu0
      %v316 = vadd.f32 %v227, %v315
      %v317 = vpop.f32.mrf.mxu0
      %318 = vmatprep.mubr.f32.mxu0 0.0
      %319 = vmatmul.mubr.f32.gmra.mxu0 %v179
      %v320 = vpop.f32.mrf.mxu0
      %v321 = vadd.f32 %v227, %v320
      %v322 = vpop.f32.mrf.mxu0
      %323 = vmatprep.mubr.f32.mxu0 0.0
      %324 = vmatmul.mubr.f32.gmra.mxu0 %v180
      %v325 = vpop.f32.mrf.mxu0
      %v326 = vadd.f32 %v227, %v325
      %v327 = vpop.f32.mrf.mxu0
      %328 = vmatprep.mubr.f32.mxu0 0.0
      %329 = vmatmul.mubr.f32.gmra.mxu0 %v181
      %v330 = vpop.f32.mrf.mxu0
      %v331 = vadd.f32 %v227, %v330
      %v332 = vpop.f32.mrf.mxu0
      %333 = vmatprep.mubr.f32.mxu0 0.0
      %334 = vmatmul.mubr.f32.gmra.mxu0 %v182
      %v335 = vpop.f32.mrf.mxu0
      %v336 = vadd.f32 %v227, %v335
      %v337 = vpop.f32.mrf.mxu0
      %338 = vmatprep.mubr.f32.mxu0 0.0
      %339 = vmatmul.mubr.f32.gmra.mxu0 %v183
      %v340 = vpop.f32.mrf.mxu0
      %v341 = vadd.f32 %v227, %v340
      %v342 = vpop.f32.mrf.mxu0
      %343 = vmatprep.mubr.f32.mxu0 0.0
      %344 = vmatmul.mubr.f32.gmra.mxu0 %v184
      %v345 = vpop.f32.mrf.mxu0
      %v346 = vadd.f32 %v227, %v345
      %v347 = vpop.f32.mrf.mxu0
      %348 = vmatprep.mubr.f32.mxu0 0.0
      %349 = vmatmul.mubr.f32.gmra.mxu0 %v185
      %v350 = vpop.f32.mrf.mxu0
      %v351 = vadd.f32 %v227, %v350
      %v352 = vpop.f32.mrf.mxu0
      %353 = vmatprep.mubr.f32.mxu0 0.0
      %354 = vmatmul.mubr.f32.gmra.mxu0 %v186
      %v355 = vpop.f32.mrf.mxu0
      %v356 = vadd.f32 %v227, %v355
      %v357 = vpop.f32.mrf.mxu0
      %358 = vmatprep.mubr.f32.mxu0 0.0
      %359 = vmatmul.mubr.f32.gmra.mxu0 %v187
      %v360 = vpop.f32.mrf.mxu0
      %v361 = vadd.f32 %v227, %v360
      %v362 = vpop.f32.mrf.mxu0
      %363 = vmatprep.mubr.f32.mxu0 0.0
      %364 = vmatmul.mubr.f32.gmra.mxu0 %v188
      %v365 = vpop.f32.mrf.mxu0
      %v366 = vadd.f32 %v227, %v365
      %v367 = vpop.f32.mrf.mxu0
      %368 = vmatprep.mubr.f32.mxu0 0.0
      %369 = vmatmul.mubr.f32.gmra.mxu0 %v189
      %v370 = vpop.f32.mrf.mxu0
      %v371 = vadd.f32 %v227, %v370
      %v372 = vpop.f32.mrf.mxu0
      %373 = vmatprep.mubr.f32.mxu0 0.0
      %374 = vmatmul.mubr.f32.gmra.mxu0 %v190
      %v375 = vpop.f32.mrf.mxu0
      %v376 = vadd.f32 %v227, %v375
      %v377 = vpop.f32.mrf.mxu0
      %378 = vmatprep.mubr.f32.mxu0 0.0
      %379 = vmatmul.mubr.f32.gmra.mxu0 %v191
      %v380 = vpop.f32.mrf.mxu0
      %v381 = vadd.f32 %v227, %v380
      %v382 = vpop.f32.mrf.mxu0
      %383 = vmatprep.mubr.f32.mxu0 0.0
      %384 = vmatmul.mubr.f32.gmra.mxu0 %v192
      %v385 = vpop.f32.mrf.mxu0
      %v386 = vadd.f32 %v227, %v385
      %v387 = vpop.f32.mrf.mxu0
      %388 = vmatprep.mubr.f32.mxu0 0.0
      %389 = vmatmul.mubr.f32.gmra.mxu0 %v193
      %v390 = vpop.f32.mrf.mxu0
      %v391 = vadd.f32 %v227, %v390
      %v392 = vpop.f32.mrf.mxu0
      %393 = vmatprep.mubr.f32.mxu0 0.0
      %394 = vmatmul.mubr.f32.gmra.mxu0 %v194
      %v395 = vpop.f32.mrf.mxu0
      %v396 = vadd.f32 %v227, %v395
      %v397 = vpop.f32.mrf.mxu0
      %398 = vmatprep.mubr.f32.mxu0 0.0
      %399 = vmatmul.mubr.f32.gmra.mxu0 %v195
      %v400 = vpop.f32.mrf.mxu0
      %v401 = vadd.f32 %v227, %v400
      %v402 = vpop.f32.mrf.mxu0
      %403 = vmatprep.mubr.f32.mxu0 0.0
      %404 = vmatmul.mubr.f32.gmra.mxu0 %v196
      %v405 = vpop.f32.mrf.mxu0
      %v406 = vadd.f32 %v227, %v405
      %v407 = vpop.f32.mrf.mxu0
      %408 = vmatprep.mubr.f32.mxu0 0.0
      %409 = vmatmul.mubr.f32.gmra.mxu0 %v197
      %v410 = vpop.f32.mrf.mxu0
      %v411 = vadd.f32 %v227, %v410
      %v412 = vpop.f32.mrf.mxu0
      %413 = vmatprep.mubr.f32.mxu0 0.0
      %414 = vmatmul.mubr.f32.gmra.mxu0 %v198
      %v415 = vpop.f32.mrf.mxu0
      %v416 = vadd.f32 %v227, %v415
      %v417 = vpop.f32.mrf.mxu0
      %418 = vmatprep.mubr.f32.mxu0 0.0
      %419 = vmatmul.mubr.f32.gmra.mxu0 %v199
      %v420 = vpop.f32.mrf.mxu0
      %v421 = vadd.f32 %v227, %v420
      %v422 = vpop.f32.mrf.mxu0
      %423 = vmatprep.mubr.f32.mxu0 0.0
      %424 = vmatmul.mubr.f32.gmra.mxu0 %v200
      %v425 = vpop.f32.mrf.mxu0
      %v426 = vadd.f32 %v227, %v425
      %v427 = vpop.f32.mrf.mxu0
      %428 = vmatprep.mubr.f32.mxu0 0.0
      %429 = vmatmul.mubr.f32.gmra.mxu0 %v201
      %v430 = vpop.f32.mrf.mxu0
      %v431 = vadd.f32 %v227, %v430
      %v432 = vpop.f32.mrf.mxu0
      %433 = vmatprep.mubr.f32.mxu0 0.0
      %434 = vmatmul.mubr.f32.gmra.mxu0 %v202
      %v435 = vpop.f32.mrf.mxu0
      %v436 = vadd.f32 %v227, %v435
      %v437 = vpop.f32.mrf.mxu0
      %438 = vmatprep.mubr.f32.mxu0 0.0
      %439 = vmatmul.mubr.f32.gmra.mxu0 %v203
      %v440 = vpop.f32.mrf.mxu0
      %v441 = vadd.f32 %v227, %v440
      %v442 = vpop.f32.mrf.mxu0
      %443 = vmatprep.mubr.f32.mxu0 0.0
      %444 = vmatmul.mubr.f32.gmra.mxu0 %v204
      %v445 = vpop.f32.mrf.mxu0
      %v446 = vadd.f32 %v227, %v445
      %v447 = vpop.f32.mrf.mxu0
      %448 = vmatprep.mubr.f32.mxu0 0.0
      %449 = vmatmul.mubr.f32.gmra.mxu0 %v205
      %v450 = vpop.f32.mrf.mxu0
      %v451 = vadd.f32 %v227, %v450
      %v452 = vpop.f32.mrf.mxu0
      %453 = vdwg.mxu0
      %v454 = vmax.f32 %v296, 0.0
      %v455 = vmax.f32 %v301, 0.0
      %v456 = vmax.f32 %v306, 0.0
      %v457 = vmax.f32 %v311, 0.0
      %v458 = vmax.f32 %v316, 0.0
      %v459 = vmax.f32 %v321, 0.0
      %v460 = vmax.f32 %v326, 0.0
      %v461 = vmax.f32 %v331, 0.0
      %v462 = vmax.f32 %v336, 0.0
      %v463 = vmax.f32 %v341, 0.0
      %v464 = vmax.f32 %v346, 0.0
      %v465 = vmax.f32 %v351, 0.0
      %v466 = vmax.f32 %v356, 0.0
      %v467 = vmax.f32 %v361, 0.0
      %v468 = vmax.f32 %v366, 0.0
      %v469 = vmax.f32 %v371, 0.0
      %v470 = vmax.f32 %v376, 0.0
      %v471 = vmax.f32 %v381, 0.0
      %v472 = vmax.f32 %v386, 0.0
      %v473 = vmax.f32 %v391, 0.0
      %v474 = vmax.f32 %v396, 0.0
      %v475 = vmax.f32 %v401, 0.0
      %v476 = vmax.f32 %v406, 0.0
      %v477 = vmax.f32 %v411, 0.0
      %v478 = vmax.f32 %v416, 0.0
      %v479 = vmax.f32 %v421, 0.0
      %v480 = vmax.f32 %v426, 0.0
      %v481 = vmax.f32 %v431, 0.0
      %v482 = vmax.f32 %v436, 0.0
      %v483 = vmax.f32 %v441, 0.0
      %v484 = vmax.f32 %v446, 0.0
      %v485 = vmax.f32 %v451, 0.0
      %486 = vst [vmem:[%s172] sm:$0xff] %v454
      %487 = vst [vmem:[%s172 + $0x8] sm:$0xff] %v455
      %488 = vst [vmem:[%s172 + $0x10] sm:$0xff] %v456
      %489 = vst [vmem:[%s172 + $0x18] sm:$0xff] %v457
      %490 = vst [vmem:[%s172 + $0x20] sm:$0xff] %v458
      %491 = vst [vmem:[%s172 + $0x28] sm:$0xff] %v459
      %492 = vst [vmem:[%s172 + $0x30] sm:$0xff] %v460
      %493 = vst [vmem:[%s172 + $0x38] sm:$0xff] %v461
      %494 = vst [vmem:[%s172 + $0x40] sm:$0xff] %v462
      %495 = vst [vmem:[%s172 + $0x48] sm:$0xff] %v463
      %496 = vst [vmem:[%s172 + $0x50] sm:$0xff] %v464
      %497 = vst [vmem:[%s172 + $0x58] sm:$0xff] %v465
      %498 = vst [vmem:[%s172 + $0x60] sm:$0xff] %v466
      %499 = vst [vmem:[%s172 + $0x68] sm:$0xff] %v467
      %500 = vst [vmem:[%s172 + $0x70] sm:$0xff] %v468
      %501 = vst [vmem:[%s172 + $0x78] sm:$0xff] %v469
      %502 = vst [vmem:[%s172 + $0x80] sm:$0xff] %v470
      %503 = vst [vmem:[%s172 + $0x88] sm:$0xff] %v471
      %504 = vst [vmem:[%s172 + $0x90] sm:$0xff] %v472
      %505 = vst [vmem:[%s172 + $0x98] sm:$0xff] %v473
      %506 = vst [vmem:[%s172 + $0xa0] sm:$0xff] %v474
      %507 = vst [vmem:[%s172 + $0xa8] sm:$0xff] %v475
      %508 = vst [vmem:[%s172 + $0xb0] sm:$0xff] %v476
      %509 = vst [vmem:[%s172 + $0xb8] sm:$0xff] %v477
      %510 = vst [vmem:[%s172 + $0xc0] sm:$0xff] %v478
      %511 = vst [vmem:[%s172 + $0xc8] sm:$0xff] %v479
      %512 = vst [vmem:[%s172 + $0xd0] sm:$0xff] %v480
      %513 = vst [vmem:[%s172 + $0xd8] sm:$0xff] %v481
      %514 = vst [vmem:[%s172 + $0xe0] sm:$0xff] %v482
      %515 = vst [vmem:[%s172 + $0xe8] sm:$0xff] %v483
      %516 = vst [vmem:[%s172 + $0xf0] sm:$0xff] %v484
      %517 = vst [vmem:[%s172 + $0xf8] sm:$0xff] %v485
      %s518 = smul.u32 32, %s14
      %p519 = scmp.lt.s32.totalorder %s518, 63
      %s520 = scalar_select %p519, %s518, 63
      %s521 = smul.addr %s520, 8
      %s522 = scalar_lea.vmem %s3, %s521
      // Predicated region
      $region33: #{dqn_forward.2} parent=31 // pred_check
        %p523 = pneg %p100
      $region34: #{dqn_forward.2} parent=31 // pred_check_branch
        %525 = sbr.rel (%p523) target = $region36
      $region35: #{dqn_forward.2} parent=31 // pred_region
        %s526 = smul.u32 32, %s14
      $region36: #{dqn_forward.2} parent=31 // pred_fallthru
        _
    $region32: #{dqn_forward.2} parent=5 // pred_fallthru
      _
    %p527 = scmp.le.s32.totalorder 2, %s9
    // Predicated region
    $region37: #{dqn_forward.2} parent=5 // pred_check
      %p528 = pneg %p527
    $region38: #{dqn_forward.2} parent=5 // pred_check_branch
      %530 = sbr.rel (%p528) target = $region40
    $region39: #{dqn_forward.2} parent=5 // pred_region
      %s531 = ssub.s32 %s9, 2
      // Predicated region
      $region41: #{dqn_forward.2} parent=39 // pred_check
        %p532 = pneg %p106
      $region42: #{dqn_forward.2} parent=39 // pred_check_branch
        %534 = sbr.rel (%p532) target = $region44
      $region43: #{dqn_forward.2} parent=39 // pred_region
        %s535 = smul.u32 32, %s15
        %p536 = scmp.lt.s32.totalorder %s535, 63
        %s537 = scalar_select %p536, %s535, 63
        %s538 = smul.addr %s537, 8
        %s539 = scalar_lea.vmem %s3, %s538
      $region44: #{dqn_forward.2} parent=39 // pred_fallthru
        _
    $region40: #{dqn_forward.2} parent=5 // pred_fallthru
      _
  $region6: #{dqn_forward.2} parent=0 // loop_footer
    %s13 = sadd.s32 1, %s9
  $region7: #{dqn_forward.2} parent=0 // loop_footer_branch
    %8 = sbr.rel target = $region3
  $region8: #{dqn_forward.2} parent=0 // loop_exit
    _

// kernel: dqn_forward.3
$region0: #{dqn_forward.3}
  #allocation0 [shape = 'u32[]', space=smem, size = 0x4, offset = 0x4, fixed_abs, tag = 'smem constant byte address 0x4 - core index']
  #allocation1 [shape = 'u32[144,128]{1,0:T(1,128)}', space=vmem, size = 0x12000, scoped, tag = 'internal scratch']
  %s0 = inlined_call_operand.vmem [shape: f32[9,2,3200], index: 0, kind: input, shape index: {}]
  %s1 = inlined_call_operand.vmem [shape: f32[3200,64], index: 1, kind: input, shape index: {}]
  %s2 = inlined_call_operand.vmem [shape: f32[1,64], index: 2, kind: input, shape index: {}]
  %s3 = inlined_call_operand.vmem [shape: f32[9,64,256], index: 3, kind: input, shape index: {}]
  %s4 = inlined_call_operand.vmem [shape: f32[1,256], index: 4, kind: input, shape index: {}]
  %s5 = inlined_call_operand.vmem [shape: f32[128,51], index: 5, kind: input, shape index: {}]
  %s6 = inlined_call_operand.vmem [shape: f32[1,51], index: 6, kind: input, shape index: {}]
  %s7 = inlined_call_operand.vmem [shape: f32[4,128,51], index: 7, kind: input, shape index: {}]
  %s8 = inlined_call_operand.vmem [shape: f32[4,1,51], index: 8, kind: input, shape index: {}]
  %s9 = inlined_call_operand.vmem [shape: f32[4,2,51], index: 9, kind: output, shape index: {}]
  %s10 = sld [smem:[#allocation0]]
  $region46: #{dqn_forward.3} parent=0
    _
  %s12 = ssub.s32 1, %s10
  %s13 = scalar_select 0, %s12, %s10
  // Predicated region
  $region2: #{dqn_forward.3} parent=0 // pred_check
    _
  $region3: #{dqn_forward.3} parent=0 // pred_check_branch
    %15 = sbr.rel (0) target = $region5
  $region4: #{dqn_forward.3} parent=0 // pred_region
    _
  $region5: #{dqn_forward.3} parent=0 // pred_fallthru
    _
  // Predicated region
  $region6: #{dqn_forward.3} parent=0 // pred_check
    _
  $region7: #{dqn_forward.3} parent=0 // pred_check_branch
    %17 = sbr.rel (0) target = $region9
  $region8: #{dqn_forward.3} parent=0 // pred_region
    _
  $region9: #{dqn_forward.3} parent=0 // pred_fallthru
    _
  // Predicated region
  $region10: #{dqn_forward.3} parent=0 // pred_check
    _
  $region11: #{dqn_forward.3} parent=0 // pred_check_branch
    %19 = sbr.rel (0) target = $region13
  $region12: #{dqn_forward.3} parent=0 // pred_region
    _
  $region13: #{dqn_forward.3} parent=0 // pred_fallthru
    _
  // Predicated region
  $region14: #{dqn_forward.3} parent=0 // pred_check
    _
  $region15: #{dqn_forward.3} parent=0 // pred_check_branch
    %21 = sbr.rel (0) target = $region17
  $region16: #{dqn_forward.3} parent=0 // pred_region
    _
  $region17: #{dqn_forward.3} parent=0 // pred_fallthru
    _
  // Predicated region
  $region18: #{dqn_forward.3} parent=0 // pred_check
    _
  $region19: #{dqn_forward.3} parent=0 // pred_check_branch
    %23 = sbr.rel (0) target = $region21
  $region20: #{dqn_forward.3} parent=0 // pred_region
    _
  $region21: #{dqn_forward.3} parent=0 // pred_fallthru
    _
  // Predicated region
  $region22: #{dqn_forward.3} parent=0 // pred_check
    _
  $region23: #{dqn_forward.3} parent=0 // pred_check_branch
    %25 = sbr.rel (0) target = $region25
  $region24: #{dqn_forward.3} parent=0 // pred_region
    _
  $region25: #{dqn_forward.3} parent=0 // pred_fallthru
    _
  // Predicated region
  $region26: #{dqn_forward.3} parent=0 // pred_check
    _
  $region27: #{dqn_forward.3} parent=0 // pred_check_branch
    %27 = sbr.rel (0) target = $region29
  $region28: #{dqn_forward.3} parent=0 // pred_region
    _
  $region29: #{dqn_forward.3} parent=0 // pred_fallthru
    _
  // Predicated region
  $region30: #{dqn_forward.3} parent=0 // pred_check
    _
  $region31: #{dqn_forward.3} parent=0 // pred_check_branch
    %29 = sbr.rel (0) target = $region33
  $region32: #{dqn_forward.3} parent=0 // pred_region
    _
  $region33: #{dqn_forward.3} parent=0 // pred_fallthru
    _
  // Predicated region
  $region34: #{dqn_forward.3} parent=0 // pred_check
    _
  $region35: #{dqn_forward.3} parent=0 // pred_check_branch
    %31 = sbr.rel (0) target = $region37
  $region36: #{dqn_forward.3} parent=0 // pred_region
    _
  $region37: #{dqn_forward.3} parent=0 // pred_fallthru
    _
  %v32 = vld [vmem:[%s0] sm:$0xff]
  %v33 = vld [vmem:[%s0 + $0x8] sm:$0xff]
  %v34 = vld [vmem:[%s0 + $0x10] sm:$0xff]
  %v35 = vld [vmem:[%s0 + $0x18] sm:$0xff]
  %v36 = vld [vmem:[%s0 + $0x20] sm:$0xff]
  %v37 = vld [vmem:[%s0 + $0x28] sm:$0xff]
  %v38 = vld [vmem:[%s0 + $0x30] sm:$0x3]
  %v39 = vld [vmem:[%s1] sm:$0xff]
  %v40 = vld [vmem:[%s1 + $0x8] sm:$0xff]
  %v41 = vld [vmem:[%s1 + $0x10] sm:$0xff]
  %v42 = vld [vmem:[%s1 + $0x18] sm:$0xff]
  %v43 = vld [vmem:[%s1 + $0x20] sm:$0xff]
  %v44 = vld [vmem:[%s1 + $0x28] sm:$0xff]
  %v45 = vld [vmem:[%s1 + $0x30] sm:$0xff]
  %v46 = vld [vmem:[%s1 + $0x38] sm:$0xff]
  %v47 = vld [vmem:[%s1 + $0x40] sm:$0xff]
  %v48 = vld [vmem:[%s1 + $0x48] sm:$0xff]
  %v49 = vld [vmem:[%s1 + $0x50] sm:$0xff]
  %v50 = vld [vmem:[%s1 + $0x58] sm:$0xff]
  %v51 = vld [vmem:[%s1 + $0x60] sm:$0xff]
  %v52 = vld [vmem:[%s1 + $0x68] sm:$0xff]
  %v53 = vld [vmem:[%s1 + $0x70] sm:$0xff]
  %v54 = vld [vmem:[%s1 + $0x78] sm:$0xff]
  %v55 = vld [vmem:[%s1 + $0x80] sm:$0xff]
  %v56 = vld [vmem:[%s1 + $0x88] sm:$0xff]
  %v57 = vld [vmem:[%s1 + $0x90] sm:$0xff]
  %v58 = vld [vmem:[%s1 + $0x98] sm:$0xff]
  %v59 = vld [vmem:[%s1 + $0xa0] sm:$0xff]
  %v60 = vld [vmem:[%s1 + $0xa8] sm:$0xff]
  %v61 = vld [vmem:[%s1 + $0xb0] sm:$0xff]
  %v62 = vld [vmem:[%s1 + $0xb8] sm:$0xff]
  %v63 = vld [vmem:[%s1 + $0xc0] sm:$0xff]
  %v64 = vld [vmem:[%s1 + $0xc8] sm:$0xff]
  %v65 = vld [vmem:[%s1 + $0xd0] sm:$0xff]
  %v66 = vld [vmem:[%s1 + $0xd8] sm:$0xff]
  %v67 = vld [vmem:[%s1 + $0xe0] sm:$0xff]
  %v68 = vld [vmem:[%s1 + $0xe8] sm:$0xff]
  %v69 = vld [vmem:[%s1 + $0xf0] sm:$0xff]
  %v70 = vld [vmem:[%s1 + $0xf8] sm:$0xff]
  %v71 = vld [vmem:[%s1 + $0x100] sm:$0xff]
  %v72 = vld [vmem:[%s1 + $0x108] sm:$0xff]
  %v73 = vld [vmem:[%s1 + $0x110] sm:$0xff]
  %v74 = vld [vmem:[%s1 + $0x118] sm:$0xff]
  %v75 = vld [vmem:[%s1 + $0x120] sm:$0xff]
  %v76 = vld [vmem:[%s1 + $0x128] sm:$0xff]
  %v77 = vld [vmem:[%s1 + $0x130] sm:$0xff]
  %v78 = vld [vmem:[%s1 + $0x138] sm:$0xff]
  %v79 = vld [vmem:[%s1 + $0x140] sm:$0xff]
  %v80 = vld [vmem:[%s1 + $0x148] sm:$0xff]
  %v81 = vld [vmem:[%s1 + $0x150] sm:$0xff]
  %v82 = vld [vmem:[%s1 + $0x158] sm:$0xff]
  %v83 = vld [vmem:[%s1 + $0x160] sm:$0xff]
  %v84 = vld [vmem:[%s1 + $0x168] sm:$0xff]
  %v85 = vld [vmem:[%s1 + $0x170] sm:$0xff]
  %v86 = vld [vmem:[%s1 + $0x178] sm:$0xff]
  %v87 = vld [vmem:[%s1 + $0x180] sm:$0xff]
  %v88 = vld [vmem:[%s1 + $0x188] sm:$0xff]
  %v89 = vld [vmem:[%s1 + $0x190] sm:$0xff]
  %v90 = vld [vmem:[%s1 + $0x198] sm:$0xff]
  %v91 = vld [vmem:[%s1 + $0x1a0] sm:$0xff]
  %v92 = vld [vmem:[%s1 + $0x1a8] sm:$0xff]
  %v93 = vld [vmem:[%s1 + $0x1b0] sm:$0xff]
  %v94 = vld [vmem:[%s1 + $0x1b8] sm:$0xff]
  %v95 = vld [vmem:[%s1 + $0x1c0] sm:$0xff]
  %v96 = vld [vmem:[%s1 + $0x1c8] sm:$0xff]
  %v97 = vld [vmem:[%s1 + $0x1d0] sm:$0xff]
  %v98 = vld [vmem:[%s1 + $0x1d8] sm:$0xff]
  %v99 = vld [vmem:[%s1 + $0x1e0] sm:$0xff]
  %v100 = vld [vmem:[%s1 + $0x1e8] sm:$0xff]
  %v101 = vld [vmem:[%s1 + $0x1f0] sm:$0xff]
  %v102 = vld [vmem:[%s1 + $0x1f8] sm:$0xff]
  %v103 = vld [vmem:[%s1 + $0x200] sm:$0xff]
  %v104 = vld [vmem:[%s1 + $0x208] sm:$0xff]
  %v105 = vld [vmem:[%s1 + $0x210] sm:$0xff]
  %v106 = vld [vmem:[%s1 + $0x218] sm:$0xff]
  %v107 = vld [vmem:[%s1 + $0x220] sm:$0xff]
  %v108 = vld [vmem:[%s1 + $0x228] sm:$0xff]
  %v109 = vld [vmem:[%s1 + $0x230] sm:$0xff]
  %v110 = vld [vmem:[%s1 + $0x238] sm:$0xff]
  %v111 = vld [vmem:[%s1 + $0x240] sm:$0xff]
  %v112 = vld [vmem:[%s1 + $0x248] sm:$0xff]
  %v113 = vld [vmem:[%s1 + $0x250] sm:$0xff]
  %v114 = vld [vmem:[%s1 + $0x258] sm:$0xff]
  %v115 = vld [vmem:[%s1 + $0x260] sm:$0xff]
  %v116 = vld [vmem:[%s1 + $0x268] sm:$0xff]
  %v117 = vld [vmem:[%s1 + $0x270] sm:$0xff]
  %v118 = vld [vmem:[%s1 + $0x278] sm:$0xff]
  %v119 = vld [vmem:[%s1 + $0x280] sm:$0xff]
  %v120 = vld [vmem:[%s1 + $0x288] sm:$0xff]
  %v121 = vld [vmem:[%s1 + $0x290] sm:$0xff]
  %v122 = vld [vmem:[%s1 + $0x298] sm:$0xff]
  %v123 = vld [vmem:[%s1 + $0x2a0] sm:$0xff]
  %v124 = vld [vmem:[%s1 + $0x2a8] sm:$0xff]
  %v125 = vld [vmem:[%s1 + $0x2b0] sm:$0xff]
  %v126 = vld [vmem:[%s1 + $0x2b8] sm:$0xff]
  %v127 = vld [vmem:[%s1 + $0x2c0] sm:$0xff]
  %v128 = vld [vmem:[%s1 + $0x2c8] sm:$0xff]
  %v129 = vld [vmem:[%s1 + $0x2d0] sm:$0xff]
  %v130 = vld [vmem:[%s1 + $0x2d8] sm:$0xff]
  %v131 = vld [vmem:[%s1 + $0x2e0] sm:$0xff]
  %v132 = vld [vmem:[%s1 + $0x2e8] sm:$0xff]
  %v133 = vld [vmem:[%s1 + $0x2f0] sm:$0xff]
  %v134 = vld [vmem:[%s1 + $0x2f8] sm:$0xff]
  %v135 = vld [vmem:[%s1 + $0x300] sm:$0xff]
  %v136 = vld [vmem:[%s1 + $0x308] sm:$0xff]
  %v137 = vld [vmem:[%s1 + $0x310] sm:$0xff]
  %v138 = vld [vmem:[%s1 + $0x318] sm:$0xff]
  %v139 = vld [vmem:[%s1 + $0x320] sm:$0xff]
  %v140 = vld [vmem:[%s1 + $0x328] sm:$0xff]
  %v141 = vld [vmem:[%s1 + $0x330] sm:$0xff]
  %v142 = vld [vmem:[%s1 + $0x338] sm:$0xff]
  %v143 = vld [vmem:[%s1 + $0x340] sm:$0xff]
  %v144 = vld [vmem:[%s1 + $0x348] sm:$0xff]
  %v145 = vld [vmem:[%s1 + $0x350] sm:$0xff]
  %v146 = vld [vmem:[%s1 + $0x358] sm:$0xff]
  %v147 = vld [vmem:[%s1 + $0x360] sm:$0xff]
  %v148 = vld [vmem:[%s1 + $0x368] sm:$0xff]
  %v149 = vld [vmem:[%s1 + $0x370] sm:$0xff]
  %v150 = vld [vmem:[%s1 + $0x378] sm:$0xff]
  %v151 = vld [vmem:[%s1 + $0x380] sm:$0xff]
  %v152 = vld [vmem:[%s1 + $0x388] sm:$0xff]
  %v153 = vld [vmem:[%s1 + $0x390] sm:$0xff]
  %v154 = vld [vmem:[%s1 + $0x398] sm:$0xff]
  %v155 = vld [vmem:[%s1 + $0x3a0] sm:$0xff]
  %v156 = vld [vmem:[%s1 + $0x3a8] sm:$0xff]
  %v157 = vld [vmem:[%s1 + $0x3b0] sm:$0xff]
  %v158 = vld [vmem:[%s1 + $0x3b8] sm:$0xff]
  %v159 = vld [vmem:[%s1 + $0x3c0] sm:$0xff]
  %v160 = vld [vmem:[%s1 + $0x3c8] sm:$0xff]
  %v161 = vld [vmem:[%s1 + $0x3d0] sm:$0xff]
  %v162 = vld [vmem:[%s1 + $0x3d8] sm:$0xff]
  %v163 = vld [vmem:[%s1 + $0x3e0] sm:$0xff]
  %v164 = vld [vmem:[%s1 + $0x3e8] sm:$0xff]
  %v165 = vld [vmem:[%s1 + $0x3f0] sm:$0xff]
  %v166 = vld [vmem:[%s1 + $0x3f8] sm:$0xff]
  %v167 = vld [vmem:[%s1 + $0x400] sm:$0xff]
  %v168 = vld [vmem:[%s1 + $0x408] sm:$0xff]
  %v169 = vld [vmem:[%s1 + $0x410] sm:$0xff]
  %v170 = vld [vmem:[%s1 + $0x418] sm:$0xff]
  %v171 = vld [vmem:[%s1 + $0x420] sm:$0xff]
  %v172 = vld [vmem:[%s1 + $0x428] sm:$0xff]
  %v173 = vld [vmem:[%s1 + $0x430] sm:$0xff]
  %v174 = vld [vmem:[%s1 + $0x438] sm:$0xff]
  %v175 = vld [vmem:[%s1 + $0x440] sm:$0xff]
  %v176 = vld [vmem:[%s1 + $0x448] sm:$0xff]
  %v177 = vld [vmem:[%s1 + $0x450] sm:$0xff]
  %v178 = vld [vmem:[%s1 + $0x458] sm:$0xff]
  %v179 = vld [vmem:[%s1 + $0x460] sm:$0xff]
  %v180 = vld [vmem:[%s1 + $0x468] sm:$0xff]
  %v181 = vld [vmem:[%s1 + $0x470] sm:$0xff]
  %v182 = vld [vmem:[%s1 + $0x478] sm:$0xff]
  %v183 = vld [vmem:[%s1 + $0x480] sm:$0xff]
  %v184 = vld [vmem:[%s1 + $0x488] sm:$0xff]
  %v185 = vld [vmem:[%s1 + $0x490] sm:$0xff]
  %v186 = vld [vmem:[%s1 + $0x498] sm:$0xff]
  %v187 = vld [vmem:[%s1 + $0x4a0] sm:$0xff]
  %v188 = vld [vmem:[%s1 + $0x4a8] sm:$0xff]
  %v189 = vld [vmem:[%s1 + $0x4b0] sm:$0xff]
  %v190 = vld [vmem:[%s1 + $0x4b8] sm:$0xff]
  %v191 = vld [vmem:[%s1 + $0x4c0] sm:$0xff]
  %v192 = vld [vmem:[%s1 + $0x4c8] sm:$0xff]
  %v193 = vld [vmem:[%s1 + $0x4d0] sm:$0xff]
  %v194 = vld [vmem:[%s1 + $0x4d8] sm:$0xff]
  %v195 = vld [vmem:[%s1 + $0x4e0] sm:$0xff]
  %v196 = vld [vmem:[%s1 + $0x4e8] sm:$0xff]
  %v197 = vld [vmem:[%s1 + $0x4f0] sm:$0xff]
  %v198 = vld [vmem:[%s1 + $0x4f8] sm:$0xff]
  %v199 = vld [vmem:[%s1 + $0x500] sm:$0xff]
  %v200 = vld [vmem:[%s1 + $0x508] sm:$0xff]
  %v201 = vld [vmem:[%s1 + $0x510] sm:$0xff]
  %v202 = vld [vmem:[%s1 + $0x518] sm:$0xff]
  %v203 = vld [vmem:[%s1 + $0x520] sm:$0xff]
  %v204 = vld [vmem:[%s1 + $0x528] sm:$0xff]
  %v205 = vld [vmem:[%s1 + $0x530] sm:$0xff]
  %v206 = vld [vmem:[%s1 + $0x538] sm:$0xff]
  %v207 = vld [vmem:[%s1 + $0x540] sm:$0xff]
  %v208 = vld [vmem:[%s1 + $0x548] sm:$0xff]
  %v209 = vld [vmem:[%s1 + $0x550] sm:$0xff]
  %v210 = vld [vmem:[%s1 + $0x558] sm:$0xff]
  %v211 = vld [vmem:[%s1 + $0x560] sm:$0xff]
  %v212 = vld [vmem:[%s1 + $0x568] sm:$0xff]
  %v213 = vld [vmem:[%s1 + $0x570] sm:$0xff]
  %v214 = vld [vmem:[%s1 + $0x578] sm:$0xff]
  %v215 = vld [vmem:[%s1 + $0x580] sm:$0xff]
  %v216 = vld [vmem:[%s1 + $0x588] sm:$0xff]
  %v217 = vld [vmem:[%s1 + $0x590] sm:$0xff]
  %v218 = vld [vmem:[%s1 + $0x598] sm:$0xff]
  %v219 = vld [vmem:[%s1 + $0x5a0] sm:$0xff]
  %v220 = vld [vmem:[%s1 + $0x5a8] sm:$0xff]
  %v221 = vld [vmem:[%s1 + $0x5b0] sm:$0xff]
  %v222 = vld [vmem:[%s1 + $0x5b8] sm:$0xff]
  %v223 = vld [vmem:[%s1 + $0x5c0] sm:$0xff]
  %v224 = vld [vmem:[%s1 + $0x5c8] sm:$0xff]
  %v225 = vld [vmem:[%s1 + $0x5d0] sm:$0xff]
  %v226 = vld [vmem:[%s1 + $0x5d8] sm:$0xff]
  %v227 = vld [vmem:[%s1 + $0x5e0] sm:$0xff]
  %v228 = vld [vmem:[%s1 + $0x5e8] sm:$0xff]
  %v229 = vld [vmem:[%s1 + $0x5f0] sm:$0xff]
  %v230 = vld [vmem:[%s1 + $0x5f8] sm:$0xff]
  %v231 = vld [vmem:[%s1 + $0x600] sm:$0xff]
  %v232 = vld [vmem:[%s1 + $0x608] sm:$0xff]
  %v233 = vld [vmem:[%s1 + $0x610] sm:$0xff]
  %v234 = vld [vmem:[%s1 + $0x618] sm:$0xff]
  %v235 = vld [vmem:[%s1 + $0x620] sm:$0xff]
  %v236 = vld [vmem:[%s1 + $0x628] sm:$0xff]
  %v237 = vld [vmem:[%s1 + $0x630] sm:$0xff]
  %v238 = vld [vmem:[%s1 + $0x638] sm:$0xff]
  %v239 = vld [vmem:[%s1 + $0x640] sm:$0xff]
  %v240 = vld [vmem:[%s1 + $0x648] sm:$0xff]
  %v241 = vld [vmem:[%s1 + $0x650] sm:$0xff]
  %v242 = vld [vmem:[%s1 + $0x658] sm:$0xff]
  %v243 = vld [vmem:[%s1 + $0x660] sm:$0xff]
  %v244 = vld [vmem:[%s1 + $0x668] sm:$0xff]
  %v245 = vld [vmem:[%s1 + $0x670] sm:$0xff]
  %v246 = vld [vmem:[%s1 + $0x678] sm:$0xff]
  %v247 = vld [vmem:[%s1 + $0x680] sm:$0xff]
  %v248 = vld [vmem:[%s1 + $0x688] sm:$0xff]
  %v249 = vld [vmem:[%s1 + $0x690] sm:$0xff]
  %v250 = vld [vmem:[%s1 + $0x698] sm:$0xff]
  %v251 = vld [vmem:[%s1 + $0x6a0] sm:$0xff]
  %v252 = vld [vmem:[%s1 + $0x6a8] sm:$0xff]
  %v253 = vld [vmem:[%s1 + $0x6b0] sm:$0xff]
  %v254 = vld [vmem:[%s1 + $0x6b8] sm:$0xff]
  %v255 = vld [vmem:[%s1 + $0x6c0] sm:$0xff]
  %v256 = vld [vmem:[%s1 + $0x6c8] sm:$0xff]
  %v257 = vld [vmem:[%s1 + $0x6d0] sm:$0xff]
  %v258 = vld [vmem:[%s1 + $0x6d8] sm:$0xff]
  %v259 = vld [vmem:[%s1 + $0x6e0] sm:$0xff]
  %v260 = vld [vmem:[%s1 + $0x6e8] sm:$0xff]
  %v261 = vld [vmem:[%s1 + $0x6f0] sm:$0xff]
  %v262 = vld [vmem:[%s1 + $0x6f8] sm:$0xff]
  %v263 = vld [vmem:[%s1 + $0x700] sm:$0xff]
  %v264 = vld [vmem:[%s1 + $0x708] sm:$0xff]
  %v265 = vld [vmem:[%s1 + $0x710] sm:$0xff]
  %v266 = vld [vmem:[%s1 + $0x718] sm:$0xff]
  %v267 = vld [vmem:[%s1 + $0x720] sm:$0xff]
  %v268 = vld [vmem:[%s1 + $0x728] sm:$0xff]
  %v269 = vld [vmem:[%s1 + $0x730] sm:$0xff]
  %v270 = vld [vmem:[%s1 + $0x738] sm:$0xff]
  %v271 = vld [vmem:[%s1 + $0x740] sm:$0xff]
  %v272 = vld [vmem:[%s1 + $0x748] sm:$0xff]
  %v273 = vld [vmem:[%s1 + $0x750] sm:$0xff]
  %v274 = vld [vmem:[%s1 + $0x758] sm:$0xff]
  %v275 = vld [vmem:[%s1 + $0x760] sm:$0xff]
  %v276 = vld [vmem:[%s1 + $0x768] sm:$0xff]
  %v277 = vld [vmem:[%s1 + $0x770] sm:$0xff]
  %v278 = vld [vmem:[%s1 + $0x778] sm:$0xff]
  %v279 = vld [vmem:[%s1 + $0x780] sm:$0xff]
  %v280 = vld [vmem:[%s1 + $0x788] sm:$0xff]
  %v281 = vld [vmem:[%s1 + $0x790] sm:$0xff]
  %v282 = vld [vmem:[%s1 + $0x798] sm:$0xff]
  %v283 = vld [vmem:[%s1 + $0x7a0] sm:$0xff]
  %v284 = vld [vmem:[%s1 + $0x7a8] sm:$0xff]
  %v285 = vld [vmem:[%s1 + $0x7b0] sm:$0xff]
  %v286 = vld [vmem:[%s1 + $0x7b8] sm:$0xff]
  %v287 = vld [vmem:[%s1 + $0x7c0] sm:$0xff]
  %v288 = vld [vmem:[%s1 + $0x7c8] sm:$0xff]
  %v289 = vld [vmem:[%s1 + $0x7d0] sm:$0xff]
  %v290 = vld [vmem:[%s1 + $0x7d8] sm:$0xff]
  %v291 = vld [vmem:[%s1 + $0x7e0] sm:$0xff]
  %v292 = vld [vmem:[%s1 + $0x7e8] sm:$0xff]
  %v293 = vld [vmem:[%s1 + $0x7f0] sm:$0xff]
  %v294 = vld [vmem:[%s1 + $0x7f8] sm:$0xff]
  %v295 = vld [vmem:[%s1 + $0x800] sm:$0xff]
  %v296 = vld [vmem:[%s1 + $0x808] sm:$0xff]
  %v297 = vld [vmem:[%s1 + $0x810] sm:$0xff]
  %v298 = vld [vmem:[%s1 + $0x818] sm:$0xff]
  %v299 = vld [vmem:[%s1 + $0x820] sm:$0xff]
  %v300 = vld [vmem:[%s1 + $0x828] sm:$0xff]
  %v301 = vld [vmem:[%s1 + $0x830] sm:$0xff]
  %v302 = vld [vmem:[%s1 + $0x838] sm:$0xff]
  %v303 = vld [vmem:[%s1 + $0x840] sm:$0xff]
  %v304 = vld [vmem:[%s1 + $0x848] sm:$0xff]
  %v305 = vld [vmem:[%s1 + $0x850] sm:$0xff]
  %v306 = vld [vmem:[%s1 + $0x858] sm:$0xff]
  %v307 = vld [vmem:[%s1 + $0x860] sm:$0xff]
  %v308 = vld [vmem:[%s1 + $0x868] sm:$0xff]
  %v309 = vld [vmem:[%s1 + $0x870] sm:$0xff]
  %v310 = vld [vmem:[%s1 + $0x878] sm:$0xff]
  %v311 = vld [vmem:[%s1 + $0x880] sm:$0xff]
  %v312 = vld [vmem:[%s1 + $0x888] sm:$0xff]
  %v313 = vld [vmem:[%s1 + $0x890] sm:$0xff]
  %v314 = vld [vmem:[%s1 + $0x898] sm:$0xff]
  %v315 = vld [vmem:[%s1 + $0x8a0] sm:$0xff]
  %v316 = vld [vmem:[%s1 + $0x8a8] sm:$0xff]
  %v317 = vld [vmem:[%s1 + $0x8b0] sm:$0xff]
  %v318 = vld [vmem:[%s1 + $0x8b8] sm:$0xff]
  %v319 = vld [vmem:[%s1 + $0x8c0] sm:$0xff]
  %v320 = vld [vmem:[%s1 + $0x8c8] sm:$0xff]
  %v321 = vld [vmem:[%s1 + $0x8d0] sm:$0xff]
  %v322 = vld [vmem:[%s1 + $0x8d8] sm:$0xff]
  %v323 = vld [vmem:[%s1 + $0x8e0] sm:$0xff]
  %v324 = vld [vmem:[%s1 + $0x8e8] sm:$0xff]
  %v325 = vld [vmem:[%s1 + $0x8f0] sm:$0xff]
  %v326 = vld [vmem:[%s1 + $0x8f8] sm:$0xff]
  %v327 = vld [vmem:[%s1 + $0x900] sm:$0xff]
  %v328 = vld [vmem:[%s1 + $0x908] sm:$0xff]
  %v329 = vld [vmem:[%s1 + $0x910] sm:$0xff]
  %v330 = vld [vmem:[%s1 + $0x918] sm:$0xff]
  %v331 = vld [vmem:[%s1 + $0x920] sm:$0xff]
  %v332 = vld [vmem:[%s1 + $0x928] sm:$0xff]
  %v333 = vld [vmem:[%s1 + $0x930] sm:$0xff]
  %v334 = vld [vmem:[%s1 + $0x938] sm:$0xff]
  %v335 = vld [vmem:[%s1 + $0x940] sm:$0xff]
  %v336 = vld [vmem:[%s1 + $0x948] sm:$0xff]
  %v337 = vld [vmem:[%s1 + $0x950] sm:$0xff]
  %v338 = vld [vmem:[%s1 + $0x958] sm:$0xff]
  %v339 = vld [vmem:[%s1 + $0x960] sm:$0xff]
  %v340 = vld [vmem:[%s1 + $0x968] sm:$0xff]
  %v341 = vld [vmem:[%s1 + $0x970] sm:$0xff]
  %v342 = vld [vmem:[%s1 + $0x978] sm:$0xff]
  %v343 = vld [vmem:[%s1 + $0x980] sm:$0xff]
  %v344 = vld [vmem:[%s1 + $0x988] sm:$0xff]
  %v345 = vld [vmem:[%s1 + $0x990] sm:$0xff]
  %v346 = vld [vmem:[%s1 + $0x998] sm:$0xff]
  %v347 = vld [vmem:[%s1 + $0x9a0] sm:$0xff]
  %v348 = vld [vmem:[%s1 + $0x9a8] sm:$0xff]
  %v349 = vld [vmem:[%s1 + $0x9b0] sm:$0xff]
  %v350 = vld [vmem:[%s1 + $0x9b8] sm:$0xff]
  %v351 = vld [vmem:[%s1 + $0x9c0] sm:$0xff]
  %v352 = vld [vmem:[%s1 + $0x9c8] sm:$0xff]
  %v353 = vld [vmem:[%s1 + $0x9d0] sm:$0xff]
  %v354 = vld [vmem:[%s1 + $0x9d8] sm:$0xff]
  %v355 = vld [vmem:[%s1 + $0x9e0] sm:$0xff]
  %v356 = vld [vmem:[%s1 + $0x9e8] sm:$0xff]
  %v357 = vld [vmem:[%s1 + $0x9f0] sm:$0xff]
  %v358 = vld [vmem:[%s1 + $0x9f8] sm:$0xff]
  %v359 = vld [vmem:[%s1 + $0xa00] sm:$0xff]
  %v360 = vld [vmem:[%s1 + $0xa08] sm:$0xff]
  %v361 = vld [vmem:[%s1 + $0xa10] sm:$0xff]
  %v362 = vld [vmem:[%s1 + $0xa18] sm:$0xff]
  %v363 = vld [vmem:[%s1 + $0xa20] sm:$0xff]
  %v364 = vld [vmem:[%s1 + $0xa28] sm:$0xff]
  %v365 = vld [vmem:[%s1 + $0xa30] sm:$0xff]
  %v366 = vld [vmem:[%s1 + $0xa38] sm:$0xff]
  %v367 = vld [vmem:[%s1 + $0xa40] sm:$0xff]
  %v368 = vld [vmem:[%s1 + $0xa48] sm:$0xff]
  %v369 = vld [vmem:[%s1 + $0xa50] sm:$0xff]
  %v370 = vld [vmem:[%s1 + $0xa58] sm:$0xff]
  %v371 = vld [vmem:[%s1 + $0xa60] sm:$0xff]
  %v372 = vld [vmem:[%s1 + $0xa68] sm:$0xff]
  %v373 = vld [vmem:[%s1 + $0xa70] sm:$0xff]
  %v374 = vld [vmem:[%s1 + $0xa78] sm:$0xff]
  %v375 = vld [vmem:[%s1 + $0xa80] sm:$0xff]
  %v376 = vld [vmem:[%s1 + $0xa88] sm:$0xff]
  %v377 = vld [vmem:[%s1 + $0xa90] sm:$0xff]
  %v378 = vld [vmem:[%s1 + $0xa98] sm:$0xff]
  %v379 = vld [vmem:[%s1 + $0xaa0] sm:$0xff]
  %v380 = vld [vmem:[%s1 + $0xaa8] sm:$0xff]
  %v381 = vld [vmem:[%s1 + $0xab0] sm:$0xff]
  %v382 = vld [vmem:[%s1 + $0xab8] sm:$0xff]
  %v383 = vld [vmem:[%s1 + $0xac0] sm:$0xff]
  %v384 = vld [vmem:[%s1 + $0xac8] sm:$0xff]
  %v385 = vld [vmem:[%s1 + $0xad0] sm:$0xff]
  %v386 = vld [vmem:[%s1 + $0xad8] sm:$0xff]
  %v387 = vld [vmem:[%s1 + $0xae0] sm:$0xff]
  %v388 = vld [vmem:[%s1 + $0xae8] sm:$0xff]
  %v389 = vld [vmem:[%s1 + $0xaf0] sm:$0xff]
  %v390 = vld [vmem:[%s1 + $0xaf8] sm:$0xff]
  %v391 = vld [vmem:[%s1 + $0xb00] sm:$0xff]
  %v392 = vld [vmem:[%s1 + $0xb08] sm:$0xff]
  %v393 = vld [vmem:[%s1 + $0xb10] sm:$0xff]
  %v394 = vld [vmem:[%s1 + $0xb18] sm:$0xff]
  %v395 = vld [vmem:[%s1 + $0xb20] sm:$0xff]
  %v396 = vld [vmem:[%s1 + $0xb28] sm:$0xff]
  %v397 = vld [vmem:[%s1 + $0xb30] sm:$0xff]
  %v398 = vld [vmem:[%s1 + $0xb38] sm:$0xff]
  %v399 = vld [vmem:[%s1 + $0xb40] sm:$0xff]
  %v400 = vld [vmem:[%s1 + $0xb48] sm:$0xff]
  %v401 = vld [vmem:[%s1 + $0xb50] sm:$0xff]
  %v402 = vld [vmem:[%s1 + $0xb58] sm:$0xff]
  %v403 = vld [vmem:[%s1 + $0xb60] sm:$0xff]
  %v404 = vld [vmem:[%s1 + $0xb68] sm:$0xff]
  %v405 = vld [vmem:[%s1 + $0xb70] sm:$0xff]
  %v406 = vld [vmem:[%s1 + $0xb78] sm:$0xff]
  %v407 = vld [vmem:[%s1 + $0xb80] sm:$0xff]
  %v408 = vld [vmem:[%s1 + $0xb88] sm:$0xff]
  %v409 = vld [vmem:[%s1 + $0xb90] sm:$0xff]
  %v410 = vld [vmem:[%s1 + $0xb98] sm:$0xff]
  %v411 = vld [vmem:[%s1 + $0xba0] sm:$0xff]
  %v412 = vld [vmem:[%s1 + $0xba8] sm:$0xff]
  %v413 = vld [vmem:[%s1 + $0xbb0] sm:$0xff]
  %v414 = vld [vmem:[%s1 + $0xbb8] sm:$0xff]
  %v415 = vld [vmem:[%s1 + $0xbc0] sm:$0xff]
  %v416 = vld [vmem:[%s1 + $0xbc8] sm:$0xff]
  %v417 = vld [vmem:[%s1 + $0xbd0] sm:$0xff]
  %v418 = vld [vmem:[%s1 + $0xbd8] sm:$0xff]
  %v419 = vld [vmem:[%s1 + $0xbe0] sm:$0xff]
  %v420 = vld [vmem:[%s1 + $0xbe8] sm:$0xff]
  %v421 = vld [vmem:[%s1 + $0xbf0] sm:$0xff]
  %v422 = vld [vmem:[%s1 + $0xbf8] sm:$0xff]
  %v423 = vld [vmem:[%s1 + $0xc00] sm:$0xff]
  %v424 = vld [vmem:[%s1 + $0xc08] sm:$0xff]
  %v425 = vld [vmem:[%s1 + $0xc10] sm:$0xff]
  %v426 = vld [vmem:[%s1 + $0xc18] sm:$0xff]
  %v427 = vld [vmem:[%s1 + $0xc20] sm:$0xff]
  %v428 = vld [vmem:[%s1 + $0xc28] sm:$0xff]
  %v429 = vld [vmem:[%s1 + $0xc30] sm:$0xff]
  %v430 = vld [vmem:[%s1 + $0xc38] sm:$0xff]
  %v431 = vld [vmem:[%s1 + $0xc40] sm:$0xff]
  %v432 = vld [vmem:[%s1 + $0xc48] sm:$0xff]
  %v433 = vld [vmem:[%s1 + $0xc50] sm:$0xff]
  %v434 = vld [vmem:[%s1 + $0xc58] sm:$0xff]
  %v435 = vld [vmem:[%s1 + $0xc60] sm:$0xff]
  %v436 = vld [vmem:[%s1 + $0xc68] sm:$0xff]
  %v437 = vld [vmem:[%s1 + $0xc70] sm:$0xff]
  %v438 = vld [vmem:[%s1 + $0xc78] sm:$0xff]
  %v439 = vld [vmem:[%s2] sm:$0x1]
  %v441 = vlaneseq
  %v442 = vshrl.u32 %v441, 7
  %v443 = vsub.s32 0, %v442
  %v444 = vrot.slane %v439, %v443
  %v453 = vcombine.high %v32, %v32
  %v455 = vunpack.c.l.s4 1983009808
  %v456 = vunpack.c.0.s8 %v455
  %v457 = vlaneseq
  %v458 = vshrl.u32 %v457, 7
  %v459 = vsub.s32 %v456, %v458
  %v460 = vrot.slane %v32, %v459
  %v462 = vunpack.c.l.s4 1983009808
  %v463 = vunpack.c.0.s8 %v462
  %v464 = vlaneseq
  %v465 = vshrl.u32 %v464, 7
  %v466 = vsub.s32 %v463, %v465
  %v467 = vrot.slane %v453, %v466
  %v468 = vcombine.high %v460, %v460
  %v469 = vcombine.high %v467, %v467
  %v470 = vcombine.high %v33, %v33
  %v472 = vunpack.c.l.s4 1983009808
  %v473 = vunpack.c.0.s8 %v472
  %v474 = vlaneseq
  %v475 = vshrl.u32 %v474, 7
  %v476 = vsub.s32 %v473, %v475
  %v477 = vrot.slane %v33, %v476
  %v479 = vunpack.c.l.s4 1983009808
  %v480 = vunpack.c.0.s8 %v479
  %v481 = vlaneseq
  %v482 = vshrl.u32 %v481, 7
  %v483 = vsub.s32 %v480, %v482
  %v484 = vrot.slane %v470, %v483
  %v485 = vcombine.high %v477, %v477
  %v486 = vcombine.high %v484, %v484
  %v487 = vcombine.high %v34, %v34
  %v489 = vunpack.c.l.s4 1983009808
  %v490 = vunpack.c.0.s8 %v489
  %v491 = vlaneseq
  %v492 = vshrl.u32 %v491, 7
  %v493 = vsub.s32 %v490, %v492
  %v494 = vrot.slane %v34, %v493
  %v496 = vunpack.c.l.s4 1983009808
  %v497 = vunpack.c.0.s8 %v496
  %v498 = vlaneseq
  %v499 = vshrl.u32 %v498, 7
  %v500 = vsub.s32 %v497, %v499
  %v501 = vrot.slane %v487, %v500
  %v502 = vcombine.high %v494, %v494
  %v503 = vcombine.high %v501, %v501
  %v504 = vcombine.high %v35, %v35
  %v506 = vunpack.c.l.s4 1983009808
  %v507 = vunpack.c.0.s8 %v506
  %v508 = vlaneseq
  %v509 = vshrl.u32 %v508, 7
  %v510 = vsub.s32 %v507, %v509
  %v511 = vrot.slane %v35, %v510
  %v513 = vunpack.c.l.s4 1983009808
  %v514 = vunpack.c.0.s8 %v513
  %v515 = vlaneseq
  %v516 = vshrl.u32 %v515, 7
  %v517 = vsub.s32 %v514, %v516
  %v518 = vrot.slane %v504, %v517
  %v519 = vcombine.high %v511, %v511
  %v520 = vcombine.high %v518, %v518
  %v521 = vcombine.high %v36, %v36
  %v523 = vunpack.c.l.s4 1983009808
  %v524 = vunpack.c.0.s8 %v523
  %v525 = vlaneseq
  %v526 = vshrl.u32 %v525, 7
  %v527 = vsub.s32 %v524, %v526
  %v528 = vrot.slane %v36, %v527
  %v530 = vunpack.c.l.s4 1983009808
  %v531 = vunpack.c.0.s8 %v530
  %v532 = vlaneseq
  %v533 = vshrl.u32 %v532, 7
  %v534 = vsub.s32 %v531, %v533
  %v535 = vrot.slane %v521, %v534
  %v536 = vcombine.high %v528, %v528
  %v537 = vcombine.high %v535, %v535
  %v538 = vcombine.high %v37, %v37
  %v540 = vunpack.c.l.s4 1983009808
  %v541 = vunpack.c.0.s8 %v540
  %v542 = vlaneseq
  %v543 = vshrl.u32 %v542, 7
  %v544 = vsub.s32 %v541, %v543
  %v545 = vrot.slane %v37, %v544
  %v547 = vunpack.c.l.s4 1983009808
  %v548 = vunpack.c.0.s8 %v547
  %v549 = vlaneseq
  %v550 = vshrl.u32 %v549, 7
  %v551 = vsub.s32 %v548, %v550
  %v552 = vrot.slane %v538, %v551
  %v553 = vcombine.high %v545, %v545
  %v554 = vcombine.high %v552, %v552
  %v556 = vunpack.c.l.s4 1983009808
  %v557 = vunpack.c.0.s8 %v556
  %v558 = vlaneseq
  %v559 = vshrl.u32 %v558, 7
  %v560 = vsub.s32 %v557, %v559
  %v561 = vrot.slane %v38, %v560
  %587 = vmatprep.subr.mxu0 0.0
  %588 = vmatpush1.msra.mxu0 %v54
  %589 = vmatprep.subr.mxu0 0.0
  %590 = vmatpush1.msra.mxu0 %v53
  %591 = vmatprep.subr.mxu0 0.0
  %592 = vmatpush1.msra.mxu0 %v52
  %593 = vmatprep.subr.mxu0 0.0
  %594 = vmatpush1.msra.mxu0 %v51
  %595 = vmatprep.subr.mxu0 0.0
  %596 = vmatpush1.msra.mxu0 %v50
  %597 = vmatprep.subr.mxu0 0.0
  %598 = vmatpush1.msra.mxu0 %v49
  %599 = vmatprep.subr.mxu0 0.0
  %600 = vmatpush1.msra.mxu0 %v48
  %601 = vmatprep.subr.mxu0 0.0
  %602 = vmatpush1.msra.mxu0 %v47
  %603 = vmatprep.subr.mxu0 0.0
  %604 = vmatpush1.msra.mxu0 %v46
  %605 = vmatprep.subr.mxu0 0.0
  %606 = vmatpush1.msra.mxu0 %v45
  %607 = vmatprep.subr.mxu0 0.0
  %608 = vmatpush1.msra.mxu0 %v44
  %609 = vmatprep.subr.mxu0 0.0
  %610 = vmatpush1.msra.mxu0 %v43
  %611 = vmatprep.subr.mxu0 0.0
  %612 = vmatpush1.msra.mxu0 %v42
  %613 = vmatprep.subr.mxu0 0.0
  %614 = vmatpush1.msra.mxu0 %v41
  %615 = vmatprep.subr.mxu0 0.0
  %616 = vmatpush1.msra.mxu0 %v40
  %617 = vmatprep.subr.mxu0 0.0
  %618 = vmatpush1.msra.mxu0 %v39
  %619 = vmatprep.subr.mxu0 0.0
  %620 = vmatpush2.msra.mxu0 %v70
  %621 = vmatprep.subr.mxu0 0.0
  %622 = vmatpush2.msra.mxu0 %v69
  %623 = vmatprep.subr.mxu0 0.0
  %624 = vmatpush2.msra.mxu0 %v68
  %625 = vmatprep.subr.mxu0 0.0
  %626 = vmatpush2.msra.mxu0 %v67
  %627 = vmatprep.subr.mxu0 0.0
  %628 = vmatpush2.msra.mxu0 %v66
  %629 = vmatprep.subr.mxu0 0.0
  %630 = vmatpush2.msra.mxu0 %v65
  %631 = vmatprep.subr.mxu0 0.0
  %632 = vmatpush2.msra.mxu0 %v64
  %633 = vmatprep.subr.mxu0 0.0
  %634 = vmatpush2.msra.mxu0 %v63
  %635 = vmatprep.subr.mxu0 0.0
  %636 = vmatpush2.msra.mxu0 %v62
  %637 = vmatprep.subr.mxu0 0.0
  %638 = vmatpush2.msra.mxu0 %v61
  %639 = vmatprep.subr.mxu0 0.0
  %640 = vmatpush2.msra.mxu0 %v60
  %641 = vmatprep.subr.mxu0 0.0
  %642 = vmatpush2.msra.mxu0 %v59
  %643 = vmatprep.subr.mxu0 0.0
  %644 = vmatpush2.msra.mxu0 %v58
  %645 = vmatprep.subr.mxu0 0.0
  %646 = vmatpush2.msra.mxu0 %v57
  %647 = vmatprep.subr.mxu0 0.0
  %648 = vmatpush2.msra.mxu0 %v56
  %649 = vmatprep.subr.mxu0 0.0
  %650 = vmatpush2.msra.mxu0 %v55
  %651 = vmatprep.mubr.f32.mxu0 %v468
  %652 = vmatmul.mubr.f32.gmra.mxu0 %v460
  %v653 = vpop.f32.mrf.mxu0
  %v654 = vadd.f32 %v444, %v653
  %v655 = vpop.f32.mrf.mxu0
  %656 = vdwg.mxu0
  %657 = vmatprep.subr.mxu0 0.0
  %658 = vmatpush1.msra.mxu0 %v86
  %659 = vmatprep.subr.mxu0 0.0
  %660 = vmatpush1.msra.mxu0 %v85
  %661 = vmatprep.subr.mxu0 0.0
  %662 = vmatpush1.msra.mxu0 %v84
  %663 = vmatprep.subr.mxu0 0.0
  %664 = vmatpush1.msra.mxu0 %v83
  %665 = vmatprep.subr.mxu0 0.0
  %666 = vmatpush1.msra.mxu0 %v82
  %667 = vmatprep.subr.mxu0 0.0
  %668 = vmatpush1.msra.mxu0 %v81
  %669 = vmatprep.subr.mxu0 0.0
  %670 = vmatpush1.msra.mxu0 %v80
  %671 = vmatprep.subr.mxu0 0.0
  %672 = vmatpush1.msra.mxu0 %v79
  %673 = vmatprep.subr.mxu0 0.0
  %674 = vmatpush1.msra.mxu0 %v78
  %675 = vmatprep.subr.mxu0 0.0
  %676 = vmatpush1.msra.mxu0 %v77
  %677 = vmatprep.subr.mxu0 0.0
  %678 = vmatpush1.msra.mxu0 %v76
  %679 = vmatprep.subr.mxu0 0.0
  %680 = vmatpush1.msra.mxu0 %v75
  %681 = vmatprep.subr.mxu0 0.0
  %682 = vmatpush1.msra.mxu0 %v74
  %683 = vmatprep.subr.mxu0 0.0
  %684 = vmatpush1.msra.mxu0 %v73
  %685 = vmatprep.subr.mxu0 0.0
  %686 = vmatpush1.msra.mxu0 %v72
  %687 = vmatprep.subr.mxu0 0.0
  %688 = vmatpush1.msra.mxu0 %v71
  %689 = vmatprep.subr.mxu0 0.0
  %690 = vmatpush2.msra.mxu0 %v102
  %691 = vmatprep.subr.mxu0 0.0
  %692 = vmatpush2.msra.mxu0 %v101
  %693 = vmatprep.subr.mxu0 0.0
  %694 = vmatpush2.msra.mxu0 %v100
  %695 = vmatprep.subr.mxu0 0.0
  %696 = vmatpush2.msra.mxu0 %v99
  %697 = vmatprep.subr.mxu0 0.0
  %698 = vmatpush2.msra.mxu0 %v98
  %699 = vmatprep.subr.mxu0 0.0
  %700 = vmatpush2.msra.mxu0 %v97
  %701 = vmatprep.subr.mxu0 0.0
  %702 = vmatpush2.msra.mxu0 %v96
  %703 = vmatprep.subr.mxu0 0.0
  %704 = vmatpush2.msra.mxu0 %v95
  %705 = vmatprep.subr.mxu0 0.0
  %706 = vmatpush2.msra.mxu0 %v94
  %707 = vmatprep.subr.mxu0 0.0
  %708 = vmatpush2.msra.mxu0 %v93
  %709 = vmatprep.subr.mxu0 0.0
  %710 = vmatpush2.msra.mxu0 %v92
  %711 = vmatprep.subr.mxu0 0.0
  %712 = vmatpush2.msra.mxu0 %v91
  %713 = vmatprep.subr.mxu0 0.0
  %714 = vmatpush2.msra.mxu0 %v90
  %715 = vmatprep.subr.mxu0 0.0
  %716 = vmatpush2.msra.mxu0 %v89
  %717 = vmatprep.subr.mxu0 0.0
  %718 = vmatpush2.msra.mxu0 %v88
  %719 = vmatprep.subr.mxu0 0.0
  %720 = vmatpush2.msra.mxu0 %v87
  %721 = vmatprep.mubr.f32.mxu0 %v469
  %722 = vmatmul.mubr.f32.gmra.mxu0 %v467
  %v723 = vpop.f32.mrf.mxu0
  %v724 = vadd.f32 %v654, %v723
  %v725 = vpop.f32.mrf.mxu0
  %726 = vdwg.mxu0
  %727 = vmatprep.subr.mxu0 0.0
  %728 = vmatpush1.msra.mxu0 %v118
  %729 = vmatprep.subr.mxu0 0.0
  %730 = vmatpush1.msra.mxu0 %v117
  %731 = vmatprep.subr.mxu0 0.0
  %732 = vmatpush1.msra.mxu0 %v116
  %733 = vmatprep.subr.mxu0 0.0
  %734 = vmatpush1.msra.mxu0 %v115
  %735 = vmatprep.subr.mxu0 0.0
  %736 = vmatpush1.msra.mxu0 %v114
  %737 = vmatprep.subr.mxu0 0.0
  %738 = vmatpush1.msra.mxu0 %v113
  %739 = vmatprep.subr.mxu0 0.0
  %740 = vmatpush1.msra.mxu0 %v112
  %741 = vmatprep.subr.mxu0 0.0
  %742 = vmatpush1.msra.mxu0 %v111
  %743 = vmatprep.subr.mxu0 0.0
  %744 = vmatpush1.msra.mxu0 %v110
  %745 = vmatprep.subr.mxu0 0.0
  %746 = vmatpush1.msra.mxu0 %v109
  %747 = vmatprep.subr.mxu0 0.0
  %748 = vmatpush1.msra.mxu0 %v108
  %749 = vmatprep.subr.mxu0 0.0
  %750 = vmatpush1.msra.mxu0 %v107
  %751 = vmatprep.subr.mxu0 0.0
  %752 = vmatpush1.msra.mxu0 %v106
  %753 = vmatprep.subr.mxu0 0.0
  %754 = vmatpush1.msra.mxu0 %v105
  %755 = vmatprep.subr.mxu0 0.0
  %756 = vmatpush1.msra.mxu0 %v104
  %757 = vmatprep.subr.mxu0 0.0
  %758 = vmatpush1.msra.mxu0 %v103
  %759 = vmatprep.subr.mxu0 0.0
  %760 = vmatpush2.msra.mxu0 %v134
  %761 = vmatprep.subr.mxu0 0.0
  %762 = vmatpush2.msra.mxu0 %v133
  %763 = vmatprep.subr.mxu0 0.0
  %764 = vmatpush2.msra.mxu0 %v132
  %765 = vmatprep.subr.mxu0 0.0
  %766 = vmatpush2.msra.mxu0 %v131
  %767 = vmatprep.subr.mxu0 0.0
  %768 = vmatpush2.msra.mxu0 %v130
  %769 = vmatprep.subr.mxu0 0.0
  %770 = vmatpush2.msra.mxu0 %v129
  %771 = vmatprep.subr.mxu0 0.0
  %772 = vmatpush2.msra.mxu0 %v128
  %773 = vmatprep.subr.mxu0 0.0
  %774 = vmatpush2.msra.mxu0 %v127
  %775 = vmatprep.subr.mxu0 0.0
  %776 = vmatpush2.msra.mxu0 %v126
  %777 = vmatprep.subr.mxu0 0.0
  %778 = vmatpush2.msra.mxu0 %v125
  %779 = vmatprep.subr.mxu0 0.0
  %780 = vmatpush2.msra.mxu0 %v124
  %781 = vmatprep.subr.mxu0 0.0
  %782 = vmatpush2.msra.mxu0 %v123
  %783 = vmatprep.subr.mxu0 0.0
  %784 = vmatpush2.msra.mxu0 %v122
  %785 = vmatprep.subr.mxu0 0.0
  %786 = vmatpush2.msra.mxu0 %v121
  %787 = vmatprep.subr.mxu0 0.0
  %788 = vmatpush2.msra.mxu0 %v120
  %789 = vmatprep.subr.mxu0 0.0
  %790 = vmatpush2.msra.mxu0 %v119
  %791 = vmatprep.mubr.f32.mxu0 %v485
  %792 = vmatmul.mubr.f32.gmra.mxu0 %v477
  %v793 = vpop.f32.mrf.mxu0
  %v794 = vadd.f32 %v724, %v793
  %v795 = vpop.f32.mrf.mxu0
  %796 = vdwg.mxu0
  %797 = vmatprep.subr.mxu0 0.0
  %798 = vmatpush1.msra.mxu0 %v150
  %799 = vmatprep.subr.mxu0 0.0
  %800 = vmatpush1.msra.mxu0 %v149
  %801 = vmatprep.subr.mxu0 0.0
  %802 = vmatpush1.msra.mxu0 %v148
  %803 = vmatprep.subr.mxu0 0.0
  %804 = vmatpush1.msra.mxu0 %v147
  %805 = vmatprep.subr.mxu0 0.0
  %806 = vmatpush1.msra.mxu0 %v146
  %807 = vmatprep.subr.mxu0 0.0
  %808 = vmatpush1.msra.mxu0 %v145
  %809 = vmatprep.subr.mxu0 0.0
  %810 = vmatpush1.msra.mxu0 %v144
  %811 = vmatprep.subr.mxu0 0.0
  %812 = vmatpush1.msra.mxu0 %v143
  %813 = vmatprep.subr.mxu0 0.0
  %814 = vmatpush1.msra.mxu0 %v142
  %815 = vmatprep.subr.mxu0 0.0
  %816 = vmatpush1.msra.mxu0 %v141
  %817 = vmatprep.subr.mxu0 0.0
  %818 = vmatpush1.msra.mxu0 %v140
  %819 = vmatprep.subr.mxu0 0.0
  %820 = vmatpush1.msra.mxu0 %v139
  %821 = vmatprep.subr.mxu0 0.0
  %822 = vmatpush1.msra.mxu0 %v138
  %823 = vmatprep.subr.mxu0 0.0
  %824 = vmatpush1.msra.mxu0 %v137
  %825 = vmatprep.subr.mxu0 0.0
  %826 = vmatpush1.msra.mxu0 %v136
  %827 = vmatprep.subr.mxu0 0.0
  %828 = vmatpush1.msra.mxu0 %v135
  %829 = vmatprep.subr.mxu0 0.0
  %830 = vmatpush2.msra.mxu0 %v166
  %831 = vmatprep.subr.mxu0 0.0
  %832 = vmatpush2.msra.mxu0 %v165
  %833 = vmatprep.subr.mxu0 0.0
  %834 = vmatpush2.msra.mxu0 %v164
  %835 = vmatprep.subr.mxu0 0.0
  %836 = vmatpush2.msra.mxu0 %v163
  %837 = vmatprep.subr.mxu0 0.0
  %838 = vmatpush2.msra.mxu0 %v162
  %839 = vmatprep.subr.mxu0 0.0
  %840 = vmatpush2.msra.mxu0 %v161
  %841 = vmatprep.subr.mxu0 0.0
  %842 = vmatpush2.msra.mxu0 %v160
  %843 = vmatprep.subr.mxu0 0.0
  %844 = vmatpush2.msra.mxu0 %v159
  %845 = vmatprep.subr.mxu0 0.0
  %846 = vmatpush2.msra.mxu0 %v158
  %847 = vmatprep.subr.mxu0 0.0
  %848 = vmatpush2.msra.mxu0 %v157
  %849 = vmatprep.subr.mxu0 0.0
  %850 = vmatpush2.msra.mxu0 %v156
  %851 = vmatprep.subr.mxu0 0.0
  %852 = vmatpush2.msra.mxu0 %v155
  %853 = vmatprep.subr.mxu0 0.0
  %854 = vmatpush2.msra.mxu0 %v154
  %855 = vmatprep.subr.mxu0 0.0
  %856 = vmatpush2.msra.mxu0 %v153
  %857 = vmatprep.subr.mxu0 0.0
  %858 = vmatpush2.msra.mxu0 %v152
  %859 = vmatprep.subr.mxu0 0.0
  %860 = vmatpush2.msra.mxu0 %v151
  %861 = vmatprep.mubr.f32.mxu0 %v486
  %862 = vmatmul.mubr.f32.gmra.mxu0 %v484
  %v863 = vpop.f32.mrf.mxu0
  %v864 = vadd.f32 %v794, %v863
  %v865 = vpop.f32.mrf.mxu0
  %866 = vdwg.mxu0
  %867 = vmatprep.subr.mxu0 0.0
  %868 = vmatpush1.msra.mxu0 %v182
  %869 = vmatprep.subr.mxu0 0.0
  %870 = vmatpush1.msra.mxu0 %v181
  %871 = vmatprep.subr.mxu0 0.0
  %872 = vmatpush1.msra.mxu0 %v180
  %873 = vmatprep.subr.mxu0 0.0
  %874 = vmatpush1.msra.mxu0 %v179
  %875 = vmatprep.subr.mxu0 0.0
  %876 = vmatpush1.msra.mxu0 %v178
  %877 = vmatprep.subr.mxu0 0.0
  %878 = vmatpush1.msra.mxu0 %v177
  %879 = vmatprep.subr.mxu0 0.0
  %880 = vmatpush1.msra.mxu0 %v176
  %881 = vmatprep.subr.mxu0 0.0
  %882 = vmatpush1.msra.mxu0 %v175
  %883 = vmatprep.subr.mxu0 0.0
  %884 = vmatpush1.msra.mxu0 %v174
  %885 = vmatprep.subr.mxu0 0.0
  %886 = vmatpush1.msra.mxu0 %v173
  %887 = vmatprep.subr.mxu0 0.0
  %888 = vmatpush1.msra.mxu0 %v172
  %889 = vmatprep.subr.mxu0 0.0
  %890 = vmatpush1.msra.mxu0 %v171
  %891 = vmatprep.subr.mxu0 0.0
  %892 = vmatpush1.msra.mxu0 %v170
  %893 = vmatprep.subr.mxu0 0.0
  %894 = vmatpush1.msra.mxu0 %v169
  %895 = vmatprep.subr.mxu0 0.0
  %896 = vmatpush1.msra.mxu0 %v168
  %897 = vmatprep.subr.mxu0 0.0
  %898 = vmatpush1.msra.mxu0 %v167
  %899 = vmatprep.subr.mxu0 0.0
  %900 = vmatpush2.msra.mxu0 %v198
  %901 = vmatprep.subr.mxu0 0.0
  %902 = vmatpush2.msra.mxu0 %v197
  %903 = vmatprep.subr.mxu0 0.0
  %904 = vmatpush2.msra.mxu0 %v196
  %905 = vmatprep.subr.mxu0 0.0
  %906 = vmatpush2.msra.mxu0 %v195
  %907 = vmatprep.subr.mxu0 0.0
  %908 = vmatpush2.msra.mxu0 %v194
  %909 = vmatprep.subr.mxu0 0.0
  %910 = vmatpush2.msra.mxu0 %v193
  %911 = vmatprep.subr.mxu0 0.0
  %912 = vmatpush2.msra.mxu0 %v192
  %913 = vmatprep.subr.mxu0 0.0
  %914 = vmatpush2.msra.mxu0 %v191
  %915 = vmatprep.subr.mxu0 0.0
  %916 = vmatpush2.msra.mxu0 %v190
  %917 = vmatprep.subr.mxu0 0.0
  %918 = vmatpush2.msra.mxu0 %v189
  %919 = vmatprep.subr.mxu0 0.0
  %920 = vmatpush2.msra.mxu0 %v188
  %921 = vmatprep.subr.mxu0 0.0
  %922 = vmatpush2.msra.mxu0 %v187
  %923 = vmatprep.subr.mxu0 0.0
  %924 = vmatpush2.msra.mxu0 %v186
  %925 = vmatprep.subr.mxu0 0.0
  %926 = vmatpush2.msra.mxu0 %v185
  %927 = vmatprep.subr.mxu0 0.0
  %928 = vmatpush2.msra.mxu0 %v184
  %929 = vmatprep.subr.mxu0 0.0
  %930 = vmatpush2.msra.mxu0 %v183
  %931 = vmatprep.mubr.f32.mxu0 %v502
  %932 = vmatmul.mubr.f32.gmra.mxu0 %v494
  %v933 = vpop.f32.mrf.mxu0
  %v934 = vadd.f32 %v864, %v933
  %v935 = vpop.f32.mrf.mxu0
  %936 = vdwg.mxu0
  %937 = vmatprep.subr.mxu0 0.0
  %938 = vmatpush1.msra.mxu0 %v214
  %939 = vmatprep.subr.mxu0 0.0
  %940 = vmatpush1.msra.mxu0 %v213
  %941 = vmatprep.subr.mxu0 0.0
  %942 = vmatpush1.msra.mxu0 %v212
  %943 = vmatprep.subr.mxu0 0.0
  %944 = vmatpush1.msra.mxu0 %v211
  %945 = vmatprep.subr.mxu0 0.0
  %946 = vmatpush1.msra.mxu0 %v210
  %947 = vmatprep.subr.mxu0 0.0
  %948 = vmatpush1.msra.mxu0 %v209
  %949 = vmatprep.subr.mxu0 0.0
  %950 = vmatpush1.msra.mxu0 %v208
  %951 = vmatprep.subr.mxu0 0.0
  %952 = vmatpush1.msra.mxu0 %v207
  %953 = vmatprep.subr.mxu0 0.0
  %954 = vmatpush1.msra.mxu0 %v206
  %955 = vmatprep.subr.mxu0 0.0
  %956 = vmatpush1.msra.mxu0 %v205
  %957 = vmatprep.subr.mxu0 0.0
  %958 = vmatpush1.msra.mxu0 %v204
  %959 = vmatprep.subr.mxu0 0.0
  %960 = vmatpush1.msra.mxu0 %v203
  %961 = vmatprep.subr.mxu0 0.0
  %962 = vmatpush1.msra.mxu0 %v202
  %963 = vmatprep.subr.mxu0 0.0
  %964 = vmatpush1.msra.mxu0 %v201
  %965 = vmatprep.subr.mxu0 0.0
  %966 = vmatpush1.msra.mxu0 %v200
  %967 = vmatprep.subr.mxu0 0.0
  %968 = vmatpush1.msra.mxu0 %v199
  %969 = vmatprep.subr.mxu0 0.0
  %970 = vmatpush2.msra.mxu0 %v230
  %971 = vmatprep.subr.mxu0 0.0
  %972 = vmatpush2.msra.mxu0 %v229
  %973 = vmatprep.subr.mxu0 0.0
  %974 = vmatpush2.msra.mxu0 %v228
  %975 = vmatprep.subr.mxu0 0.0
  %976 = vmatpush2.msra.mxu0 %v227
  %977 = vmatprep.subr.mxu0 0.0
  %978 = vmatpush2.msra.mxu0 %v226
  %979 = vmatprep.subr.mxu0 0.0
  %980 = vmatpush2.msra.mxu0 %v225
  %981 = vmatprep.subr.mxu0 0.0
  %982 = vmatpush2.msra.mxu0 %v224
  %983 = vmatprep.subr.mxu0 0.0
  %984 = vmatpush2.msra.mxu0 %v223
  %985 = vmatprep.subr.mxu0 0.0
  %986 = vmatpush2.msra.mxu0 %v222
  %987 = vmatprep.subr.mxu0 0.0
  %988 = vmatpush2.msra.mxu0 %v221
  %989 = vmatprep.subr.mxu0 0.0
  %990 = vmatpush2.msra.mxu0 %v220
  %991 = vmatprep.subr.mxu0 0.0
  %992 = vmatpush2.msra.mxu0 %v219
  %993 = vmatprep.subr.mxu0 0.0
  %994 = vmatpush2.msra.mxu0 %v218
  %995 = vmatprep.subr.mxu0 0.0
  %996 = vmatpush2.msra.mxu0 %v217
  %997 = vmatprep.subr.mxu0 0.0
  %998 = vmatpush2.msra.mxu0 %v216
  %999 = vmatprep.subr.mxu0 0.0
  %1000 = vmatpush2.msra.mxu0 %v215
  %1001 = vmatprep.mubr.f32.mxu0 %v503
  %1002 = vmatmul.mubr.f32.gmra.mxu0 %v501
  %v1003 = vpop.f32.mrf.mxu0
  %v1004 = vadd.f32 %v934, %v1003
  %v1005 = vpop.f32.mrf.mxu0
  %1006 = vdwg.mxu0
  %1007 = vmatprep.subr.mxu0 0.0
  %1008 = vmatpush1.msra.mxu0 %v246
  %1009 = vmatprep.subr.mxu0 0.0
  %1010 = vmatpush1.msra.mxu0 %v245
  %1011 = vmatprep.subr.mxu0 0.0
  %1012 = vmatpush1.msra.mxu0 %v244
  %1013 = vmatprep.subr.mxu0 0.0
  %1014 = vmatpush1.msra.mxu0 %v243
  %1015 = vmatprep.subr.mxu0 0.0
  %1016 = vmatpush1.msra.mxu0 %v242
  %1017 = vmatprep.subr.mxu0 0.0
  %1018 = vmatpush1.msra.mxu0 %v241
  %1019 = vmatprep.subr.mxu0 0.0
  %1020 = vmatpush1.msra.mxu0 %v240
  %1021 = vmatprep.subr.mxu0 0.0
  %1022 = vmatpush1.msra.mxu0 %v239
  %1023 = vmatprep.subr.mxu0 0.0
  %1024 = vmatpush1.msra.mxu0 %v238
  %1025 = vmatprep.subr.mxu0 0.0
  %1026 = vmatpush1.msra.mxu0 %v237
  %1027 = vmatprep.subr.mxu0 0.0
  %1028 = vmatpush1.msra.mxu0 %v236
  %1029 = vmatprep.subr.mxu0 0.0
  %1030 = vmatpush1.msra.mxu0 %v235
  %1031 = vmatprep.subr.mxu0 0.0
  %1032 = vmatpush1.msra.mxu0 %v234
  %1033 = vmatprep.subr.mxu0 0.0
  %1034 = vmatpush1.msra.mxu0 %v233
  %1035 = vmatprep.subr.mxu0 0.0
  %1036 = vmatpush1.msra.mxu0 %v232
  %1037 = vmatprep.subr.mxu0 0.0
  %1038 = vmatpush1.msra.mxu0 %v231
  %1039 = vmatprep.subr.mxu0 0.0
  %1040 = vmatpush2.msra.mxu0 %v262
  %1041 = vmatprep.subr.mxu0 0.0
  %1042 = vmatpush2.msra.mxu0 %v261
  %1043 = vmatprep.subr.mxu0 0.0
  %1044 = vmatpush2.msra.mxu0 %v260
  %1045 = vmatprep.subr.mxu0 0.0
  %1046 = vmatpush2.msra.mxu0 %v259
  %1047 = vmatprep.subr.mxu0 0.0
  %1048 = vmatpush2.msra.mxu0 %v258
  %1049 = vmatprep.subr.mxu0 0.0
  %1050 = vmatpush2.msra.mxu0 %v257
  %1051 = vmatprep.subr.mxu0 0.0
  %1052 = vmatpush2.msra.mxu0 %v256
  %1053 = vmatprep.subr.mxu0 0.0
  %1054 = vmatpush2.msra.mxu0 %v255
  %1055 = vmatprep.subr.mxu0 0.0
  %1056 = vmatpush2.msra.mxu0 %v254
  %1057 = vmatprep.subr.mxu0 0.0
  %1058 = vmatpush2.msra.mxu0 %v253
  %1059 = vmatprep.subr.mxu0 0.0
  %1060 = vmatpush2.msra.mxu0 %v252
  %1061 = vmatprep.subr.mxu0 0.0
  %1062 = vmatpush2.msra.mxu0 %v251
  %1063 = vmatprep.subr.mxu0 0.0
  %1064 = vmatpush2.msra.mxu0 %v250
  %1065 = vmatprep.subr.mxu0 0.0
  %1066 = vmatpush2.msra.mxu0 %v249
  %1067 = vmatprep.subr.mxu0 0.0
  %1068 = vmatpush2.msra.mxu0 %v248
  %1069 = vmatprep.subr.mxu0 0.0
  %1070 = vmatpush2.msra.mxu0 %v247
  %1071 = vmatprep.mubr.f32.mxu0 %v519
  %1072 = vmatmul.mubr.f32.gmra.mxu0 %v511
  %v1073 = vpop.f32.mrf.mxu0
  %v1074 = vadd.f32 %v1004, %v1073
  %v1075 = vpop.f32.mrf.mxu0
  %1076 = vdwg.mxu0
  %1077 = vmatprep.subr.mxu0 0.0
  %1078 = vmatpush1.msra.mxu0 %v278
  %1079 = vmatprep.subr.mxu0 0.0
  %1080 = vmatpush1.msra.mxu0 %v277
  %1081 = vmatprep.subr.mxu0 0.0
  %1082 = vmatpush1.msra.mxu0 %v276
  %1083 = vmatprep.subr.mxu0 0.0
  %1084 = vmatpush1.msra.mxu0 %v275
  %1085 = vmatprep.subr.mxu0 0.0
  %1086 = vmatpush1.msra.mxu0 %v274
  %1087 = vmatprep.subr.mxu0 0.0
  %1088 = vmatpush1.msra.mxu0 %v273
  %1089 = vmatprep.subr.mxu0 0.0
  %1090 = vmatpush1.msra.mxu0 %v272
  %1091 = vmatprep.subr.mxu0 0.0
  %1092 = vmatpush1.msra.mxu0 %v271
  %1093 = vmatprep.subr.mxu0 0.0
  %1094 = vmatpush1.msra.mxu0 %v270
  %1095 = vmatprep.subr.mxu0 0.0
  %1096 = vmatpush1.msra.mxu0 %v269
  %1097 = vmatprep.subr.mxu0 0.0
  %1098 = vmatpush1.msra.mxu0 %v268
  %1099 = vmatprep.subr.mxu0 0.0
  %1100 = vmatpush1.msra.mxu0 %v267
  %1101 = vmatprep.subr.mxu0 0.0
  %1102 = vmatpush1.msra.mxu0 %v266
  %1103 = vmatprep.subr.mxu0 0.0
  %1104 = vmatpush1.msra.mxu0 %v265
  %1105 = vmatprep.subr.mxu0 0.0
  %1106 = vmatpush1.msra.mxu0 %v264
  %1107 = vmatprep.subr.mxu0 0.0
  %1108 = vmatpush1.msra.mxu0 %v263
  %1109 = vmatprep.subr.mxu0 0.0
  %1110 = vmatpush2.msra.mxu0 %v294
  %1111 = vmatprep.subr.mxu0 0.0
  %1112 = vmatpush2.msra.mxu0 %v293
  %1113 = vmatprep.subr.mxu0 0.0
  %1114 = vmatpush2.msra.mxu0 %v292
  %1115 = vmatprep.subr.mxu0 0.0
  %1116 = vmatpush2.msra.mxu0 %v291
  %1117 = vmatprep.subr.mxu0 0.0
  %1118 = vmatpush2.msra.mxu0 %v290
  %1119 = vmatprep.subr.mxu0 0.0
  %1120 = vmatpush2.msra.mxu0 %v289
  %1121 = vmatprep.subr.mxu0 0.0
  %1122 = vmatpush2.msra.mxu0 %v288
  %1123 = vmatprep.subr.mxu0 0.0
  %1124 = vmatpush2.msra.mxu0 %v287
  %1125 = vmatprep.subr.mxu0 0.0
  %1126 = vmatpush2.msra.mxu0 %v286
  %1127 = vmatprep.subr.mxu0 0.0
  %1128 = vmatpush2.msra.mxu0 %v285
  %1129 = vmatprep.subr.mxu0 0.0
  %1130 = vmatpush2.msra.mxu0 %v284
  %1131 = vmatprep.subr.mxu0 0.0
  %1132 = vmatpush2.msra.mxu0 %v283
  %1133 = vmatprep.subr.mxu0 0.0
  %1134 = vmatpush2.msra.mxu0 %v282
  %1135 = vmatprep.subr.mxu0 0.0
  %1136 = vmatpush2.msra.mxu0 %v281
  %1137 = vmatprep.subr.mxu0 0.0
  %1138 = vmatpush2.msra.mxu0 %v280
  %1139 = vmatprep.subr.mxu0 0.0
  %1140 = vmatpush2.msra.mxu0 %v279
  %1141 = vmatprep.mubr.f32.mxu0 %v520
  %1142 = vmatmul.mubr.f32.gmra.mxu0 %v518
  %v1143 = vpop.f32.mrf.mxu0
  %v1144 = vadd.f32 %v1074, %v1143
  %v1145 = vpop.f32.mrf.mxu0
  %1146 = vdwg.mxu0
  %1147 = vmatprep.subr.mxu0 0.0
  %1148 = vmatpush1.msra.mxu0 %v310
  %1149 = vmatprep.subr.mxu0 0.0
  %1150 = vmatpush1.msra.mxu0 %v309
  %1151 = vmatprep.subr.mxu0 0.0
  %1152 = vmatpush1.msra.mxu0 %v308
  %1153 = vmatprep.subr.mxu0 0.0
  %1154 = vmatpush1.msra.mxu0 %v307
  %1155 = vmatprep.subr.mxu0 0.0
  %1156 = vmatpush1.msra.mxu0 %v306
  %1157 = vmatprep.subr.mxu0 0.0
  %1158 = vmatpush1.msra.mxu0 %v305
  %1159 = vmatprep.subr.mxu0 0.0
  %1160 = vmatpush1.msra.mxu0 %v304
  %1161 = vmatprep.subr.mxu0 0.0
  %1162 = vmatpush1.msra.mxu0 %v303
  %1163 = vmatprep.subr.mxu0 0.0
  %1164 = vmatpush1.msra.mxu0 %v302
  %1165 = vmatprep.subr.mxu0 0.0
  %1166 = vmatpush1.msra.mxu0 %v301
  %1167 = vmatprep.subr.mxu0 0.0
  %1168 = vmatpush1.msra.mxu0 %v300
  %1169 = vmatprep.subr.mxu0 0.0
  %1170 = vmatpush1.msra.mxu0 %v299
  %1171 = vmatprep.subr.mxu0 0.0
  %1172 = vmatpush1.msra.mxu0 %v298
  %1173 = vmatprep.subr.mxu0 0.0
  %1174 = vmatpush1.msra.mxu0 %v297
  %1175 = vmatprep.subr.mxu0 0.0
  %1176 = vmatpush1.msra.mxu0 %v296
  %1177 = vmatprep.subr.mxu0 0.0
  %1178 = vmatpush1.msra.mxu0 %v295
  %1179 = vmatprep.subr.mxu0 0.0
  %1180 = vmatpush2.msra.mxu0 %v326
  %1181 = vmatprep.subr.mxu0 0.0
  %1182 = vmatpush2.msra.mxu0 %v325
  %1183 = vmatprep.subr.mxu0 0.0
  %1184 = vmatpush2.msra.mxu0 %v324
  %1185 = vmatprep.subr.mxu0 0.0
  %1186 = vmatpush2.msra.mxu0 %v323
  %1187 = vmatprep.subr.mxu0 0.0
  %1188 = vmatpush2.msra.mxu0 %v322
  %1189 = vmatprep.subr.mxu0 0.0
  %1190 = vmatpush2.msra.mxu0 %v321
  %1191 = vmatprep.subr.mxu0 0.0
  %1192 = vmatpush2.msra.mxu0 %v320
  %1193 = vmatprep.subr.mxu0 0.0
  %1194 = vmatpush2.msra.mxu0 %v319
  %1195 = vmatprep.subr.mxu0 0.0
  %1196 = vmatpush2.msra.mxu0 %v318
  %1197 = vmatprep.subr.mxu0 0.0
  %1198 = vmatpush2.msra.mxu0 %v317
  %1199 = vmatprep.subr.mxu0 0.0
  %1200 = vmatpush2.msra.mxu0 %v316
  %1201 = vmatprep.subr.mxu0 0.0
  %1202 = vmatpush2.msra.mxu0 %v315
  %1203 = vmatprep.subr.mxu0 0.0
  %1204 = vmatpush2.msra.mxu0 %v314
  %1205 = vmatprep.subr.mxu0 0.0
  %1206 = vmatpush2.msra.mxu0 %v313
  %1207 = vmatprep.subr.mxu0 0.0
  %1208 = vmatpush2.msra.mxu0 %v312
  %1209 = vmatprep.subr.mxu0 0.0
  %1210 = vmatpush2.msra.mxu0 %v311
  %1211 = vmatprep.mubr.f32.mxu0 %v536
  %1212 = vmatmul.mubr.f32.gmra.mxu0 %v528
  %v1213 = vpop.f32.mrf.mxu0
  %v1214 = vadd.f32 %v1144, %v1213
  %v1215 = vpop.f32.mrf.mxu0
  %1216 = vdwg.mxu0
  %1217 = vmatprep.subr.mxu0 0.0
  %1218 = vmatpush1.msra.mxu0 %v342
  %1219 = vmatprep.subr.mxu0 0.0
  %1220 = vmatpush1.msra.mxu0 %v341
  %1221 = vmatprep.subr.mxu0 0.0
  %1222 = vmatpush1.msra.mxu0 %v340
  %1223 = vmatprep.subr.mxu0 0.0
  %1224 = vmatpush1.msra.mxu0 %v339
  %1225 = vmatprep.subr.mxu0 0.0
  %1226 = vmatpush1.msra.mxu0 %v338
  %1227 = vmatprep.subr.mxu0 0.0
  %1228 = vmatpush1.msra.mxu0 %v337
  %1229 = vmatprep.subr.mxu0 0.0
  %1230 = vmatpush1.msra.mxu0 %v336
  %1231 = vmatprep.subr.mxu0 0.0
  %1232 = vmatpush1.msra.mxu0 %v335
  %1233 = vmatprep.subr.mxu0 0.0
  %1234 = vmatpush1.msra.mxu0 %v334
  %1235 = vmatprep.subr.mxu0 0.0
  %1236 = vmatpush1.msra.mxu0 %v333
  %1237 = vmatprep.subr.mxu0 0.0
  %1238 = vmatpush1.msra.mxu0 %v332
  %1239 = vmatprep.subr.mxu0 0.0
  %1240 = vmatpush1.msra.mxu0 %v331
  %1241 = vmatprep.subr.mxu0 0.0
  %1242 = vmatpush1.msra.mxu0 %v330
  %1243 = vmatprep.subr.mxu0 0.0
  %1244 = vmatpush1.msra.mxu0 %v329
  %1245 = vmatprep.subr.mxu0 0.0
  %1246 = vmatpush1.msra.mxu0 %v328
  %1247 = vmatprep.subr.mxu0 0.0
  %1248 = vmatpush1.msra.mxu0 %v327
  %1249 = vmatprep.subr.mxu0 0.0
  %1250 = vmatpush2.msra.mxu0 %v358
  %1251 = vmatprep.subr.mxu0 0.0
  %1252 = vmatpush2.msra.mxu0 %v357
  %1253 = vmatprep.subr.mxu0 0.0
  %1254 = vmatpush2.msra.mxu0 %v356
  %1255 = vmatprep.subr.mxu0 0.0
  %1256 = vmatpush2.msra.mxu0 %v355
  %1257 = vmatprep.subr.mxu0 0.0
  %1258 = vmatpush2.msra.mxu0 %v354
  %1259 = vmatprep.subr.mxu0 0.0
  %1260 = vmatpush2.msra.mxu0 %v353
  %1261 = vmatprep.subr.mxu0 0.0
  %1262 = vmatpush2.msra.mxu0 %v352
  %1263 = vmatprep.subr.mxu0 0.0
  %1264 = vmatpush2.msra.mxu0 %v351
  %1265 = vmatprep.subr.mxu0 0.0
  %1266 = vmatpush2.msra.mxu0 %v350
  %1267 = vmatprep.subr.mxu0 0.0
  %1268 = vmatpush2.msra.mxu0 %v349
  %1269 = vmatprep.subr.mxu0 0.0
  %1270 = vmatpush2.msra.mxu0 %v348
  %1271 = vmatprep.subr.mxu0 0.0
  %1272 = vmatpush2.msra.mxu0 %v347
  %1273 = vmatprep.subr.mxu0 0.0
  %1274 = vmatpush2.msra.mxu0 %v346
  %1275 = vmatprep.subr.mxu0 0.0
  %1276 = vmatpush2.msra.mxu0 %v345
  %1277 = vmatprep.subr.mxu0 0.0
  %1278 = vmatpush2.msra.mxu0 %v344
  %1279 = vmatprep.subr.mxu0 0.0
  %1280 = vmatpush2.msra.mxu0 %v343
  %1281 = vmatprep.mubr.f32.mxu0 %v537
  %1282 = vmatmul.mubr.f32.gmra.mxu0 %v535
  %v1283 = vpop.f32.mrf.mxu0
  %v1284 = vadd.f32 %v1214, %v1283
  %v1285 = vpop.f32.mrf.mxu0
  %1286 = vdwg.mxu0
  %1287 = vmatprep.subr.mxu0 0.0
  %1288 = vmatpush1.msra.mxu0 %v374
  %1289 = vmatprep.subr.mxu0 0.0
  %1290 = vmatpush1.msra.mxu0 %v373
  %1291 = vmatprep.subr.mxu0 0.0
  %1292 = vmatpush1.msra.mxu0 %v372
  %1293 = vmatprep.subr.mxu0 0.0
  %1294 = vmatpush1.msra.mxu0 %v371
  %1295 = vmatprep.subr.mxu0 0.0
  %1296 = vmatpush1.msra.mxu0 %v370
  %1297 = vmatprep.subr.mxu0 0.0
  %1298 = vmatpush1.msra.mxu0 %v369
  %1299 = vmatprep.subr.mxu0 0.0
  %1300 = vmatpush1.msra.mxu0 %v368
  %1301 = vmatprep.subr.mxu0 0.0
  %1302 = vmatpush1.msra.mxu0 %v367
  %1303 = vmatprep.subr.mxu0 0.0
  %1304 = vmatpush1.msra.mxu0 %v366
  %1305 = vmatprep.subr.mxu0 0.0
  %1306 = vmatpush1.msra.mxu0 %v365
  %1307 = vmatprep.subr.mxu0 0.0
  %1308 = vmatpush1.msra.mxu0 %v364
  %1309 = vmatprep.subr.mxu0 0.0
  %1310 = vmatpush1.msra.mxu0 %v363
  %1311 = vmatprep.subr.mxu0 0.0
  %1312 = vmatpush1.msra.mxu0 %v362
  %1313 = vmatprep.subr.mxu0 0.0
  %1314 = vmatpush1.msra.mxu0 %v361
  %1315 = vmatprep.subr.mxu0 0.0
  %1316 = vmatpush1.msra.mxu0 %v360
  %1317 = vmatprep.subr.mxu0 0.0
  %1318 = vmatpush1.msra.mxu0 %v359
  %1319 = vmatprep.subr.mxu0 0.0
  %1320 = vmatpush2.msra.mxu0 %v390
  %1321 = vmatprep.subr.mxu0 0.0
  %1322 = vmatpush2.msra.mxu0 %v389
  %1323 = vmatprep.subr.mxu0 0.0
  %1324 = vmatpush2.msra.mxu0 %v388
  %1325 = vmatprep.subr.mxu0 0.0
  %1326 = vmatpush2.msra.mxu0 %v387
  %1327 = vmatprep.subr.mxu0 0.0
  %1328 = vmatpush2.msra.mxu0 %v386
  %1329 = vmatprep.subr.mxu0 0.0
  %1330 = vmatpush2.msra.mxu0 %v385
  %1331 = vmatprep.subr.mxu0 0.0
  %1332 = vmatpush2.msra.mxu0 %v384
  %1333 = vmatprep.subr.mxu0 0.0
  %1334 = vmatpush2.msra.mxu0 %v383
  %1335 = vmatprep.subr.mxu0 0.0
  %1336 = vmatpush2.msra.mxu0 %v382
  %1337 = vmatprep.subr.mxu0 0.0
  %1338 = vmatpush2.msra.mxu0 %v381
  %1339 = vmatprep.subr.mxu0 0.0
  %1340 = vmatpush2.msra.mxu0 %v380
  %1341 = vmatprep.subr.mxu0 0.0
  %1342 = vmatpush2.msra.mxu0 %v379
  %1343 = vmatprep.subr.mxu0 0.0
  %1344 = vmatpush2.msra.mxu0 %v378
  %1345 = vmatprep.subr.mxu0 0.0
  %1346 = vmatpush2.msra.mxu0 %v377
  %1347 = vmatprep.subr.mxu0 0.0
  %1348 = vmatpush2.msra.mxu0 %v376
  %1349 = vmatprep.subr.mxu0 0.0
  %1350 = vmatpush2.msra.mxu0 %v375
  %1351 = vmatprep.mubr.f32.mxu0 %v553
  %1352 = vmatmul.mubr.f32.gmra.mxu0 %v545
  %v1353 = vpop.f32.mrf.mxu0
  %v1354 = vadd.f32 %v1284, %v1353
  %v1355 = vpop.f32.mrf.mxu0
  %1356 = vdwg.mxu0
  %1357 = vmatprep.subr.mxu0 0.0
  %1358 = vmatpush1.msra.mxu0 %v406
  %1359 = vmatprep.subr.mxu0 0.0
  %1360 = vmatpush1.msra.mxu0 %v405
  %1361 = vmatprep.subr.mxu0 0.0
  %1362 = vmatpush1.msra.mxu0 %v404
  %1363 = vmatprep.subr.mxu0 0.0
  %1364 = vmatpush1.msra.mxu0 %v403
  %1365 = vmatprep.subr.mxu0 0.0
  %1366 = vmatpush1.msra.mxu0 %v402
  %1367 = vmatprep.subr.mxu0 0.0
  %1368 = vmatpush1.msra.mxu0 %v401
  %1369 = vmatprep.subr.mxu0 0.0
  %1370 = vmatpush1.msra.mxu0 %v400
  %1371 = vmatprep.subr.mxu0 0.0
  %1372 = vmatpush1.msra.mxu0 %v399
  %1373 = vmatprep.subr.mxu0 0.0
  %1374 = vmatpush1.msra.mxu0 %v398
  %1375 = vmatprep.subr.mxu0 0.0
  %1376 = vmatpush1.msra.mxu0 %v397
  %1377 = vmatprep.subr.mxu0 0.0
  %1378 = vmatpush1.msra.mxu0 %v396
  %1379 = vmatprep.subr.mxu0 0.0
  %1380 = vmatpush1.msra.mxu0 %v395
  %1381 = vmatprep.subr.mxu0 0.0
  %1382 = vmatpush1.msra.mxu0 %v394
  %1383 = vmatprep.subr.mxu0 0.0
  %1384 = vmatpush1.msra.mxu0 %v393
  %1385 = vmatprep.subr.mxu0 0.0
  %1386 = vmatpush1.msra.mxu0 %v392
  %1387 = vmatprep.subr.mxu0 0.0
  %1388 = vmatpush1.msra.mxu0 %v391
  %1389 = vmatprep.subr.mxu0 0.0
  %1390 = vmatpush2.msra.mxu0 %v422
  %1391 = vmatprep.subr.mxu0 0.0
  %1392 = vmatpush2.msra.mxu0 %v421
  %1393 = vmatprep.subr.mxu0 0.0
  %1394 = vmatpush2.msra.mxu0 %v420
  %1395 = vmatprep.subr.mxu0 0.0
  %1396 = vmatpush2.msra.mxu0 %v419
  %1397 = vmatprep.subr.mxu0 0.0
  %1398 = vmatpush2.msra.mxu0 %v418
  %1399 = vmatprep.subr.mxu0 0.0
  %1400 = vmatpush2.msra.mxu0 %v417
  %1401 = vmatprep.subr.mxu0 0.0
  %1402 = vmatpush2.msra.mxu0 %v416
  %1403 = vmatprep.subr.mxu0 0.0
  %1404 = vmatpush2.msra.mxu0 %v415
  %1405 = vmatprep.subr.mxu0 0.0
  %1406 = vmatpush2.msra.mxu0 %v414
  %1407 = vmatprep.subr.mxu0 0.0
  %1408 = vmatpush2.msra.mxu0 %v413
  %1409 = vmatprep.subr.mxu0 0.0
  %1410 = vmatpush2.msra.mxu0 %v412
  %1411 = vmatprep.subr.mxu0 0.0
  %1412 = vmatpush2.msra.mxu0 %v411
  %1413 = vmatprep.subr.mxu0 0.0
  %1414 = vmatpush2.msra.mxu0 %v410
  %1415 = vmatprep.subr.mxu0 0.0
  %1416 = vmatpush2.msra.mxu0 %v409
  %1417 = vmatprep.subr.mxu0 0.0
  %1418 = vmatpush2.msra.mxu0 %v408
  %1419 = vmatprep.subr.mxu0 0.0
  %1420 = vmatpush2.msra.mxu0 %v407
  %1421 = vmatprep.mubr.f32.mxu0 %v554
  %1422 = vmatmul.mubr.f32.gmra.mxu0 %v552
  %v1423 = vpop.f32.mrf.mxu0
  %v1424 = vadd.f32 %v1354, %v1423
  %v1425 = vpop.f32.mrf.mxu0
  %1426 = vdwg.mxu0
  %1427 = vmatprep.subr.mxu0 0.0
  %1428 = vmatpush1.msra.mxu0 %v438
  %1429 = vmatprep.subr.mxu0 0.0
  %1430 = vmatpush1.msra.mxu0 %v437
  %1431 = vmatprep.subr.mxu0 0.0
  %1432 = vmatpush1.msra.mxu0 %v436
  %1433 = vmatprep.subr.mxu0 0.0
  %1434 = vmatpush1.msra.mxu0 %v435
  %1435 = vmatprep.subr.mxu0 0.0
  %1436 = vmatpush1.msra.mxu0 %v434
  %1437 = vmatprep.subr.mxu0 0.0
  %1438 = vmatpush1.msra.mxu0 %v433
  %1439 = vmatprep.subr.mxu0 0.0
  %1440 = vmatpush1.msra.mxu0 %v432
  %1441 = vmatprep.subr.mxu0 0.0
  %1442 = vmatpush1.msra.mxu0 %v431
  %1443 = vmatprep.subr.mxu0 0.0
  %1444 = vmatpush1.msra.mxu0 %v430
  %1445 = vmatprep.subr.mxu0 0.0
  %1446 = vmatpush1.msra.mxu0 %v429
  %1447 = vmatprep.subr.mxu0 0.0
  %1448 = vmatpush1.msra.mxu0 %v428
  %1449 = vmatprep.subr.mxu0 0.0
  %1450 = vmatpush1.msra.mxu0 %v427
  %1451 = vmatprep.subr.mxu0 0.0
  %1452 = vmatpush1.msra.mxu0 %v426
  %1453 = vmatprep.subr.mxu0 0.0
  %1454 = vmatpush1.msra.mxu0 %v425
  %1455 = vmatprep.subr.mxu0 0.0
  %1456 = vmatpush1.msra.mxu0 %v424
  %1457 = vmatprep.subr.mxu0 0.0
  %1458 = vmatpush1.msra.mxu0 %v423
  %1459 = vmatprep.subr.mxu0 0.0
  %1460 = vmatpush2.msra.mxu0 0.0
  %1461 = vmatprep.subr.mxu0 0.0
  %1462 = vmatpush2.msra.mxu0 0.0
  %1463 = vmatprep.subr.mxu0 0.0
  %1464 = vmatpush2.msra.mxu0 0.0
  %1465 = vmatprep.subr.mxu0 0.0
  %1466 = vmatpush2.msra.mxu0 0.0
  %1467 = vmatprep.subr.mxu0 0.0
  %1468 = vmatpush2.msra.mxu0 0.0
  %1469 = vmatprep.subr.mxu0 0.0
  %1470 = vmatpush2.msra.mxu0 0.0
  %1471 = vmatprep.subr.mxu0 0.0
  %1472 = vmatpush2.msra.mxu0 0.0
  %1473 = vmatprep.subr.mxu0 0.0
  %1474 = vmatpush2.msra.mxu0 0.0
  %1475 = vmatprep.subr.mxu0 0.0
  %1476 = vmatpush2.msra.mxu0 0.0
  %1477 = vmatprep.subr.mxu0 0.0
  %1478 = vmatpush2.msra.mxu0 0.0
  %1479 = vmatprep.subr.mxu0 0.0
  %1480 = vmatpush2.msra.mxu0 0.0
  %1481 = vmatprep.subr.mxu0 0.0
  %1482 = vmatpush2.msra.mxu0 0.0
  %1483 = vmatprep.subr.mxu0 0.0
  %1484 = vmatpush2.msra.mxu0 0.0
  %1485 = vmatprep.subr.mxu0 0.0
  %1486 = vmatpush2.msra.mxu0 0.0
  %1487 = vmatprep.subr.mxu0 0.0
  %1488 = vmatpush2.msra.mxu0 0.0
  %1489 = vmatprep.subr.mxu0 0.0
  %1490 = vmatpush2.msra.mxu0 0.0
  %1491 = vmatprep.mubr.f32.mxu0 0.0
  %1492 = vmatmul.mubr.f32.gmra.mxu0 %v561
  %v1493 = vpop.f32.mrf.mxu0
  %v1494 = vadd.f32 %v1424, %v1493
  %v1495 = vpop.f32.mrf.mxu0
  %1496 = vdwg.mxu0
  %v1497 = vmax.f32 %v1494, 0.0
  %v1498 = vld [vmem:[%s3] sm:$0xff]
  %v1499 = vld [vmem:[%s3 + $0x8] sm:$0xff]
  %v1500 = vld [vmem:[%s3 + $0x10] sm:$0xff]
  %v1501 = vld [vmem:[%s3 + $0x18] sm:$0xff]
  %v1502 = vld [vmem:[%s3 + $0x20] sm:$0xff]
  %v1503 = vld [vmem:[%s3 + $0x28] sm:$0xff]
  %v1504 = vld [vmem:[%s3 + $0x30] sm:$0xff]
  %v1505 = vld [vmem:[%s3 + $0x38] sm:$0xff]
  %v1506 = vld [vmem:[%s3 + $0x40] sm:$0xff]
  %v1507 = vld [vmem:[%s3 + $0x48] sm:$0xff]
  %v1508 = vld [vmem:[%s3 + $0x50] sm:$0xff]
  %v1509 = vld [vmem:[%s3 + $0x58] sm:$0xff]
  %v1510 = vld [vmem:[%s3 + $0x60] sm:$0xff]
  %v1511 = vld [vmem:[%s3 + $0x68] sm:$0xff]
  %v1512 = vld [vmem:[%s3 + $0x70] sm:$0xff]
  %v1513 = vld [vmem:[%s3 + $0x78] sm:$0xff]
  %s1514 = scalar_lea.vmem %s0, 50
  %v1515 = vld [vmem:[%s1514] sm:$0xff]
  %v1516 = vld [vmem:[%s1514 + $0x8] sm:$0xff]
  %v1517 = vld [vmem:[%s1514 + $0x10] sm:$0xff]
  %v1518 = vld [vmem:[%s1514 + $0x18] sm:$0xff]
  %v1519 = vld [vmem:[%s1514 + $0x20] sm:$0xff]
  %v1520 = vld [vmem:[%s1514 + $0x28] sm:$0xff]
  %v1521 = vld [vmem:[%s1514 + $0x30] sm:$0x3]
  %v1529 = vcombine.high %v1515, %v1515
  %v1531 = vunpack.c.l.s4 1983009808
  %v1532 = vunpack.c.0.s8 %v1531
  %v1533 = vlaneseq
  %v1534 = vshrl.u32 %v1533, 7
  %v1535 = vsub.s32 %v1532, %v1534
  %v1536 = vrot.slane %v1515, %v1535
  %v1538 = vunpack.c.l.s4 1983009808
  %v1539 = vunpack.c.0.s8 %v1538
  %v1540 = vlaneseq
  %v1541 = vshrl.u32 %v1540, 7
  %v1542 = vsub.s32 %v1539, %v1541
  %v1543 = vrot.slane %v1529, %v1542
  %v1544 = vcombine.high %v1536, %v1536
  %v1545 = vcombine.high %v1543, %v1543
  %v1546 = vcombine.high %v1516, %v1516
  %v1548 = vunpack.c.l.s4 1983009808
  %v1549 = vunpack.c.0.s8 %v1548
  %v1550 = vlaneseq
  %v1551 = vshrl.u32 %v1550, 7
  %v1552 = vsub.s32 %v1549, %v1551
  %v1553 = vrot.slane %v1516, %v1552
  %v1555 = vunpack.c.l.s4 1983009808
  %v1556 = vunpack.c.0.s8 %v1555
  %v1557 = vlaneseq
  %v1558 = vshrl.u32 %v1557, 7
  %v1559 = vsub.s32 %v1556, %v1558
  %v1560 = vrot.slane %v1546, %v1559
  %v1561 = vcombine.high %v1553, %v1553
  %v1562 = vcombine.high %v1560, %v1560
  %v1563 = vcombine.high %v1517, %v1517
  %v1565 = vunpack.c.l.s4 1983009808
  %v1566 = vunpack.c.0.s8 %v1565
  %v1567 = vlaneseq
  %v1568 = vshrl.u32 %v1567, 7
  %v1569 = vsub.s32 %v1566, %v1568
  %v1570 = vrot.slane %v1517, %v1569
  %v1572 = vunpack.c.l.s4 1983009808
  %v1573 = vunpack.c.0.s8 %v1572
  %v1574 = vlaneseq
  %v1575 = vshrl.u32 %v1574, 7
  %v1576 = vsub.s32 %v1573, %v1575
  %v1577 = vrot.slane %v1563, %v1576
  %v1578 = vcombine.high %v1570, %v1570
  %v1579 = vcombine.high %v1577, %v1577
  %v1580 = vcombine.high %v1518, %v1518
  %v1582 = vunpack.c.l.s4 1983009808
  %v1583 = vunpack.c.0.s8 %v1582
  %v1584 = vlaneseq
  %v1585 = vshrl.u32 %v1584, 7
  %v1586 = vsub.s32 %v1583, %v1585
  %v1587 = vrot.slane %v1518, %v1586
  %v1589 = vunpack.c.l.s4 1983009808
  %v1590 = vunpack.c.0.s8 %v1589
  %v1591 = vlaneseq
  %v1592 = vshrl.u32 %v1591, 7
  %v1593 = vsub.s32 %v1590, %v1592
  %v1594 = vrot.slane %v1580, %v1593
  %v1595 = vcombine.high %v1587, %v1587
  %v1596 = vcombine.high %v1594, %v1594
  %v1597 = vcombine.high %v1519, %v1519
  %v1599 = vunpack.c.l.s4 1983009808
  %v1600 = vunpack.c.0.s8 %v1599
  %v1601 = vlaneseq
  %v1602 = vshrl.u32 %v1601, 7
  %v1603 = vsub.s32 %v1600, %v1602
  %v1604 = vrot.slane %v1519, %v1603
  %v1606 = vunpack.c.l.s4 1983009808
  %v1607 = vunpack.c.0.s8 %v1606
  %v1608 = vlaneseq
  %v1609 = vshrl.u32 %v1608, 7
  %v1610 = vsub.s32 %v1607, %v1609
  %v1611 = vrot.slane %v1597, %v1610
  %v1612 = vcombine.high %v1604, %v1604
  %v1613 = vcombine.high %v1611, %v1611
  %v1614 = vcombine.high %v1520, %v1520
  %v1616 = vunpack.c.l.s4 1983009808
  %v1617 = vunpack.c.0.s8 %v1616
  %v1618 = vlaneseq
  %v1619 = vshrl.u32 %v1618, 7
  %v1620 = vsub.s32 %v1617, %v1619
  %v1621 = vrot.slane %v1520, %v1620
  %v1623 = vunpack.c.l.s4 1983009808
  %v1624 = vunpack.c.0.s8 %v1623
  %v1625 = vlaneseq
  %v1626 = vshrl.u32 %v1625, 7
  %v1627 = vsub.s32 %v1624, %v1626
  %v1628 = vrot.slane %v1614, %v1627
  %v1629 = vcombine.high %v1621, %v1621
  %v1630 = vcombine.high %v1628, %v1628
  %v1632 = vunpack.c.l.s4 1983009808
  %v1633 = vunpack.c.0.s8 %v1632
  %v1634 = vlaneseq
  %v1635 = vshrl.u32 %v1634, 7
  %v1636 = vsub.s32 %v1633, %v1635
  %v1637 = vrot.slane %v1521, %v1636
  %1663 = vmatprep.subr.mxu0 0.0
  %1664 = vmatpush1.msra.mxu0 %v54
  %1665 = vmatprep.subr.mxu0 0.0
  %1666 = vmatpush1.msra.mxu0 %v53
  %1667 = vmatprep.subr.mxu0 0.0
  %1668 = vmatpush1.msra.mxu0 %v52
  %1669 = vmatprep.subr.mxu0 0.0
  %1670 = vmatpush1.msra.mxu0 %v51
  %1671 = vmatprep.subr.mxu0 0.0
  %1672 = vmatpush1.msra.mxu0 %v50
  %1673 = vmatprep.subr.mxu0 0.0
  %1674 = vmatpush1.msra.mxu0 %v49
  %1675 = vmatprep.subr.mxu0 0.0
  %1676 = vmatpush1.msra.mxu0 %v48
  %1677 = vmatprep.subr.mxu0 0.0
  %1678 = vmatpush1.msra.mxu0 %v47
  %1679 = vmatprep.subr.mxu0 0.0
  %1680 = vmatpush1.msra.mxu0 %v46
  %1681 = vmatprep.subr.mxu0 0.0
  %1682 = vmatpush1.msra.mxu0 %v45
  %1683 = vmatprep.subr.mxu0 0.0
  %1684 = vmatpush1.msra.mxu0 %v44
  %1685 = vmatprep.subr.mxu0 0.0
  %1686 = vmatpush1.msra.mxu0 %v43
  %1687 = vmatprep.subr.mxu0 0.0
  %1688 = vmatpush1.msra.mxu0 %v42
  %1689 = vmatprep.subr.mxu0 0.0
  %1690 = vmatpush1.msra.mxu0 %v41
  %1691 = vmatprep.subr.mxu0 0.0
  %1692 = vmatpush1.msra.mxu0 %v40
  %1693 = vmatprep.subr.mxu0 0.0
  %1694 = vmatpush1.msra.mxu0 %v39
  %1695 = vmatprep.subr.mxu0 0.0
  %1696 = vmatpush2.msra.mxu0 %v70
  %1697 = vmatprep.subr.mxu0 0.0
  %1698 = vmatpush2.msra.mxu0 %v69
  %1699 = vmatprep.subr.mxu0 0.0
  %1700 = vmatpush2.msra.mxu0 %v68
  %1701 = vmatprep.subr.mxu0 0.0
  %1702 = vmatpush2.msra.mxu0 %v67
  %1703 = vmatprep.subr.mxu0 0.0
  %1704 = vmatpush2.msra.mxu0 %v66
  %1705 = vmatprep.subr.mxu0 0.0
  %1706 = vmatpush2.msra.mxu0 %v65
  %1707 = vmatprep.subr.mxu0 0.0
  %1708 = vmatpush2.msra.mxu0 %v64
  %1709 = vmatprep.subr.mxu0 0.0
  %1710 = vmatpush2.msra.mxu0 %v63
  %1711 = vmatprep.subr.mxu0 0.0
  %1712 = vmatpush2.msra.mxu0 %v62
  %1713 = vmatprep.subr.mxu0 0.0
  %1714 = vmatpush2.msra.mxu0 %v61
  %1715 = vmatprep.subr.mxu0 0.0
  %1716 = vmatpush2.msra.mxu0 %v60
  %1717 = vmatprep.subr.mxu0 0.0
  %1718 = vmatpush2.msra.mxu0 %v59
  %1719 = vmatprep.subr.mxu0 0.0
  %1720 = vmatpush2.msra.mxu0 %v58
  %1721 = vmatprep.subr.mxu0 0.0
  %1722 = vmatpush2.msra.mxu0 %v57
  %1723 = vmatprep.subr.mxu0 0.0
  %1724 = vmatpush2.msra.mxu0 %v56
  %1725 = vmatprep.subr.mxu0 0.0
  %1726 = vmatpush2.msra.mxu0 %v55
  %1727 = vmatprep.mubr.f32.mxu0 %v1544
  %1728 = vmatmul.mubr.f32.gmra.mxu0 %v1536
  %v1729 = vpop.f32.mrf.mxu0
  %v1730 = vadd.f32 %v444, %v1729
  %v1731 = vpop.f32.mrf.mxu0
  %1732 = vdwg.mxu0
  %1733 = vmatprep.subr.mxu0 0.0
  %1734 = vmatpush1.msra.mxu0 %v86
  %1735 = vmatprep.subr.mxu0 0.0
  %1736 = vmatpush1.msra.mxu0 %v85
  %1737 = vmatprep.subr.mxu0 0.0
  %1738 = vmatpush1.msra.mxu0 %v84
  %1739 = vmatprep.subr.mxu0 0.0
  %1740 = vmatpush1.msra.mxu0 %v83
  %1741 = vmatprep.subr.mxu0 0.0
  %1742 = vmatpush1.msra.mxu0 %v82
  %1743 = vmatprep.subr.mxu0 0.0
  %1744 = vmatpush1.msra.mxu0 %v81
  %1745 = vmatprep.subr.mxu0 0.0
  %1746 = vmatpush1.msra.mxu0 %v80
  %1747 = vmatprep.subr.mxu0 0.0
  %1748 = vmatpush1.msra.mxu0 %v79
  %1749 = vmatprep.subr.mxu0 0.0
  %1750 = vmatpush1.msra.mxu0 %v78
  %1751 = vmatprep.subr.mxu0 0.0
  %1752 = vmatpush1.msra.mxu0 %v77
  %1753 = vmatprep.subr.mxu0 0.0
  %1754 = vmatpush1.msra.mxu0 %v76
  %1755 = vmatprep.subr.mxu0 0.0
  %1756 = vmatpush1.msra.mxu0 %v75
  %1757 = vmatprep.subr.mxu0 0.0
  %1758 = vmatpush1.msra.mxu0 %v74
  %1759 = vmatprep.subr.mxu0 0.0
  %1760 = vmatpush1.msra.mxu0 %v73
  %1761 = vmatprep.subr.mxu0 0.0
  %1762 = vmatpush1.msra.mxu0 %v72
  %1763 = vmatprep.subr.mxu0 0.0
  %1764 = vmatpush1.msra.mxu0 %v71
  %1765 = vmatprep.subr.mxu0 0.0
  %1766 = vmatpush2.msra.mxu0 %v102
  %1767 = vmatprep.subr.mxu0 0.0
  %1768 = vmatpush2.msra.mxu0 %v101
  %1769 = vmatprep.subr.mxu0 0.0
  %1770 = vmatpush2.msra.mxu0 %v100
  %1771 = vmatprep.subr.mxu0 0.0
  %1772 = vmatpush2.msra.mxu0 %v99
  %1773 = vmatprep.subr.mxu0 0.0
  %1774 = vmatpush2.msra.mxu0 %v98
  %1775 = vmatprep.subr.mxu0 0.0
  %1776 = vmatpush2.msra.mxu0 %v97
  %1777 = vmatprep.subr.mxu0 0.0
  %1778 = vmatpush2.msra.mxu0 %v96
  %1779 = vmatprep.subr.mxu0 0.0
  %1780 = vmatpush2.msra.mxu0 %v95
  %1781 = vmatprep.subr.mxu0 0.0
  %1782 = vmatpush2.msra.mxu0 %v94
  %1783 = vmatprep.subr.mxu0 0.0
  %1784 = vmatpush2.msra.mxu0 %v93
  %1785 = vmatprep.subr.mxu0 0.0
  %1786 = vmatpush2.msra.mxu0 %v92
  %1787 = vmatprep.subr.mxu0 0.0
  %1788 = vmatpush2.msra.mxu0 %v91
  %1789 = vmatprep.subr.mxu0 0.0
  %1790 = vmatpush2.msra.mxu0 %v90
  %1791 = vmatprep.subr.mxu0 0.0
  %1792 = vmatpush2.msra.mxu0 %v89
  %1793 = vmatprep.subr.mxu0 0.0
  %1794 = vmatpush2.msra.mxu0 %v88
  %1795 = vmatprep.subr.mxu0 0.0
  %1796 = vmatpush2.msra.mxu0 %v87
  %1797 = vmatprep.mubr.f32.mxu0 %v1545
  %1798 = vmatmul.mubr.f32.gmra.mxu0 %v1543
  %v1799 = vpop.f32.mrf.mxu0
  %v1800 = vadd.f32 %v1730, %v1799
  %v1801 = vpop.f32.mrf.mxu0
  %1802 = vdwg.mxu0
  %1803 = vmatprep.subr.mxu0 0.0
  %1804 = vmatpush1.msra.mxu0 %v118
  %1805 = vmatprep.subr.mxu0 0.0
  %1806 = vmatpush1.msra.mxu0 %v117
  %1807 = vmatprep.subr.mxu0 0.0
  %1808 = vmatpush1.msra.mxu0 %v116
  %1809 = vmatprep.subr.mxu0 0.0
  %1810 = vmatpush1.msra.mxu0 %v115
  %1811 = vmatprep.subr.mxu0 0.0
  %1812 = vmatpush1.msra.mxu0 %v114
  %1813 = vmatprep.subr.mxu0 0.0
  %1814 = vmatpush1.msra.mxu0 %v113
  %1815 = vmatprep.subr.mxu0 0.0
  %1816 = vmatpush1.msra.mxu0 %v112
  %1817 = vmatprep.subr.mxu0 0.0
  %1818 = vmatpush1.msra.mxu0 %v111
  %1819 = vmatprep.subr.mxu0 0.0
  %1820 = vmatpush1.msra.mxu0 %v110
  %1821 = vmatprep.subr.mxu0 0.0
  %1822 = vmatpush1.msra.mxu0 %v109
  %1823 = vmatprep.subr.mxu0 0.0
  %1824 = vmatpush1.msra.mxu0 %v108
  %1825 = vmatprep.subr.mxu0 0.0
  %1826 = vmatpush1.msra.mxu0 %v107
  %1827 = vmatprep.subr.mxu0 0.0
  %1828 = vmatpush1.msra.mxu0 %v106
  %1829 = vmatprep.subr.mxu0 0.0
  %1830 = vmatpush1.msra.mxu0 %v105
  %1831 = vmatprep.subr.mxu0 0.0
  %1832 = vmatpush1.msra.mxu0 %v104
  %1833 = vmatprep.subr.mxu0 0.0
  %1834 = vmatpush1.msra.mxu0 %v103
  %1835 = vmatprep.subr.mxu0 0.0
  %1836 = vmatpush2.msra.mxu0 %v134
  %1837 = vmatprep.subr.mxu0 0.0
  %1838 = vmatpush2.msra.mxu0 %v133
  %1839 = vmatprep.subr.mxu0 0.0
  %1840 = vmatpush2.msra.mxu0 %v132
  %1841 = vmatprep.subr.mxu0 0.0
  %1842 = vmatpush2.msra.mxu0 %v131
  %1843 = vmatprep.subr.mxu0 0.0
  %1844 = vmatpush2.msra.mxu0 %v130
  %1845 = vmatprep.subr.mxu0 0.0
  %1846 = vmatpush2.msra.mxu0 %v129
  %1847 = vmatprep.subr.mxu0 0.0
  %1848 = vmatpush2.msra.mxu0 %v128
  %1849 = vmatprep.subr.mxu0 0.0
  %1850 = vmatpush2.msra.mxu0 %v127
  %1851 = vmatprep.subr.mxu0 0.0
  %1852 = vmatpush2.msra.mxu0 %v126
  %1853 = vmatprep.subr.mxu0 0.0
  %1854 = vmatpush2.msra.mxu0 %v125
  %1855 = vmatprep.subr.mxu0 0.0
  %1856 = vmatpush2.msra.mxu0 %v124
  %1857 = vmatprep.subr.mxu0 0.0
  %1858 = vmatpush2.msra.mxu0 %v123
  %1859 = vmatprep.subr.mxu0 0.0
  %1860 = vmatpush2.msra.mxu0 %v122
  %1861 = vmatprep.subr.mxu0 0.0
  %1862 = vmatpush2.msra.mxu0 %v121
  %1863 = vmatprep.subr.mxu0 0.0
  %1864 = vmatpush2.msra.mxu0 %v120
  %1865 = vmatprep.subr.mxu0 0.0
  %1866 = vmatpush2.msra.mxu0 %v119
  %1867 = vmatprep.mubr.f32.mxu0 %v1561
  %1868 = vmatmul.mubr.f32.gmra.mxu0 %v1553
  %v1869 = vpop.f32.mrf.mxu0
  %v1870 = vadd.f32 %v1800, %v1869
  %v1871 = vpop.f32.mrf.mxu0
  %1872 = vdwg.mxu0
  %1873 = vmatprep.subr.mxu0 0.0
  %1874 = vmatpush1.msra.mxu0 %v150
  %1875 = vmatprep.subr.mxu0 0.0
  %1876 = vmatpush1.msra.mxu0 %v149
  %1877 = vmatprep.subr.mxu0 0.0
  %1878 = vmatpush1.msra.mxu0 %v148
  %1879 = vmatprep.subr.mxu0 0.0
  %1880 = vmatpush1.msra.mxu0 %v147
  %1881 = vmatprep.subr.mxu0 0.0
  %1882 = vmatpush1.msra.mxu0 %v146
  %1883 = vmatprep.subr.mxu0 0.0
  %1884 = vmatpush1.msra.mxu0 %v145
  %1885 = vmatprep.subr.mxu0 0.0
  %1886 = vmatpush1.msra.mxu0 %v144
  %1887 = vmatprep.subr.mxu0 0.0
  %1888 = vmatpush1.msra.mxu0 %v143
  %1889 = vmatprep.subr.mxu0 0.0
  %1890 = vmatpush1.msra.mxu0 %v142
  %1891 = vmatprep.subr.mxu0 0.0
  %1892 = vmatpush1.msra.mxu0 %v141
  %1893 = vmatprep.subr.mxu0 0.0
  %1894 = vmatpush1.msra.mxu0 %v140
  %1895 = vmatprep.subr.mxu0 0.0
  %1896 = vmatpush1.msra.mxu0 %v139
  %1897 = vmatprep.subr.mxu0 0.0
  %1898 = vmatpush1.msra.mxu0 %v138
  %1899 = vmatprep.subr.mxu0 0.0
  %1900 = vmatpush1.msra.mxu0 %v137
  %1901 = vmatprep.subr.mxu0 0.0
  %1902 = vmatpush1.msra.mxu0 %v136
  %1903 = vmatprep.subr.mxu0 0.0
  %1904 = vmatpush1.msra.mxu0 %v135
  %1905 = vmatprep.subr.mxu0 0.0
  %1906 = vmatpush2.msra.mxu0 %v166
  %1907 = vmatprep.subr.mxu0 0.0
  %1908 = vmatpush2.msra.mxu0 %v165
  %1909 = vmatprep.subr.mxu0 0.0
  %1910 = vmatpush2.msra.mxu0 %v164
  %1911 = vmatprep.subr.mxu0 0.0
  %1912 = vmatpush2.msra.mxu0 %v163
  %1913 = vmatprep.subr.mxu0 0.0
  %1914 = vmatpush2.msra.mxu0 %v162
  %1915 = vmatprep.subr.mxu0 0.0
  %1916 = vmatpush2.msra.mxu0 %v161
  %1917 = vmatprep.subr.mxu0 0.0
  %1918 = vmatpush2.msra.mxu0 %v160
  %1919 = vmatprep.subr.mxu0 0.0
  %1920 = vmatpush2.msra.mxu0 %v159
  %1921 = vmatprep.subr.mxu0 0.0
  %1922 = vmatpush2.msra.mxu0 %v158
  %1923 = vmatprep.subr.mxu0 0.0
  %1924 = vmatpush2.msra.mxu0 %v157
  %1925 = vmatprep.subr.mxu0 0.0
  %1926 = vmatpush2.msra.mxu0 %v156
  %1927 = vmatprep.subr.mxu0 0.0
  %1928 = vmatpush2.msra.mxu0 %v155
  %1929 = vmatprep.subr.mxu0 0.0
  %1930 = vmatpush2.msra.mxu0 %v154
  %1931 = vmatprep.subr.mxu0 0.0
  %1932 = vmatpush2.msra.mxu0 %v153
  %1933 = vmatprep.subr.mxu0 0.0
  %1934 = vmatpush2.msra.mxu0 %v152
  %1935 = vmatprep.subr.mxu0 0.0
  %1936 = vmatpush2.msra.mxu0 %v151
  %1937 = vmatprep.mubr.f32.mxu0 %v1562
  %1938 = vmatmul.mubr.f32.gmra.mxu0 %v1560
  %v1939 = vpop.f32.mrf.mxu0
  %v1940 = vadd.f32 %v1870, %v1939
  %v1941 = vpop.f32.mrf.mxu0
  %1942 = vdwg.mxu0
  %1943 = vmatprep.subr.mxu0 0.0
  %1944 = vmatpush1.msra.mxu0 %v182
  %1945 = vmatprep.subr.mxu0 0.0
  %1946 = vmatpush1.msra.mxu0 %v181
  %1947 = vmatprep.subr.mxu0 0.0
  %1948 = vmatpush1.msra.mxu0 %v180
  %1949 = vmatprep.subr.mxu0 0.0
  %1950 = vmatpush1.msra.mxu0 %v179
  %1951 = vmatprep.subr.mxu0 0.0
  %1952 = vmatpush1.msra.mxu0 %v178
  %1953 = vmatprep.subr.mxu0 0.0
  %1954 = vmatpush1.msra.mxu0 %v177
  %1955 = vmatprep.subr.mxu0 0.0
  %1956 = vmatpush1.msra.mxu0 %v176
  %1957 = vmatprep.subr.mxu0 0.0
  %1958 = vmatpush1.msra.mxu0 %v175
  %1959 = vmatprep.subr.mxu0 0.0
  %1960 = vmatpush1.msra.mxu0 %v174
  %1961 = vmatprep.subr.mxu0 0.0
  %1962 = vmatpush1.msra.mxu0 %v173
  %1963 = vmatprep.subr.mxu0 0.0
  %1964 = vmatpush1.msra.mxu0 %v172
  %1965 = vmatprep.subr.mxu0 0.0
  %1966 = vmatpush1.msra.mxu0 %v171
  %1967 = vmatprep.subr.mxu0 0.0
  %1968 = vmatpush1.msra.mxu0 %v170
  %1969 = vmatprep.subr.mxu0 0.0
  %1970 = vmatpush1.msra.mxu0 %v169
  %1971 = vmatprep.subr.mxu0 0.0
  %1972 = vmatpush1.msra.mxu0 %v168
  %1973 = vmatprep.subr.mxu0 0.0
  %1974 = vmatpush1.msra.mxu0 %v167
  %1975 = vmatprep.subr.mxu0 0.0
  %1976 = vmatpush2.msra.mxu0 %v198
  %1977 = vmatprep.subr.mxu0 0.0
  %1978 = vmatpush2.msra.mxu0 %v197
  %1979 = vmatprep.subr.mxu0 0.0
  %1980 = vmatpush2.msra.mxu0 %v196
  %1981 = vmatprep.subr.mxu0 0.0
  %1982 = vmatpush2.msra.mxu0 %v195
  %1983 = vmatprep.subr.mxu0 0.0
  %1984 = vmatpush2.msra.mxu0 %v194
  %1985 = vmatprep.subr.mxu0 0.0
  %1986 = vmatpush2.msra.mxu0 %v193
  %1987 = vmatprep.subr.mxu0 0.0
  %1988 = vmatpush2.msra.mxu0 %v192
  %1989 = vmatprep.subr.mxu0 0.0
  %1990 = vmatpush2.msra.mxu0 %v191
  %1991 = vmatprep.subr.mxu0 0.0
  %1992 = vmatpush2.msra.mxu0 %v190
  %1993 = vmatprep.subr.mxu0 0.0
  %1994 = vmatpush2.msra.mxu0 %v189
  %1995 = vmatprep.subr.mxu0 0.0
  %1996 = vmatpush2.msra.mxu0 %v188
  %1997 = vmatprep.subr.mxu0 0.0
  %1998 = vmatpush2.msra.mxu0 %v187
  %1999 = vmatprep.subr.mxu0 0.0
  %2000 = vmatpush2.msra.mxu0 %v186
  %2001 = vmatprep.subr.mxu0 0.0
  %2002 = vmatpush2.msra.mxu0 %v185
  %2003 = vmatprep.subr.mxu0 0.0
  %2004 = vmatpush2.msra.mxu0 %v184
  %2005 = vmatprep.subr.mxu0 0.0
  %2006 = vmatpush2.msra.mxu0 %v183
  %2007 = vmatprep.mubr.f32.mxu0 %v1578
  %2008 = vmatmul.mubr.f32.gmra.mxu0 %v1570
  %v2009 = vpop.f32.mrf.mxu0
  %v2010 = vadd.f32 %v1940, %v2009
  %v2011 = vpop.f32.mrf.mxu0
  %2012 = vdwg.mxu0
  %2013 = vmatprep.subr.mxu0 0.0
  %2014 = vmatpush1.msra.mxu0 %v214
  %2015 = vmatprep.subr.mxu0 0.0
  %2016 = vmatpush1.msra.mxu0 %v213
  %2017 = vmatprep.subr.mxu0 0.0
  %2018 = vmatpush1.msra.mxu0 %v212
  %2019 = vmatprep.subr.mxu0 0.0
  %2020 = vmatpush1.msra.mxu0 %v211
  %2021 = vmatprep.subr.mxu0 0.0
  %2022 = vmatpush1.msra.mxu0 %v210
  %2023 = vmatprep.subr.mxu0 0.0
  %2024 = vmatpush1.msra.mxu0 %v209
  %2025 = vmatprep.subr.mxu0 0.0
  %2026 = vmatpush1.msra.mxu0 %v208
  %2027 = vmatprep.subr.mxu0 0.0
  %2028 = vmatpush1.msra.mxu0 %v207
  %2029 = vmatprep.subr.mxu0 0.0
  %2030 = vmatpush1.msra.mxu0 %v206
  %2031 = vmatprep.subr.mxu0 0.0
  %2032 = vmatpush1.msra.mxu0 %v205
  %2033 = vmatprep.subr.mxu0 0.0
  %2034 = vmatpush1.msra.mxu0 %v204
  %2035 = vmatprep.subr.mxu0 0.0
  %2036 = vmatpush1.msra.mxu0 %v203
  %2037 = vmatprep.subr.mxu0 0.0
  %2038 = vmatpush1.msra.mxu0 %v202
  %2039 = vmatprep.subr.mxu0 0.0
  %2040 = vmatpush1.msra.mxu0 %v201
  %2041 = vmatprep.subr.mxu0 0.0
  %2042 = vmatpush1.msra.mxu0 %v200
  %2043 = vmatprep.subr.mxu0 0.0
  %2044 = vmatpush1.msra.mxu0 %v199
  %2045 = vmatprep.subr.mxu0 0.0
  %2046 = vmatpush2.msra.mxu0 %v230
  %2047 = vmatprep.subr.mxu0 0.0
  %2048 = vmatpush2.msra.mxu0 %v229
  %2049 = vmatprep.subr.mxu0 0.0
  %2050 = vmatpush2.msra.mxu0 %v228
  %2051 = vmatprep.subr.mxu0 0.0
  %2052 = vmatpush2.msra.mxu0 %v227
  %2053 = vmatprep.subr.mxu0 0.0
  %2054 = vmatpush2.msra.mxu0 %v226
  %2055 = vmatprep.subr.mxu0 0.0
  %2056 = vmatpush2.msra.mxu0 %v225
  %2057 = vmatprep.subr.mxu0 0.0
  %2058 = vmatpush2.msra.mxu0 %v224
  %2059 = vmatprep.subr.mxu0 0.0
  %2060 = vmatpush2.msra.mxu0 %v223
  %2061 = vmatprep.subr.mxu0 0.0
  %2062 = vmatpush2.msra.mxu0 %v222
  %2063 = vmatprep.subr.mxu0 0.0
  %2064 = vmatpush2.msra.mxu0 %v221
  %2065 = vmatprep.subr.mxu0 0.0
  %2066 = vmatpush2.msra.mxu0 %v220
  %2067 = vmatprep.subr.mxu0 0.0
  %2068 = vmatpush2.msra.mxu0 %v219
  %2069 = vmatprep.subr.mxu0 0.0
  %2070 = vmatpush2.msra.mxu0 %v218
  %2071 = vmatprep.subr.mxu0 0.0
  %2072 = vmatpush2.msra.mxu0 %v217
  %2073 = vmatprep.subr.mxu0 0.0
  %2074 = vmatpush2.msra.mxu0 %v216
  %2075 = vmatprep.subr.mxu0 0.0
  %2076 = vmatpush2.msra.mxu0 %v215
  %2077 = vmatprep.mubr.f32.mxu0 %v1579
  %2078 = vmatmul.mubr.f32.gmra.mxu0 %v1577
  %v2079 = vpop.f32.mrf.mxu0
  %v2080 = vadd.f32 %v2010, %v2079
  %v2081 = vpop.f32.mrf.mxu0
  %2082 = vdwg.mxu0
  %2083 = vmatprep.subr.mxu0 0.0
  %2084 = vmatpush1.msra.mxu0 %v246
  %2085 = vmatprep.subr.mxu0 0.0
  %2086 = vmatpush1.msra.mxu0 %v245
  %2087 = vmatprep.subr.mxu0 0.0
  %2088 = vmatpush1.msra.mxu0 %v244
  %2089 = vmatprep.subr.mxu0 0.0
  %2090 = vmatpush1.msra.mxu0 %v243
  %2091 = vmatprep.subr.mxu0 0.0
  %2092 = vmatpush1.msra.mxu0 %v242
  %2093 = vmatprep.subr.mxu0 0.0
  %2094 = vmatpush1.msra.mxu0 %v241
  %2095 = vmatprep.subr.mxu0 0.0
  %2096 = vmatpush1.msra.mxu0 %v240
  %2097 = vmatprep.subr.mxu0 0.0
  %2098 = vmatpush1.msra.mxu0 %v239
  %2099 = vmatprep.subr.mxu0 0.0
  %2100 = vmatpush1.msra.mxu0 %v238
  %2101 = vmatprep.subr.mxu0 0.0
  %2102 = vmatpush1.msra.mxu0 %v237
  %2103 = vmatprep.subr.mxu0 0.0
  %2104 = vmatpush1.msra.mxu0 %v236
  %2105 = vmatprep.subr.mxu0 0.0
  %2106 = vmatpush1.msra.mxu0 %v235
  %2107 = vmatprep.subr.mxu0 0.0
  %2108 = vmatpush1.msra.mxu0 %v234
  %2109 = vmatprep.subr.mxu0 0.0
  %2110 = vmatpush1.msra.mxu0 %v233
  %2111 = vmatprep.subr.mxu0 0.0
  %2112 = vmatpush1.msra.mxu0 %v232
  %2113 = vmatprep.subr.mxu0 0.0
  %2114 = vmatpush1.msra.mxu0 %v231
  %2115 = vmatprep.subr.mxu0 0.0
  %2116 = vmatpush2.msra.mxu0 %v262
  %2117 = vmatprep.subr.mxu0 0.0
  %2118 = vmatpush2.msra.mxu0 %v261
  %2119 = vmatprep.subr.mxu0 0.0
  %2120 = vmatpush2.msra.mxu0 %v260
  %2121 = vmatprep.subr.mxu0 0.0
  %2122 = vmatpush2.msra.mxu0 %v259
  %2123 = vmatprep.subr.mxu0 0.0
  %2124 = vmatpush2.msra.mxu0 %v258
  %2125 = vmatprep.subr.mxu0 0.0
  %2126 = vmatpush2.msra.mxu0 %v257
  %2127 = vmatprep.subr.mxu0 0.0
  %2128 = vmatpush2.msra.mxu0 %v256
  %2129 = vmatprep.subr.mxu0 0.0
  %2130 = vmatpush2.msra.mxu0 %v255
  %2131 = vmatprep.subr.mxu0 0.0
  %2132 = vmatpush2.msra.mxu0 %v254
  %2133 = vmatprep.subr.mxu0 0.0
  %2134 = vmatpush2.msra.mxu0 %v253
  %2135 = vmatprep.subr.mxu0 0.0
  %2136 = vmatpush2.msra.mxu0 %v252
  %2137 = vmatprep.subr.mxu0 0.0
  %2138 = vmatpush2.msra.mxu0 %v251
  %2139 = vmatprep.subr.mxu0 0.0
  %2140 = vmatpush2.msra.mxu0 %v250
  %2141 = vmatprep.subr.mxu0 0.0
  %2142 = vmatpush2.msra.mxu0 %v249
  %2143 = vmatprep.subr.mxu0 0.0
  %2144 = vmatpush2.msra.mxu0 %v248
  %2145 = vmatprep.subr.mxu0 0.0
  %2146 = vmatpush2.msra.mxu0 %v247
  %2147 = vmatprep.mubr.f32.mxu0 %v1595
  %2148 = vmatmul.mubr.f32.gmra.mxu0 %v1587
  %v2149 = vpop.f32.mrf.mxu0
  %v2150 = vadd.f32 %v2080, %v2149
  %v2151 = vpop.f32.mrf.mxu0
  %2152 = vdwg.mxu0
  %2153 = vmatprep.subr.mxu0 0.0
  %2154 = vmatpush1.msra.mxu0 %v278
  %2155 = vmatprep.subr.mxu0 0.0
  %2156 = vmatpush1.msra.mxu0 %v277
  %2157 = vmatprep.subr.mxu0 0.0
  %2158 = vmatpush1.msra.mxu0 %v276
  %2159 = vmatprep.subr.mxu0 0.0
  %2160 = vmatpush1.msra.mxu0 %v275
  %2161 = vmatprep.subr.mxu0 0.0
  %2162 = vmatpush1.msra.mxu0 %v274
  %2163 = vmatprep.subr.mxu0 0.0
  %2164 = vmatpush1.msra.mxu0 %v273
  %2165 = vmatprep.subr.mxu0 0.0
  %2166 = vmatpush1.msra.mxu0 %v272
  %2167 = vmatprep.subr.mxu0 0.0
  %2168 = vmatpush1.msra.mxu0 %v271
  %2169 = vmatprep.subr.mxu0 0.0
  %2170 = vmatpush1.msra.mxu0 %v270
  %2171 = vmatprep.subr.mxu0 0.0
  %2172 = vmatpush1.msra.mxu0 %v269
  %2173 = vmatprep.subr.mxu0 0.0
  %2174 = vmatpush1.msra.mxu0 %v268
  %2175 = vmatprep.subr.mxu0 0.0
  %2176 = vmatpush1.msra.mxu0 %v267
  %2177 = vmatprep.subr.mxu0 0.0
  %2178 = vmatpush1.msra.mxu0 %v266
  %2179 = vmatprep.subr.mxu0 0.0
  %2180 = vmatpush1.msra.mxu0 %v265
  %2181 = vmatprep.subr.mxu0 0.0
  %2182 = vmatpush1.msra.mxu0 %v264
  %2183 = vmatprep.subr.mxu0 0.0
  %2184 = vmatpush1.msra.mxu0 %v263
  %2185 = vmatprep.subr.mxu0 0.0
  %2186 = vmatpush2.msra.mxu0 %v294
  %2187 = vmatprep.subr.mxu0 0.0
  %2188 = vmatpush2.msra.mxu0 %v293
  %2189 = vmatprep.subr.mxu0 0.0
  %2190 = vmatpush2.msra.mxu0 %v292
  %2191 = vmatprep.subr.mxu0 0.0
  %2192 = vmatpush2.msra.mxu0 %v291
  %2193 = vmatprep.subr.mxu0 0.0
  %2194 = vmatpush2.msra.mxu0 %v290
  %2195 = vmatprep.subr.mxu0 0.0
  %2196 = vmatpush2.msra.mxu0 %v289
  %2197 = vmatprep.subr.mxu0 0.0
  %2198 = vmatpush2.msra.mxu0 %v288
  %2199 = vmatprep.subr.mxu0 0.0
  %2200 = vmatpush2.msra.mxu0 %v287
  %2201 = vmatprep.subr.mxu0 0.0
  %2202 = vmatpush2.msra.mxu0 %v286
  %2203 = vmatprep.subr.mxu0 0.0
  %2204 = vmatpush2.msra.mxu0 %v285
  %2205 = vmatprep.subr.mxu0 0.0
  %2206 = vmatpush2.msra.mxu0 %v284
  %2207 = vmatprep.subr.mxu0 0.0
  %2208 = vmatpush2.msra.mxu0 %v283
  %2209 = vmatprep.subr.mxu0 0.0
  %2210 = vmatpush2.msra.mxu0 %v282
  %2211 = vmatprep.subr.mxu0 0.0
  %2212 = vmatpush2.msra.mxu0 %v281
  %2213 = vmatprep.subr.mxu0 0.0
  %2214 = vmatpush2.msra.mxu0 %v280
  %2215 = vmatprep.subr.mxu0 0.0
  %2216 = vmatpush2.msra.mxu0 %v279
  %2217 = vmatprep.mubr.f32.mxu0 %v1596
  %2218 = vmatmul.mubr.f32.gmra.mxu0 %v1594
  %v2219 = vpop.f32.mrf.mxu0
  %v2220 = vadd.f32 %v2150, %v2219
  %v2221 = vpop.f32.mrf.mxu0
  %2222 = vdwg.mxu0
  %2223 = vmatprep.subr.mxu0 0.0
  %2224 = vmatpush1.msra.mxu0 %v310
  %2225 = vmatprep.subr.mxu0 0.0
  %2226 = vmatpush1.msra.mxu0 %v309
  %2227 = vmatprep.subr.mxu0 0.0
  %2228 = vmatpush1.msra.mxu0 %v308
  %2229 = vmatprep.subr.mxu0 0.0
  %2230 = vmatpush1.msra.mxu0 %v307
  %2231 = vmatprep.subr.mxu0 0.0
  %2232 = vmatpush1.msra.mxu0 %v306
  %2233 = vmatprep.subr.mxu0 0.0
  %2234 = vmatpush1.msra.mxu0 %v305
  %2235 = vmatprep.subr.mxu0 0.0
  %2236 = vmatpush1.msra.mxu0 %v304
  %2237 = vmatprep.subr.mxu0 0.0
  %2238 = vmatpush1.msra.mxu0 %v303
  %2239 = vmatprep.subr.mxu0 0.0
  %2240 = vmatpush1.msra.mxu0 %v302
  %2241 = vmatprep.subr.mxu0 0.0
  %2242 = vmatpush1.msra.mxu0 %v301
  %2243 = vmatprep.subr.mxu0 0.0
  %2244 = vmatpush1.msra.mxu0 %v300
  %2245 = vmatprep.subr.mxu0 0.0
  %2246 = vmatpush1.msra.mxu0 %v299
  %2247 = vmatprep.subr.mxu0 0.0
  %2248 = vmatpush1.msra.mxu0 %v298
  %2249 = vmatprep.subr.mxu0 0.0
  %2250 = vmatpush1.msra.mxu0 %v297
  %2251 = vmatprep.subr.mxu0 0.0
  %2252 = vmatpush1.msra.mxu0 %v296
  %2253 = vmatprep.subr.mxu0 0.0
  %2254 = vmatpush1.msra.mxu0 %v295
  %2255 = vmatprep.subr.mxu0 0.0
  %2256 = vmatpush2.msra.mxu0 %v326
  %2257 = vmatprep.subr.mxu0 0.0
  %2258 = vmatpush2.msra.mxu0 %v325
  %2259 = vmatprep.subr.mxu0 0.0
  %2260 = vmatpush2.msra.mxu0 %v324
  %2261 = vmatprep.subr.mxu0 0.0
  %2262 = vmatpush2.msra.mxu0 %v323
  %2263 = vmatprep.subr.mxu0 0.0
  %2264 = vmatpush2.msra.mxu0 %v322
  %2265 = vmatprep.subr.mxu0 0.0
  %2266 = vmatpush2.msra.mxu0 %v321
  %2267 = vmatprep.subr.mxu0 0.0
  %2268 = vmatpush2.msra.mxu0 %v320
  %2269 = vmatprep.subr.mxu0 0.0
  %2270 = vmatpush2.msra.mxu0 %v319
  %2271 = vmatprep.subr.mxu0 0.0
  %2272 = vmatpush2.msra.mxu0 %v318
  %2273 = vmatprep.subr.mxu0 0.0
  %2274 = vmatpush2.msra.mxu0 %v317
  %2275 = vmatprep.subr.mxu0 0.0
  %2276 = vmatpush2.msra.mxu0 %v316
  %2277 = vmatprep.subr.mxu0 0.0
  %2278 = vmatpush2.msra.mxu0 %v315
  %2279 = vmatprep.subr.mxu0 0.0
  %2280 = vmatpush2.msra.mxu0 %v314
  %2281 = vmatprep.subr.mxu0 0.0
  %2282 = vmatpush2.msra.mxu0 %v313
  %2283 = vmatprep.subr.mxu0 0.0
  %2284 = vmatpush2.msra.mxu0 %v312
  %2285 = vmatprep.subr.mxu0 0.0
  %2286 = vmatpush2.msra.mxu0 %v311
  %2287 = vmatprep.mubr.f32.mxu0 %v1612
  %2288 = vmatmul.mubr.f32.gmra.mxu0 %v1604
  %v2289 = vpop.f32.mrf.mxu0
  %v2290 = vadd.f32 %v2220, %v2289
  %v2291 = vpop.f32.mrf.mxu0
  %2292 = vdwg.mxu0
  %2293 = vmatprep.subr.mxu0 0.0
  %2294 = vmatpush1.msra.mxu0 %v342
  %2295 = vmatprep.subr.mxu0 0.0
  %2296 = vmatpush1.msra.mxu0 %v341
  %2297 = vmatprep.subr.mxu0 0.0
  %2298 = vmatpush1.msra.mxu0 %v340
  %2299 = vmatprep.subr.mxu0 0.0
  %2300 = vmatpush1.msra.mxu0 %v339
  %2301 = vmatprep.subr.mxu0 0.0
  %2302 = vmatpush1.msra.mxu0 %v338
  %2303 = vmatprep.subr.mxu0 0.0
  %2304 = vmatpush1.msra.mxu0 %v337
  %2305 = vmatprep.subr.mxu0 0.0
  %2306 = vmatpush1.msra.mxu0 %v336
  %2307 = vmatprep.subr.mxu0 0.0
  %2308 = vmatpush1.msra.mxu0 %v335
  %2309 = vmatprep.subr.mxu0 0.0
  %2310 = vmatpush1.msra.mxu0 %v334
  %2311 = vmatprep.subr.mxu0 0.0
  %2312 = vmatpush1.msra.mxu0 %v333
  %2313 = vmatprep.subr.mxu0 0.0
  %2314 = vmatpush1.msra.mxu0 %v332
  %2315 = vmatprep.subr.mxu0 0.0
  %2316 = vmatpush1.msra.mxu0 %v331
  %2317 = vmatprep.subr.mxu0 0.0
  %2318 = vmatpush1.msra.mxu0 %v330
  %2319 = vmatprep.subr.mxu0 0.0
  %2320 = vmatpush1.msra.mxu0 %v329
  %2321 = vmatprep.subr.mxu0 0.0
  %2322 = vmatpush1.msra.mxu0 %v328
  %2323 = vmatprep.subr.mxu0 0.0
  %2324 = vmatpush1.msra.mxu0 %v327
  %2325 = vmatprep.subr.mxu0 0.0
  %2326 = vmatpush2.msra.mxu0 %v358
  %2327 = vmatprep.subr.mxu0 0.0
  %2328 = vmatpush2.msra.mxu0 %v357
  %2329 = vmatprep.subr.mxu0 0.0
  %2330 = vmatpush2.msra.mxu0 %v356
  %2331 = vmatprep.subr.mxu0 0.0
  %2332 = vmatpush2.msra.mxu0 %v355
  %2333 = vmatprep.subr.mxu0 0.0
  %2334 = vmatpush2.msra.mxu0 %v354
  %2335 = vmatprep.subr.mxu0 0.0
  %2336 = vmatpush2.msra.mxu0 %v353
  %2337 = vmatprep.subr.mxu0 0.0
  %2338 = vmatpush2.msra.mxu0 %v352
  %2339 = vmatprep.subr.mxu0 0.0
  %2340 = vmatpush2.msra.mxu0 %v351
  %2341 = vmatprep.subr.mxu0 0.0
  %2342 = vmatpush2.msra.mxu0 %v350
  %2343 = vmatprep.subr.mxu0 0.0
  %2344 = vmatpush2.msra.mxu0 %v349
  %2345 = vmatprep.subr.mxu0 0.0
  %2346 = vmatpush2.msra.mxu0 %v348
  %2347 = vmatprep.subr.mxu0 0.0
  %2348 = vmatpush2.msra.mxu0 %v347
  %2349 = vmatprep.subr.mxu0 0.0
  %2350 = vmatpush2.msra.mxu0 %v346
  %2351 = vmatprep.subr.mxu0 0.0
  %2352 = vmatpush2.msra.mxu0 %v345
  %2353 = vmatprep.subr.mxu0 0.0
  %2354 = vmatpush2.msra.mxu0 %v344
  %2355 = vmatprep.subr.mxu0 0.0
  %2356 = vmatpush2.msra.mxu0 %v343
  %2357 = vmatprep.mubr.f32.mxu0 %v1613
  %2358 = vmatmul.mubr.f32.gmra.mxu0 %v1611
  %v2359 = vpop.f32.mrf.mxu0
  %v2360 = vadd.f32 %v2290, %v2359
  %v2361 = vpop.f32.mrf.mxu0
  %2362 = vdwg.mxu0
  %2363 = vmatprep.subr.mxu0 0.0
  %2364 = vmatpush1.msra.mxu0 %v374
  %2365 = vmatprep.subr.mxu0 0.0
  %2366 = vmatpush1.msra.mxu0 %v373
  %2367 = vmatprep.subr.mxu0 0.0
  %2368 = vmatpush1.msra.mxu0 %v372
  %2369 = vmatprep.subr.mxu0 0.0
  %2370 = vmatpush1.msra.mxu0 %v371
  %2371 = vmatprep.subr.mxu0 0.0
  %2372 = vmatpush1.msra.mxu0 %v370
  %2373 = vmatprep.subr.mxu0 0.0
  %2374 = vmatpush1.msra.mxu0 %v369
  %2375 = vmatprep.subr.mxu0 0.0
  %2376 = vmatpush1.msra.mxu0 %v368
  %2377 = vmatprep.subr.mxu0 0.0
  %2378 = vmatpush1.msra.mxu0 %v367
  %2379 = vmatprep.subr.mxu0 0.0
  %2380 = vmatpush1.msra.mxu0 %v366
  %2381 = vmatprep.subr.mxu0 0.0
  %2382 = vmatpush1.msra.mxu0 %v365
  %2383 = vmatprep.subr.mxu0 0.0
  %2384 = vmatpush1.msra.mxu0 %v364
  %2385 = vmatprep.subr.mxu0 0.0
  %2386 = vmatpush1.msra.mxu0 %v363
  %2387 = vmatprep.subr.mxu0 0.0
  %2388 = vmatpush1.msra.mxu0 %v362
  %2389 = vmatprep.subr.mxu0 0.0
  %2390 = vmatpush1.msra.mxu0 %v361
  %2391 = vmatprep.subr.mxu0 0.0
  %2392 = vmatpush1.msra.mxu0 %v360
  %2393 = vmatprep.subr.mxu0 0.0
  %2394 = vmatpush1.msra.mxu0 %v359
  %2395 = vmatprep.subr.mxu0 0.0
  %2396 = vmatpush2.msra.mxu0 %v390
  %2397 = vmatprep.subr.mxu0 0.0
  %2398 = vmatpush2.msra.mxu0 %v389
  %2399 = vmatprep.subr.mxu0 0.0
  %2400 = vmatpush2.msra.mxu0 %v388
  %2401 = vmatprep.subr.mxu0 0.0
  %2402 = vmatpush2.msra.mxu0 %v387
  %2403 = vmatprep.subr.mxu0 0.0
  %2404 = vmatpush2.msra.mxu0 %v386
  %2405 = vmatprep.subr.mxu0 0.0
  %2406 = vmatpush2.msra.mxu0 %v385
  %2407 = vmatprep.subr.mxu0 0.0
  %2408 = vmatpush2.msra.mxu0 %v384
  %2409 = vmatprep.subr.mxu0 0.0
  %2410 = vmatpush2.msra.mxu0 %v383
  %2411 = vmatprep.subr.mxu0 0.0
  %2412 = vmatpush2.msra.mxu0 %v382
  %2413 = vmatprep.subr.mxu0 0.0
  %2414 = vmatpush2.msra.mxu0 %v381
  %2415 = vmatprep.subr.mxu0 0.0
  %2416 = vmatpush2.msra.mxu0 %v380
  %2417 = vmatprep.subr.mxu0 0.0
  %2418 = vmatpush2.msra.mxu0 %v379
  %2419 = vmatprep.subr.mxu0 0.0
  %2420 = vmatpush2.msra.mxu0 %v378
  %2421 = vmatprep.subr.mxu0 0.0
  %2422 = vmatpush2.msra.mxu0 %v377
  %2423 = vmatprep.subr.mxu0 0.0
  %2424 = vmatpush2.msra.mxu0 %v376
  %2425 = vmatprep.subr.mxu0 0.0
  %2426 = vmatpush2.msra.mxu0 %v375
  %2427 = vmatprep.mubr.f32.mxu0 %v1629
  %2428 = vmatmul.mubr.f32.gmra.mxu0 %v1621
  %v2429 = vpop.f32.mrf.mxu0
  %v2430 = vadd.f32 %v2360, %v2429
  %v2431 = vpop.f32.mrf.mxu0
  %2432 = vdwg.mxu0
  %2433 = vmatprep.subr.mxu0 0.0
  %2434 = vmatpush1.msra.mxu0 %v406
  %2435 = vmatprep.subr.mxu0 0.0
  %2436 = vmatpush1.msra.mxu0 %v405
  %2437 = vmatprep.subr.mxu0 0.0
  %2438 = vmatpush1.msra.mxu0 %v404
  %2439 = vmatprep.subr.mxu0 0.0
  %2440 = vmatpush1.msra.mxu0 %v403
  %2441 = vmatprep.subr.mxu0 0.0
  %2442 = vmatpush1.msra.mxu0 %v402
  %2443 = vmatprep.subr.mxu0 0.0
  %2444 = vmatpush1.msra.mxu0 %v401
  %2445 = vmatprep.subr.mxu0 0.0
  %2446 = vmatpush1.msra.mxu0 %v400
  %2447 = vmatprep.subr.mxu0 0.0
  %2448 = vmatpush1.msra.mxu0 %v399
  %2449 = vmatprep.subr.mxu0 0.0
  %2450 = vmatpush1.msra.mxu0 %v398
  %2451 = vmatprep.subr.mxu0 0.0
  %2452 = vmatpush1.msra.mxu0 %v397
  %2453 = vmatprep.subr.mxu0 0.0
  %2454 = vmatpush1.msra.mxu0 %v396
  %2455 = vmatprep.subr.mxu0 0.0
  %2456 = vmatpush1.msra.mxu0 %v395
  %2457 = vmatprep.subr.mxu0 0.0
  %2458 = vmatpush1.msra.mxu0 %v394
  %2459 = vmatprep.subr.mxu0 0.0
  %2460 = vmatpush1.msra.mxu0 %v393
  %2461 = vmatprep.subr.mxu0 0.0
  %2462 = vmatpush1.msra.mxu0 %v392
  %2463 = vmatprep.subr.mxu0 0.0
  %2464 = vmatpush1.msra.mxu0 %v391
  %2465 = vmatprep.subr.mxu0 0.0
  %2466 = vmatpush2.msra.mxu0 %v422
  %2467 = vmatprep.subr.mxu0 0.0
  %2468 = vmatpush2.msra.mxu0 %v421
  %2469 = vmatprep.subr.mxu0 0.0
  %2470 = vmatpush2.msra.mxu0 %v420
  %2471 = vmatprep.subr.mxu0 0.0
  %2472 = vmatpush2.msra.mxu0 %v419
  %2473 = vmatprep.subr.mxu0 0.0
  %2474 = vmatpush2.msra.mxu0 %v418
  %2475 = vmatprep.subr.mxu0 0.0
  %2476 = vmatpush2.msra.mxu0 %v417
  %2477 = vmatprep.subr.mxu0 0.0
  %2478 = vmatpush2.msra.mxu0 %v416
  %2479 = vmatprep.subr.mxu0 0.0
  %2480 = vmatpush2.msra.mxu0 %v415
  %2481 = vmatprep.subr.mxu0 0.0
  %2482 = vmatpush2.msra.mxu0 %v414
  %2483 = vmatprep.subr.mxu0 0.0
  %2484 = vmatpush2.msra.mxu0 %v413
  %2485 = vmatprep.subr.mxu0 0.0
  %2486 = vmatpush2.msra.mxu0 %v412
  %2487 = vmatprep.subr.mxu0 0.0
  %2488 = vmatpush2.msra.mxu0 %v411
  %2489 = vmatprep.subr.mxu0 0.0
  %2490 = vmatpush2.msra.mxu0 %v410
  %2491 = vmatprep.subr.mxu0 0.0
  %2492 = vmatpush2.msra.mxu0 %v409
  %2493 = vmatprep.subr.mxu0 0.0
  %2494 = vmatpush2.msra.mxu0 %v408
  %2495 = vmatprep.subr.mxu0 0.0
  %2496 = vmatpush2.msra.mxu0 %v407
  %2497 = vmatprep.mubr.f32.mxu0 %v1630
  %2498 = vmatmul.mubr.f32.gmra.mxu0 %v1628
  %v2499 = vpop.f32.mrf.mxu0
  %v2500 = vadd.f32 %v2430, %v2499
  %v2501 = vpop.f32.mrf.mxu0
  %2502 = vdwg.mxu0
  %2503 = vmatprep.subr.mxu0 0.0
  %2504 = vmatpush1.msra.mxu0 %v438
  %2505 = vmatprep.subr.mxu0 0.0
  %2506 = vmatpush1.msra.mxu0 %v437
  %2507 = vmatprep.subr.mxu0 0.0
  %2508 = vmatpush1.msra.mxu0 %v436
  %2509 = vmatprep.subr.mxu0 0.0
  %2510 = vmatpush1.msra.mxu0 %v435
  %2511 = vmatprep.subr.mxu0 0.0
  %2512 = vmatpush1.msra.mxu0 %v434
  %2513 = vmatprep.subr.mxu0 0.0
  %2514 = vmatpush1.msra.mxu0 %v433
  %2515 = vmatprep.subr.mxu0 0.0
  %2516 = vmatpush1.msra.mxu0 %v432
  %2517 = vmatprep.subr.mxu0 0.0
  %2518 = vmatpush1.msra.mxu0 %v431
  %2519 = vmatprep.subr.mxu0 0.0
  %2520 = vmatpush1.msra.mxu0 %v430
  %2521 = vmatprep.subr.mxu0 0.0
  %2522 = vmatpush1.msra.mxu0 %v429
  %2523 = vmatprep.subr.mxu0 0.0
  %2524 = vmatpush1.msra.mxu0 %v428
  %2525 = vmatprep.subr.mxu0 0.0
  %2526 = vmatpush1.msra.mxu0 %v427
  %2527 = vmatprep.subr.mxu0 0.0
  %2528 = vmatpush1.msra.mxu0 %v426
  %2529 = vmatprep.subr.mxu0 0.0
  %2530 = vmatpush1.msra.mxu0 %v425
  %2531 = vmatprep.subr.mxu0 0.0
  %2532 = vmatpush1.msra.mxu0 %v424
  %2533 = vmatprep.subr.mxu0 0.0
  %2534 = vmatpush1.msra.mxu0 %v423
  %2535 = vmatprep.subr.mxu0 0.0
  %2536 = vmatpush2.msra.mxu0 0.0
  %2537 = vmatprep.subr.mxu0 0.0
  %2538 = vmatpush2.msra.mxu0 0.0
  %2539 = vmatprep.subr.mxu0 0.0
  %2540 = vmatpush2.msra.mxu0 0.0
  %2541 = vmatprep.subr.mxu0 0.0
  %2542 = vmatpush2.msra.mxu0 0.0
  %2543 = vmatprep.subr.mxu0 0.0
  %2544 = vmatpush2.msra.mxu0 0.0
  %2545 = vmatprep.subr.mxu0 0.0
  %2546 = vmatpush2.msra.mxu0 0.0
  %2547 = vmatprep.subr.mxu0 0.0
  %2548 = vmatpush2.msra.mxu0 0.0
  %2549 = vmatprep.subr.mxu0 0.0
  %2550 = vmatpush2.msra.mxu0 0.0
  %2551 = vmatprep.subr.mxu0 0.0
  %2552 = vmatpush2.msra.mxu0 0.0
  %2553 = vmatprep.subr.mxu0 0.0
  %2554 = vmatpush2.msra.mxu0 0.0
  %2555 = vmatprep.subr.mxu0 0.0
  %2556 = vmatpush2.msra.mxu0 0.0
  %2557 = vmatprep.subr.mxu0 0.0
  %2558 = vmatpush2.msra.mxu0 0.0
  %2559 = vmatprep.subr.mxu0 0.0
  %2560 = vmatpush2.msra.mxu0 0.0
  %2561 = vmatprep.subr.mxu0 0.0
  %2562 = vmatpush2.msra.mxu0 0.0
  %2563 = vmatprep.subr.mxu0 0.0
  %2564 = vmatpush2.msra.mxu0 0.0
  %2565 = vmatprep.subr.mxu0 0.0
  %2566 = vmatpush2.msra.mxu0 0.0
  %2567 = vmatprep.mubr.f32.mxu0 0.0
  %2568 = vmatmul.mubr.f32.gmra.mxu0 %v1637
  %v2569 = vpop.f32.mrf.mxu0
  %v2570 = vadd.f32 %v2500, %v2569
  %v2571 = vpop.f32.mrf.mxu0
  %2572 = vdwg.mxu0
  %v2573 = vmax.f32 %v2570, 0.0
  %s2574 = scalar_lea.vmem %s3, 128
  %v2575 = vld [vmem:[%s2574] sm:$0xff]
  %v2576 = vld [vmem:[%s2574 + $0x8] sm:$0xff]
  %v2577 = vld [vmem:[%s2574 + $0x10] sm:$0xff]
  %v2578 = vld [vmem:[%s2574 + $0x18] sm:$0xff]
  %v2579 = vld [vmem:[%s2574 + $0x20] sm:$0xff]
  %v2580 = vld [vmem:[%s2574 + $0x28] sm:$0xff]
  %v2581 = vld [vmem:[%s2574 + $0x30] sm:$0xff]
  %v2582 = vld [vmem:[%s2574 + $0x38] sm:$0xff]
  %v2583 = vld [vmem:[%s2574 + $0x40] sm:$0xff]
  %v2584 = vld [vmem:[%s2574 + $0x48] sm:$0xff]
  %v2585 = vld [vmem:[%s2574 + $0x50] sm:$0xff]
  %v2586 = vld [vmem:[%s2574 + $0x58] sm:$0xff]
  %v2587 = vld [vmem:[%s2574 + $0x60] sm:$0xff]
  %v2588 = vld [vmem:[%s2574 + $0x68] sm:$0xff]
  %v2589 = vld [vmem:[%s2574 + $0x70] sm:$0xff]
  %v2590 = vld [vmem:[%s2574 + $0x78] sm:$0xff]
  %vm2591 = vcmask 523264
  %v2593 = vsel %vm2591, %v2573, 0
  %2595 = vmatprep.subr.mxu0 0.0
  %2596 = vmatpush1.msra.mxu0 0.0
  %2597 = vmatprep.subr.mxu0 0.0
  %2598 = vmatpush1.msra.mxu0 0.0
  %2599 = vmatprep.subr.mxu0 0.0
  %2600 = vmatpush1.msra.mxu0 0.0
  %2601 = vmatprep.subr.mxu0 0.0
  %2602 = vmatpush1.msra.mxu0 0.0
  %2603 = vmatprep.subr.mxu0 0.0
  %2604 = vmatpush1.msra.mxu0 0.0
  %2605 = vmatprep.subr.mxu0 0.0
  %2606 = vmatpush1.msra.mxu0 0.0
  %2607 = vmatprep.subr.mxu0 0.0
  %2608 = vmatpush1.msra.mxu0 0.0
  %2609 = vmatprep.subr.mxu0 0.0
  %2610 = vmatpush1.msra.mxu0 0.0
  %2611 = vmatprep.subr.mxu0 %v2590
  %2612 = vmatpush1.msra.mxu0 %v2589
  %2613 = vmatprep.subr.mxu0 %v2588
  %2614 = vmatpush1.msra.mxu0 %v2587
  %2615 = vmatprep.subr.mxu0 %v2586
  %2616 = vmatpush1.msra.mxu0 %v2585
  %2617 = vmatprep.subr.mxu0 %v2584
  %2618 = vmatpush1.msra.mxu0 %v2583
  %2619 = vmatprep.subr.mxu0 %v2582
  %2620 = vmatpush1.msra.mxu0 %v2581
  %2621 = vmatprep.subr.mxu0 %v2580
  %2622 = vmatpush1.msra.mxu0 %v2579
  %2623 = vmatprep.subr.mxu0 %v2578
  %2624 = vmatpush1.msra.mxu0 %v2577
  %2625 = vmatprep.subr.mxu0 %v2576
  %2626 = vmatpush1.msra.mxu0 %v2575
  %2627 = vmatprep.subr.mxu0 0.0
  %2628 = vmatpush2.msra.mxu0 0.0
  %2629 = vmatprep.subr.mxu0 0.0
  %2630 = vmatpush2.msra.mxu0 0.0
  %2631 = vmatprep.subr.mxu0 0.0
  %2632 = vmatpush2.msra.mxu0 0.0
  %2633 = vmatprep.subr.mxu0 0.0
  %2634 = vmatpush2.msra.mxu0 0.0
  %2635 = vmatprep.subr.mxu0 0.0
  %2636 = vmatpush2.msra.mxu0 0.0
  %2637 = vmatprep.subr.mxu0 0.0
  %2638 = vmatpush2.msra.mxu0 0.0
  %2639 = vmatprep.subr.mxu0 0.0
  %2640 = vmatpush2.msra.mxu0 0.0
  %2641 = vmatprep.subr.mxu0 0.0
  %2642 = vmatpush2.msra.mxu0 0.0
  %2643 = vmatprep.subr.mxu0 0.0
  %2644 = vmatpush2.msra.mxu0 0.0
  %2645 = vmatprep.subr.mxu0 0.0
  %2646 = vmatpush2.msra.mxu0 0.0
  %2647 = vmatprep.subr.mxu0 0.0
  %2648 = vmatpush2.msra.mxu0 0.0
  %2649 = vmatprep.subr.mxu0 0.0
  %2650 = vmatpush2.msra.mxu0 0.0
  %2651 = vmatprep.subr.mxu0 0.0
  %2652 = vmatpush2.msra.mxu0 0.0
  %2653 = vmatprep.subr.mxu0 0.0
  %2654 = vmatpush2.msra.mxu0 0.0
  %2655 = vmatprep.subr.mxu0 0.0
  %2656 = vmatpush2.msra.mxu0 0.0
  %2657 = vmatprep.subr.mxu0 0.0
  %2658 = vmatpush2.msra.mxu0 0.0
  %2659 = vmatprep.mubr.f32.mxu0 0.0
  %2660 = vmatmul.mubr.f32.gmra.mxu0 %v2593
  %v2661 = vpop.f32.mrf.mxu0
  %v2662 = vadd.f32 0.0, %v2661
  %v2663 = vpop.f32.mrf.mxu0
  %v2664 = vadd.f32 0.0, %v2663
  %2665 = vdwg.mxu0
  %v2667 = vsel %vm2591, %v1497, 0
  %2669 = vmatprep.subr.mxu0 0.0
  %2670 = vmatpush1.msra.mxu0 0.0
  %2671 = vmatprep.subr.mxu0 0.0
  %2672 = vmatpush1.msra.mxu0 0.0
  %2673 = vmatprep.subr.mxu0 0.0
  %2674 = vmatpush1.msra.mxu0 0.0
  %2675 = vmatprep.subr.mxu0 0.0
  %2676 = vmatpush1.msra.mxu0 0.0
  %2677 = vmatprep.subr.mxu0 0.0
  %2678 = vmatpush1.msra.mxu0 0.0
  %2679 = vmatprep.subr.mxu0 0.0
  %2680 = vmatpush1.msra.mxu0 0.0
  %2681 = vmatprep.subr.mxu0 0.0
  %2682 = vmatpush1.msra.mxu0 0.0
  %2683 = vmatprep.subr.mxu0 0.0
  %2684 = vmatpush1.msra.mxu0 0.0
  %2685 = vmatprep.subr.mxu0 %v1513
  %2686 = vmatpush1.msra.mxu0 %v1512
  %2687 = vmatprep.subr.mxu0 %v1511
  %2688 = vmatpush1.msra.mxu0 %v1510
  %2689 = vmatprep.subr.mxu0 %v1509
  %2690 = vmatpush1.msra.mxu0 %v1508
  %2691 = vmatprep.subr.mxu0 %v1507
  %2692 = vmatpush1.msra.mxu0 %v1506
  %2693 = vmatprep.subr.mxu0 %v1505
  %2694 = vmatpush1.msra.mxu0 %v1504
  %2695 = vmatprep.subr.mxu0 %v1503
  %2696 = vmatpush1.msra.mxu0 %v1502
  %2697 = vmatprep.subr.mxu0 %v1501
  %2698 = vmatpush1.msra.mxu0 %v1500
  %2699 = vmatprep.subr.mxu0 %v1499
  %2700 = vmatpush1.msra.mxu0 %v1498
  %2701 = vmatprep.subr.mxu0 0.0
  %2702 = vmatpush2.msra.mxu0 0.0
  %2703 = vmatprep.subr.mxu0 0.0
  %2704 = vmatpush2.msra.mxu0 0.0
  %2705 = vmatprep.subr.mxu0 0.0
  %2706 = vmatpush2.msra.mxu0 0.0
  %2707 = vmatprep.subr.mxu0 0.0
  %2708 = vmatpush2.msra.mxu0 0.0
  %2709 = vmatprep.subr.mxu0 0.0
  %2710 = vmatpush2.msra.mxu0 0.0
  %2711 = vmatprep.subr.mxu0 0.0
  %2712 = vmatpush2.msra.mxu0 0.0
  %2713 = vmatprep.subr.mxu0 0.0
  %2714 = vmatpush2.msra.mxu0 0.0
  %2715 = vmatprep.subr.mxu0 0.0
  %2716 = vmatpush2.msra.mxu0 0.0
  %2717 = vmatprep.subr.mxu0 0.0
  %2718 = vmatpush2.msra.mxu0 0.0
  %2719 = vmatprep.subr.mxu0 0.0
  %2720 = vmatpush2.msra.mxu0 0.0
  %2721 = vmatprep.subr.mxu0 0.0
  %2722 = vmatpush2.msra.mxu0 0.0
  %2723 = vmatprep.subr.mxu0 0.0
  %2724 = vmatpush2.msra.mxu0 0.0
  %2725 = vmatprep.subr.mxu0 0.0
  %2726 = vmatpush2.msra.mxu0 0.0
  %2727 = vmatprep.subr.mxu0 0.0
  %2728 = vmatpush2.msra.mxu0 0.0
  %2729 = vmatprep.subr.mxu0 0.0
  %2730 = vmatpush2.msra.mxu0 0.0
  %2731 = vmatprep.subr.mxu0 0.0
  %2732 = vmatpush2.msra.mxu0 0.0
  %2733 = vmatprep.mubr.f32.mxu0 0.0
  %2734 = vmatmul.mubr.f32.gmra.mxu0 %v2667
  %v2735 = vpop.f32.mrf.mxu0
  %v2736 = vadd.f32 %v2662, %v2735
  %v2737 = vpop.f32.mrf.mxu0
  %v2738 = vadd.f32 %v2664, %v2737
  %2739 = vdwg.mxu0
  %s2740 = scalar_lea.vmem %s0, 100
  %v2741 = vld [vmem:[%s2740] sm:$0xff]
  %v2742 = vld [vmem:[%s2740 + $0x8] sm:$0xff]
  %v2743 = vld [vmem:[%s2740 + $0x10] sm:$0xff]
  %v2744 = vld [vmem:[%s2740 + $0x18] sm:$0xff]
  %v2745 = vld [vmem:[%s2740 + $0x20] sm:$0xff]
  %v2746 = vld [vmem:[%s2740 + $0x28] sm:$0xff]
  %v2747 = vld [vmem:[%s2740 + $0x30] sm:$0x3]
  %v2755 = vcombine.high %v2741, %v2741
  %v2757 = vunpack.c.l.s4 1983009808
  %v2758 = vunpack.c.0.s8 %v2757
  %v2759 = vlaneseq
  %v2760 = vshrl.u32 %v2759, 7
  %v2761 = vsub.s32 %v2758, %v2760
  %v2762 = vrot.slane %v2741, %v2761
  %v2764 = vunpack.c.l.s4 1983009808
  %v2765 = vunpack.c.0.s8 %v2764
  %v2766 = vlaneseq
  %v2767 = vshrl.u32 %v2766, 7
  %v2768 = vsub.s32 %v2765, %v2767
  %v2769 = vrot.slane %v2755, %v2768
  %v2770 = vcombine.high %v2762, %v2762
  %v2771 = vcombine.high %v2769, %v2769
  %v2772 = vcombine.high %v2742, %v2742
  %v2774 = vunpack.c.l.s4 1983009808
  %v2775 = vunpack.c.0.s8 %v2774
  %v2776 = vlaneseq
  %v2777 = vshrl.u32 %v2776, 7
  %v2778 = vsub.s32 %v2775, %v2777
  %v2779 = vrot.slane %v2742, %v2778
  %v2781 = vunpack.c.l.s4 1983009808
  %v2782 = vunpack.c.0.s8 %v2781
  %v2783 = vlaneseq
  %v2784 = vshrl.u32 %v2783, 7
  %v2785 = vsub.s32 %v2782, %v2784
  %v2786 = vrot.slane %v2772, %v2785
  %v2787 = vcombine.high %v2779, %v2779
  %v2788 = vcombine.high %v2786, %v2786
  %v2789 = vcombine.high %v2743, %v2743
  %v2791 = vunpack.c.l.s4 1983009808
  %v2792 = vunpack.c.0.s8 %v2791
  %v2793 = vlaneseq
  %v2794 = vshrl.u32 %v2793, 7
  %v2795 = vsub.s32 %v2792, %v2794
  %v2796 = vrot.slane %v2743, %v2795
  %v2798 = vunpack.c.l.s4 1983009808
  %v2799 = vunpack.c.0.s8 %v2798
  %v2800 = vlaneseq
  %v2801 = vshrl.u32 %v2800, 7
  %v2802 = vsub.s32 %v2799, %v2801
  %v2803 = vrot.slane %v2789, %v2802
  %v2804 = vcombine.high %v2796, %v2796
  %v2805 = vcombine.high %v2803, %v2803
  %v2806 = vcombine.high %v2744, %v2744
  %v2808 = vunpack.c.l.s4 1983009808
  %v2809 = vunpack.c.0.s8 %v2808
  %v2810 = vlaneseq
  %v2811 = vshrl.u32 %v2810, 7
  %v2812 = vsub.s32 %v2809, %v2811
  %v2813 = vrot.slane %v2744, %v2812
  %v2815 = vunpack.c.l.s4 1983009808
  %v2816 = vunpack.c.0.s8 %v2815
  %v2817 = vlaneseq
  %v2818 = vshrl.u32 %v2817, 7
  %v2819 = vsub.s32 %v2816, %v2818
  %v2820 = vrot.slane %v2806, %v2819
  %v2821 = vcombine.high %v2813, %v2813
  %v2822 = vcombine.high %v2820, %v2820
  %v2823 = vcombine.high %v2745, %v2745
  %v2825 = vunpack.c.l.s4 1983009808
  %v2826 = vunpack.c.0.s8 %v2825
  %v2827 = vlaneseq
  %v2828 = vshrl.u32 %v2827, 7
  %v2829 = vsub.s32 %v2826, %v2828
  %v2830 = vrot.slane %v2745, %v2829
  %v2832 = vunpack.c.l.s4 1983009808
  %v2833 = vunpack.c.0.s8 %v2832
  %v2834 = vlaneseq
  %v2835 = vshrl.u32 %v2834, 7
  %v2836 = vsub.s32 %v2833, %v2835
  %v2837 = vrot.slane %v2823, %v2836
  %v2838 = vcombine.high %v2830, %v2830
  %v2839 = vcombine.high %v2837, %v2837
  %v2840 = vcombine.high %v2746, %v2746
  %v2842 = vunpack.c.l.s4 1983009808
  %v2843 = vunpack.c.0.s8 %v2842
  %v2844 = vlaneseq
  %v2845 = vshrl.u32 %v2844, 7
  %v2846 = vsub.s32 %v2843, %v2845
  %v2847 = vrot.slane %v2746, %v2846
  %v2849 = vunpack.c.l.s4 1983009808
  %v2850 = vunpack.c.0.s8 %v2849
  %v2851 = vlaneseq
  %v2852 = vshrl.u32 %v2851, 7
  %v2853 = vsub.s32 %v2850, %v2852
  %v2854 = vrot.slane %v2840, %v2853
  %v2855 = vcombine.high %v2847, %v2847
  %v2856 = vcombine.high %v2854, %v2854
  %v2858 = vunpack.c.l.s4 1983009808
  %v2859 = vunpack.c.0.s8 %v2858
  %v2860 = vlaneseq
  %v2861 = vshrl.u32 %v2860, 7
  %v2862 = vsub.s32 %v2859, %v2861
  %v2863 = vrot.slane %v2747, %v2862
  %2889 = vmatprep.subr.mxu0 0.0
  %2890 = vmatpush1.msra.mxu0 %v54
  %2891 = vmatprep.subr.mxu0 0.0
  %2892 = vmatpush1.msra.mxu0 %v53
  %2893 = vmatprep.subr.mxu0 0.0
  %2894 = vmatpush1.msra.mxu0 %v52
  %2895 = vmatprep.subr.mxu0 0.0
  %2896 = vmatpush1.msra.mxu0 %v51
  %2897 = vmatprep.subr.mxu0 0.0
  %2898 = vmatpush1.msra.mxu0 %v50
  %2899 = vmatprep.subr.mxu0 0.0
  %2900 = vmatpush1.msra.mxu0 %v49
  %2901 = vmatprep.subr.mxu0 0.0
  %2902 = vmatpush1.msra.mxu0 %v48
  %2903 = vmatprep.subr.mxu0 0.0
  %2904 = vmatpush1.msra.mxu0 %v47
  %2905 = vmatprep.subr.mxu0 0.0
  %2906 = vmatpush1.msra.mxu0 %v46
  %2907 = vmatprep.subr.mxu0 0.0
  %2908 = vmatpush1.msra.mxu0 %v45
  %2909 = vmatprep.subr.mxu0 0.0
  %2910 = vmatpush1.msra.mxu0 %v44
  %2911 = vmatprep.subr.mxu0 0.0
  %2912 = vmatpush1.msra.mxu0 %v43
  %2913 = vmatprep.subr.mxu0 0.0
  %2914 = vmatpush1.msra.mxu0 %v42
  %2915 = vmatprep.subr.mxu0 0.0
  %2916 = vmatpush1.msra.mxu0 %v41
  %2917 = vmatprep.subr.mxu0 0.0
  %2918 = vmatpush1.msra.mxu0 %v40
  %2919 = vmatprep.subr.mxu0 0.0
  %2920 = vmatpush1.msra.mxu0 %v39
  %2921 = vmatprep.subr.mxu0 0.0
  %2922 = vmatpush2.msra.mxu0 %v70
  %2923 = vmatprep.subr.mxu0 0.0
  %2924 = vmatpush2.msra.mxu0 %v69
  %2925 = vmatprep.subr.mxu0 0.0
  %2926 = vmatpush2.msra.mxu0 %v68
  %2927 = vmatprep.subr.mxu0 0.0
  %2928 = vmatpush2.msra.mxu0 %v67
  %2929 = vmatprep.subr.mxu0 0.0
  %2930 = vmatpush2.msra.mxu0 %v66
  %2931 = vmatprep.subr.mxu0 0.0
  %2932 = vmatpush2.msra.mxu0 %v65
  %2933 = vmatprep.subr.mxu0 0.0
  %2934 = vmatpush2.msra.mxu0 %v64
  %2935 = vmatprep.subr.mxu0 0.0
  %2936 = vmatpush2.msra.mxu0 %v63
  %2937 = vmatprep.subr.mxu0 0.0
  %2938 = vmatpush2.msra.mxu0 %v62
  %2939 = vmatprep.subr.mxu0 0.0
  %2940 = vmatpush2.msra.mxu0 %v61
  %2941 = vmatprep.subr.mxu0 0.0
  %2942 = vmatpush2.msra.mxu0 %v60
  %2943 = vmatprep.subr.mxu0 0.0
  %2944 = vmatpush2.msra.mxu0 %v59
  %2945 = vmatprep.subr.mxu0 0.0
  %2946 = vmatpush2.msra.mxu0 %v58
  %2947 = vmatprep.subr.mxu0 0.0
  %2948 = vmatpush2.msra.mxu0 %v57
  %2949 = vmatprep.subr.mxu0 0.0
  %2950 = vmatpush2.msra.mxu0 %v56
  %2951 = vmatprep.subr.mxu0 0.0
  %2952 = vmatpush2.msra.mxu0 %v55
  %2953 = vmatprep.mubr.f32.mxu0 %v2770
  %2954 = vmatmul.mubr.f32.gmra.mxu0 %v2762
  %v2955 = vpop.f32.mrf.mxu0
  %v2956 = vadd.f32 %v444, %v2955
  %v2957 = vpop.f32.mrf.mxu0
  %2958 = vdwg.mxu0
  %2959 = vmatprep.subr.mxu0 0.0
  %2960 = vmatpush1.msra.mxu0 %v86
  %2961 = vmatprep.subr.mxu0 0.0
  %2962 = vmatpush1.msra.mxu0 %v85
  %2963 = vmatprep.subr.mxu0 0.0
  %2964 = vmatpush1.msra.mxu0 %v84
  %2965 = vmatprep.subr.mxu0 0.0
  %2966 = vmatpush1.msra.mxu0 %v83
  %2967 = vmatprep.subr.mxu0 0.0
  %2968 = vmatpush1.msra.mxu0 %v82
  %2969 = vmatprep.subr.mxu0 0.0
  %2970 = vmatpush1.msra.mxu0 %v81
  %2971 = vmatprep.subr.mxu0 0.0
  %2972 = vmatpush1.msra.mxu0 %v80
  %2973 = vmatprep.subr.mxu0 0.0
  %2974 = vmatpush1.msra.mxu0 %v79
  %2975 = vmatprep.subr.mxu0 0.0
  %2976 = vmatpush1.msra.mxu0 %v78
  %2977 = vmatprep.subr.mxu0 0.0
  %2978 = vmatpush1.msra.mxu0 %v77
  %2979 = vmatprep.subr.mxu0 0.0
  %2980 = vmatpush1.msra.mxu0 %v76
  %2981 = vmatprep.subr.mxu0 0.0
  %2982 = vmatpush1.msra.mxu0 %v75
  %2983 = vmatprep.subr.mxu0 0.0
  %2984 = vmatpush1.msra.mxu0 %v74
  %2985 = vmatprep.subr.mxu0 0.0
  %2986 = vmatpush1.msra.mxu0 %v73
  %2987 = vmatprep.subr.mxu0 0.0
  %2988 = vmatpush1.msra.mxu0 %v72
  %2989 = vmatprep.subr.mxu0 0.0
  %2990 = vmatpush1.msra.mxu0 %v71
  %2991 = vmatprep.subr.mxu0 0.0
  %2992 = vmatpush2.msra.mxu0 %v102
  %2993 = vmatprep.subr.mxu0 0.0
  %2994 = vmatpush2.msra.mxu0 %v101
  %2995 = vmatprep.subr.mxu0 0.0
  %2996 = vmatpush2.msra.mxu0 %v100
  %2997 = vmatprep.subr.mxu0 0.0
  %2998 = vmatpush2.msra.mxu0 %v99
  %2999 = vmatprep.subr.mxu0 0.0
  %3000 = vmatpush2.msra.mxu0 %v98
  %3001 = vmatprep.subr.mxu0 0.0
  %3002 = vmatpush2.msra.mxu0 %v97
  %3003 = vmatprep.subr.mxu0 0.0
  %3004 = vmatpush2.msra.mxu0 %v96
  %3005 = vmatprep.subr.mxu0 0.0
  %3006 = vmatpush2.msra.mxu0 %v95
  %3007 = vmatprep.subr.mxu0 0.0
  %3008 = vmatpush2.msra.mxu0 %v94
  %3009 = vmatprep.subr.mxu0 0.0
  %3010 = vmatpush2.msra.mxu0 %v93
  %3011 = vmatprep.subr.mxu0 0.0
  %3012 = vmatpush2.msra.mxu0 %v92
  %3013 = vmatprep.subr.mxu0 0.0
  %3014 = vmatpush2.msra.mxu0 %v91
  %3015 = vmatprep.subr.mxu0 0.0
  %3016 = vmatpush2.msra.mxu0 %v90
  %3017 = vmatprep.subr.mxu0 0.0
  %3018 = vmatpush2.msra.mxu0 %v89
  %3019 = vmatprep.subr.mxu0 0.0
  %3020 = vmatpush2.msra.mxu0 %v88
  %3021 = vmatprep.subr.mxu0 0.0
  %3022 = vmatpush2.msra.mxu0 %v87
  %3023 = vmatprep.mubr.f32.mxu0 %v2771
  %3024 = vmatmul.mubr.f32.gmra.mxu0 %v2769
  %v3025 = vpop.f32.mrf.mxu0
  %v3026 = vadd.f32 %v2956, %v3025
  %v3027 = vpop.f32.mrf.mxu0
  %3028 = vdwg.mxu0
  %3029 = vmatprep.subr.mxu0 0.0
  %3030 = vmatpush1.msra.mxu0 %v118
  %3031 = vmatprep.subr.mxu0 0.0
  %3032 = vmatpush1.msra.mxu0 %v117
  %3033 = vmatprep.subr.mxu0 0.0
  %3034 = vmatpush1.msra.mxu0 %v116
  %3035 = vmatprep.subr.mxu0 0.0
  %3036 = vmatpush1.msra.mxu0 %v115
  %3037 = vmatprep.subr.mxu0 0.0
  %3038 = vmatpush1.msra.mxu0 %v114
  %3039 = vmatprep.subr.mxu0 0.0
  %3040 = vmatpush1.msra.mxu0 %v113
  %3041 = vmatprep.subr.mxu0 0.0
  %3042 = vmatpush1.msra.mxu0 %v112
  %3043 = vmatprep.subr.mxu0 0.0
  %3044 = vmatpush1.msra.mxu0 %v111
  %3045 = vmatprep.subr.mxu0 0.0
  %3046 = vmatpush1.msra.mxu0 %v110
  %3047 = vmatprep.subr.mxu0 0.0
  %3048 = vmatpush1.msra.mxu0 %v109
  %3049 = vmatprep.subr.mxu0 0.0
  %3050 = vmatpush1.msra.mxu0 %v108
  %3051 = vmatprep.subr.mxu0 0.0
  %3052 = vmatpush1.msra.mxu0 %v107
  %3053 = vmatprep.subr.mxu0 0.0
  %3054 = vmatpush1.msra.mxu0 %v106
  %3055 = vmatprep.subr.mxu0 0.0
  %3056 = vmatpush1.msra.mxu0 %v105
  %3057 = vmatprep.subr.mxu0 0.0
  %3058 = vmatpush1.msra.mxu0 %v104
  %3059 = vmatprep.subr.mxu0 0.0
  %3060 = vmatpush1.msra.mxu0 %v103
  %3061 = vmatprep.subr.mxu0 0.0
  %3062 = vmatpush2.msra.mxu0 %v134
  %3063 = vmatprep.subr.mxu0 0.0
  %3064 = vmatpush2.msra.mxu0 %v133
  %3065 = vmatprep.subr.mxu0 0.0
  %3066 = vmatpush2.msra.mxu0 %v132
  %3067 = vmatprep.subr.mxu0 0.0
  %3068 = vmatpush2.msra.mxu0 %v131
  %3069 = vmatprep.subr.mxu0 0.0
  %3070 = vmatpush2.msra.mxu0 %v130
  %3071 = vmatprep.subr.mxu0 0.0
  %3072 = vmatpush2.msra.mxu0 %v129
  %3073 = vmatprep.subr.mxu0 0.0
  %3074 = vmatpush2.msra.mxu0 %v128
  %3075 = vmatprep.subr.mxu0 0.0
  %3076 = vmatpush2.msra.mxu0 %v127
  %3077 = vmatprep.subr.mxu0 0.0
  %3078 = vmatpush2.msra.mxu0 %v126
  %3079 = vmatprep.subr.mxu0 0.0
  %3080 = vmatpush2.msra.mxu0 %v125
  %3081 = vmatprep.subr.mxu0 0.0
  %3082 = vmatpush2.msra.mxu0 %v124
  %3083 = vmatprep.subr.mxu0 0.0
  %3084 = vmatpush2.msra.mxu0 %v123
  %3085 = vmatprep.subr.mxu0 0.0
  %3086 = vmatpush2.msra.mxu0 %v122
  %3087 = vmatprep.subr.mxu0 0.0
  %3088 = vmatpush2.msra.mxu0 %v121
  %3089 = vmatprep.subr.mxu0 0.0
  %3090 = vmatpush2.msra.mxu0 %v120
  %3091 = vmatprep.subr.mxu0 0.0
  %3092 = vmatpush2.msra.mxu0 %v119
  %3093 = vmatprep.mubr.f32.mxu0 %v2787
  %3094 = vmatmul.mubr.f32.gmra.mxu0 %v2779
  %v3095 = vpop.f32.mrf.mxu0
  %v3096 = vadd.f32 %v3026, %v3095
  %v3097 = vpop.f32.mrf.mxu0
  %3098 = vdwg.mxu0
  %3099 = vmatprep.subr.mxu0 0.0
  %3100 = vmatpush1.msra.mxu0 %v150
  %3101 = vmatprep.subr.mxu0 0.0
  %3102 = vmatpush1.msra.mxu0 %v149
  %3103 = vmatprep.subr.mxu0 0.0
  %3104 = vmatpush1.msra.mxu0 %v148
  %3105 = vmatprep.subr.mxu0 0.0
  %3106 = vmatpush1.msra.mxu0 %v147
  %3107 = vmatprep.subr.mxu0 0.0
  %3108 = vmatpush1.msra.mxu0 %v146
  %3109 = vmatprep.subr.mxu0 0.0
  %3110 = vmatpush1.msra.mxu0 %v145
  %3111 = vmatprep.subr.mxu0 0.0
  %3112 = vmatpush1.msra.mxu0 %v144
  %3113 = vmatprep.subr.mxu0 0.0
  %3114 = vmatpush1.msra.mxu0 %v143
  %3115 = vmatprep.subr.mxu0 0.0
  %3116 = vmatpush1.msra.mxu0 %v142
  %3117 = vmatprep.subr.mxu0 0.0
  %3118 = vmatpush1.msra.mxu0 %v141
  %3119 = vmatprep.subr.mxu0 0.0
  %3120 = vmatpush1.msra.mxu0 %v140
  %3121 = vmatprep.subr.mxu0 0.0
  %3122 = vmatpush1.msra.mxu0 %v139
  %3123 = vmatprep.subr.mxu0 0.0
  %3124 = vmatpush1.msra.mxu0 %v138
  %3125 = vmatprep.subr.mxu0 0.0
  %3126 = vmatpush1.msra.mxu0 %v137
  %3127 = vmatprep.subr.mxu0 0.0
  %3128 = vmatpush1.msra.mxu0 %v136
  %3129 = vmatprep.subr.mxu0 0.0
  %3130 = vmatpush1.msra.mxu0 %v135
  %3131 = vmatprep.subr.mxu0 0.0
  %3132 = vmatpush2.msra.mxu0 %v166
  %3133 = vmatprep.subr.mxu0 0.0
  %3134 = vmatpush2.msra.mxu0 %v165
  %3135 = vmatprep.subr.mxu0 0.0
  %3136 = vmatpush2.msra.mxu0 %v164
  %3137 = vmatprep.subr.mxu0 0.0
  %3138 = vmatpush2.msra.mxu0 %v163
  %3139 = vmatprep.subr.mxu0 0.0
  %3140 = vmatpush2.msra.mxu0 %v162
  %3141 = vmatprep.subr.mxu0 0.0
  %3142 = vmatpush2.msra.mxu0 %v161
  %3143 = vmatprep.subr.mxu0 0.0
  %3144 = vmatpush2.msra.mxu0 %v160
  %3145 = vmatprep.subr.mxu0 0.0
  %3146 = vmatpush2.msra.mxu0 %v159
  %3147 = vmatprep.subr.mxu0 0.0
  %3148 = vmatpush2.msra.mxu0 %v158
  %3149 = vmatprep.subr.mxu0 0.0
  %3150 = vmatpush2.msra.mxu0 %v157
  %3151 = vmatprep.subr.mxu0 0.0
  %3152 = vmatpush2.msra.mxu0 %v156
  %3153 = vmatprep.subr.mxu0 0.0
  %3154 = vmatpush2.msra.mxu0 %v155
  %3155 = vmatprep.subr.mxu0 0.0
  %3156 = vmatpush2.msra.mxu0 %v154
  %3157 = vmatprep.subr.mxu0 0.0
  %3158 = vmatpush2.msra.mxu0 %v153
  %3159 = vmatprep.subr.mxu0 0.0
  %3160 = vmatpush2.msra.mxu0 %v152
  %3161 = vmatprep.subr.mxu0 0.0
  %3162 = vmatpush2.msra.mxu0 %v151
  %3163 = vmatprep.mubr.f32.mxu0 %v2788
  %3164 = vmatmul.mubr.f32.gmra.mxu0 %v2786
  %v3165 = vpop.f32.mrf.mxu0
  %v3166 = vadd.f32 %v3096, %v3165
  %v3167 = vpop.f32.mrf.mxu0
  %3168 = vdwg.mxu0
  %3169 = vmatprep.subr.mxu0 0.0
  %3170 = vmatpush1.msra.mxu0 %v182
  %3171 = vmatprep.subr.mxu0 0.0
  %3172 = vmatpush1.msra.mxu0 %v181
  %3173 = vmatprep.subr.mxu0 0.0
  %3174 = vmatpush1.msra.mxu0 %v180
  %3175 = vmatprep.subr.mxu0 0.0
  %3176 = vmatpush1.msra.mxu0 %v179
  %3177 = vmatprep.subr.mxu0 0.0
  %3178 = vmatpush1.msra.mxu0 %v178
  %3179 = vmatprep.subr.mxu0 0.0
  %3180 = vmatpush1.msra.mxu0 %v177
  %3181 = vmatprep.subr.mxu0 0.0
  %3182 = vmatpush1.msra.mxu0 %v176
  %3183 = vmatprep.subr.mxu0 0.0
  %3184 = vmatpush1.msra.mxu0 %v175
  %3185 = vmatprep.subr.mxu0 0.0
  %3186 = vmatpush1.msra.mxu0 %v174
  %3187 = vmatprep.subr.mxu0 0.0
  %3188 = vmatpush1.msra.mxu0 %v173
  %3189 = vmatprep.subr.mxu0 0.0
  %3190 = vmatpush1.msra.mxu0 %v172
  %3191 = vmatprep.subr.mxu0 0.0
  %3192 = vmatpush1.msra.mxu0 %v171
  %3193 = vmatprep.subr.mxu0 0.0
  %3194 = vmatpush1.msra.mxu0 %v170
  %3195 = vmatprep.subr.mxu0 0.0
  %3196 = vmatpush1.msra.mxu0 %v169
  %3197 = vmatprep.subr.mxu0 0.0
  %3198 = vmatpush1.msra.mxu0 %v168
  %3199 = vmatprep.subr.mxu0 0.0
  %3200 = vmatpush1.msra.mxu0 %v167
  %3201 = vmatprep.subr.mxu0 0.0
  %3202 = vmatpush2.msra.mxu0 %v198
  %3203 = vmatprep.subr.mxu0 0.0
  %3204 = vmatpush2.msra.mxu0 %v197
  %3205 = vmatprep.subr.mxu0 0.0
  %3206 = vmatpush2.msra.mxu0 %v196
  %3207 = vmatprep.subr.mxu0 0.0
  %3208 = vmatpush2.msra.mxu0 %v195
  %3209 = vmatprep.subr.mxu0 0.0
  %3210 = vmatpush2.msra.mxu0 %v194
  %3211 = vmatprep.subr.mxu0 0.0
  %3212 = vmatpush2.msra.mxu0 %v193
  %3213 = vmatprep.subr.mxu0 0.0
  %3214 = vmatpush2.msra.mxu0 %v192
  %3215 = vmatprep.subr.mxu0 0.0
  %3216 = vmatpush2.msra.mxu0 %v191
  %3217 = vmatprep.subr.mxu0 0.0
  %3218 = vmatpush2.msra.mxu0 %v190
  %3219 = vmatprep.subr.mxu0 0.0
  %3220 = vmatpush2.msra.mxu0 %v189
  %3221 = vmatprep.subr.mxu0 0.0
  %3222 = vmatpush2.msra.mxu0 %v188
  %3223 = vmatprep.subr.mxu0 0.0
  %3224 = vmatpush2.msra.mxu0 %v187
  %3225 = vmatprep.subr.mxu0 0.0
  %3226 = vmatpush2.msra.mxu0 %v186
  %3227 = vmatprep.subr.mxu0 0.0
  %3228 = vmatpush2.msra.mxu0 %v185
  %3229 = vmatprep.subr.mxu0 0.0
  %3230 = vmatpush2.msra.mxu0 %v184
  %3231 = vmatprep.subr.mxu0 0.0
  %3232 = vmatpush2.msra.mxu0 %v183
  %3233 = vmatprep.mubr.f32.mxu0 %v2804
  %3234 = vmatmul.mubr.f32.gmra.mxu0 %v2796
  %v3235 = vpop.f32.mrf.mxu0
  %v3236 = vadd.f32 %v3166, %v3235
  %v3237 = vpop.f32.mrf.mxu0
  %3238 = vdwg.mxu0
  %3239 = vmatprep.subr.mxu0 0.0
  %3240 = vmatpush1.msra.mxu0 %v214
  %3241 = vmatprep.subr.mxu0 0.0
  %3242 = vmatpush1.msra.mxu0 %v213
  %3243 = vmatprep.subr.mxu0 0.0
  %3244 = vmatpush1.msra.mxu0 %v212
  %3245 = vmatprep.subr.mxu0 0.0
  %3246 = vmatpush1.msra.mxu0 %v211
  %3247 = vmatprep.subr.mxu0 0.0
  %3248 = vmatpush1.msra.mxu0 %v210
  %3249 = vmatprep.subr.mxu0 0.0
  %3250 = vmatpush1.msra.mxu0 %v209
  %3251 = vmatprep.subr.mxu0 0.0
  %3252 = vmatpush1.msra.mxu0 %v208
  %3253 = vmatprep.subr.mxu0 0.0
  %3254 = vmatpush1.msra.mxu0 %v207
  %3255 = vmatprep.subr.mxu0 0.0
  %3256 = vmatpush1.msra.mxu0 %v206
  %3257 = vmatprep.subr.mxu0 0.0
  %3258 = vmatpush1.msra.mxu0 %v205
  %3259 = vmatprep.subr.mxu0 0.0
  %3260 = vmatpush1.msra.mxu0 %v204
  %3261 = vmatprep.subr.mxu0 0.0
  %3262 = vmatpush1.msra.mxu0 %v203
  %3263 = vmatprep.subr.mxu0 0.0
  %3264 = vmatpush1.msra.mxu0 %v202
  %3265 = vmatprep.subr.mxu0 0.0
  %3266 = vmatpush1.msra.mxu0 %v201
  %3267 = vmatprep.subr.mxu0 0.0
  %3268 = vmatpush1.msra.mxu0 %v200
  %3269 = vmatprep.subr.mxu0 0.0
  %3270 = vmatpush1.msra.mxu0 %v199
  %3271 = vmatprep.subr.mxu0 0.0
  %3272 = vmatpush2.msra.mxu0 %v230
  %3273 = vmatprep.subr.mxu0 0.0
  %3274 = vmatpush2.msra.mxu0 %v229
  %3275 = vmatprep.subr.mxu0 0.0
  %3276 = vmatpush2.msra.mxu0 %v228
  %3277 = vmatprep.subr.mxu0 0.0
  %3278 = vmatpush2.msra.mxu0 %v227
  %3279 = vmatprep.subr.mxu0 0.0
  %3280 = vmatpush2.msra.mxu0 %v226
  %3281 = vmatprep.subr.mxu0 0.0
  %3282 = vmatpush2.msra.mxu0 %v225
  %3283 = vmatprep.subr.mxu0 0.0
  %3284 = vmatpush2.msra.mxu0 %v224
  %3285 = vmatprep.subr.mxu0 0.0
  %3286 = vmatpush2.msra.mxu0 %v223
  %3287 = vmatprep.subr.mxu0 0.0
  %3288 = vmatpush2.msra.mxu0 %v222
  %3289 = vmatprep.subr.mxu0 0.0
  %3290 = vmatpush2.msra.mxu0 %v221
  %3291 = vmatprep.subr.mxu0 0.0
  %3292 = vmatpush2.msra.mxu0 %v220
  %3293 = vmatprep.subr.mxu0 0.0
  %3294 = vmatpush2.msra.mxu0 %v219
  %3295 = vmatprep.subr.mxu0 0.0
  %3296 = vmatpush2.msra.mxu0 %v218
  %3297 = vmatprep.subr.mxu0 0.0
  %3298 = vmatpush2.msra.mxu0 %v217
  %3299 = vmatprep.subr.mxu0 0.0
  %3300 = vmatpush2.msra.mxu0 %v216
  %3301 = vmatprep.subr.mxu0 0.0
  %3302 = vmatpush2.msra.mxu0 %v215
  %3303 = vmatprep.mubr.f32.mxu0 %v2805
  %3304 = vmatmul.mubr.f32.gmra.mxu0 %v2803
  %v3305 = vpop.f32.mrf.mxu0
  %v3306 = vadd.f32 %v3236, %v3305
  %v3307 = vpop.f32.mrf.mxu0
  %3308 = vdwg.mxu0
  %3309 = vmatprep.subr.mxu0 0.0
  %3310 = vmatpush1.msra.mxu0 %v246
  %3311 = vmatprep.subr.mxu0 0.0
  %3312 = vmatpush1.msra.mxu0 %v245
  %3313 = vmatprep.subr.mxu0 0.0
  %3314 = vmatpush1.msra.mxu0 %v244
  %3315 = vmatprep.subr.mxu0 0.0
  %3316 = vmatpush1.msra.mxu0 %v243
  %3317 = vmatprep.subr.mxu0 0.0
  %3318 = vmatpush1.msra.mxu0 %v242
  %3319 = vmatprep.subr.mxu0 0.0
  %3320 = vmatpush1.msra.mxu0 %v241
  %3321 = vmatprep.subr.mxu0 0.0
  %3322 = vmatpush1.msra.mxu0 %v240
  %3323 = vmatprep.subr.mxu0 0.0
  %3324 = vmatpush1.msra.mxu0 %v239
  %3325 = vmatprep.subr.mxu0 0.0
  %3326 = vmatpush1.msra.mxu0 %v238
  %3327 = vmatprep.subr.mxu0 0.0
  %3328 = vmatpush1.msra.mxu0 %v237
  %3329 = vmatprep.subr.mxu0 0.0
  %3330 = vmatpush1.msra.mxu0 %v236
  %3331 = vmatprep.subr.mxu0 0.0
  %3332 = vmatpush1.msra.mxu0 %v235
  %3333 = vmatprep.subr.mxu0 0.0
  %3334 = vmatpush1.msra.mxu0 %v234
  %3335 = vmatprep.subr.mxu0 0.0
  %3336 = vmatpush1.msra.mxu0 %v233
  %3337 = vmatprep.subr.mxu0 0.0
  %3338 = vmatpush1.msra.mxu0 %v232
  %3339 = vmatprep.subr.mxu0 0.0
  %3340 = vmatpush1.msra.mxu0 %v231
  %3341 = vmatprep.subr.mxu0 0.0
  %3342 = vmatpush2.msra.mxu0 %v262
  %3343 = vmatprep.subr.mxu0 0.0
  %3344 = vmatpush2.msra.mxu0 %v261
  %3345 = vmatprep.subr.mxu0 0.0
  %3346 = vmatpush2.msra.mxu0 %v260
  %3347 = vmatprep.subr.mxu0 0.0
  %3348 = vmatpush2.msra.mxu0 %v259
  %3349 = vmatprep.subr.mxu0 0.0
  %3350 = vmatpush2.msra.mxu0 %v258
  %3351 = vmatprep.subr.mxu0 0.0
  %3352 = vmatpush2.msra.mxu0 %v257
  %3353 = vmatprep.subr.mxu0 0.0
  %3354 = vmatpush2.msra.mxu0 %v256
  %3355 = vmatprep.subr.mxu0 0.0
  %3356 = vmatpush2.msra.mxu0 %v255
  %3357 = vmatprep.subr.mxu0 0.0
  %3358 = vmatpush2.msra.mxu0 %v254
  %3359 = vmatprep.subr.mxu0 0.0
  %3360 = vmatpush2.msra.mxu0 %v253
  %3361 = vmatprep.subr.mxu0 0.0
  %3362 = vmatpush2.msra.mxu0 %v252
  %3363 = vmatprep.subr.mxu0 0.0
  %3364 = vmatpush2.msra.mxu0 %v251
  %3365 = vmatprep.subr.mxu0 0.0
  %3366 = vmatpush2.msra.mxu0 %v250
  %3367 = vmatprep.subr.mxu0 0.0
  %3368 = vmatpush2.msra.mxu0 %v249
  %3369 = vmatprep.subr.mxu0 0.0
  %3370 = vmatpush2.msra.mxu0 %v248
  %3371 = vmatprep.subr.mxu0 0.0
  %3372 = vmatpush2.msra.mxu0 %v247
  %3373 = vmatprep.mubr.f32.mxu0 %v2821
  %3374 = vmatmul.mubr.f32.gmra.mxu0 %v2813
  %v3375 = vpop.f32.mrf.mxu0
  %v3376 = vadd.f32 %v3306, %v3375
  %v3377 = vpop.f32.mrf.mxu0
  %3378 = vdwg.mxu0
  %3379 = vmatprep.subr.mxu0 0.0
  %3380 = vmatpush1.msra.mxu0 %v278
  %3381 = vmatprep.subr.mxu0 0.0
  %3382 = vmatpush1.msra.mxu0 %v277
  %3383 = vmatprep.subr.mxu0 0.0
  %3384 = vmatpush1.msra.mxu0 %v276
  %3385 = vmatprep.subr.mxu0 0.0
  %3386 = vmatpush1.msra.mxu0 %v275
  %3387 = vmatprep.subr.mxu0 0.0
  %3388 = vmatpush1.msra.mxu0 %v274
  %3389 = vmatprep.subr.mxu0 0.0
  %3390 = vmatpush1.msra.mxu0 %v273
  %3391 = vmatprep.subr.mxu0 0.0
  %3392 = vmatpush1.msra.mxu0 %v272
  %3393 = vmatprep.subr.mxu0 0.0
  %3394 = vmatpush1.msra.mxu0 %v271
  %3395 = vmatprep.subr.mxu0 0.0
  %3396 = vmatpush1.msra.mxu0 %v270
  %3397 = vmatprep.subr.mxu0 0.0
  %3398 = vmatpush1.msra.mxu0 %v269
  %3399 = vmatprep.subr.mxu0 0.0
  %3400 = vmatpush1.msra.mxu0 %v268
  %3401 = vmatprep.subr.mxu0 0.0
  %3402 = vmatpush1.msra.mxu0 %v267
  %3403 = vmatprep.subr.mxu0 0.0
  %3404 = vmatpush1.msra.mxu0 %v266
  %3405 = vmatprep.subr.mxu0 0.0
  %3406 = vmatpush1.msra.mxu0 %v265
  %3407 = vmatprep.subr.mxu0 0.0
  %3408 = vmatpush1.msra.mxu0 %v264
  %3409 = vmatprep.subr.mxu0 0.0
  %3410 = vmatpush1.msra.mxu0 %v263
  %3411 = vmatprep.subr.mxu0 0.0
  %3412 = vmatpush2.msra.mxu0 %v294
  %3413 = vmatprep.subr.mxu0 0.0
  %3414 = vmatpush2.msra.mxu0 %v293
  %3415 = vmatprep.subr.mxu0 0.0
  %3416 = vmatpush2.msra.mxu0 %v292
  %3417 = vmatprep.subr.mxu0 0.0
  %3418 = vmatpush2.msra.mxu0 %v291
  %3419 = vmatprep.subr.mxu0 0.0
  %3420 = vmatpush2.msra.mxu0 %v290
  %3421 = vmatprep.subr.mxu0 0.0
  %3422 = vmatpush2.msra.mxu0 %v289
  %3423 = vmatprep.subr.mxu0 0.0
  %3424 = vmatpush2.msra.mxu0 %v288
  %3425 = vmatprep.subr.mxu0 0.0
  %3426 = vmatpush2.msra.mxu0 %v287
  %3427 = vmatprep.subr.mxu0 0.0
  %3428 = vmatpush2.msra.mxu0 %v286
  %3429 = vmatprep.subr.mxu0 0.0
  %3430 = vmatpush2.msra.mxu0 %v285
  %3431 = vmatprep.subr.mxu0 0.0
  %3432 = vmatpush2.msra.mxu0 %v284
  %3433 = vmatprep.subr.mxu0 0.0
  %3434 = vmatpush2.msra.mxu0 %v283
  %3435 = vmatprep.subr.mxu0 0.0
  %3436 = vmatpush2.msra.mxu0 %v282
  %3437 = vmatprep.subr.mxu0 0.0
  %3438 = vmatpush2.msra.mxu0 %v281
  %3439 = vmatprep.subr.mxu0 0.0
  %3440 = vmatpush2.msra.mxu0 %v280
  %3441 = vmatprep.subr.mxu0 0.0
  %3442 = vmatpush2.msra.mxu0 %v279
  %3443 = vmatprep.mubr.f32.mxu0 %v2822
  %3444 = vmatmul.mubr.f32.gmra.mxu0 %v2820
  %v3445 = vpop.f32.mrf.mxu0
  %v3446 = vadd.f32 %v3376, %v3445
  %v3447 = vpop.f32.mrf.mxu0
  %3448 = vdwg.mxu0
  %3449 = vmatprep.subr.mxu0 0.0
  %3450 = vmatpush1.msra.mxu0 %v310
  %3451 = vmatprep.subr.mxu0 0.0
  %3452 = vmatpush1.msra.mxu0 %v309
  %3453 = vmatprep.subr.mxu0 0.0
  %3454 = vmatpush1.msra.mxu0 %v308
  %3455 = vmatprep.subr.mxu0 0.0
  %3456 = vmatpush1.msra.mxu0 %v307
  %3457 = vmatprep.subr.mxu0 0.0
  %3458 = vmatpush1.msra.mxu0 %v306
  %3459 = vmatprep.subr.mxu0 0.0
  %3460 = vmatpush1.msra.mxu0 %v305
  %3461 = vmatprep.subr.mxu0 0.0
  %3462 = vmatpush1.msra.mxu0 %v304
  %3463 = vmatprep.subr.mxu0 0.0
  %3464 = vmatpush1.msra.mxu0 %v303
  %3465 = vmatprep.subr.mxu0 0.0
  %3466 = vmatpush1.msra.mxu0 %v302
  %3467 = vmatprep.subr.mxu0 0.0
  %3468 = vmatpush1.msra.mxu0 %v301
  %3469 = vmatprep.subr.mxu0 0.0
  %3470 = vmatpush1.msra.mxu0 %v300
  %3471 = vmatprep.subr.mxu0 0.0
  %3472 = vmatpush1.msra.mxu0 %v299
  %3473 = vmatprep.subr.mxu0 0.0
  %3474 = vmatpush1.msra.mxu0 %v298
  %3475 = vmatprep.subr.mxu0 0.0
  %3476 = vmatpush1.msra.mxu0 %v297
  %3477 = vmatprep.subr.mxu0 0.0
  %3478 = vmatpush1.msra.mxu0 %v296
  %3479 = vmatprep.subr.mxu0 0.0
  %3480 = vmatpush1.msra.mxu0 %v295
  %3481 = vmatprep.subr.mxu0 0.0
  %3482 = vmatpush2.msra.mxu0 %v326
  %3483 = vmatprep.subr.mxu0 0.0
  %3484 = vmatpush2.msra.mxu0 %v325
  %3485 = vmatprep.subr.mxu0 0.0
  %3486 = vmatpush2.msra.mxu0 %v324
  %3487 = vmatprep.subr.mxu0 0.0
  %3488 = vmatpush2.msra.mxu0 %v323
  %3489 = vmatprep.subr.mxu0 0.0
  %3490 = vmatpush2.msra.mxu0 %v322
  %3491 = vmatprep.subr.mxu0 0.0
  %3492 = vmatpush2.msra.mxu0 %v321
  %3493 = vmatprep.subr.mxu0 0.0
  %3494 = vmatpush2.msra.mxu0 %v320
  %3495 = vmatprep.subr.mxu0 0.0
  %3496 = vmatpush2.msra.mxu0 %v319
  %3497 = vmatprep.subr.mxu0 0.0
  %3498 = vmatpush2.msra.mxu0 %v318
  %3499 = vmatprep.subr.mxu0 0.0
  %3500 = vmatpush2.msra.mxu0 %v317
  %3501 = vmatprep.subr.mxu0 0.0
  %3502 = vmatpush2.msra.mxu0 %v316
  %3503 = vmatprep.subr.mxu0 0.0
  %3504 = vmatpush2.msra.mxu0 %v315
  %3505 = vmatprep.subr.mxu0 0.0
  %3506 = vmatpush2.msra.mxu0 %v314
  %3507 = vmatprep.subr.mxu0 0.0
  %3508 = vmatpush2.msra.mxu0 %v313
  %3509 = vmatprep.subr.mxu0 0.0
  %3510 = vmatpush2.msra.mxu0 %v312
  %3511 = vmatprep.subr.mxu0 0.0
  %3512 = vmatpush2.msra.mxu0 %v311
  %3513 = vmatprep.mubr.f32.mxu0 %v2838
  %3514 = vmatmul.mubr.f32.gmra.mxu0 %v2830
  %v3515 = vpop.f32.mrf.mxu0
  %v3516 = vadd.f32 %v3446, %v3515
  %v3517 = vpop.f32.mrf.mxu0
  %3518 = vdwg.mxu0
  %3519 = vmatprep.subr.mxu0 0.0
  %3520 = vmatpush1.msra.mxu0 %v342
  %3521 = vmatprep.subr.mxu0 0.0
  %3522 = vmatpush1.msra.mxu0 %v341
  %3523 = vmatprep.subr.mxu0 0.0
  %3524 = vmatpush1.msra.mxu0 %v340
  %3525 = vmatprep.subr.mxu0 0.0
  %3526 = vmatpush1.msra.mxu0 %v339
  %3527 = vmatprep.subr.mxu0 0.0
  %3528 = vmatpush1.msra.mxu0 %v338
  %3529 = vmatprep.subr.mxu0 0.0
  %3530 = vmatpush1.msra.mxu0 %v337
  %3531 = vmatprep.subr.mxu0 0.0
  %3532 = vmatpush1.msra.mxu0 %v336
  %3533 = vmatprep.subr.mxu0 0.0
  %3534 = vmatpush1.msra.mxu0 %v335
  %3535 = vmatprep.subr.mxu0 0.0
  %3536 = vmatpush1.msra.mxu0 %v334
  %3537 = vmatprep.subr.mxu0 0.0
  %3538 = vmatpush1.msra.mxu0 %v333
  %3539 = vmatprep.subr.mxu0 0.0
  %3540 = vmatpush1.msra.mxu0 %v332
  %3541 = vmatprep.subr.mxu0 0.0
  %3542 = vmatpush1.msra.mxu0 %v331
  %3543 = vmatprep.subr.mxu0 0.0
  %3544 = vmatpush1.msra.mxu0 %v330
  %3545 = vmatprep.subr.mxu0 0.0
  %3546 = vmatpush1.msra.mxu0 %v329
  %3547 = vmatprep.subr.mxu0 0.0
  %3548 = vmatpush1.msra.mxu0 %v328
  %3549 = vmatprep.subr.mxu0 0.0
  %3550 = vmatpush1.msra.mxu0 %v327
  %3551 = vmatprep.subr.mxu0 0.0
  %3552 = vmatpush2.msra.mxu0 %v358
  %3553 = vmatprep.subr.mxu0 0.0
  %3554 = vmatpush2.msra.mxu0 %v357
  %3555 = vmatprep.subr.mxu0 0.0
  %3556 = vmatpush2.msra.mxu0 %v356
  %3557 = vmatprep.subr.mxu0 0.0
  %3558 = vmatpush2.msra.mxu0 %v355
  %3559 = vmatprep.subr.mxu0 0.0
  %3560 = vmatpush2.msra.mxu0 %v354
  %3561 = vmatprep.subr.mxu0 0.0
  %3562 = vmatpush2.msra.mxu0 %v353
  %3563 = vmatprep.subr.mxu0 0.0
  %3564 = vmatpush2.msra.mxu0 %v352
  %3565 = vmatprep.subr.mxu0 0.0
  %3566 = vmatpush2.msra.mxu0 %v351
  %3567 = vmatprep.subr.mxu0 0.0
  %3568 = vmatpush2.msra.mxu0 %v350
  %3569 = vmatprep.subr.mxu0 0.0
  %3570 = vmatpush2.msra.mxu0 %v349
  %3571 = vmatprep.subr.mxu0 0.0
  %3572 = vmatpush2.msra.mxu0 %v348
  %3573 = vmatprep.subr.mxu0 0.0
  %3574 = vmatpush2.msra.mxu0 %v347
  %3575 = vmatprep.subr.mxu0 0.0
  %3576 = vmatpush2.msra.mxu0 %v346
  %3577 = vmatprep.subr.mxu0 0.0
  %3578 = vmatpush2.msra.mxu0 %v345
  %3579 = vmatprep.subr.mxu0 0.0
  %3580 = vmatpush2.msra.mxu0 %v344
  %3581 = vmatprep.subr.mxu0 0.0
  %3582 = vmatpush2.msra.mxu0 %v343
  %3583 = vmatprep.mubr.f32.mxu0 %v2839
  %3584 = vmatmul.mubr.f32.gmra.mxu0 %v2837
  %v3585 = vpop.f32.mrf.mxu0
  %v3586 = vadd.f32 %v3516, %v3585
  %v3587 = vpop.f32.mrf.mxu0
  %3588 = vdwg.mxu0
  %3589 = vmatprep.subr.mxu0 0.0
  %3590 = vmatpush1.msra.mxu0 %v374
  %3591 = vmatprep.subr.mxu0 0.0
  %3592 = vmatpush1.msra.mxu0 %v373
  %3593 = vmatprep.subr.mxu0 0.0
  %3594 = vmatpush1.msra.mxu0 %v372
  %3595 = vmatprep.subr.mxu0 0.0
  %3596 = vmatpush1.msra.mxu0 %v371
  %3597 = vmatprep.subr.mxu0 0.0
  %3598 = vmatpush1.msra.mxu0 %v370
  %3599 = vmatprep.subr.mxu0 0.0
  %3600 = vmatpush1.msra.mxu0 %v369
  %3601 = vmatprep.subr.mxu0 0.0
  %3602 = vmatpush1.msra.mxu0 %v368
  %3603 = vmatprep.subr.mxu0 0.0
  %3604 = vmatpush1.msra.mxu0 %v367
  %3605 = vmatprep.subr.mxu0 0.0
  %3606 = vmatpush1.msra.mxu0 %v366
  %3607 = vmatprep.subr.mxu0 0.0
  %3608 = vmatpush1.msra.mxu0 %v365
  %3609 = vmatprep.subr.mxu0 0.0
  %3610 = vmatpush1.msra.mxu0 %v364
  %3611 = vmatprep.subr.mxu0 0.0
  %3612 = vmatpush1.msra.mxu0 %v363
  %3613 = vmatprep.subr.mxu0 0.0
  %3614 = vmatpush1.msra.mxu0 %v362
  %3615 = vmatprep.subr.mxu0 0.0
  %3616 = vmatpush1.msra.mxu0 %v361
  %3617 = vmatprep.subr.mxu0 0.0
  %3618 = vmatpush1.msra.mxu0 %v360
  %3619 = vmatprep.subr.mxu0 0.0
  %3620 = vmatpush1.msra.mxu0 %v359
  %3621 = vmatprep.subr.mxu0 0.0
  %3622 = vmatpush2.msra.mxu0 %v390
  %3623 = vmatprep.subr.mxu0 0.0
  %3624 = vmatpush2.msra.mxu0 %v389
  %3625 = vmatprep.subr.mxu0 0.0
  %3626 = vmatpush2.msra.mxu0 %v388
  %3627 = vmatprep.subr.mxu0 0.0
  %3628 = vmatpush2.msra.mxu0 %v387
  %3629 = vmatprep.subr.mxu0 0.0
  %3630 = vmatpush2.msra.mxu0 %v386
  %3631 = vmatprep.subr.mxu0 0.0
  %3632 = vmatpush2.msra.mxu0 %v385
  %3633 = vmatprep.subr.mxu0 0.0
  %3634 = vmatpush2.msra.mxu0 %v384
  %3635 = vmatprep.subr.mxu0 0.0
  %3636 = vmatpush2.msra.mxu0 %v383
  %3637 = vmatprep.subr.mxu0 0.0
  %3638 = vmatpush2.msra.mxu0 %v382
  %3639 = vmatprep.subr.mxu0 0.0
  %3640 = vmatpush2.msra.mxu0 %v381
  %3641 = vmatprep.subr.mxu0 0.0
  %3642 = vmatpush2.msra.mxu0 %v380
  %3643 = vmatprep.subr.mxu0 0.0
  %3644 = vmatpush2.msra.mxu0 %v379
  %3645 = vmatprep.subr.mxu0 0.0
  %3646 = vmatpush2.msra.mxu0 %v378
  %3647 = vmatprep.subr.mxu0 0.0
  %3648 = vmatpush2.msra.mxu0 %v377
  %3649 = vmatprep.subr.mxu0 0.0
  %3650 = vmatpush2.msra.mxu0 %v376
  %3651 = vmatprep.subr.mxu0 0.0
  %3652 = vmatpush2.msra.mxu0 %v375
  %3653 = vmatprep.mubr.f32.mxu0 %v2855
  %3654 = vmatmul.mubr.f32.gmra.mxu0 %v2847
  %v3655 = vpop.f32.mrf.mxu0
  %v3656 = vadd.f32 %v3586, %v3655
  %v3657 = vpop.f32.mrf.mxu0
  %3658 = vdwg.mxu0
  %3659 = vmatprep.subr.mxu0 0.0
  %3660 = vmatpush1.msra.mxu0 %v406
  %3661 = vmatprep.subr.mxu0 0.0
  %3662 = vmatpush1.msra.mxu0 %v405
  %3663 = vmatprep.subr.mxu0 0.0
  %3664 = vmatpush1.msra.mxu0 %v404
  %3665 = vmatprep.subr.mxu0 0.0
  %3666 = vmatpush1.msra.mxu0 %v403
  %3667 = vmatprep.subr.mxu0 0.0
  %3668 = vmatpush1.msra.mxu0 %v402
  %3669 = vmatprep.subr.mxu0 0.0
  %3670 = vmatpush1.msra.mxu0 %v401
  %3671 = vmatprep.subr.mxu0 0.0
  %3672 = vmatpush1.msra.mxu0 %v400
  %3673 = vmatprep.subr.mxu0 0.0
  %3674 = vmatpush1.msra.mxu0 %v399
  %3675 = vmatprep.subr.mxu0 0.0
  %3676 = vmatpush1.msra.mxu0 %v398
  %3677 = vmatprep.subr.mxu0 0.0
  %3678 = vmatpush1.msra.mxu0 %v397
  %3679 = vmatprep.subr.mxu0 0.0
  %3680 = vmatpush1.msra.mxu0 %v396
  %3681 = vmatprep.subr.mxu0 0.0
  %3682 = vmatpush1.msra.mxu0 %v395
  %3683 = vmatprep.subr.mxu0 0.0
  %3684 = vmatpush1.msra.mxu0 %v394
  %3685 = vmatprep.subr.mxu0 0.0
  %3686 = vmatpush1.msra.mxu0 %v393
  %3687 = vmatprep.subr.mxu0 0.0
  %3688 = vmatpush1.msra.mxu0 %v392
  %3689 = vmatprep.subr.mxu0 0.0
  %3690 = vmatpush1.msra.mxu0 %v391
  %3691 = vmatprep.subr.mxu0 0.0
  %3692 = vmatpush2.msra.mxu0 %v422
  %3693 = vmatprep.subr.mxu0 0.0
  %3694 = vmatpush2.msra.mxu0 %v421
  %3695 = vmatprep.subr.mxu0 0.0
  %3696 = vmatpush2.msra.mxu0 %v420
  %3697 = vmatprep.subr.mxu0 0.0
  %3698 = vmatpush2.msra.mxu0 %v419
  %3699 = vmatprep.subr.mxu0 0.0
  %3700 = vmatpush2.msra.mxu0 %v418
  %3701 = vmatprep.subr.mxu0 0.0
  %3702 = vmatpush2.msra.mxu0 %v417
  %3703 = vmatprep.subr.mxu0 0.0
  %3704 = vmatpush2.msra.mxu0 %v416
  %3705 = vmatprep.subr.mxu0 0.0
  %3706 = vmatpush2.msra.mxu0 %v415
  %3707 = vmatprep.subr.mxu0 0.0
  %3708 = vmatpush2.msra.mxu0 %v414
  %3709 = vmatprep.subr.mxu0 0.0
  %3710 = vmatpush2.msra.mxu0 %v413
  %3711 = vmatprep.subr.mxu0 0.0
  %3712 = vmatpush2.msra.mxu0 %v412
  %3713 = vmatprep.subr.mxu0 0.0
  %3714 = vmatpush2.msra.mxu0 %v411
  %3715 = vmatprep.subr.mxu0 0.0
  %3716 = vmatpush2.msra.mxu0 %v410
  %3717 = vmatprep.subr.mxu0 0.0
  %3718 = vmatpush2.msra.mxu0 %v409
  %3719 = vmatprep.subr.mxu0 0.0
  %3720 = vmatpush2.msra.mxu0 %v408
  %3721 = vmatprep.subr.mxu0 0.0
  %3722 = vmatpush2.msra.mxu0 %v407
  %3723 = vmatprep.mubr.f32.mxu0 %v2856
  %3724 = vmatmul.mubr.f32.gmra.mxu0 %v2854
  %v3725 = vpop.f32.mrf.mxu0
  %v3726 = vadd.f32 %v3656, %v3725
  %v3727 = vpop.f32.mrf.mxu0
  %3728 = vdwg.mxu0
  %3729 = vmatprep.subr.mxu0 0.0
  %3730 = vmatpush1.msra.mxu0 %v438
  %3731 = vmatprep.subr.mxu0 0.0
  %3732 = vmatpush1.msra.mxu0 %v437
  %3733 = vmatprep.subr.mxu0 0.0
  %3734 = vmatpush1.msra.mxu0 %v436
  %3735 = vmatprep.subr.mxu0 0.0
  %3736 = vmatpush1.msra.mxu0 %v435
  %3737 = vmatprep.subr.mxu0 0.0
  %3738 = vmatpush1.msra.mxu0 %v434
  %3739 = vmatprep.subr.mxu0 0.0
  %3740 = vmatpush1.msra.mxu0 %v433
  %3741 = vmatprep.subr.mxu0 0.0
  %3742 = vmatpush1.msra.mxu0 %v432
  %3743 = vmatprep.subr.mxu0 0.0
  %3744 = vmatpush1.msra.mxu0 %v431
  %3745 = vmatprep.subr.mxu0 0.0
  %3746 = vmatpush1.msra.mxu0 %v430
  %3747 = vmatprep.subr.mxu0 0.0
  %3748 = vmatpush1.msra.mxu0 %v429
  %3749 = vmatprep.subr.mxu0 0.0
  %3750 = vmatpush1.msra.mxu0 %v428
  %3751 = vmatprep.subr.mxu0 0.0
  %3752 = vmatpush1.msra.mxu0 %v427
  %3753 = vmatprep.subr.mxu0 0.0
  %3754 = vmatpush1.msra.mxu0 %v426
  %3755 = vmatprep.subr.mxu0 0.0
  %3756 = vmatpush1.msra.mxu0 %v425
  %3757 = vmatprep.subr.mxu0 0.0
  %3758 = vmatpush1.msra.mxu0 %v424
  %3759 = vmatprep.subr.mxu0 0.0
  %3760 = vmatpush1.msra.mxu0 %v423
  %3761 = vmatprep.subr.mxu0 0.0
  %3762 = vmatpush2.msra.mxu0 0.0
  %3763 = vmatprep.subr.mxu0 0.0
  %3764 = vmatpush2.msra.mxu0 0.0
  %3765 = vmatprep.subr.mxu0 0.0
  %3766 = vmatpush2.msra.mxu0 0.0
  %3767 = vmatprep.subr.mxu0 0.0
  %3768 = vmatpush2.msra.mxu0 0.0
  %3769 = vmatprep.subr.mxu0 0.0
  %3770 = vmatpush2.msra.mxu0 0.0
  %3771 = vmatprep.subr.mxu0 0.0
  %3772 = vmatpush2.msra.mxu0 0.0
  %3773 = vmatprep.subr.mxu0 0.0
  %3774 = vmatpush2.msra.mxu0 0.0
  %3775 = vmatprep.subr.mxu0 0.0
  %3776 = vmatpush2.msra.mxu0 0.0
  %3777 = vmatprep.subr.mxu0 0.0
  %3778 = vmatpush2.msra.mxu0 0.0
  %3779 = vmatprep.subr.mxu0 0.0
  %3780 = vmatpush2.msra.mxu0 0.0
  %3781 = vmatprep.subr.mxu0 0.0
  %3782 = vmatpush2.msra.mxu0 0.0
  %3783 = vmatprep.subr.mxu0 0.0
  %3784 = vmatpush2.msra.mxu0 0.0
  %3785 = vmatprep.subr.mxu0 0.0
  %3786 = vmatpush2.msra.mxu0 0.0
  %3787 = vmatprep.subr.mxu0 0.0
  %3788 = vmatpush2.msra.mxu0 0.0
  %3789 = vmatprep.subr.mxu0 0.0
  %3790 = vmatpush2.msra.mxu0 0.0
  %3791 = vmatprep.subr.mxu0 0.0
  %3792 = vmatpush2.msra.mxu0 0.0
  %3793 = vmatprep.mubr.f32.mxu0 0.0
  %3794 = vmatmul.mubr.f32.gmra.mxu0 %v2863
  %v3795 = vpop.f32.mrf.mxu0
  %v3796 = vadd.f32 %v3726, %v3795
  %v3797 = vpop.f32.mrf.mxu0
  %3798 = vdwg.mxu0
  %v3799 = vmax.f32 %v3796, 0.0
  %s3800 = scalar_lea.vmem %s3, 256
  %v3801 = vld [vmem:[%s3800] sm:$0xff]
  %v3802 = vld [vmem:[%s3800 + $0x8] sm:$0xff]
  %v3803 = vld [vmem:[%s3800 + $0x10] sm:$0xff]
  %v3804 = vld [vmem:[%s3800 + $0x18] sm:$0xff]
  %v3805 = vld [vmem:[%s3800 + $0x20] sm:$0xff]
  %v3806 = vld [vmem:[%s3800 + $0x28] sm:$0xff]
  %v3807 = vld [vmem:[%s3800 + $0x30] sm:$0xff]
  %v3808 = vld [vmem:[%s3800 + $0x38] sm:$0xff]
  %v3809 = vld [vmem:[%s3800 + $0x40] sm:$0xff]
  %v3810 = vld [vmem:[%s3800 + $0x48] sm:$0xff]
  %v3811 = vld [vmem:[%s3800 + $0x50] sm:$0xff]
  %v3812 = vld [vmem:[%s3800 + $0x58] sm:$0xff]
  %v3813 = vld [vmem:[%s3800 + $0x60] sm:$0xff]
  %v3814 = vld [vmem:[%s3800 + $0x68] sm:$0xff]
  %v3815 = vld [vmem:[%s3800 + $0x70] sm:$0xff]
  %v3816 = vld [vmem:[%s3800 + $0x78] sm:$0xff]
  %v3818 = vsel %vm2591, %v3799, 0
  %3820 = vmatprep.subr.mxu0 0.0
  %3821 = vmatpush1.msra.mxu0 0.0
  %3822 = vmatprep.subr.mxu0 0.0
  %3823 = vmatpush1.msra.mxu0 0.0
  %3824 = vmatprep.subr.mxu0 0.0
  %3825 = vmatpush1.msra.mxu0 0.0
  %3826 = vmatprep.subr.mxu0 0.0
  %3827 = vmatpush1.msra.mxu0 0.0
  %3828 = vmatprep.subr.mxu0 0.0
  %3829 = vmatpush1.msra.mxu0 0.0
  %3830 = vmatprep.subr.mxu0 0.0
  %3831 = vmatpush1.msra.mxu0 0.0
  %3832 = vmatprep.subr.mxu0 0.0
  %3833 = vmatpush1.msra.mxu0 0.0
  %3834 = vmatprep.subr.mxu0 0.0
  %3835 = vmatpush1.msra.mxu0 0.0
  %3836 = vmatprep.subr.mxu0 %v3816
  %3837 = vmatpush1.msra.mxu0 %v3815
  %3838 = vmatprep.subr.mxu0 %v3814
  %3839 = vmatpush1.msra.mxu0 %v3813
  %3840 = vmatprep.subr.mxu0 %v3812
  %3841 = vmatpush1.msra.mxu0 %v3811
  %3842 = vmatprep.subr.mxu0 %v3810
  %3843 = vmatpush1.msra.mxu0 %v3809
  %3844 = vmatprep.subr.mxu0 %v3808
  %3845 = vmatpush1.msra.mxu0 %v3807
  %3846 = vmatprep.subr.mxu0 %v3806
  %3847 = vmatpush1.msra.mxu0 %v3805
  %3848 = vmatprep.subr.mxu0 %v3804
  %3849 = vmatpush1.msra.mxu0 %v3803
  %3850 = vmatprep.subr.mxu0 %v3802
  %3851 = vmatpush1.msra.mxu0 %v3801
  %3852 = vmatprep.subr.mxu0 0.0
  %3853 = vmatpush2.msra.mxu0 0.0
  %3854 = vmatprep.subr.mxu0 0.0
  %3855 = vmatpush2.msra.mxu0 0.0
  %3856 = vmatprep.subr.mxu0 0.0
  %3857 = vmatpush2.msra.mxu0 0.0
  %3858 = vmatprep.subr.mxu0 0.0
  %3859 = vmatpush2.msra.mxu0 0.0
  %3860 = vmatprep.subr.mxu0 0.0
  %3861 = vmatpush2.msra.mxu0 0.0
  %3862 = vmatprep.subr.mxu0 0.0
  %3863 = vmatpush2.msra.mxu0 0.0
  %3864 = vmatprep.subr.mxu0 0.0
  %3865 = vmatpush2.msra.mxu0 0.0
  %3866 = vmatprep.subr.mxu0 0.0
  %3867 = vmatpush2.msra.mxu0 0.0
  %3868 = vmatprep.subr.mxu0 0.0
  %3869 = vmatpush2.msra.mxu0 0.0
  %3870 = vmatprep.subr.mxu0 0.0
  %3871 = vmatpush2.msra.mxu0 0.0
  %3872 = vmatprep.subr.mxu0 0.0
  %3873 = vmatpush2.msra.mxu0 0.0
  %3874 = vmatprep.subr.mxu0 0.0
  %3875 = vmatpush2.msra.mxu0 0.0
  %3876 = vmatprep.subr.mxu0 0.0
  %3877 = vmatpush2.msra.mxu0 0.0
  %3878 = vmatprep.subr.mxu0 0.0
  %3879 = vmatpush2.msra.mxu0 0.0
  %3880 = vmatprep.subr.mxu0 0.0
  %3881 = vmatpush2.msra.mxu0 0.0
  %3882 = vmatprep.subr.mxu0 0.0
  %3883 = vmatpush2.msra.mxu0 0.0
  %3884 = vmatprep.mubr.f32.mxu0 0.0
  %3885 = vmatmul.mubr.f32.gmra.mxu0 %v3818
  %v3886 = vpop.f32.mrf.mxu0
  %v3887 = vadd.f32 0.0, %v3886
  %v3888 = vpop.f32.mrf.mxu0
  %v3889 = vadd.f32 0.0, %v3888
  %3890 = vdwg.mxu0
  %v3891 = vadd.f32 %v2736, %v3887
  %v3892 = vadd.f32 %v2738, %v3889
  %s3893 = scalar_lea.vmem %s0, 150
  %v3894 = vld [vmem:[%s3893] sm:$0xff]
  %v3895 = vld [vmem:[%s3893 + $0x8] sm:$0xff]
  %v3896 = vld [vmem:[%s3893 + $0x10] sm:$0xff]
  %v3897 = vld [vmem:[%s3893 + $0x18] sm:$0xff]
  %v3898 = vld [vmem:[%s3893 + $0x20] sm:$0xff]
  %v3899 = vld [vmem:[%s3893 + $0x28] sm:$0xff]
  %v3900 = vld [vmem:[%s3893 + $0x30] sm:$0x3]
  %v3908 = vcombine.high %v3894, %v3894
  %v3910 = vunpack.c.l.s4 1983009808
  %v3911 = vunpack.c.0.s8 %v3910
  %v3912 = vlaneseq
  %v3913 = vshrl.u32 %v3912, 7
  %v3914 = vsub.s32 %v3911, %v3913
  %v3915 = vrot.slane %v3894, %v3914
  %v3917 = vunpack.c.l.s4 1983009808
  %v3918 = vunpack.c.0.s8 %v3917
  %v3919 = vlaneseq
  %v3920 = vshrl.u32 %v3919, 7
  %v3921 = vsub.s32 %v3918, %v3920
  %v3922 = vrot.slane %v3908, %v3921
  %v3923 = vcombine.high %v3915, %v3915
  %v3924 = vcombine.high %v3922, %v3922
  %v3925 = vcombine.high %v3895, %v3895
  %v3927 = vunpack.c.l.s4 1983009808
  %v3928 = vunpack.c.0.s8 %v3927
  %v3929 = vlaneseq
  %v3930 = vshrl.u32 %v3929, 7
  %v3931 = vsub.s32 %v3928, %v3930
  %v3932 = vrot.slane %v3895, %v3931
  %v3934 = vunpack.c.l.s4 1983009808
  %v3935 = vunpack.c.0.s8 %v3934
  %v3936 = vlaneseq
  %v3937 = vshrl.u32 %v3936, 7
  %v3938 = vsub.s32 %v3935, %v3937
  %v3939 = vrot.slane %v3925, %v3938
  %v3940 = vcombine.high %v3932, %v3932
  %v3941 = vcombine.high %v3939, %v3939
  %v3942 = vcombine.high %v3896, %v3896
  %v3944 = vunpack.c.l.s4 1983009808
  %v3945 = vunpack.c.0.s8 %v3944
  %v3946 = vlaneseq
  %v3947 = vshrl.u32 %v3946, 7
  %v3948 = vsub.s32 %v3945, %v3947
  %v3949 = vrot.slane %v3896, %v3948
  %v3951 = vunpack.c.l.s4 1983009808
  %v3952 = vunpack.c.0.s8 %v3951
  %v3953 = vlaneseq
  %v3954 = vshrl.u32 %v3953, 7
  %v3955 = vsub.s32 %v3952, %v3954
  %v3956 = vrot.slane %v3942, %v3955
  %v3957 = vcombine.high %v3949, %v3949
  %v3958 = vcombine.high %v3956, %v3956
  %v3959 = vcombine.high %v3897, %v3897
  %v3961 = vunpack.c.l.s4 1983009808
  %v3962 = vunpack.c.0.s8 %v3961
  %v3963 = vlaneseq
  %v3964 = vshrl.u32 %v3963, 7
  %v3965 = vsub.s32 %v3962, %v3964
  %v3966 = vrot.slane %v3897, %v3965
  %v3968 = vunpack.c.l.s4 1983009808
  %v3969 = vunpack.c.0.s8 %v3968
  %v3970 = vlaneseq
  %v3971 = vshrl.u32 %v3970, 7
  %v3972 = vsub.s32 %v3969, %v3971
  %v3973 = vrot.slane %v3959, %v3972
  %v3974 = vcombine.high %v3966, %v3966
  %v3975 = vcombine.high %v3973, %v3973
  %v3976 = vcombine.high %v3898, %v3898
  %v3978 = vunpack.c.l.s4 1983009808
  %v3979 = vunpack.c.0.s8 %v3978
  %v3980 = vlaneseq
  %v3981 = vshrl.u32 %v3980, 7
  %v3982 = vsub.s32 %v3979, %v3981
  %v3983 = vrot.slane %v3898, %v3982
  %v3985 = vunpack.c.l.s4 1983009808
  %v3986 = vunpack.c.0.s8 %v3985
  %v3987 = vlaneseq
  %v3988 = vshrl.u32 %v3987, 7
  %v3989 = vsub.s32 %v3986, %v3988
  %v3990 = vrot.slane %v3976, %v3989
  %v3991 = vcombine.high %v3983, %v3983
  %v3992 = vcombine.high %v3990, %v3990
  %v3993 = vcombine.high %v3899, %v3899
  %v3995 = vunpack.c.l.s4 1983009808
  %v3996 = vunpack.c.0.s8 %v3995
  %v3997 = vlaneseq
  %v3998 = vshrl.u32 %v3997, 7
  %v3999 = vsub.s32 %v3996, %v3998
  %v4000 = vrot.slane %v3899, %v3999
  %v4002 = vunpack.c.l.s4 1983009808
  %v4003 = vunpack.c.0.s8 %v4002
  %v4004 = vlaneseq
  %v4005 = vshrl.u32 %v4004, 7
  %v4006 = vsub.s32 %v4003, %v4005
  %v4007 = vrot.slane %v3993, %v4006
  %v4008 = vcombine.high %v4000, %v4000
  %v4009 = vcombine.high %v4007, %v4007
  %v4011 = vunpack.c.l.s4 1983009808
  %v4012 = vunpack.c.0.s8 %v4011
  %v4013 = vlaneseq
  %v4014 = vshrl.u32 %v4013, 7
  %v4015 = vsub.s32 %v4012, %v4014
  %v4016 = vrot.slane %v3900, %v4015
  %4042 = vmatprep.subr.mxu0 0.0
  %4043 = vmatpush1.msra.mxu0 %v54
  %4044 = vmatprep.subr.mxu0 0.0
  %4045 = vmatpush1.msra.mxu0 %v53
  %4046 = vmatprep.subr.mxu0 0.0
  %4047 = vmatpush1.msra.mxu0 %v52
  %4048 = vmatprep.subr.mxu0 0.0
  %4049 = vmatpush1.msra.mxu0 %v51
  %4050 = vmatprep.subr.mxu0 0.0
  %4051 = vmatpush1.msra.mxu0 %v50
  %4052 = vmatprep.subr.mxu0 0.0
  %4053 = vmatpush1.msra.mxu0 %v49
  %4054 = vmatprep.subr.mxu0 0.0
  %4055 = vmatpush1.msra.mxu0 %v48
  %4056 = vmatprep.subr.mxu0 0.0
  %4057 = vmatpush1.msra.mxu0 %v47
  %4058 = vmatprep.subr.mxu0 0.0
  %4059 = vmatpush1.msra.mxu0 %v46
  %4060 = vmatprep.subr.mxu0 0.0
  %4061 = vmatpush1.msra.mxu0 %v45
  %4062 = vmatprep.subr.mxu0 0.0
  %4063 = vmatpush1.msra.mxu0 %v44
  %4064 = vmatprep.subr.mxu0 0.0
  %4065 = vmatpush1.msra.mxu0 %v43
  %4066 = vmatprep.subr.mxu0 0.0
  %4067 = vmatpush1.msra.mxu0 %v42
  %4068 = vmatprep.subr.mxu0 0.0
  %4069 = vmatpush1.msra.mxu0 %v41
  %4070 = vmatprep.subr.mxu0 0.0
  %4071 = vmatpush1.msra.mxu0 %v40
  %4072 = vmatprep.subr.mxu0 0.0
  %4073 = vmatpush1.msra.mxu0 %v39
  %4074 = vmatprep.subr.mxu0 0.0
  %4075 = vmatpush2.msra.mxu0 %v70
  %4076 = vmatprep.subr.mxu0 0.0
  %4077 = vmatpush2.msra.mxu0 %v69
  %4078 = vmatprep.subr.mxu0 0.0
  %4079 = vmatpush2.msra.mxu0 %v68
  %4080 = vmatprep.subr.mxu0 0.0
  %4081 = vmatpush2.msra.mxu0 %v67
  %4082 = vmatprep.subr.mxu0 0.0
  %4083 = vmatpush2.msra.mxu0 %v66
  %4084 = vmatprep.subr.mxu0 0.0
  %4085 = vmatpush2.msra.mxu0 %v65
  %4086 = vmatprep.subr.mxu0 0.0
  %4087 = vmatpush2.msra.mxu0 %v64
  %4088 = vmatprep.subr.mxu0 0.0
  %4089 = vmatpush2.msra.mxu0 %v63
  %4090 = vmatprep.subr.mxu0 0.0
  %4091 = vmatpush2.msra.mxu0 %v62
  %4092 = vmatprep.subr.mxu0 0.0
  %4093 = vmatpush2.msra.mxu0 %v61
  %4094 = vmatprep.subr.mxu0 0.0
  %4095 = vmatpush2.msra.mxu0 %v60
  %4096 = vmatprep.subr.mxu0 0.0
  %4097 = vmatpush2.msra.mxu0 %v59
  %4098 = vmatprep.subr.mxu0 0.0
  %4099 = vmatpush2.msra.mxu0 %v58
  %4100 = vmatprep.subr.mxu0 0.0
  %4101 = vmatpush2.msra.mxu0 %v57
  %4102 = vmatprep.subr.mxu0 0.0
  %4103 = vmatpush2.msra.mxu0 %v56
  %4104 = vmatprep.subr.mxu0 0.0
  %4105 = vmatpush2.msra.mxu0 %v55
  %4106 = vmatprep.mubr.f32.mxu0 %v3923
  %4107 = vmatmul.mubr.f32.gmra.mxu0 %v3915
  %v4108 = vpop.f32.mrf.mxu0
  %v4109 = vadd.f32 %v444, %v4108
  %v4110 = vpop.f32.mrf.mxu0
  %4111 = vdwg.mxu0
  %4112 = vmatprep.subr.mxu0 0.0
  %4113 = vmatpush1.msra.mxu0 %v86
  %4114 = vmatprep.subr.mxu0 0.0
  %4115 = vmatpush1.msra.mxu0 %v85
  %4116 = vmatprep.subr.mxu0 0.0
  %4117 = vmatpush1.msra.mxu0 %v84
  %4118 = vmatprep.subr.mxu0 0.0
  %4119 = vmatpush1.msra.mxu0 %v83
  %4120 = vmatprep.subr.mxu0 0.0
  %4121 = vmatpush1.msra.mxu0 %v82
  %4122 = vmatprep.subr.mxu0 0.0
  %4123 = vmatpush1.msra.mxu0 %v81
  %4124 = vmatprep.subr.mxu0 0.0
  %4125 = vmatpush1.msra.mxu0 %v80
  %4126 = vmatprep.subr.mxu0 0.0
  %4127 = vmatpush1.msra.mxu0 %v79
  %4128 = vmatprep.subr.mxu0 0.0
  %4129 = vmatpush1.msra.mxu0 %v78
  %4130 = vmatprep.subr.mxu0 0.0
  %4131 = vmatpush1.msra.mxu0 %v77
  %4132 = vmatprep.subr.mxu0 0.0
  %4133 = vmatpush1.msra.mxu0 %v76
  %4134 = vmatprep.subr.mxu0 0.0
  %4135 = vmatpush1.msra.mxu0 %v75
  %4136 = vmatprep.subr.mxu0 0.0
  %4137 = vmatpush1.msra.mxu0 %v74
  %4138 = vmatprep.subr.mxu0 0.0
  %4139 = vmatpush1.msra.mxu0 %v73
  %4140 = vmatprep.subr.mxu0 0.0
  %4141 = vmatpush1.msra.mxu0 %v72
  %4142 = vmatprep.subr.mxu0 0.0
  %4143 = vmatpush1.msra.mxu0 %v71
  %4144 = vmatprep.subr.mxu0 0.0
  %4145 = vmatpush2.msra.mxu0 %v102
  %4146 = vmatprep.subr.mxu0 0.0
  %4147 = vmatpush2.msra.mxu0 %v101
  %4148 = vmatprep.subr.mxu0 0.0
  %4149 = vmatpush2.msra.mxu0 %v100
  %4150 = vmatprep.subr.mxu0 0.0
  %4151 = vmatpush2.msra.mxu0 %v99
  %4152 = vmatprep.subr.mxu0 0.0
  %4153 = vmatpush2.msra.mxu0 %v98
  %4154 = vmatprep.subr.mxu0 0.0
  %4155 = vmatpush2.msra.mxu0 %v97
  %4156 = vmatprep.subr.mxu0 0.0
  %4157 = vmatpush2.msra.mxu0 %v96
  %4158 = vmatprep.subr.mxu0 0.0
  %4159 = vmatpush2.msra.mxu0 %v95
  %4160 = vmatprep.subr.mxu0 0.0
  %4161 = vmatpush2.msra.mxu0 %v94
  %4162 = vmatprep.subr.mxu0 0.0
  %4163 = vmatpush2.msra.mxu0 %v93
  %4164 = vmatprep.subr.mxu0 0.0
  %4165 = vmatpush2.msra.mxu0 %v92
  %4166 = vmatprep.subr.mxu0 0.0
  %4167 = vmatpush2.msra.mxu0 %v91
  %4168 = vmatprep.subr.mxu0 0.0
  %4169 = vmatpush2.msra.mxu0 %v90
  %4170 = vmatprep.subr.mxu0 0.0
  %4171 = vmatpush2.msra.mxu0 %v89
  %4172 = vmatprep.subr.mxu0 0.0
  %4173 = vmatpush2.msra.mxu0 %v88
  %4174 = vmatprep.subr.mxu0 0.0
  %4175 = vmatpush2.msra.mxu0 %v87
  %4176 = vmatprep.mubr.f32.mxu0 %v3924
  %4177 = vmatmul.mubr.f32.gmra.mxu0 %v3922
  %v4178 = vpop.f32.mrf.mxu0
  %v4179 = vadd.f32 %v4109, %v4178
  %v4180 = vpop.f32.mrf.mxu0
  %4181 = vdwg.mxu0
  %4182 = vmatprep.subr.mxu0 0.0
  %4183 = vmatpush1.msra.mxu0 %v118
  %4184 = vmatprep.subr.mxu0 0.0
  %4185 = vmatpush1.msra.mxu0 %v117
  %4186 = vmatprep.subr.mxu0 0.0
  %4187 = vmatpush1.msra.mxu0 %v116
  %4188 = vmatprep.subr.mxu0 0.0
  %4189 = vmatpush1.msra.mxu0 %v115
  %4190 = vmatprep.subr.mxu0 0.0
  %4191 = vmatpush1.msra.mxu0 %v114
  %4192 = vmatprep.subr.mxu0 0.0
  %4193 = vmatpush1.msra.mxu0 %v113
  %4194 = vmatprep.subr.mxu0 0.0
  %4195 = vmatpush1.msra.mxu0 %v112
  %4196 = vmatprep.subr.mxu0 0.0
  %4197 = vmatpush1.msra.mxu0 %v111
  %4198 = vmatprep.subr.mxu0 0.0
  %4199 = vmatpush1.msra.mxu0 %v110
  %4200 = vmatprep.subr.mxu0 0.0
  %4201 = vmatpush1.msra.mxu0 %v109
  %4202 = vmatprep.subr.mxu0 0.0
  %4203 = vmatpush1.msra.mxu0 %v108
  %4204 = vmatprep.subr.mxu0 0.0
  %4205 = vmatpush1.msra.mxu0 %v107
  %4206 = vmatprep.subr.mxu0 0.0
  %4207 = vmatpush1.msra.mxu0 %v106
  %4208 = vmatprep.subr.mxu0 0.0
  %4209 = vmatpush1.msra.mxu0 %v105
  %4210 = vmatprep.subr.mxu0 0.0
  %4211 = vmatpush1.msra.mxu0 %v104
  %4212 = vmatprep.subr.mxu0 0.0
  %4213 = vmatpush1.msra.mxu0 %v103
  %4214 = vmatprep.subr.mxu0 0.0
  %4215 = vmatpush2.msra.mxu0 %v134
  %4216 = vmatprep.subr.mxu0 0.0
  %4217 = vmatpush2.msra.mxu0 %v133
  %4218 = vmatprep.subr.mxu0 0.0
  %4219 = vmatpush2.msra.mxu0 %v132
  %4220 = vmatprep.subr.mxu0 0.0
  %4221 = vmatpush2.msra.mxu0 %v131
  %4222 = vmatprep.subr.mxu0 0.0
  %4223 = vmatpush2.msra.mxu0 %v130
  %4224 = vmatprep.subr.mxu0 0.0
  %4225 = vmatpush2.msra.mxu0 %v129
  %4226 = vmatprep.subr.mxu0 0.0
  %4227 = vmatpush2.msra.mxu0 %v128
  %4228 = vmatprep.subr.mxu0 0.0
  %4229 = vmatpush2.msra.mxu0 %v127
  %4230 = vmatprep.subr.mxu0 0.0
  %4231 = vmatpush2.msra.mxu0 %v126
  %4232 = vmatprep.subr.mxu0 0.0
  %4233 = vmatpush2.msra.mxu0 %v125
  %4234 = vmatprep.subr.mxu0 0.0
  %4235 = vmatpush2.msra.mxu0 %v124
  %4236 = vmatprep.subr.mxu0 0.0
  %4237 = vmatpush2.msra.mxu0 %v123
  %4238 = vmatprep.subr.mxu0 0.0
  %4239 = vmatpush2.msra.mxu0 %v122
  %4240 = vmatprep.subr.mxu0 0.0
  %4241 = vmatpush2.msra.mxu0 %v121
  %4242 = vmatprep.subr.mxu0 0.0
  %4243 = vmatpush2.msra.mxu0 %v120
  %4244 = vmatprep.subr.mxu0 0.0
  %4245 = vmatpush2.msra.mxu0 %v119
  %4246 = vmatprep.mubr.f32.mxu0 %v3940
  %4247 = vmatmul.mubr.f32.gmra.mxu0 %v3932
  %v4248 = vpop.f32.mrf.mxu0
  %v4249 = vadd.f32 %v4179, %v4248
  %v4250 = vpop.f32.mrf.mxu0
  %4251 = vdwg.mxu0
  %4252 = vmatprep.subr.mxu0 0.0
  %4253 = vmatpush1.msra.mxu0 %v150
  %4254 = vmatprep.subr.mxu0 0.0
  %4255 = vmatpush1.msra.mxu0 %v149
  %4256 = vmatprep.subr.mxu0 0.0
  %4257 = vmatpush1.msra.mxu0 %v148
  %4258 = vmatprep.subr.mxu0 0.0
  %4259 = vmatpush1.msra.mxu0 %v147
  %4260 = vmatprep.subr.mxu0 0.0
  %4261 = vmatpush1.msra.mxu0 %v146
  %4262 = vmatprep.subr.mxu0 0.0
  %4263 = vmatpush1.msra.mxu0 %v145
  %4264 = vmatprep.subr.mxu0 0.0
  %4265 = vmatpush1.msra.mxu0 %v144
  %4266 = vmatprep.subr.mxu0 0.0
  %4267 = vmatpush1.msra.mxu0 %v143
  %4268 = vmatprep.subr.mxu0 0.0
  %4269 = vmatpush1.msra.mxu0 %v142
  %4270 = vmatprep.subr.mxu0 0.0
  %4271 = vmatpush1.msra.mxu0 %v141
  %4272 = vmatprep.subr.mxu0 0.0
  %4273 = vmatpush1.msra.mxu0 %v140
  %4274 = vmatprep.subr.mxu0 0.0
  %4275 = vmatpush1.msra.mxu0 %v139
  %4276 = vmatprep.subr.mxu0 0.0
  %4277 = vmatpush1.msra.mxu0 %v138
  %4278 = vmatprep.subr.mxu0 0.0
  %4279 = vmatpush1.msra.mxu0 %v137
  %4280 = vmatprep.subr.mxu0 0.0
  %4281 = vmatpush1.msra.mxu0 %v136
  %4282 = vmatprep.subr.mxu0 0.0
  %4283 = vmatpush1.msra.mxu0 %v135
  %4284 = vmatprep.subr.mxu0 0.0
  %4285 = vmatpush2.msra.mxu0 %v166
  %4286 = vmatprep.subr.mxu0 0.0
  %4287 = vmatpush2.msra.mxu0 %v165
  %4288 = vmatprep.subr.mxu0 0.0
  %4289 = vmatpush2.msra.mxu0 %v164
  %4290 = vmatprep.subr.mxu0 0.0
  %4291 = vmatpush2.msra.mxu0 %v163
  %4292 = vmatprep.subr.mxu0 0.0
  %4293 = vmatpush2.msra.mxu0 %v162
  %4294 = vmatprep.subr.mxu0 0.0
  %4295 = vmatpush2.msra.mxu0 %v161
  %4296 = vmatprep.subr.mxu0 0.0
  %4297 = vmatpush2.msra.mxu0 %v160
  %4298 = vmatprep.subr.mxu0 0.0
  %4299 = vmatpush2.msra.mxu0 %v159
  %4300 = vmatprep.subr.mxu0 0.0
  %4301 = vmatpush2.msra.mxu0 %v158
  %4302 = vmatprep.subr.mxu0 0.0
  %4303 = vmatpush2.msra.mxu0 %v157
  %4304 = vmatprep.subr.mxu0 0.0
  %4305 = vmatpush2.msra.mxu0 %v156
  %4306 = vmatprep.subr.mxu0 0.0
  %4307 = vmatpush2.msra.mxu0 %v155
  %4308 = vmatprep.subr.mxu0 0.0
  %4309 = vmatpush2.msra.mxu0 %v154
  %4310 = vmatprep.subr.mxu0 0.0
  %4311 = vmatpush2.msra.mxu0 %v153
  %4312 = vmatprep.subr.mxu0 0.0
  %4313 = vmatpush2.msra.mxu0 %v152
  %4314 = vmatprep.subr.mxu0 0.0
  %4315 = vmatpush2.msra.mxu0 %v151
  %4316 = vmatprep.mubr.f32.mxu0 %v3941
  %4317 = vmatmul.mubr.f32.gmra.mxu0 %v3939
  %v4318 = vpop.f32.mrf.mxu0
  %v4319 = vadd.f32 %v4249, %v4318
  %v4320 = vpop.f32.mrf.mxu0
  %4321 = vdwg.mxu0
  %4322 = vmatprep.subr.mxu0 0.0
  %4323 = vmatpush1.msra.mxu0 %v182
  %4324 = vmatprep.subr.mxu0 0.0
  %4325 = vmatpush1.msra.mxu0 %v181
  %4326 = vmatprep.subr.mxu0 0.0
  %4327 = vmatpush1.msra.mxu0 %v180
  %4328 = vmatprep.subr.mxu0 0.0
  %4329 = vmatpush1.msra.mxu0 %v179
  %4330 = vmatprep.subr.mxu0 0.0
  %4331 = vmatpush1.msra.mxu0 %v178
  %4332 = vmatprep.subr.mxu0 0.0
  %4333 = vmatpush1.msra.mxu0 %v177
  %4334 = vmatprep.subr.mxu0 0.0
  %4335 = vmatpush1.msra.mxu0 %v176
  %4336 = vmatprep.subr.mxu0 0.0
  %4337 = vmatpush1.msra.mxu0 %v175
  %4338 = vmatprep.subr.mxu0 0.0
  %4339 = vmatpush1.msra.mxu0 %v174
  %4340 = vmatprep.subr.mxu0 0.0
  %4341 = vmatpush1.msra.mxu0 %v173
  %4342 = vmatprep.subr.mxu0 0.0
  %4343 = vmatpush1.msra.mxu0 %v172
  %4344 = vmatprep.subr.mxu0 0.0
  %4345 = vmatpush1.msra.mxu0 %v171
  %4346 = vmatprep.subr.mxu0 0.0
  %4347 = vmatpush1.msra.mxu0 %v170
  %4348 = vmatprep.subr.mxu0 0.0
  %4349 = vmatpush1.msra.mxu0 %v169
  %4350 = vmatprep.subr.mxu0 0.0
  %4351 = vmatpush1.msra.mxu0 %v168
  %4352 = vmatprep.subr.mxu0 0.0
  %4353 = vmatpush1.msra.mxu0 %v167
  %4354 = vmatprep.subr.mxu0 0.0
  %4355 = vmatpush2.msra.mxu0 %v198
  %4356 = vmatprep.subr.mxu0 0.0
  %4357 = vmatpush2.msra.mxu0 %v197
  %4358 = vmatprep.subr.mxu0 0.0
  %4359 = vmatpush2.msra.mxu0 %v196
  %4360 = vmatprep.subr.mxu0 0.0
  %4361 = vmatpush2.msra.mxu0 %v195
  %4362 = vmatprep.subr.mxu0 0.0
  %4363 = vmatpush2.msra.mxu0 %v194
  %4364 = vmatprep.subr.mxu0 0.0
  %4365 = vmatpush2.msra.mxu0 %v193
  %4366 = vmatprep.subr.mxu0 0.0
  %4367 = vmatpush2.msra.mxu0 %v192
  %4368 = vmatprep.subr.mxu0 0.0
  %4369 = vmatpush2.msra.mxu0 %v191
  %4370 = vmatprep.subr.mxu0 0.0
  %4371 = vmatpush2.msra.mxu0 %v190
  %4372 = vmatprep.subr.mxu0 0.0
  %4373 = vmatpush2.msra.mxu0 %v189
  %4374 = vmatprep.subr.mxu0 0.0
  %4375 = vmatpush2.msra.mxu0 %v188
  %4376 = vmatprep.subr.mxu0 0.0
  %4377 = vmatpush2.msra.mxu0 %v187
  %4378 = vmatprep.subr.mxu0 0.0
  %4379 = vmatpush2.msra.mxu0 %v186
  %4380 = vmatprep.subr.mxu0 0.0
  %4381 = vmatpush2.msra.mxu0 %v185
  %4382 = vmatprep.subr.mxu0 0.0
  %4383 = vmatpush2.msra.mxu0 %v184
  %4384 = vmatprep.subr.mxu0 0.0
  %4385 = vmatpush2.msra.mxu0 %v183
  %4386 = vmatprep.mubr.f32.mxu0 %v3957
  %4387 = vmatmul.mubr.f32.gmra.mxu0 %v3949
  %v4388 = vpop.f32.mrf.mxu0
  %v4389 = vadd.f32 %v4319, %v4388
  %v4390 = vpop.f32.mrf.mxu0
  %4391 = vdwg.mxu0
  %4392 = vmatprep.subr.mxu0 0.0
  %4393 = vmatpush1.msra.mxu0 %v214
  %4394 = vmatprep.subr.mxu0 0.0
  %4395 = vmatpush1.msra.mxu0 %v213
  %4396 = vmatprep.subr.mxu0 0.0
  %4397 = vmatpush1.msra.mxu0 %v212
  %4398 = vmatprep.subr.mxu0 0.0
  %4399 = vmatpush1.msra.mxu0 %v211
  %4400 = vmatprep.subr.mxu0 0.0
  %4401 = vmatpush1.msra.mxu0 %v210
  %4402 = vmatprep.subr.mxu0 0.0
  %4403 = vmatpush1.msra.mxu0 %v209
  %4404 = vmatprep.subr.mxu0 0.0
  %4405 = vmatpush1.msra.mxu0 %v208
  %4406 = vmatprep.subr.mxu0 0.0
  %4407 = vmatpush1.msra.mxu0 %v207
  %4408 = vmatprep.subr.mxu0 0.0
  %4409 = vmatpush1.msra.mxu0 %v206
  %4410 = vmatprep.subr.mxu0 0.0
  %4411 = vmatpush1.msra.mxu0 %v205
  %4412 = vmatprep.subr.mxu0 0.0
  %4413 = vmatpush1.msra.mxu0 %v204
  %4414 = vmatprep.subr.mxu0 0.0
  %4415 = vmatpush1.msra.mxu0 %v203
  %4416 = vmatprep.subr.mxu0 0.0
  %4417 = vmatpush1.msra.mxu0 %v202
  %4418 = vmatprep.subr.mxu0 0.0
  %4419 = vmatpush1.msra.mxu0 %v201
  %4420 = vmatprep.subr.mxu0 0.0
  %4421 = vmatpush1.msra.mxu0 %v200
  %4422 = vmatprep.subr.mxu0 0.0
  %4423 = vmatpush1.msra.mxu0 %v199
  %4424 = vmatprep.subr.mxu0 0.0
  %4425 = vmatpush2.msra.mxu0 %v230
  %4426 = vmatprep.subr.mxu0 0.0
  %4427 = vmatpush2.msra.mxu0 %v229
  %4428 = vmatprep.subr.mxu0 0.0
  %4429 = vmatpush2.msra.mxu0 %v228
  %4430 = vmatprep.subr.mxu0 0.0
  %4431 = vmatpush2.msra.mxu0 %v227
  %4432 = vmatprep.subr.mxu0 0.0
  %4433 = vmatpush2.msra.mxu0 %v226
  %4434 = vmatprep.subr.mxu0 0.0
  %4435 = vmatpush2.msra.mxu0 %v225
  %4436 = vmatprep.subr.mxu0 0.0
  %4437 = vmatpush2.msra.mxu0 %v224
  %4438 = vmatprep.subr.mxu0 0.0
  %4439 = vmatpush2.msra.mxu0 %v223
  %4440 = vmatprep.subr.mxu0 0.0
  %4441 = vmatpush2.msra.mxu0 %v222
  %4442 = vmatprep.subr.mxu0 0.0
  %4443 = vmatpush2.msra.mxu0 %v221
  %4444 = vmatprep.subr.mxu0 0.0
  %4445 = vmatpush2.msra.mxu0 %v220
  %4446 = vmatprep.subr.mxu0 0.0
  %4447 = vmatpush2.msra.mxu0 %v219
  %4448 = vmatprep.subr.mxu0 0.0
  %4449 = vmatpush2.msra.mxu0 %v218
  %4450 = vmatprep.subr.mxu0 0.0
  %4451 = vmatpush2.msra.mxu0 %v217
  %4452 = vmatprep.subr.mxu0 0.0
  %4453 = vmatpush2.msra.mxu0 %v216
  %4454 = vmatprep.subr.mxu0 0.0
  %4455 = vmatpush2.msra.mxu0 %v215
  %4456 = vmatprep.mubr.f32.mxu0 %v3958
  %4457 = vmatmul.mubr.f32.gmra.mxu0 %v3956
  %v4458 = vpop.f32.mrf.mxu0
  %v4459 = vadd.f32 %v4389, %v4458
  %v4460 = vpop.f32.mrf.mxu0
  %4461 = vdwg.mxu0
  %4462 = vmatprep.subr.mxu0 0.0
  %4463 = vmatpush1.msra.mxu0 %v246
  %4464 = vmatprep.subr.mxu0 0.0
  %4465 = vmatpush1.msra.mxu0 %v245
  %4466 = vmatprep.subr.mxu0 0.0
  %4467 = vmatpush1.msra.mxu0 %v244
  %4468 = vmatprep.subr.mxu0 0.0
  %4469 = vmatpush1.msra.mxu0 %v243
  %4470 = vmatprep.subr.mxu0 0.0
  %4471 = vmatpush1.msra.mxu0 %v242
  %4472 = vmatprep.subr.mxu0 0.0
  %4473 = vmatpush1.msra.mxu0 %v241
  %4474 = vmatprep.subr.mxu0 0.0
  %4475 = vmatpush1.msra.mxu0 %v240
  %4476 = vmatprep.subr.mxu0 0.0
  %4477 = vmatpush1.msra.mxu0 %v239
  %4478 = vmatprep.subr.mxu0 0.0
  %4479 = vmatpush1.msra.mxu0 %v238
  %4480 = vmatprep.subr.mxu0 0.0
  %4481 = vmatpush1.msra.mxu0 %v237
  %4482 = vmatprep.subr.mxu0 0.0
  %4483 = vmatpush1.msra.mxu0 %v236
  %4484 = vmatprep.subr.mxu0 0.0
  %4485 = vmatpush1.msra.mxu0 %v235
  %4486 = vmatprep.subr.mxu0 0.0
  %4487 = vmatpush1.msra.mxu0 %v234
  %4488 = vmatprep.subr.mxu0 0.0
  %4489 = vmatpush1.msra.mxu0 %v233
  %4490 = vmatprep.subr.mxu0 0.0
  %4491 = vmatpush1.msra.mxu0 %v232
  %4492 = vmatprep.subr.mxu0 0.0
  %4493 = vmatpush1.msra.mxu0 %v231
  %4494 = vmatprep.subr.mxu0 0.0
  %4495 = vmatpush2.msra.mxu0 %v262
  %4496 = vmatprep.subr.mxu0 0.0
  %4497 = vmatpush2.msra.mxu0 %v261
  %4498 = vmatprep.subr.mxu0 0.0
  %4499 = vmatpush2.msra.mxu0 %v260
  %4500 = vmatprep.subr.mxu0 0.0
  %4501 = vmatpush2.msra.mxu0 %v259
  %4502 = vmatprep.subr.mxu0 0.0
  %4503 = vmatpush2.msra.mxu0 %v258
  %4504 = vmatprep.subr.mxu0 0.0
  %4505 = vmatpush2.msra.mxu0 %v257
  %4506 = vmatprep.subr.mxu0 0.0
  %4507 = vmatpush2.msra.mxu0 %v256
  %4508 = vmatprep.subr.mxu0 0.0
  %4509 = vmatpush2.msra.mxu0 %v255
  %4510 = vmatprep.subr.mxu0 0.0
  %4511 = vmatpush2.msra.mxu0 %v254
  %4512 = vmatprep.subr.mxu0 0.0
  %4513 = vmatpush2.msra.mxu0 %v253
  %4514 = vmatprep.subr.mxu0 0.0
  %4515 = vmatpush2.msra.mxu0 %v252
  %4516 = vmatprep.subr.mxu0 0.0
  %4517 = vmatpush2.msra.mxu0 %v251
  %4518 = vmatprep.subr.mxu0 0.0
  %4519 = vmatpush2.msra.mxu0 %v250
  %4520 = vmatprep.subr.mxu0 0.0
  %4521 = vmatpush2.msra.mxu0 %v249
  %4522 = vmatprep.subr.mxu0 0.0
  %4523 = vmatpush2.msra.mxu0 %v248
  %4524 = vmatprep.subr.mxu0 0.0
  %4525 = vmatpush2.msra.mxu0 %v247
  %4526 = vmatprep.mubr.f32.mxu0 %v3974
  %4527 = vmatmul.mubr.f32.gmra.mxu0 %v3966
  %v4528 = vpop.f32.mrf.mxu0
  %v4529 = vadd.f32 %v4459, %v4528
  %v4530 = vpop.f32.mrf.mxu0
  %4531 = vdwg.mxu0
  %4532 = vmatprep.subr.mxu0 0.0
  %4533 = vmatpush1.msra.mxu0 %v278
  %4534 = vmatprep.subr.mxu0 0.0
  %4535 = vmatpush1.msra.mxu0 %v277
  %4536 = vmatprep.subr.mxu0 0.0
  %4537 = vmatpush1.msra.mxu0 %v276
  %4538 = vmatprep.subr.mxu0 0.0
  %4539 = vmatpush1.msra.mxu0 %v275
  %4540 = vmatprep.subr.mxu0 0.0
  %4541 = vmatpush1.msra.mxu0 %v274
  %4542 = vmatprep.subr.mxu0 0.0
  %4543 = vmatpush1.msra.mxu0 %v273
  %4544 = vmatprep.subr.mxu0 0.0
  %4545 = vmatpush1.msra.mxu0 %v272
  %4546 = vmatprep.subr.mxu0 0.0
  %4547 = vmatpush1.msra.mxu0 %v271
  %4548 = vmatprep.subr.mxu0 0.0
  %4549 = vmatpush1.msra.mxu0 %v270
  %4550 = vmatprep.subr.mxu0 0.0
  %4551 = vmatpush1.msra.mxu0 %v269
  %4552 = vmatprep.subr.mxu0 0.0
  %4553 = vmatpush1.msra.mxu0 %v268
  %4554 = vmatprep.subr.mxu0 0.0
  %4555 = vmatpush1.msra.mxu0 %v267
  %4556 = vmatprep.subr.mxu0 0.0
  %4557 = vmatpush1.msra.mxu0 %v266
  %4558 = vmatprep.subr.mxu0 0.0
  %4559 = vmatpush1.msra.mxu0 %v265
  %4560 = vmatprep.subr.mxu0 0.0
  %4561 = vmatpush1.msra.mxu0 %v264
  %4562 = vmatprep.subr.mxu0 0.0
  %4563 = vmatpush1.msra.mxu0 %v263
  %4564 = vmatprep.subr.mxu0 0.0
  %4565 = vmatpush2.msra.mxu0 %v294
  %4566 = vmatprep.subr.mxu0 0.0
  %4567 = vmatpush2.msra.mxu0 %v293
  %4568 = vmatprep.subr.mxu0 0.0
  %4569 = vmatpush2.msra.mxu0 %v292
  %4570 = vmatprep.subr.mxu0 0.0
  %4571 = vmatpush2.msra.mxu0 %v291
  %4572 = vmatprep.subr.mxu0 0.0
  %4573 = vmatpush2.msra.mxu0 %v290
  %4574 = vmatprep.subr.mxu0 0.0
  %4575 = vmatpush2.msra.mxu0 %v289
  %4576 = vmatprep.subr.mxu0 0.0
  %4577 = vmatpush2.msra.mxu0 %v288
  %4578 = vmatprep.subr.mxu0 0.0
  %4579 = vmatpush2.msra.mxu0 %v287
  %4580 = vmatprep.subr.mxu0 0.0
  %4581 = vmatpush2.msra.mxu0 %v286
  %4582 = vmatprep.subr.mxu0 0.0
  %4583 = vmatpush2.msra.mxu0 %v285
  %4584 = vmatprep.subr.mxu0 0.0
  %4585 = vmatpush2.msra.mxu0 %v284
  %4586 = vmatprep.subr.mxu0 0.0
  %4587 = vmatpush2.msra.mxu0 %v283
  %4588 = vmatprep.subr.mxu0 0.0
  %4589 = vmatpush2.msra.mxu0 %v282
  %4590 = vmatprep.subr.mxu0 0.0
  %4591 = vmatpush2.msra.mxu0 %v281
  %4592 = vmatprep.subr.mxu0 0.0
  %4593 = vmatpush2.msra.mxu0 %v280
  %4594 = vmatprep.subr.mxu0 0.0
  %4595 = vmatpush2.msra.mxu0 %v279
  %4596 = vmatprep.mubr.f32.mxu0 %v3975
  %4597 = vmatmul.mubr.f32.gmra.mxu0 %v3973
  %v4598 = vpop.f32.mrf.mxu0
  %v4599 = vadd.f32 %v4529, %v4598
  %v4600 = vpop.f32.mrf.mxu0
  %4601 = vdwg.mxu0
  %4602 = vmatprep.subr.mxu0 0.0
  %4603 = vmatpush1.msra.mxu0 %v310
  %4604 = vmatprep.subr.mxu0 0.0
  %4605 = vmatpush1.msra.mxu0 %v309
  %4606 = vmatprep.subr.mxu0 0.0
  %4607 = vmatpush1.msra.mxu0 %v308
  %4608 = vmatprep.subr.mxu0 0.0
  %4609 = vmatpush1.msra.mxu0 %v307
  %4610 = vmatprep.subr.mxu0 0.0
  %4611 = vmatpush1.msra.mxu0 %v306
  %4612 = vmatprep.subr.mxu0 0.0
  %4613 = vmatpush1.msra.mxu0 %v305
  %4614 = vmatprep.subr.mxu0 0.0
  %4615 = vmatpush1.msra.mxu0 %v304
  %4616 = vmatprep.subr.mxu0 0.0
  %4617 = vmatpush1.msra.mxu0 %v303
  %4618 = vmatprep.subr.mxu0 0.0
  %4619 = vmatpush1.msra.mxu0 %v302
  %4620 = vmatprep.subr.mxu0 0.0
  %4621 = vmatpush1.msra.mxu0 %v301
  %4622 = vmatprep.subr.mxu0 0.0
  %4623 = vmatpush1.msra.mxu0 %v300
  %4624 = vmatprep.subr.mxu0 0.0
  %4625 = vmatpush1.msra.mxu0 %v299
  %4626 = vmatprep.subr.mxu0 0.0
  %4627 = vmatpush1.msra.mxu0 %v298
  %4628 = vmatprep.subr.mxu0 0.0
  %4629 = vmatpush1.msra.mxu0 %v297
  %4630 = vmatprep.subr.mxu0 0.0
  %4631 = vmatpush1.msra.mxu0 %v296
  %4632 = vmatprep.subr.mxu0 0.0
  %4633 = vmatpush1.msra.mxu0 %v295
  %4634 = vmatprep.subr.mxu0 0.0
  %4635 = vmatpush2.msra.mxu0 %v326
  %4636 = vmatprep.subr.mxu0 0.0
  %4637 = vmatpush2.msra.mxu0 %v325
  %4638 = vmatprep.subr.mxu0 0.0
  %4639 = vmatpush2.msra.mxu0 %v324
  %4640 = vmatprep.subr.mxu0 0.0
  %4641 = vmatpush2.msra.mxu0 %v323
  %4642 = vmatprep.subr.mxu0 0.0
  %4643 = vmatpush2.msra.mxu0 %v322
  %4644 = vmatprep.subr.mxu0 0.0
  %4645 = vmatpush2.msra.mxu0 %v321
  %4646 = vmatprep.subr.mxu0 0.0
  %4647 = vmatpush2.msra.mxu0 %v320
  %4648 = vmatprep.subr.mxu0 0.0
  %4649 = vmatpush2.msra.mxu0 %v319
  %4650 = vmatprep.subr.mxu0 0.0
  %4651 = vmatpush2.msra.mxu0 %v318
  %4652 = vmatprep.subr.mxu0 0.0
  %4653 = vmatpush2.msra.mxu0 %v317
  %4654 = vmatprep.subr.mxu0 0.0
  %4655 = vmatpush2.msra.mxu0 %v316
  %4656 = vmatprep.subr.mxu0 0.0
  %4657 = vmatpush2.msra.mxu0 %v315
  %4658 = vmatprep.subr.mxu0 0.0
  %4659 = vmatpush2.msra.mxu0 %v314
  %4660 = vmatprep.subr.mxu0 0.0
  %4661 = vmatpush2.msra.mxu0 %v313
  %4662 = vmatprep.subr.mxu0 0.0
  %4663 = vmatpush2.msra.mxu0 %v312
  %4664 = vmatprep.subr.mxu0 0.0
  %4665 = vmatpush2.msra.mxu0 %v311
  %4666 = vmatprep.mubr.f32.mxu0 %v3991
  %4667 = vmatmul.mubr.f32.gmra.mxu0 %v3983
  %v4668 = vpop.f32.mrf.mxu0
  %v4669 = vadd.f32 %v4599, %v4668
  %v4670 = vpop.f32.mrf.mxu0
  %4671 = vdwg.mxu0
  %4672 = vmatprep.subr.mxu0 0.0
  %4673 = vmatpush1.msra.mxu0 %v342
  %4674 = vmatprep.subr.mxu0 0.0
  %4675 = vmatpush1.msra.mxu0 %v341
  %4676 = vmatprep.subr.mxu0 0.0
  %4677 = vmatpush1.msra.mxu0 %v340
  %4678 = vmatprep.subr.mxu0 0.0
  %4679 = vmatpush1.msra.mxu0 %v339
  %4680 = vmatprep.subr.mxu0 0.0
  %4681 = vmatpush1.msra.mxu0 %v338
  %4682 = vmatprep.subr.mxu0 0.0
  %4683 = vmatpush1.msra.mxu0 %v337
  %4684 = vmatprep.subr.mxu0 0.0
  %4685 = vmatpush1.msra.mxu0 %v336
  %4686 = vmatprep.subr.mxu0 0.0
  %4687 = vmatpush1.msra.mxu0 %v335
  %4688 = vmatprep.subr.mxu0 0.0
  %4689 = vmatpush1.msra.mxu0 %v334
  %4690 = vmatprep.subr.mxu0 0.0
  %4691 = vmatpush1.msra.mxu0 %v333
  %4692 = vmatprep.subr.mxu0 0.0
  %4693 = vmatpush1.msra.mxu0 %v332
  %4694 = vmatprep.subr.mxu0 0.0
  %4695 = vmatpush1.msra.mxu0 %v331
  %4696 = vmatprep.subr.mxu0 0.0
  %4697 = vmatpush1.msra.mxu0 %v330
  %4698 = vmatprep.subr.mxu0 0.0
  %4699 = vmatpush1.msra.mxu0 %v329
  %4700 = vmatprep.subr.mxu0 0.0
  %4701 = vmatpush1.msra.mxu0 %v328
  %4702 = vmatprep.subr.mxu0 0.0
  %4703 = vmatpush1.msra.mxu0 %v327
  %4704 = vmatprep.subr.mxu0 0.0
  %4705 = vmatpush2.msra.mxu0 %v358
  %4706 = vmatprep.subr.mxu0 0.0
  %4707 = vmatpush2.msra.mxu0 %v357
  %4708 = vmatprep.subr.mxu0 0.0
  %4709 = vmatpush2.msra.mxu0 %v356
  %4710 = vmatprep.subr.mxu0 0.0
  %4711 = vmatpush2.msra.mxu0 %v355
  %4712 = vmatprep.subr.mxu0 0.0
  %4713 = vmatpush2.msra.mxu0 %v354
  %4714 = vmatprep.subr.mxu0 0.0
  %4715 = vmatpush2.msra.mxu0 %v353
  %4716 = vmatprep.subr.mxu0 0.0
  %4717 = vmatpush2.msra.mxu0 %v352
  %4718 = vmatprep.subr.mxu0 0.0
  %4719 = vmatpush2.msra.mxu0 %v351
  %4720 = vmatprep.subr.mxu0 0.0
  %4721 = vmatpush2.msra.mxu0 %v350
  %4722 = vmatprep.subr.mxu0 0.0
  %4723 = vmatpush2.msra.mxu0 %v349
  %4724 = vmatprep.subr.mxu0 0.0
  %4725 = vmatpush2.msra.mxu0 %v348
  %4726 = vmatprep.subr.mxu0 0.0
  %4727 = vmatpush2.msra.mxu0 %v347
  %4728 = vmatprep.subr.mxu0 0.0
  %4729 = vmatpush2.msra.mxu0 %v346
  %4730 = vmatprep.subr.mxu0 0.0
  %4731 = vmatpush2.msra.mxu0 %v345
  %4732 = vmatprep.subr.mxu0 0.0
  %4733 = vmatpush2.msra.mxu0 %v344
  %4734 = vmatprep.subr.mxu0 0.0
  %4735 = vmatpush2.msra.mxu0 %v343
  %4736 = vmatprep.mubr.f32.mxu0 %v3992
  %4737 = vmatmul.mubr.f32.gmra.mxu0 %v3990
  %v4738 = vpop.f32.mrf.mxu0
  %v4739 = vadd.f32 %v4669, %v4738
  %v4740 = vpop.f32.mrf.mxu0
  %4741 = vdwg.mxu0
  %4742 = vmatprep.subr.mxu0 0.0
  %4743 = vmatpush1.msra.mxu0 %v374
  %4744 = vmatprep.subr.mxu0 0.0
  %4745 = vmatpush1.msra.mxu0 %v373
  %4746 = vmatprep.subr.mxu0 0.0
  %4747 = vmatpush1.msra.mxu0 %v372
  %4748 = vmatprep.subr.mxu0 0.0
  %4749 = vmatpush1.msra.mxu0 %v371
  %4750 = vmatprep.subr.mxu0 0.0
  %4751 = vmatpush1.msra.mxu0 %v370
  %4752 = vmatprep.subr.mxu0 0.0
  %4753 = vmatpush1.msra.mxu0 %v369
  %4754 = vmatprep.subr.mxu0 0.0
  %4755 = vmatpush1.msra.mxu0 %v368
  %4756 = vmatprep.subr.mxu0 0.0
  %4757 = vmatpush1.msra.mxu0 %v367
  %4758 = vmatprep.subr.mxu0 0.0
  %4759 = vmatpush1.msra.mxu0 %v366
  %4760 = vmatprep.subr.mxu0 0.0
  %4761 = vmatpush1.msra.mxu0 %v365
  %4762 = vmatprep.subr.mxu0 0.0
  %4763 = vmatpush1.msra.mxu0 %v364
  %4764 = vmatprep.subr.mxu0 0.0
  %4765 = vmatpush1.msra.mxu0 %v363
  %4766 = vmatprep.subr.mxu0 0.0
  %4767 = vmatpush1.msra.mxu0 %v362
  %4768 = vmatprep.subr.mxu0 0.0
  %4769 = vmatpush1.msra.mxu0 %v361
  %4770 = vmatprep.subr.mxu0 0.0
  %4771 = vmatpush1.msra.mxu0 %v360
  %4772 = vmatprep.subr.mxu0 0.0
  %4773 = vmatpush1.msra.mxu0 %v359
  %4774 = vmatprep.subr.mxu0 0.0
  %4775 = vmatpush2.msra.mxu0 %v390
  %4776 = vmatprep.subr.mxu0 0.0
  %4777 = vmatpush2.msra.mxu0 %v389
  %4778 = vmatprep.subr.mxu0 0.0
  %4779 = vmatpush2.msra.mxu0 %v388
  %4780 = vmatprep.subr.mxu0 0.0
  %4781 = vmatpush2.msra.mxu0 %v387
  %4782 = vmatprep.subr.mxu0 0.0
  %4783 = vmatpush2.msra.mxu0 %v386
  %4784 = vmatprep.subr.mxu0 0.0
  %4785 = vmatpush2.msra.mxu0 %v385
  %4786 = vmatprep.subr.mxu0 0.0
  %4787 = vmatpush2.msra.mxu0 %v384
  %4788 = vmatprep.subr.mxu0 0.0
  %4789 = vmatpush2.msra.mxu0 %v383
  %4790 = vmatprep.subr.mxu0 0.0
  %4791 = vmatpush2.msra.mxu0 %v382
  %4792 = vmatprep.subr.mxu0 0.0
  %4793 = vmatpush2.msra.mxu0 %v381
  %4794 = vmatprep.subr.mxu0 0.0
  %4795 = vmatpush2.msra.mxu0 %v380
  %4796 = vmatprep.subr.mxu0 0.0
  %4797 = vmatpush2.msra.mxu0 %v379
  %4798 = vmatprep.subr.mxu0 0.0
  %4799 = vmatpush2.msra.mxu0 %v378
  %4800 = vmatprep.subr.mxu0 0.0
  %4801 = vmatpush2.msra.mxu0 %v377
  %4802 = vmatprep.subr.mxu0 0.0
  %4803 = vmatpush2.msra.mxu0 %v376
  %4804 = vmatprep.subr.mxu0 0.0
  %4805 = vmatpush2.msra.mxu0 %v375
  %4806 = vmatprep.mubr.f32.mxu0 %v4008
  %4807 = vmatmul.mubr.f32.gmra.mxu0 %v4000
  %v4808 = vpop.f32.mrf.mxu0
  %v4809 = vadd.f32 %v4739, %v4808
  %v4810 = vpop.f32.mrf.mxu0
  %4811 = vdwg.mxu0
  %4812 = vmatprep.subr.mxu0 0.0
  %4813 = vmatpush1.msra.mxu0 %v406
  %4814 = vmatprep.subr.mxu0 0.0
  %4815 = vmatpush1.msra.mxu0 %v405
  %4816 = vmatprep.subr.mxu0 0.0
  %4817 = vmatpush1.msra.mxu0 %v404
  %4818 = vmatprep.subr.mxu0 0.0
  %4819 = vmatpush1.msra.mxu0 %v403
  %4820 = vmatprep.subr.mxu0 0.0
  %4821 = vmatpush1.msra.mxu0 %v402
  %4822 = vmatprep.subr.mxu0 0.0
  %4823 = vmatpush1.msra.mxu0 %v401
  %4824 = vmatprep.subr.mxu0 0.0
  %4825 = vmatpush1.msra.mxu0 %v400
  %4826 = vmatprep.subr.mxu0 0.0
  %4827 = vmatpush1.msra.mxu0 %v399
  %4828 = vmatprep.subr.mxu0 0.0
  %4829 = vmatpush1.msra.mxu0 %v398
  %4830 = vmatprep.subr.mxu0 0.0
  %4831 = vmatpush1.msra.mxu0 %v397
  %4832 = vmatprep.subr.mxu0 0.0
  %4833 = vmatpush1.msra.mxu0 %v396
  %4834 = vmatprep.subr.mxu0 0.0
  %4835 = vmatpush1.msra.mxu0 %v395
  %4836 = vmatprep.subr.mxu0 0.0
  %4837 = vmatpush1.msra.mxu0 %v394
  %4838 = vmatprep.subr.mxu0 0.0
  %4839 = vmatpush1.msra.mxu0 %v393
  %4840 = vmatprep.subr.mxu0 0.0
  %4841 = vmatpush1.msra.mxu0 %v392
  %4842 = vmatprep.subr.mxu0 0.0
  %4843 = vmatpush1.msra.mxu0 %v391
  %4844 = vmatprep.subr.mxu0 0.0
  %4845 = vmatpush2.msra.mxu0 %v422
  %4846 = vmatprep.subr.mxu0 0.0
  %4847 = vmatpush2.msra.mxu0 %v421
  %4848 = vmatprep.subr.mxu0 0.0
  %4849 = vmatpush2.msra.mxu0 %v420
  %4850 = vmatprep.subr.mxu0 0.0
  %4851 = vmatpush2.msra.mxu0 %v419
  %4852 = vmatprep.subr.mxu0 0.0
  %4853 = vmatpush2.msra.mxu0 %v418
  %4854 = vmatprep.subr.mxu0 0.0
  %4855 = vmatpush2.msra.mxu0 %v417
  %4856 = vmatprep.subr.mxu0 0.0
  %4857 = vmatpush2.msra.mxu0 %v416
  %4858 = vmatprep.subr.mxu0 0.0
  %4859 = vmatpush2.msra.mxu0 %v415
  %4860 = vmatprep.subr.mxu0 0.0
  %4861 = vmatpush2.msra.mxu0 %v414
  %4862 = vmatprep.subr.mxu0 0.0
  %4863 = vmatpush2.msra.mxu0 %v413
  %4864 = vmatprep.subr.mxu0 0.0
  %4865 = vmatpush2.msra.mxu0 %v412
  %4866 = vmatprep.subr.mxu0 0.0
  %4867 = vmatpush2.msra.mxu0 %v411
  %4868 = vmatprep.subr.mxu0 0.0
  %4869 = vmatpush2.msra.mxu0 %v410
  %4870 = vmatprep.subr.mxu0 0.0
  %4871 = vmatpush2.msra.mxu0 %v409
  %4872 = vmatprep.subr.mxu0 0.0
  %4873 = vmatpush2.msra.mxu0 %v408
  %4874 = vmatprep.subr.mxu0 0.0
  %4875 = vmatpush2.msra.mxu0 %v407
  %4876 = vmatprep.mubr.f32.mxu0 %v4009
  %4877 = vmatmul.mubr.f32.gmra.mxu0 %v4007
  %v4878 = vpop.f32.mrf.mxu0
  %v4879 = vadd.f32 %v4809, %v4878
  %v4880 = vpop.f32.mrf.mxu0
  %4881 = vdwg.mxu0
  %4882 = vmatprep.subr.mxu0 0.0
  %4883 = vmatpush1.msra.mxu0 %v438
  %4884 = vmatprep.subr.mxu0 0.0
  %4885 = vmatpush1.msra.mxu0 %v437
  %4886 = vmatprep.subr.mxu0 0.0
  %4887 = vmatpush1.msra.mxu0 %v436
  %4888 = vmatprep.subr.mxu0 0.0
  %4889 = vmatpush1.msra.mxu0 %v435
  %4890 = vmatprep.subr.mxu0 0.0
  %4891 = vmatpush1.msra.mxu0 %v434
  %4892 = vmatprep.subr.mxu0 0.0
  %4893 = vmatpush1.msra.mxu0 %v433
  %4894 = vmatprep.subr.mxu0 0.0
  %4895 = vmatpush1.msra.mxu0 %v432
  %4896 = vmatprep.subr.mxu0 0.0
  %4897 = vmatpush1.msra.mxu0 %v431
  %4898 = vmatprep.subr.mxu0 0.0
  %4899 = vmatpush1.msra.mxu0 %v430
  %4900 = vmatprep.subr.mxu0 0.0
  %4901 = vmatpush1.msra.mxu0 %v429
  %4902 = vmatprep.subr.mxu0 0.0
  %4903 = vmatpush1.msra.mxu0 %v428
  %4904 = vmatprep.subr.mxu0 0.0
  %4905 = vmatpush1.msra.mxu0 %v427
  %4906 = vmatprep.subr.mxu0 0.0
  %4907 = vmatpush1.msra.mxu0 %v426
  %4908 = vmatprep.subr.mxu0 0.0
  %4909 = vmatpush1.msra.mxu0 %v425
  %4910 = vmatprep.subr.mxu0 0.0
  %4911 = vmatpush1.msra.mxu0 %v424
  %4912 = vmatprep.subr.mxu0 0.0
  %4913 = vmatpush1.msra.mxu0 %v423
  %4914 = vmatprep.subr.mxu0 0.0
  %4915 = vmatpush2.msra.mxu0 0.0
  %4916 = vmatprep.subr.mxu0 0.0
  %4917 = vmatpush2.msra.mxu0 0.0
  %4918 = vmatprep.subr.mxu0 0.0
  %4919 = vmatpush2.msra.mxu0 0.0
  %4920 = vmatprep.subr.mxu0 0.0
  %4921 = vmatpush2.msra.mxu0 0.0
  %4922 = vmatprep.subr.mxu0 0.0
  %4923 = vmatpush2.msra.mxu0 0.0
  %4924 = vmatprep.subr.mxu0 0.0
  %4925 = vmatpush2.msra.mxu0 0.0
  %4926 = vmatprep.subr.mxu0 0.0
  %4927 = vmatpush2.msra.mxu0 0.0
  %4928 = vmatprep.subr.mxu0 0.0
  %4929 = vmatpush2.msra.mxu0 0.0
  %4930 = vmatprep.subr.mxu0 0.0
  %4931 = vmatpush2.msra.mxu0 0.0
  %4932 = vmatprep.subr.mxu0 0.0
  %4933 = vmatpush2.msra.mxu0 0.0
  %4934 = vmatprep.subr.mxu0 0.0
  %4935 = vmatpush2.msra.mxu0 0.0
  %4936 = vmatprep.subr.mxu0 0.0
  %4937 = vmatpush2.msra.mxu0 0.0
  %4938 = vmatprep.subr.mxu0 0.0
  %4939 = vmatpush2.msra.mxu0 0.0
  %4940 = vmatprep.subr.mxu0 0.0
  %4941 = vmatpush2.msra.mxu0 0.0
  %4942 = vmatprep.subr.mxu0 0.0
  %4943 = vmatpush2.msra.mxu0 0.0
  %4944 = vmatprep.subr.mxu0 0.0
  %4945 = vmatpush2.msra.mxu0 0.0
  %4946 = vmatprep.mubr.f32.mxu0 0.0
  %4947 = vmatmul.mubr.f32.gmra.mxu0 %v4016
  %v4948 = vpop.f32.mrf.mxu0
  %v4949 = vadd.f32 %v4879, %v4948
  %v4950 = vpop.f32.mrf.mxu0
  %4951 = vdwg.mxu0
  %v4952 = vmax.f32 %v4949, 0.0
  %s4953 = scalar_lea.vmem %s3, 384
  %v4954 = vld [vmem:[%s4953] sm:$0xff]
  %v4955 = vld [vmem:[%s4953 + $0x8] sm:$0xff]
  %v4956 = vld [vmem:[%s4953 + $0x10] sm:$0xff]
  %v4957 = vld [vmem:[%s4953 + $0x18] sm:$0xff]
  %v4958 = vld [vmem:[%s4953 + $0x20] sm:$0xff]
  %v4959 = vld [vmem:[%s4953 + $0x28] sm:$0xff]
  %v4960 = vld [vmem:[%s4953 + $0x30] sm:$0xff]
  %v4961 = vld [vmem:[%s4953 + $0x38] sm:$0xff]
  %v4962 = vld [vmem:[%s4953 + $0x40] sm:$0xff]
  %v4963 = vld [vmem:[%s4953 + $0x48] sm:$0xff]
  %v4964 = vld [vmem:[%s4953 + $0x50] sm:$0xff]
  %v4965 = vld [vmem:[%s4953 + $0x58] sm:$0xff]
  %v4966 = vld [vmem:[%s4953 + $0x60] sm:$0xff]
  %v4967 = vld [vmem:[%s4953 + $0x68] sm:$0xff]
  %v4968 = vld [vmem:[%s4953 + $0x70] sm:$0xff]
  %v4969 = vld [vmem:[%s4953 + $0x78] sm:$0xff]
  %v4971 = vsel %vm2591, %v4952, 0
  %4973 = vmatprep.subr.mxu0 0.0
  %4974 = vmatpush1.msra.mxu0 0.0
  %4975 = vmatprep.subr.mxu0 0.0
  %4976 = vmatpush1.msra.mxu0 0.0
  %4977 = vmatprep.subr.mxu0 0.0
  %4978 = vmatpush1.msra.mxu0 0.0
  %4979 = vmatprep.subr.mxu0 0.0
  %4980 = vmatpush1.msra.mxu0 0.0
  %4981 = vmatprep.subr.mxu0 0.0
  %4982 = vmatpush1.msra.mxu0 0.0
  %4983 = vmatprep.subr.mxu0 0.0
  %4984 = vmatpush1.msra.mxu0 0.0
  %4985 = vmatprep.subr.mxu0 0.0
  %4986 = vmatpush1.msra.mxu0 0.0
  %4987 = vmatprep.subr.mxu0 0.0
  %4988 = vmatpush1.msra.mxu0 0.0
  %4989 = vmatprep.subr.mxu0 %v4969
  %4990 = vmatpush1.msra.mxu0 %v4968
  %4991 = vmatprep.subr.mxu0 %v4967
  %4992 = vmatpush1.msra.mxu0 %v4966
  %4993 = vmatprep.subr.mxu0 %v4965
  %4994 = vmatpush1.msra.mxu0 %v4964
  %4995 = vmatprep.subr.mxu0 %v4963
  %4996 = vmatpush1.msra.mxu0 %v4962
  %4997 = vmatprep.subr.mxu0 %v4961
  %4998 = vmatpush1.msra.mxu0 %v4960
  %4999 = vmatprep.subr.mxu0 %v4959
  %5000 = vmatpush1.msra.mxu0 %v4958
  %5001 = vmatprep.subr.mxu0 %v4957
  %5002 = vmatpush1.msra.mxu0 %v4956
  %5003 = vmatprep.subr.mxu0 %v4955
  %5004 = vmatpush1.msra.mxu0 %v4954
  %5005 = vmatprep.subr.mxu0 0.0
  %5006 = vmatpush2.msra.mxu0 0.0
  %5007 = vmatprep.subr.mxu0 0.0
  %5008 = vmatpush2.msra.mxu0 0.0
  %5009 = vmatprep.subr.mxu0 0.0
  %5010 = vmatpush2.msra.mxu0 0.0
  %5011 = vmatprep.subr.mxu0 0.0
  %5012 = vmatpush2.msra.mxu0 0.0
  %5013 = vmatprep.subr.mxu0 0.0
  %5014 = vmatpush2.msra.mxu0 0.0
  %5015 = vmatprep.subr.mxu0 0.0
  %5016 = vmatpush2.msra.mxu0 0.0
  %5017 = vmatprep.subr.mxu0 0.0
  %5018 = vmatpush2.msra.mxu0 0.0
  %5019 = vmatprep.subr.mxu0 0.0
  %5020 = vmatpush2.msra.mxu0 0.0
  %5021 = vmatprep.subr.mxu0 0.0
  %5022 = vmatpush2.msra.mxu0 0.0
  %5023 = vmatprep.subr.mxu0 0.0
  %5024 = vmatpush2.msra.mxu0 0.0
  %5025 = vmatprep.subr.mxu0 0.0
  %5026 = vmatpush2.msra.mxu0 0.0
  %5027 = vmatprep.subr.mxu0 0.0
  %5028 = vmatpush2.msra.mxu0 0.0
  %5029 = vmatprep.subr.mxu0 0.0
  %5030 = vmatpush2.msra.mxu0 0.0
  %5031 = vmatprep.subr.mxu0 0.0
  %5032 = vmatpush2.msra.mxu0 0.0
  %5033 = vmatprep.subr.mxu0 0.0
  %5034 = vmatpush2.msra.mxu0 0.0
  %5035 = vmatprep.subr.mxu0 0.0
  %5036 = vmatpush2.msra.mxu0 0.0
  %5037 = vmatprep.mubr.f32.mxu0 0.0
  %5038 = vmatmul.mubr.f32.gmra.mxu0 %v4971
  %v5039 = vpop.f32.mrf.mxu0
  %v5040 = vadd.f32 0.0, %v5039
  %v5041 = vpop.f32.mrf.mxu0
  %v5042 = vadd.f32 0.0, %v5041
  %5043 = vdwg.mxu0
  %v5044 = vadd.f32 %v3891, %v5040
  %v5045 = vadd.f32 %v3892, %v5042
  %s5046 = scalar_lea.vmem %s0, 200
  %v5047 = vld [vmem:[%s5046] sm:$0xff]
  %v5048 = vld [vmem:[%s5046 + $0x8] sm:$0xff]
  %v5049 = vld [vmem:[%s5046 + $0x10] sm:$0xff]
  %v5050 = vld [vmem:[%s5046 + $0x18] sm:$0xff]
  %v5051 = vld [vmem:[%s5046 + $0x20] sm:$0xff]
  %v5052 = vld [vmem:[%s5046 + $0x28] sm:$0xff]
  %v5053 = vld [vmem:[%s5046 + $0x30] sm:$0x3]
  %v5061 = vcombine.high %v5047, %v5047
  %v5063 = vunpack.c.l.s4 1983009808
  %v5064 = vunpack.c.0.s8 %v5063
  %v5065 = vlaneseq
  %v5066 = vshrl.u32 %v5065, 7
  %v5067 = vsub.s32 %v5064, %v5066
  %v5068 = vrot.slane %v5047, %v5067
  %v5070 = vunpack.c.l.s4 1983009808
  %v5071 = vunpack.c.0.s8 %v5070
  %v5072 = vlaneseq
  %v5073 = vshrl.u32 %v5072, 7
  %v5074 = vsub.s32 %v5071, %v5073
  %v5075 = vrot.slane %v5061, %v5074
  %v5076 = vcombine.high %v5068, %v5068
  %v5077 = vcombine.high %v5075, %v5075
  %v5078 = vcombine.high %v5048, %v5048
  %v5080 = vunpack.c.l.s4 1983009808
  %v5081 = vunpack.c.0.s8 %v5080
  %v5082 = vlaneseq
  %v5083 = vshrl.u32 %v5082, 7
  %v5084 = vsub.s32 %v5081, %v5083
  %v5085 = vrot.slane %v5048, %v5084
  %v5087 = vunpack.c.l.s4 1983009808
  %v5088 = vunpack.c.0.s8 %v5087
  %v5089 = vlaneseq
  %v5090 = vshrl.u32 %v5089, 7
  %v5091 = vsub.s32 %v5088, %v5090
  %v5092 = vrot.slane %v5078, %v5091
  %v5093 = vcombine.high %v5085, %v5085
  %v5094 = vcombine.high %v5092, %v5092
  %v5095 = vcombine.high %v5049, %v5049
  %v5097 = vunpack.c.l.s4 1983009808
  %v5098 = vunpack.c.0.s8 %v5097
  %v5099 = vlaneseq
  %v5100 = vshrl.u32 %v5099, 7
  %v5101 = vsub.s32 %v5098, %v5100
  %v5102 = vrot.slane %v5049, %v5101
  %v5104 = vunpack.c.l.s4 1983009808
  %v5105 = vunpack.c.0.s8 %v5104
  %v5106 = vlaneseq
  %v5107 = vshrl.u32 %v5106, 7
  %v5108 = vsub.s32 %v5105, %v5107
  %v5109 = vrot.slane %v5095, %v5108
  %v5110 = vcombine.high %v5102, %v5102
  %v5111 = vcombine.high %v5109, %v5109
  %v5112 = vcombine.high %v5050, %v5050
  %v5114 = vunpack.c.l.s4 1983009808
  %v5115 = vunpack.c.0.s8 %v5114
  %v5116 = vlaneseq
  %v5117 = vshrl.u32 %v5116, 7
  %v5118 = vsub.s32 %v5115, %v5117
  %v5119 = vrot.slane %v5050, %v5118
  %v5121 = vunpack.c.l.s4 1983009808
  %v5122 = vunpack.c.0.s8 %v5121
  %v5123 = vlaneseq
  %v5124 = vshrl.u32 %v5123, 7
  %v5125 = vsub.s32 %v5122, %v5124
  %v5126 = vrot.slane %v5112, %v5125
  %v5127 = vcombine.high %v5119, %v5119
  %v5128 = vcombine.high %v5126, %v5126
  %v5129 = vcombine.high %v5051, %v5051
  %v5131 = vunpack.c.l.s4 1983009808
  %v5132 = vunpack.c.0.s8 %v5131
  %v5133 = vlaneseq
  %v5134 = vshrl.u32 %v5133, 7
  %v5135 = vsub.s32 %v5132, %v5134
  %v5136 = vrot.slane %v5051, %v5135
  %v5138 = vunpack.c.l.s4 1983009808
  %v5139 = vunpack.c.0.s8 %v5138
  %v5140 = vlaneseq
  %v5141 = vshrl.u32 %v5140, 7
  %v5142 = vsub.s32 %v5139, %v5141
  %v5143 = vrot.slane %v5129, %v5142
  %v5144 = vcombine.high %v5136, %v5136
  %v5145 = vcombine.high %v5143, %v5143
  %v5146 = vcombine.high %v5052, %v5052
  %v5148 = vunpack.c.l.s4 1983009808
  %v5149 = vunpack.c.0.s8 %v5148
  %v5150 = vlaneseq
  %v5151 = vshrl.u32 %v5150, 7
  %v5152 = vsub.s32 %v5149, %v5151
  %v5153 = vrot.slane %v5052, %v5152
  %v5155 = vunpack.c.l.s4 1983009808
  %v5156 = vunpack.c.0.s8 %v5155
  %v5157 = vlaneseq
  %v5158 = vshrl.u32 %v5157, 7
  %v5159 = vsub.s32 %v5156, %v5158
  %v5160 = vrot.slane %v5146, %v5159
  %v5161 = vcombine.high %v5153, %v5153
  %v5162 = vcombine.high %v5160, %v5160
  %v5164 = vunpack.c.l.s4 1983009808
  %v5165 = vunpack.c.0.s8 %v5164
  %v5166 = vlaneseq
  %v5167 = vshrl.u32 %v5166, 7
  %v5168 = vsub.s32 %v5165, %v5167
  %v5169 = vrot.slane %v5053, %v5168
  %5195 = vmatprep.subr.mxu0 0.0
  %5196 = vmatpush1.msra.mxu0 %v54
  %5197 = vmatprep.subr.mxu0 0.0
  %5198 = vmatpush1.msra.mxu0 %v53
  %5199 = vmatprep.subr.mxu0 0.0
  %5200 = vmatpush1.msra.mxu0 %v52
  %5201 = vmatprep.subr.mxu0 0.0
  %5202 = vmatpush1.msra.mxu0 %v51
  %5203 = vmatprep.subr.mxu0 0.0
  %5204 = vmatpush1.msra.mxu0 %v50
  %5205 = vmatprep.subr.mxu0 0.0
  %5206 = vmatpush1.msra.mxu0 %v49
  %5207 = vmatprep.subr.mxu0 0.0
  %5208 = vmatpush1.msra.mxu0 %v48
  %5209 = vmatprep.subr.mxu0 0.0
  %5210 = vmatpush1.msra.mxu0 %v47
  %5211 = vmatprep.subr.mxu0 0.0
  %5212 = vmatpush1.msra.mxu0 %v46
  %5213 = vmatprep.subr.mxu0 0.0
  %5214 = vmatpush1.msra.mxu0 %v45
  %5215 = vmatprep.subr.mxu0 0.0
  %5216 = vmatpush1.msra.mxu0 %v44
  %5217 = vmatprep.subr.mxu0 0.0
  %5218 = vmatpush1.msra.mxu0 %v43
  %5219 = vmatprep.subr.mxu0 0.0
  %5220 = vmatpush1.msra.mxu0 %v42
  %5221 = vmatprep.subr.mxu0 0.0
  %5222 = vmatpush1.msra.mxu0 %v41
  %5223 = vmatprep.subr.mxu0 0.0
  %5224 = vmatpush1.msra.mxu0 %v40
  %5225 = vmatprep.subr.mxu0 0.0
  %5226 = vmatpush1.msra.mxu0 %v39
  %5227 = vmatprep.subr.mxu0 0.0
  %5228 = vmatpush2.msra.mxu0 %v70
  %5229 = vmatprep.subr.mxu0 0.0
  %5230 = vmatpush2.msra.mxu0 %v69
  %5231 = vmatprep.subr.mxu0 0.0
  %5232 = vmatpush2.msra.mxu0 %v68
  %5233 = vmatprep.subr.mxu0 0.0
  %5234 = vmatpush2.msra.mxu0 %v67
  %5235 = vmatprep.subr.mxu0 0.0
  %5236 = vmatpush2.msra.mxu0 %v66
  %5237 = vmatprep.subr.mxu0 0.0
  %5238 = vmatpush2.msra.mxu0 %v65
  %5239 = vmatprep.subr.mxu0 0.0
  %5240 = vmatpush2.msra.mxu0 %v64
  %5241 = vmatprep.subr.mxu0 0.0
  %5242 = vmatpush2.msra.mxu0 %v63
  %5243 = vmatprep.subr.mxu0 0.0
  %5244 = vmatpush2.msra.mxu0 %v62
  %5245 = vmatprep.subr.mxu0 0.0
  %5246 = vmatpush2.msra.mxu0 %v61
  %5247 = vmatprep.subr.mxu0 0.0
  %5248 = vmatpush2.msra.mxu0 %v60
  %5249 = vmatprep.subr.mxu0 0.0
  %5250 = vmatpush2.msra.mxu0 %v59
  %5251 = vmatprep.subr.mxu0 0.0
  %5252 = vmatpush2.msra.mxu0 %v58
  %5253 = vmatprep.subr.mxu0 0.0
  %5254 = vmatpush2.msra.mxu0 %v57
  %5255 = vmatprep.subr.mxu0 0.0
  %5256 = vmatpush2.msra.mxu0 %v56
  %5257 = vmatprep.subr.mxu0 0.0
  %5258 = vmatpush2.msra.mxu0 %v55
  %5259 = vmatprep.mubr.f32.mxu0 %v5076
  %5260 = vmatmul.mubr.f32.gmra.mxu0 %v5068
  %v5261 = vpop.f32.mrf.mxu0
  %v5262 = vadd.f32 %v444, %v5261
  %v5263 = vpop.f32.mrf.mxu0
  %5264 = vdwg.mxu0
  %5265 = vmatprep.subr.mxu0 0.0
  %5266 = vmatpush1.msra.mxu0 %v86
  %5267 = vmatprep.subr.mxu0 0.0
  %5268 = vmatpush1.msra.mxu0 %v85
  %5269 = vmatprep.subr.mxu0 0.0
  %5270 = vmatpush1.msra.mxu0 %v84
  %5271 = vmatprep.subr.mxu0 0.0
  %5272 = vmatpush1.msra.mxu0 %v83
  %5273 = vmatprep.subr.mxu0 0.0
  %5274 = vmatpush1.msra.mxu0 %v82
  %5275 = vmatprep.subr.mxu0 0.0
  %5276 = vmatpush1.msra.mxu0 %v81
  %5277 = vmatprep.subr.mxu0 0.0
  %5278 = vmatpush1.msra.mxu0 %v80
  %5279 = vmatprep.subr.mxu0 0.0
  %5280 = vmatpush1.msra.mxu0 %v79
  %5281 = vmatprep.subr.mxu0 0.0
  %5282 = vmatpush1.msra.mxu0 %v78
  %5283 = vmatprep.subr.mxu0 0.0
  %5284 = vmatpush1.msra.mxu0 %v77
  %5285 = vmatprep.subr.mxu0 0.0
  %5286 = vmatpush1.msra.mxu0 %v76
  %5287 = vmatprep.subr.mxu0 0.0
  %5288 = vmatpush1.msra.mxu0 %v75
  %5289 = vmatprep.subr.mxu0 0.0
  %5290 = vmatpush1.msra.mxu0 %v74
  %5291 = vmatprep.subr.mxu0 0.0
  %5292 = vmatpush1.msra.mxu0 %v73
  %5293 = vmatprep.subr.mxu0 0.0
  %5294 = vmatpush1.msra.mxu0 %v72
  %5295 = vmatprep.subr.mxu0 0.0
  %5296 = vmatpush1.msra.mxu0 %v71
  %5297 = vmatprep.subr.mxu0 0.0
  %5298 = vmatpush2.msra.mxu0 %v102
  %5299 = vmatprep.subr.mxu0 0.0
  %5300 = vmatpush2.msra.mxu0 %v101
  %5301 = vmatprep.subr.mxu0 0.0
  %5302 = vmatpush2.msra.mxu0 %v100
  %5303 = vmatprep.subr.mxu0 0.0
  %5304 = vmatpush2.msra.mxu0 %v99
  %5305 = vmatprep.subr.mxu0 0.0
  %5306 = vmatpush2.msra.mxu0 %v98
  %5307 = vmatprep.subr.mxu0 0.0
  %5308 = vmatpush2.msra.mxu0 %v97
  %5309 = vmatprep.subr.mxu0 0.0
  %5310 = vmatpush2.msra.mxu0 %v96
  %5311 = vmatprep.subr.mxu0 0.0
  %5312 = vmatpush2.msra.mxu0 %v95
  %5313 = vmatprep.subr.mxu0 0.0
  %5314 = vmatpush2.msra.mxu0 %v94
  %5315 = vmatprep.subr.mxu0 0.0
  %5316 = vmatpush2.msra.mxu0 %v93
  %5317 = vmatprep.subr.mxu0 0.0
  %5318 = vmatpush2.msra.mxu0 %v92
  %5319 = vmatprep.subr.mxu0 0.0
  %5320 = vmatpush2.msra.mxu0 %v91
  %5321 = vmatprep.subr.mxu0 0.0
  %5322 = vmatpush2.msra.mxu0 %v90
  %5323 = vmatprep.subr.mxu0 0.0
  %5324 = vmatpush2.msra.mxu0 %v89
  %5325 = vmatprep.subr.mxu0 0.0
  %5326 = vmatpush2.msra.mxu0 %v88
  %5327 = vmatprep.subr.mxu0 0.0
  %5328 = vmatpush2.msra.mxu0 %v87
  %5329 = vmatprep.mubr.f32.mxu0 %v5077
  %5330 = vmatmul.mubr.f32.gmra.mxu0 %v5075
  %v5331 = vpop.f32.mrf.mxu0
  %v5332 = vadd.f32 %v5262, %v5331
  %v5333 = vpop.f32.mrf.mxu0
  %5334 = vdwg.mxu0
  %5335 = vmatprep.subr.mxu0 0.0
  %5336 = vmatpush1.msra.mxu0 %v118
  %5337 = vmatprep.subr.mxu0 0.0
  %5338 = vmatpush1.msra.mxu0 %v117
  %5339 = vmatprep.subr.mxu0 0.0
  %5340 = vmatpush1.msra.mxu0 %v116
  %5341 = vmatprep.subr.mxu0 0.0
  %5342 = vmatpush1.msra.mxu0 %v115
  %5343 = vmatprep.subr.mxu0 0.0
  %5344 = vmatpush1.msra.mxu0 %v114
  %5345 = vmatprep.subr.mxu0 0.0
  %5346 = vmatpush1.msra.mxu0 %v113
  %5347 = vmatprep.subr.mxu0 0.0
  %5348 = vmatpush1.msra.mxu0 %v112
  %5349 = vmatprep.subr.mxu0 0.0
  %5350 = vmatpush1.msra.mxu0 %v111
  %5351 = vmatprep.subr.mxu0 0.0
  %5352 = vmatpush1.msra.mxu0 %v110
  %5353 = vmatprep.subr.mxu0 0.0
  %5354 = vmatpush1.msra.mxu0 %v109
  %5355 = vmatprep.subr.mxu0 0.0
  %5356 = vmatpush1.msra.mxu0 %v108
  %5357 = vmatprep.subr.mxu0 0.0
  %5358 = vmatpush1.msra.mxu0 %v107
  %5359 = vmatprep.subr.mxu0 0.0
  %5360 = vmatpush1.msra.mxu0 %v106
  %5361 = vmatprep.subr.mxu0 0.0
  %5362 = vmatpush1.msra.mxu0 %v105
  %5363 = vmatprep.subr.mxu0 0.0
  %5364 = vmatpush1.msra.mxu0 %v104
  %5365 = vmatprep.subr.mxu0 0.0
  %5366 = vmatpush1.msra.mxu0 %v103
  %5367 = vmatprep.subr.mxu0 0.0
  %5368 = vmatpush2.msra.mxu0 %v134
  %5369 = vmatprep.subr.mxu0 0.0
  %5370 = vmatpush2.msra.mxu0 %v133
  %5371 = vmatprep.subr.mxu0 0.0
  %5372 = vmatpush2.msra.mxu0 %v132
  %5373 = vmatprep.subr.mxu0 0.0
  %5374 = vmatpush2.msra.mxu0 %v131
  %5375 = vmatprep.subr.mxu0 0.0
  %5376 = vmatpush2.msra.mxu0 %v130
  %5377 = vmatprep.subr.mxu0 0.0
  %5378 = vmatpush2.msra.mxu0 %v129
  %5379 = vmatprep.subr.mxu0 0.0
  %5380 = vmatpush2.msra.mxu0 %v128
  %5381 = vmatprep.subr.mxu0 0.0
  %5382 = vmatpush2.msra.mxu0 %v127
  %5383 = vmatprep.subr.mxu0 0.0
  %5384 = vmatpush2.msra.mxu0 %v126
  %5385 = vmatprep.subr.mxu0 0.0
  %5386 = vmatpush2.msra.mxu0 %v125
  %5387 = vmatprep.subr.mxu0 0.0
  %5388 = vmatpush2.msra.mxu0 %v124
  %5389 = vmatprep.subr.mxu0 0.0
  %5390 = vmatpush2.msra.mxu0 %v123
  %5391 = vmatprep.subr.mxu0 0.0
  %5392 = vmatpush2.msra.mxu0 %v122
  %5393 = vmatprep.subr.mxu0 0.0
  %5394 = vmatpush2.msra.mxu0 %v121
  %5395 = vmatprep.subr.mxu0 0.0
  %5396 = vmatpush2.msra.mxu0 %v120
  %5397 = vmatprep.subr.mxu0 0.0
  %5398 = vmatpush2.msra.mxu0 %v119
  %5399 = vmatprep.mubr.f32.mxu0 %v5093
  %5400 = vmatmul.mubr.f32.gmra.mxu0 %v5085
  %v5401 = vpop.f32.mrf.mxu0
  %v5402 = vadd.f32 %v5332, %v5401
  %v5403 = vpop.f32.mrf.mxu0
  %5404 = vdwg.mxu0
  %5405 = vmatprep.subr.mxu0 0.0
  %5406 = vmatpush1.msra.mxu0 %v150
  %5407 = vmatprep.subr.mxu0 0.0
  %5408 = vmatpush1.msra.mxu0 %v149
  %5409 = vmatprep.subr.mxu0 0.0
  %5410 = vmatpush1.msra.mxu0 %v148
  %5411 = vmatprep.subr.mxu0 0.0
  %5412 = vmatpush1.msra.mxu0 %v147
  %5413 = vmatprep.subr.mxu0 0.0
  %5414 = vmatpush1.msra.mxu0 %v146
  %5415 = vmatprep.subr.mxu0 0.0
  %5416 = vmatpush1.msra.mxu0 %v145
  %5417 = vmatprep.subr.mxu0 0.0
  %5418 = vmatpush1.msra.mxu0 %v144
  %5419 = vmatprep.subr.mxu0 0.0
  %5420 = vmatpush1.msra.mxu0 %v143
  %5421 = vmatprep.subr.mxu0 0.0
  %5422 = vmatpush1.msra.mxu0 %v142
  %5423 = vmatprep.subr.mxu0 0.0
  %5424 = vmatpush1.msra.mxu0 %v141
  %5425 = vmatprep.subr.mxu0 0.0
  %5426 = vmatpush1.msra.mxu0 %v140
  %5427 = vmatprep.subr.mxu0 0.0
  %5428 = vmatpush1.msra.mxu0 %v139
  %5429 = vmatprep.subr.mxu0 0.0
  %5430 = vmatpush1.msra.mxu0 %v138
  %5431 = vmatprep.subr.mxu0 0.0
  %5432 = vmatpush1.msra.mxu0 %v137
  %5433 = vmatprep.subr.mxu0 0.0
  %5434 = vmatpush1.msra.mxu0 %v136
  %5435 = vmatprep.subr.mxu0 0.0
  %5436 = vmatpush1.msra.mxu0 %v135
  %5437 = vmatprep.subr.mxu0 0.0
  %5438 = vmatpush2.msra.mxu0 %v166
  %5439 = vmatprep.subr.mxu0 0.0
  %5440 = vmatpush2.msra.mxu0 %v165
  %5441 = vmatprep.subr.mxu0 0.0
  %5442 = vmatpush2.msra.mxu0 %v164
  %5443 = vmatprep.subr.mxu0 0.0
  %5444 = vmatpush2.msra.mxu0 %v163
  %5445 = vmatprep.subr.mxu0 0.0
  %5446 = vmatpush2.msra.mxu0 %v162
  %5447 = vmatprep.subr.mxu0 0.0
  %5448 = vmatpush2.msra.mxu0 %v161
  %5449 = vmatprep.subr.mxu0 0.0
  %5450 = vmatpush2.msra.mxu0 %v160
  %5451 = vmatprep.subr.mxu0 0.0
  %5452 = vmatpush2.msra.mxu0 %v159
  %5453 = vmatprep.subr.mxu0 0.0
  %5454 = vmatpush2.msra.mxu0 %v158
  %5455 = vmatprep.subr.mxu0 0.0
  %5456 = vmatpush2.msra.mxu0 %v157
  %5457 = vmatprep.subr.mxu0 0.0
  %5458 = vmatpush2.msra.mxu0 %v156
  %5459 = vmatprep.subr.mxu0 0.0
  %5460 = vmatpush2.msra.mxu0 %v155
  %5461 = vmatprep.subr.mxu0 0.0
  %5462 = vmatpush2.msra.mxu0 %v154
  %5463 = vmatprep.subr.mxu0 0.0
  %5464 = vmatpush2.msra.mxu0 %v153
  %5465 = vmatprep.subr.mxu0 0.0
  %5466 = vmatpush2.msra.mxu0 %v152
  %5467 = vmatprep.subr.mxu0 0.0
  %5468 = vmatpush2.msra.mxu0 %v151
  %5469 = vmatprep.mubr.f32.mxu0 %v5094
  %5470 = vmatmul.mubr.f32.gmra.mxu0 %v5092
  %v5471 = vpop.f32.mrf.mxu0
  %v5472 = vadd.f32 %v5402, %v5471
  %v5473 = vpop.f32.mrf.mxu0
  %5474 = vdwg.mxu0
  %5475 = vmatprep.subr.mxu0 0.0
  %5476 = vmatpush1.msra.mxu0 %v182
  %5477 = vmatprep.subr.mxu0 0.0
  %5478 = vmatpush1.msra.mxu0 %v181
  %5479 = vmatprep.subr.mxu0 0.0
  %5480 = vmatpush1.msra.mxu0 %v180
  %5481 = vmatprep.subr.mxu0 0.0
  %5482 = vmatpush1.msra.mxu0 %v179
  %5483 = vmatprep.subr.mxu0 0.0
  %5484 = vmatpush1.msra.mxu0 %v178
  %5485 = vmatprep.subr.mxu0 0.0
  %5486 = vmatpush1.msra.mxu0 %v177
  %5487 = vmatprep.subr.mxu0 0.0
  %5488 = vmatpush1.msra.mxu0 %v176
  %5489 = vmatprep.subr.mxu0 0.0
  %5490 = vmatpush1.msra.mxu0 %v175
  %5491 = vmatprep.subr.mxu0 0.0
  %5492 = vmatpush1.msra.mxu0 %v174
  %5493 = vmatprep.subr.mxu0 0.0
  %5494 = vmatpush1.msra.mxu0 %v173
  %5495 = vmatprep.subr.mxu0 0.0
  %5496 = vmatpush1.msra.mxu0 %v172
  %5497 = vmatprep.subr.mxu0 0.0
  %5498 = vmatpush1.msra.mxu0 %v171
  %5499 = vmatprep.subr.mxu0 0.0
  %5500 = vmatpush1.msra.mxu0 %v170
  %5501 = vmatprep.subr.mxu0 0.0
  %5502 = vmatpush1.msra.mxu0 %v169
  %5503 = vmatprep.subr.mxu0 0.0
  %5504 = vmatpush1.msra.mxu0 %v168
  %5505 = vmatprep.subr.mxu0 0.0
  %5506 = vmatpush1.msra.mxu0 %v167
  %5507 = vmatprep.subr.mxu0 0.0
  %5508 = vmatpush2.msra.mxu0 %v198
  %5509 = vmatprep.subr.mxu0 0.0
  %5510 = vmatpush2.msra.mxu0 %v197
  %5511 = vmatprep.subr.mxu0 0.0
  %5512 = vmatpush2.msra.mxu0 %v196
  %5513 = vmatprep.subr.mxu0 0.0
  %5514 = vmatpush2.msra.mxu0 %v195
  %5515 = vmatprep.subr.mxu0 0.0
  %5516 = vmatpush2.msra.mxu0 %v194
  %5517 = vmatprep.subr.mxu0 0.0
  %5518 = vmatpush2.msra.mxu0 %v193
  %5519 = vmatprep.subr.mxu0 0.0
  %5520 = vmatpush2.msra.mxu0 %v192
  %5521 = vmatprep.subr.mxu0 0.0
  %5522 = vmatpush2.msra.mxu0 %v191
  %5523 = vmatprep.subr.mxu0 0.0
  %5524 = vmatpush2.msra.mxu0 %v190
  %5525 = vmatprep.subr.mxu0 0.0
  %5526 = vmatpush2.msra.mxu0 %v189
  %5527 = vmatprep.subr.mxu0 0.0
  %5528 = vmatpush2.msra.mxu0 %v188
  %5529 = vmatprep.subr.mxu0 0.0
  %5530 = vmatpush2.msra.mxu0 %v187
  %5531 = vmatprep.subr.mxu0 0.0
  %5532 = vmatpush2.msra.mxu0 %v186
  %5533 = vmatprep.subr.mxu0 0.0
  %5534 = vmatpush2.msra.mxu0 %v185
  %5535 = vmatprep.subr.mxu0 0.0
  %5536 = vmatpush2.msra.mxu0 %v184
  %5537 = vmatprep.subr.mxu0 0.0
  %5538 = vmatpush2.msra.mxu0 %v183
  %5539 = vmatprep.mubr.f32.mxu0 %v5110
  %5540 = vmatmul.mubr.f32.gmra.mxu0 %v5102
  %v5541 = vpop.f32.mrf.mxu0
  %v5542 = vadd.f32 %v5472, %v5541
  %v5543 = vpop.f32.mrf.mxu0
  %5544 = vdwg.mxu0
  %5545 = vmatprep.subr.mxu0 0.0
  %5546 = vmatpush1.msra.mxu0 %v214
  %5547 = vmatprep.subr.mxu0 0.0
  %5548 = vmatpush1.msra.mxu0 %v213
  %5549 = vmatprep.subr.mxu0 0.0
  %5550 = vmatpush1.msra.mxu0 %v212
  %5551 = vmatprep.subr.mxu0 0.0
  %5552 = vmatpush1.msra.mxu0 %v211
  %5553 = vmatprep.subr.mxu0 0.0
  %5554 = vmatpush1.msra.mxu0 %v210
  %5555 = vmatprep.subr.mxu0 0.0
  %5556 = vmatpush1.msra.mxu0 %v209
  %5557 = vmatprep.subr.mxu0 0.0
  %5558 = vmatpush1.msra.mxu0 %v208
  %5559 = vmatprep.subr.mxu0 0.0
  %5560 = vmatpush1.msra.mxu0 %v207
  %5561 = vmatprep.subr.mxu0 0.0
  %5562 = vmatpush1.msra.mxu0 %v206
  %5563 = vmatprep.subr.mxu0 0.0
  %5564 = vmatpush1.msra.mxu0 %v205
  %5565 = vmatprep.subr.mxu0 0.0
  %5566 = vmatpush1.msra.mxu0 %v204
  %5567 = vmatprep.subr.mxu0 0.0
  %5568 = vmatpush1.msra.mxu0 %v203
  %5569 = vmatprep.subr.mxu0 0.0
  %5570 = vmatpush1.msra.mxu0 %v202
  %5571 = vmatprep.subr.mxu0 0.0
  %5572 = vmatpush1.msra.mxu0 %v201
  %5573 = vmatprep.subr.mxu0 0.0
  %5574 = vmatpush1.msra.mxu0 %v200
  %5575 = vmatprep.subr.mxu0 0.0
  %5576 = vmatpush1.msra.mxu0 %v199
  %5577 = vmatprep.subr.mxu0 0.0
  %5578 = vmatpush2.msra.mxu0 %v230
  %5579 = vmatprep.subr.mxu0 0.0
  %5580 = vmatpush2.msra.mxu0 %v229
  %5581 = vmatprep.subr.mxu0 0.0
  %5582 = vmatpush2.msra.mxu0 %v228
  %5583 = vmatprep.subr.mxu0 0.0
  %5584 = vmatpush2.msra.mxu0 %v227
  %5585 = vmatprep.subr.mxu0 0.0
  %5586 = vmatpush2.msra.mxu0 %v226
  %5587 = vmatprep.subr.mxu0 0.0
  %5588 = vmatpush2.msra.mxu0 %v225
  %5589 = vmatprep.subr.mxu0 0.0
  %5590 = vmatpush2.msra.mxu0 %v224
  %5591 = vmatprep.subr.mxu0 0.0
  %5592 = vmatpush2.msra.mxu0 %v223
  %5593 = vmatprep.subr.mxu0 0.0
  %5594 = vmatpush2.msra.mxu0 %v222
  %5595 = vmatprep.subr.mxu0 0.0
  %5596 = vmatpush2.msra.mxu0 %v221
  %5597 = vmatprep.subr.mxu0 0.0
  %5598 = vmatpush2.msra.mxu0 %v220
  %5599 = vmatprep.subr.mxu0 0.0
  %5600 = vmatpush2.msra.mxu0 %v219
  %5601 = vmatprep.subr.mxu0 0.0
  %5602 = vmatpush2.msra.mxu0 %v218
  %5603 = vmatprep.subr.mxu0 0.0
  %5604 = vmatpush2.msra.mxu0 %v217
  %5605 = vmatprep.subr.mxu0 0.0
  %5606 = vmatpush2.msra.mxu0 %v216
  %5607 = vmatprep.subr.mxu0 0.0
  %5608 = vmatpush2.msra.mxu0 %v215
  %5609 = vmatprep.mubr.f32.mxu0 %v5111
  %5610 = vmatmul.mubr.f32.gmra.mxu0 %v5109
  %v5611 = vpop.f32.mrf.mxu0
  %v5612 = vadd.f32 %v5542, %v5611
  %v5613 = vpop.f32.mrf.mxu0
  %5614 = vdwg.mxu0
  %5615 = vmatprep.subr.mxu0 0.0
  %5616 = vmatpush1.msra.mxu0 %v246
  %5617 = vmatprep.subr.mxu0 0.0
  %5618 = vmatpush1.msra.mxu0 %v245
  %5619 = vmatprep.subr.mxu0 0.0
  %5620 = vmatpush1.msra.mxu0 %v244
  %5621 = vmatprep.subr.mxu0 0.0
  %5622 = vmatpush1.msra.mxu0 %v243
  %5623 = vmatprep.subr.mxu0 0.0
  %5624 = vmatpush1.msra.mxu0 %v242
  %5625 = vmatprep.subr.mxu0 0.0
  %5626 = vmatpush1.msra.mxu0 %v241
  %5627 = vmatprep.subr.mxu0 0.0
  %5628 = vmatpush1.msra.mxu0 %v240
  %5629 = vmatprep.subr.mxu0 0.0
  %5630 = vmatpush1.msra.mxu0 %v239
  %5631 = vmatprep.subr.mxu0 0.0
  %5632 = vmatpush1.msra.mxu0 %v238
  %5633 = vmatprep.subr.mxu0 0.0
  %5634 = vmatpush1.msra.mxu0 %v237
  %5635 = vmatprep.subr.mxu0 0.0
  %5636 = vmatpush1.msra.mxu0 %v236
  %5637 = vmatprep.subr.mxu0 0.0
  %5638 = vmatpush1.msra.mxu0 %v235
  %5639 = vmatprep.subr.mxu0 0.0
  %5640 = vmatpush1.msra.mxu0 %v234
  %5641 = vmatprep.subr.mxu0 0.0
  %5642 = vmatpush1.msra.mxu0 %v233
  %5643 = vmatprep.subr.mxu0 0.0
  %5644 = vmatpush1.msra.mxu0 %v232
  %5645 = vmatprep.subr.mxu0 0.0
  %5646 = vmatpush1.msra.mxu0 %v231
  %5647 = vmatprep.subr.mxu0 0.0
  %5648 = vmatpush2.msra.mxu0 %v262
  %5649 = vmatprep.subr.mxu0 0.0
  %5650 = vmatpush2.msra.mxu0 %v261
  %5651 = vmatprep.subr.mxu0 0.0
  %5652 = vmatpush2.msra.mxu0 %v260
  %5653 = vmatprep.subr.mxu0 0.0
  %5654 = vmatpush2.msra.mxu0 %v259
  %5655 = vmatprep.subr.mxu0 0.0
  %5656 = vmatpush2.msra.mxu0 %v258
  %5657 = vmatprep.subr.mxu0 0.0
  %5658 = vmatpush2.msra.mxu0 %v257
  %5659 = vmatprep.subr.mxu0 0.0
  %5660 = vmatpush2.msra.mxu0 %v256
  %5661 = vmatprep.subr.mxu0 0.0
  %5662 = vmatpush2.msra.mxu0 %v255
  %5663 = vmatprep.subr.mxu0 0.0
  %5664 = vmatpush2.msra.mxu0 %v254
  %5665 = vmatprep.subr.mxu0 0.0
  %5666 = vmatpush2.msra.mxu0 %v253
  %5667 = vmatprep.subr.mxu0 0.0
  %5668 = vmatpush2.msra.mxu0 %v252
  %5669 = vmatprep.subr.mxu0 0.0
  %5670 = vmatpush2.msra.mxu0 %v251
  %5671 = vmatprep.subr.mxu0 0.0
  %5672 = vmatpush2.msra.mxu0 %v250
  %5673 = vmatprep.subr.mxu0 0.0
  %5674 = vmatpush2.msra.mxu0 %v249
  %5675 = vmatprep.subr.mxu0 0.0
  %5676 = vmatpush2.msra.mxu0 %v248
  %5677 = vmatprep.subr.mxu0 0.0
  %5678 = vmatpush2.msra.mxu0 %v247
  %5679 = vmatprep.mubr.f32.mxu0 %v5127
  %5680 = vmatmul.mubr.f32.gmra.mxu0 %v5119
  %v5681 = vpop.f32.mrf.mxu0
  %v5682 = vadd.f32 %v5612, %v5681
  %v5683 = vpop.f32.mrf.mxu0
  %5684 = vdwg.mxu0
  %5685 = vmatprep.subr.mxu0 0.0
  %5686 = vmatpush1.msra.mxu0 %v278
  %5687 = vmatprep.subr.mxu0 0.0
  %5688 = vmatpush1.msra.mxu0 %v277
  %5689 = vmatprep.subr.mxu0 0.0
  %5690 = vmatpush1.msra.mxu0 %v276
  %5691 = vmatprep.subr.mxu0 0.0
  %5692 = vmatpush1.msra.mxu0 %v275
  %5693 = vmatprep.subr.mxu0 0.0
  %5694 = vmatpush1.msra.mxu0 %v274
  %5695 = vmatprep.subr.mxu0 0.0
  %5696 = vmatpush1.msra.mxu0 %v273
  %5697 = vmatprep.subr.mxu0 0.0
  %5698 = vmatpush1.msra.mxu0 %v272
  %5699 = vmatprep.subr.mxu0 0.0
  %5700 = vmatpush1.msra.mxu0 %v271
  %5701 = vmatprep.subr.mxu0 0.0
  %5702 = vmatpush1.msra.mxu0 %v270
  %5703 = vmatprep.subr.mxu0 0.0
  %5704 = vmatpush1.msra.mxu0 %v269
  %5705 = vmatprep.subr.mxu0 0.0
  %5706 = vmatpush1.msra.mxu0 %v268
  %5707 = vmatprep.subr.mxu0 0.0
  %5708 = vmatpush1.msra.mxu0 %v267
  %5709 = vmatprep.subr.mxu0 0.0
  %5710 = vmatpush1.msra.mxu0 %v266
  %5711 = vmatprep.subr.mxu0 0.0
  %5712 = vmatpush1.msra.mxu0 %v265
  %5713 = vmatprep.subr.mxu0 0.0
  %5714 = vmatpush1.msra.mxu0 %v264
  %5715 = vmatprep.subr.mxu0 0.0
  %5716 = vmatpush1.msra.mxu0 %v263
  %5717 = vmatprep.subr.mxu0 0.0
  %5718 = vmatpush2.msra.mxu0 %v294
  %5719 = vmatprep.subr.mxu0 0.0
  %5720 = vmatpush2.msra.mxu0 %v293
  %5721 = vmatprep.subr.mxu0 0.0
  %5722 = vmatpush2.msra.mxu0 %v292
  %5723 = vmatprep.subr.mxu0 0.0
  %5724 = vmatpush2.msra.mxu0 %v291
  %5725 = vmatprep.subr.mxu0 0.0
  %5726 = vmatpush2.msra.mxu0 %v290
  %5727 = vmatprep.subr.mxu0 0.0
  %5728 = vmatpush2.msra.mxu0 %v289
  %5729 = vmatprep.subr.mxu0 0.0
  %5730 = vmatpush2.msra.mxu0 %v288
  %5731 = vmatprep.subr.mxu0 0.0
  %5732 = vmatpush2.msra.mxu0 %v287
  %5733 = vmatprep.subr.mxu0 0.0
  %5734 = vmatpush2.msra.mxu0 %v286
  %5735 = vmatprep.subr.mxu0 0.0
  %5736 = vmatpush2.msra.mxu0 %v285
  %5737 = vmatprep.subr.mxu0 0.0
  %5738 = vmatpush2.msra.mxu0 %v284
  %5739 = vmatprep.subr.mxu0 0.0
  %5740 = vmatpush2.msra.mxu0 %v283
  %5741 = vmatprep.subr.mxu0 0.0
  %5742 = vmatpush2.msra.mxu0 %v282
  %5743 = vmatprep.subr.mxu0 0.0
  %5744 = vmatpush2.msra.mxu0 %v281
  %5745 = vmatprep.subr.mxu0 0.0
  %5746 = vmatpush2.msra.mxu0 %v280
  %5747 = vmatprep.subr.mxu0 0.0
  %5748 = vmatpush2.msra.mxu0 %v279
  %5749 = vmatprep.mubr.f32.mxu0 %v5128
  %5750 = vmatmul.mubr.f32.gmra.mxu0 %v5126
  %v5751 = vpop.f32.mrf.mxu0
  %v5752 = vadd.f32 %v5682, %v5751
  %v5753 = vpop.f32.mrf.mxu0
  %5754 = vdwg.mxu0
  %5755 = vmatprep.subr.mxu0 0.0
  %5756 = vmatpush1.msra.mxu0 %v310
  %5757 = vmatprep.subr.mxu0 0.0
  %5758 = vmatpush1.msra.mxu0 %v309
  %5759 = vmatprep.subr.mxu0 0.0
  %5760 = vmatpush1.msra.mxu0 %v308
  %5761 = vmatprep.subr.mxu0 0.0
  %5762 = vmatpush1.msra.mxu0 %v307
  %5763 = vmatprep.subr.mxu0 0.0
  %5764 = vmatpush1.msra.mxu0 %v306
  %5765 = vmatprep.subr.mxu0 0.0
  %5766 = vmatpush1.msra.mxu0 %v305
  %5767 = vmatprep.subr.mxu0 0.0
  %5768 = vmatpush1.msra.mxu0 %v304
  %5769 = vmatprep.subr.mxu0 0.0
  %5770 = vmatpush1.msra.mxu0 %v303
  %5771 = vmatprep.subr.mxu0 0.0
  %5772 = vmatpush1.msra.mxu0 %v302
  %5773 = vmatprep.subr.mxu0 0.0
  %5774 = vmatpush1.msra.mxu0 %v301
  %5775 = vmatprep.subr.mxu0 0.0
  %5776 = vmatpush1.msra.mxu0 %v300
  %5777 = vmatprep.subr.mxu0 0.0
  %5778 = vmatpush1.msra.mxu0 %v299
  %5779 = vmatprep.subr.mxu0 0.0
  %5780 = vmatpush1.msra.mxu0 %v298
  %5781 = vmatprep.subr.mxu0 0.0
  %5782 = vmatpush1.msra.mxu0 %v297
  %5783 = vmatprep.subr.mxu0 0.0
  %5784 = vmatpush1.msra.mxu0 %v296
  %5785 = vmatprep.subr.mxu0 0.0
  %5786 = vmatpush1.msra.mxu0 %v295
  %5787 = vmatprep.subr.mxu0 0.0
  %5788 = vmatpush2.msra.mxu0 %v326
  %5789 = vmatprep.subr.mxu0 0.0
  %5790 = vmatpush2.msra.mxu0 %v325
  %5791 = vmatprep.subr.mxu0 0.0
  %5792 = vmatpush2.msra.mxu0 %v324
  %5793 = vmatprep.subr.mxu0 0.0
  %5794 = vmatpush2.msra.mxu0 %v323
  %5795 = vmatprep.subr.mxu0 0.0
  %5796 = vmatpush2.msra.mxu0 %v322
  %5797 = vmatprep.subr.mxu0 0.0
  %5798 = vmatpush2.msra.mxu0 %v321
  %5799 = vmatprep.subr.mxu0 0.0
  %5800 = vmatpush2.msra.mxu0 %v320
  %5801 = vmatprep.subr.mxu0 0.0
  %5802 = vmatpush2.msra.mxu0 %v319
  %5803 = vmatprep.subr.mxu0 0.0
  %5804 = vmatpush2.msra.mxu0 %v318
  %5805 = vmatprep.subr.mxu0 0.0
  %5806 = vmatpush2.msra.mxu0 %v317
  %5807 = vmatprep.subr.mxu0 0.0
  %5808 = vmatpush2.msra.mxu0 %v316
  %5809 = vmatprep.subr.mxu0 0.0
  %5810 = vmatpush2.msra.mxu0 %v315
  %5811 = vmatprep.subr.mxu0 0.0
  %5812 = vmatpush2.msra.mxu0 %v314
  %5813 = vmatprep.subr.mxu0 0.0
  %5814 = vmatpush2.msra.mxu0 %v313
  %5815 = vmatprep.subr.mxu0 0.0
  %5816 = vmatpush2.msra.mxu0 %v312
  %5817 = vmatprep.subr.mxu0 0.0
  %5818 = vmatpush2.msra.mxu0 %v311
  %5819 = vmatprep.mubr.f32.mxu0 %v5144
  %5820 = vmatmul.mubr.f32.gmra.mxu0 %v5136
  %v5821 = vpop.f32.mrf.mxu0
  %v5822 = vadd.f32 %v5752, %v5821
  %v5823 = vpop.f32.mrf.mxu0
  %5824 = vdwg.mxu0
  %5825 = vmatprep.subr.mxu0 0.0
  %5826 = vmatpush1.msra.mxu0 %v342
  %5827 = vmatprep.subr.mxu0 0.0
  %5828 = vmatpush1.msra.mxu0 %v341
  %5829 = vmatprep.subr.mxu0 0.0
  %5830 = vmatpush1.msra.mxu0 %v340
  %5831 = vmatprep.subr.mxu0 0.0
  %5832 = vmatpush1.msra.mxu0 %v339
  %5833 = vmatprep.subr.mxu0 0.0
  %5834 = vmatpush1.msra.mxu0 %v338
  %5835 = vmatprep.subr.mxu0 0.0
  %5836 = vmatpush1.msra.mxu0 %v337
  %5837 = vmatprep.subr.mxu0 0.0
  %5838 = vmatpush1.msra.mxu0 %v336
  %5839 = vmatprep.subr.mxu0 0.0
  %5840 = vmatpush1.msra.mxu0 %v335
  %5841 = vmatprep.subr.mxu0 0.0
  %5842 = vmatpush1.msra.mxu0 %v334
  %5843 = vmatprep.subr.mxu0 0.0
  %5844 = vmatpush1.msra.mxu0 %v333
  %5845 = vmatprep.subr.mxu0 0.0
  %5846 = vmatpush1.msra.mxu0 %v332
  %5847 = vmatprep.subr.mxu0 0.0
  %5848 = vmatpush1.msra.mxu0 %v331
  %5849 = vmatprep.subr.mxu0 0.0
  %5850 = vmatpush1.msra.mxu0 %v330
  %5851 = vmatprep.subr.mxu0 0.0
  %5852 = vmatpush1.msra.mxu0 %v329
  %5853 = vmatprep.subr.mxu0 0.0
  %5854 = vmatpush1.msra.mxu0 %v328
  %5855 = vmatprep.subr.mxu0 0.0
  %5856 = vmatpush1.msra.mxu0 %v327
  %5857 = vmatprep.subr.mxu0 0.0
  %5858 = vmatpush2.msra.mxu0 %v358
  %5859 = vmatprep.subr.mxu0 0.0
  %5860 = vmatpush2.msra.mxu0 %v357
  %5861 = vmatprep.subr.mxu0 0.0
  %5862 = vmatpush2.msra.mxu0 %v356
  %5863 = vmatprep.subr.mxu0 0.0
  %5864 = vmatpush2.msra.mxu0 %v355
  %5865 = vmatprep.subr.mxu0 0.0
  %5866 = vmatpush2.msra.mxu0 %v354
  %5867 = vmatprep.subr.mxu0 0.0
  %5868 = vmatpush2.msra.mxu0 %v353
  %5869 = vmatprep.subr.mxu0 0.0
  %5870 = vmatpush2.msra.mxu0 %v352
  %5871 = vmatprep.subr.mxu0 0.0
  %5872 = vmatpush2.msra.mxu0 %v351
  %5873 = vmatprep.subr.mxu0 0.0
  %5874 = vmatpush2.msra.mxu0 %v350
  %5875 = vmatprep.subr.mxu0 0.0
  %5876 = vmatpush2.msra.mxu0 %v349
  %5877 = vmatprep.subr.mxu0 0.0
  %5878 = vmatpush2.msra.mxu0 %v348
  %5879 = vmatprep.subr.mxu0 0.0
  %5880 = vmatpush2.msra.mxu0 %v347
  %5881 = vmatprep.subr.mxu0 0.0
  %5882 = vmatpush2.msra.mxu0 %v346
  %5883 = vmatprep.subr.mxu0 0.0
  %5884 = vmatpush2.msra.mxu0 %v345
  %5885 = vmatprep.subr.mxu0 0.0
  %5886 = vmatpush2.msra.mxu0 %v344
  %5887 = vmatprep.subr.mxu0 0.0
  %5888 = vmatpush2.msra.mxu0 %v343
  %5889 = vmatprep.mubr.f32.mxu0 %v5145
  %5890 = vmatmul.mubr.f32.gmra.mxu0 %v5143
  %v5891 = vpop.f32.mrf.mxu0
  %v5892 = vadd.f32 %v5822, %v5891
  %v5893 = vpop.f32.mrf.mxu0
  %5894 = vdwg.mxu0
  %5895 = vmatprep.subr.mxu0 0.0
  %5896 = vmatpush1.msra.mxu0 %v374
  %5897 = vmatprep.subr.mxu0 0.0
  %5898 = vmatpush1.msra.mxu0 %v373
  %5899 = vmatprep.subr.mxu0 0.0
  %5900 = vmatpush1.msra.mxu0 %v372
  %5901 = vmatprep.subr.mxu0 0.0
  %5902 = vmatpush1.msra.mxu0 %v371
  %5903 = vmatprep.subr.mxu0 0.0
  %5904 = vmatpush1.msra.mxu0 %v370
  %5905 = vmatprep.subr.mxu0 0.0
  %5906 = vmatpush1.msra.mxu0 %v369
  %5907 = vmatprep.subr.mxu0 0.0
  %5908 = vmatpush1.msra.mxu0 %v368
  %5909 = vmatprep.subr.mxu0 0.0
  %5910 = vmatpush1.msra.mxu0 %v367
  %5911 = vmatprep.subr.mxu0 0.0
  %5912 = vmatpush1.msra.mxu0 %v366
  %5913 = vmatprep.subr.mxu0 0.0
  %5914 = vmatpush1.msra.mxu0 %v365
  %5915 = vmatprep.subr.mxu0 0.0
  %5916 = vmatpush1.msra.mxu0 %v364
  %5917 = vmatprep.subr.mxu0 0.0
  %5918 = vmatpush1.msra.mxu0 %v363
  %5919 = vmatprep.subr.mxu0 0.0
  %5920 = vmatpush1.msra.mxu0 %v362
  %5921 = vmatprep.subr.mxu0 0.0
  %5922 = vmatpush1.msra.mxu0 %v361
  %5923 = vmatprep.subr.mxu0 0.0
  %5924 = vmatpush1.msra.mxu0 %v360
  %5925 = vmatprep.subr.mxu0 0.0
  %5926 = vmatpush1.msra.mxu0 %v359
  %5927 = vmatprep.subr.mxu0 0.0
  %5928 = vmatpush2.msra.mxu0 %v390
  %5929 = vmatprep.subr.mxu0 0.0
  %5930 = vmatpush2.msra.mxu0 %v389
  %5931 = vmatprep.subr.mxu0 0.0
  %5932 = vmatpush2.msra.mxu0 %v388
  %5933 = vmatprep.subr.mxu0 0.0
  %5934 = vmatpush2.msra.mxu0 %v387
  %5935 = vmatprep.subr.mxu0 0.0
  %5936 = vmatpush2.msra.mxu0 %v386
  %5937 = vmatprep.subr.mxu0 0.0
  %5938 = vmatpush2.msra.mxu0 %v385
  %5939 = vmatprep.subr.mxu0 0.0
  %5940 = vmatpush2.msra.mxu0 %v384
  %5941 = vmatprep.subr.mxu0 0.0
  %5942 = vmatpush2.msra.mxu0 %v383
  %5943 = vmatprep.subr.mxu0 0.0
  %5944 = vmatpush2.msra.mxu0 %v382
  %5945 = vmatprep.subr.mxu0 0.0
  %5946 = vmatpush2.msra.mxu0 %v381
  %5947 = vmatprep.subr.mxu0 0.0
  %5948 = vmatpush2.msra.mxu0 %v380
  %5949 = vmatprep.subr.mxu0 0.0
  %5950 = vmatpush2.msra.mxu0 %v379
  %5951 = vmatprep.subr.mxu0 0.0
  %5952 = vmatpush2.msra.mxu0 %v378
  %5953 = vmatprep.subr.mxu0 0.0
  %5954 = vmatpush2.msra.mxu0 %v377
  %5955 = vmatprep.subr.mxu0 0.0
  %5956 = vmatpush2.msra.mxu0 %v376
  %5957 = vmatprep.subr.mxu0 0.0
  %5958 = vmatpush2.msra.mxu0 %v375
  %5959 = vmatprep.mubr.f32.mxu0 %v5161
  %5960 = vmatmul.mubr.f32.gmra.mxu0 %v5153
  %v5961 = vpop.f32.mrf.mxu0
  %v5962 = vadd.f32 %v5892, %v5961
  %v5963 = vpop.f32.mrf.mxu0
  %5964 = vdwg.mxu0
  %5965 = vmatprep.subr.mxu0 0.0
  %5966 = vmatpush1.msra.mxu0 %v406
  %5967 = vmatprep.subr.mxu0 0.0
  %5968 = vmatpush1.msra.mxu0 %v405
  %5969 = vmatprep.subr.mxu0 0.0
  %5970 = vmatpush1.msra.mxu0 %v404
  %5971 = vmatprep.subr.mxu0 0.0
  %5972 = vmatpush1.msra.mxu0 %v403
  %5973 = vmatprep.subr.mxu0 0.0
  %5974 = vmatpush1.msra.mxu0 %v402
  %5975 = vmatprep.subr.mxu0 0.0
  %5976 = vmatpush1.msra.mxu0 %v401
  %5977 = vmatprep.subr.mxu0 0.0
  %5978 = vmatpush1.msra.mxu0 %v400
  %5979 = vmatprep.subr.mxu0 0.0
  %5980 = vmatpush1.msra.mxu0 %v399
  %5981 = vmatprep.subr.mxu0 0.0
  %5982 = vmatpush1.msra.mxu0 %v398
  %5983 = vmatprep.subr.mxu0 0.0
  %5984 = vmatpush1.msra.mxu0 %v397
  %5985 = vmatprep.subr.mxu0 0.0
  %5986 = vmatpush1.msra.mxu0 %v396
  %5987 = vmatprep.subr.mxu0 0.0
  %5988 = vmatpush1.msra.mxu0 %v395
  %5989 = vmatprep.subr.mxu0 0.0
  %5990 = vmatpush1.msra.mxu0 %v394
  %5991 = vmatprep.subr.mxu0 0.0
  %5992 = vmatpush1.msra.mxu0 %v393
  %5993 = vmatprep.subr.mxu0 0.0
  %5994 = vmatpush1.msra.mxu0 %v392
  %5995 = vmatprep.subr.mxu0 0.0
  %5996 = vmatpush1.msra.mxu0 %v391
  %5997 = vmatprep.subr.mxu0 0.0
  %5998 = vmatpush2.msra.mxu0 %v422
  %5999 = vmatprep.subr.mxu0 0.0
  %6000 = vmatpush2.msra.mxu0 %v421
  %6001 = vmatprep.subr.mxu0 0.0
  %6002 = vmatpush2.msra.mxu0 %v420
  %6003 = vmatprep.subr.mxu0 0.0
  %6004 = vmatpush2.msra.mxu0 %v419
  %6005 = vmatprep.subr.mxu0 0.0
  %6006 = vmatpush2.msra.mxu0 %v418
  %6007 = vmatprep.subr.mxu0 0.0
  %6008 = vmatpush2.msra.mxu0 %v417
  %6009 = vmatprep.subr.mxu0 0.0
  %6010 = vmatpush2.msra.mxu0 %v416
  %6011 = vmatprep.subr.mxu0 0.0
  %6012 = vmatpush2.msra.mxu0 %v415
  %6013 = vmatprep.subr.mxu0 0.0
  %6014 = vmatpush2.msra.mxu0 %v414
  %6015 = vmatprep.subr.mxu0 0.0
  %6016 = vmatpush2.msra.mxu0 %v413
  %6017 = vmatprep.subr.mxu0 0.0
  %6018 = vmatpush2.msra.mxu0 %v412
  %6019 = vmatprep.subr.mxu0 0.0
  %6020 = vmatpush2.msra.mxu0 %v411
  %6021 = vmatprep.subr.mxu0 0.0
  %6022 = vmatpush2.msra.mxu0 %v410
  %6023 = vmatprep.subr.mxu0 0.0
  %6024 = vmatpush2.msra.mxu0 %v409
  %6025 = vmatprep.subr.mxu0 0.0
  %6026 = vmatpush2.msra.mxu0 %v408
  %6027 = vmatprep.subr.mxu0 0.0
  %6028 = vmatpush2.msra.mxu0 %v407
  %6029 = vmatprep.mubr.f32.mxu0 %v5162
  %6030 = vmatmul.mubr.f32.gmra.mxu0 %v5160
  %v6031 = vpop.f32.mrf.mxu0
  %v6032 = vadd.f32 %v5962, %v6031
  %v6033 = vpop.f32.mrf.mxu0
  %6034 = vdwg.mxu0
  %6035 = vmatprep.subr.mxu0 0.0
  %6036 = vmatpush1.msra.mxu0 %v438
  %6037 = vmatprep.subr.mxu0 0.0
  %6038 = vmatpush1.msra.mxu0 %v437
  %6039 = vmatprep.subr.mxu0 0.0
  %6040 = vmatpush1.msra.mxu0 %v436
  %6041 = vmatprep.subr.mxu0 0.0
  %6042 = vmatpush1.msra.mxu0 %v435
  %6043 = vmatprep.subr.mxu0 0.0
  %6044 = vmatpush1.msra.mxu0 %v434
  %6045 = vmatprep.subr.mxu0 0.0
  %6046 = vmatpush1.msra.mxu0 %v433
  %6047 = vmatprep.subr.mxu0 0.0
  %6048 = vmatpush1.msra.mxu0 %v432
  %6049 = vmatprep.subr.mxu0 0.0
  %6050 = vmatpush1.msra.mxu0 %v431
  %6051 = vmatprep.subr.mxu0 0.0
  %6052 = vmatpush1.msra.mxu0 %v430
  %6053 = vmatprep.subr.mxu0 0.0
  %6054 = vmatpush1.msra.mxu0 %v429
  %6055 = vmatprep.subr.mxu0 0.0
  %6056 = vmatpush1.msra.mxu0 %v428
  %6057 = vmatprep.subr.mxu0 0.0
  %6058 = vmatpush1.msra.mxu0 %v427
  %6059 = vmatprep.subr.mxu0 0.0
  %6060 = vmatpush1.msra.mxu0 %v426
  %6061 = vmatprep.subr.mxu0 0.0
  %6062 = vmatpush1.msra.mxu0 %v425
  %6063 = vmatprep.subr.mxu0 0.0
  %6064 = vmatpush1.msra.mxu0 %v424
  %6065 = vmatprep.subr.mxu0 0.0
  %6066 = vmatpush1.msra.mxu0 %v423
  %6067 = vmatprep.subr.mxu0 0.0
  %6068 = vmatpush2.msra.mxu0 0.0
  %6069 = vmatprep.subr.mxu0 0.0
  %6070 = vmatpush2.msra.mxu0 0.0
  %6071 = vmatprep.subr.mxu0 0.0
  %6072 = vmatpush2.msra.mxu0 0.0
  %6073 = vmatprep.subr.mxu0 0.0
  %6074 = vmatpush2.msra.mxu0 0.0
  %6075 = vmatprep.subr.mxu0 0.0
  %6076 = vmatpush2.msra.mxu0 0.0
  %6077 = vmatprep.subr.mxu0 0.0
  %6078 = vmatpush2.msra.mxu0 0.0
  %6079 = vmatprep.subr.mxu0 0.0
  %6080 = vmatpush2.msra.mxu0 0.0
  %6081 = vmatprep.subr.mxu0 0.0
  %6082 = vmatpush2.msra.mxu0 0.0
  %6083 = vmatprep.subr.mxu0 0.0
  %6084 = vmatpush2.msra.mxu0 0.0
  %6085 = vmatprep.subr.mxu0 0.0
  %6086 = vmatpush2.msra.mxu0 0.0
  %6087 = vmatprep.subr.mxu0 0.0
  %6088 = vmatpush2.msra.mxu0 0.0
  %6089 = vmatprep.subr.mxu0 0.0
  %6090 = vmatpush2.msra.mxu0 0.0
  %6091 = vmatprep.subr.mxu0 0.0
  %6092 = vmatpush2.msra.mxu0 0.0
  %6093 = vmatprep.subr.mxu0 0.0
  %6094 = vmatpush2.msra.mxu0 0.0
  %6095 = vmatprep.subr.mxu0 0.0
  %6096 = vmatpush2.msra.mxu0 0.0
  %6097 = vmatprep.subr.mxu0 0.0
  %6098 = vmatpush2.msra.mxu0 0.0
  %6099 = vmatprep.mubr.f32.mxu0 0.0
  %6100 = vmatmul.mubr.f32.gmra.mxu0 %v5169
  %v6101 = vpop.f32.mrf.mxu0
  %v6102 = vadd.f32 %v6032, %v6101
  %v6103 = vpop.f32.mrf.mxu0
  %6104 = vdwg.mxu0
  %v6105 = vmax.f32 %v6102, 0.0
  %s6106 = scalar_lea.vmem %s3, 512
  %v6107 = vld [vmem:[%s6106] sm:$0xff]
  %v6108 = vld [vmem:[%s6106 + $0x8] sm:$0xff]
  %v6109 = vld [vmem:[%s6106 + $0x10] sm:$0xff]
  %v6110 = vld [vmem:[%s6106 + $0x18] sm:$0xff]
  %v6111 = vld [vmem:[%s6106 + $0x20] sm:$0xff]
  %v6112 = vld [vmem:[%s6106 + $0x28] sm:$0xff]
  %v6113 = vld [vmem:[%s6106 + $0x30] sm:$0xff]
  %v6114 = vld [vmem:[%s6106 + $0x38] sm:$0xff]
  %v6115 = vld [vmem:[%s6106 + $0x40] sm:$0xff]
  %v6116 = vld [vmem:[%s6106 + $0x48] sm:$0xff]
  %v6117 = vld [vmem:[%s6106 + $0x50] sm:$0xff]
  %v6118 = vld [vmem:[%s6106 + $0x58] sm:$0xff]
  %v6119 = vld [vmem:[%s6106 + $0x60] sm:$0xff]
  %v6120 = vld [vmem:[%s6106 + $0x68] sm:$0xff]
  %v6121 = vld [vmem:[%s6106 + $0x70] sm:$0xff]
  %v6122 = vld [vmem:[%s6106 + $0x78] sm:$0xff]
  %v6124 = vsel %vm2591, %v6105, 0
  %6126 = vmatprep.subr.mxu0 0.0
  %6127 = vmatpush1.msra.mxu0 0.0
  %6128 = vmatprep.subr.mxu0 0.0
  %6129 = vmatpush1.msra.mxu0 0.0
  %6130 = vmatprep.subr.mxu0 0.0
  %6131 = vmatpush1.msra.mxu0 0.0
  %6132 = vmatprep.subr.mxu0 0.0
  %6133 = vmatpush1.msra.mxu0 0.0
  %6134 = vmatprep.subr.mxu0 0.0
  %6135 = vmatpush1.msra.mxu0 0.0
  %6136 = vmatprep.subr.mxu0 0.0
  %6137 = vmatpush1.msra.mxu0 0.0
  %6138 = vmatprep.subr.mxu0 0.0
  %6139 = vmatpush1.msra.mxu0 0.0
  %6140 = vmatprep.subr.mxu0 0.0
  %6141 = vmatpush1.msra.mxu0 0.0
  %6142 = vmatprep.subr.mxu0 %v6122
  %6143 = vmatpush1.msra.mxu0 %v6121
  %6144 = vmatprep.subr.mxu0 %v6120
  %6145 = vmatpush1.msra.mxu0 %v6119
  %6146 = vmatprep.subr.mxu0 %v6118
  %6147 = vmatpush1.msra.mxu0 %v6117
  %6148 = vmatprep.subr.mxu0 %v6116
  %6149 = vmatpush1.msra.mxu0 %v6115
  %6150 = vmatprep.subr.mxu0 %v6114
  %6151 = vmatpush1.msra.mxu0 %v6113
  %6152 = vmatprep.subr.mxu0 %v6112
  %6153 = vmatpush1.msra.mxu0 %v6111
  %6154 = vmatprep.subr.mxu0 %v6110
  %6155 = vmatpush1.msra.mxu0 %v6109
  %6156 = vmatprep.subr.mxu0 %v6108
  %6157 = vmatpush1.msra.mxu0 %v6107
  %6158 = vmatprep.subr.mxu0 0.0
  %6159 = vmatpush2.msra.mxu0 0.0
  %6160 = vmatprep.subr.mxu0 0.0
  %6161 = vmatpush2.msra.mxu0 0.0
  %6162 = vmatprep.subr.mxu0 0.0
  %6163 = vmatpush2.msra.mxu0 0.0
  %6164 = vmatprep.subr.mxu0 0.0
  %6165 = vmatpush2.msra.mxu0 0.0
  %6166 = vmatprep.subr.mxu0 0.0
  %6167 = vmatpush2.msra.mxu0 0.0
  %6168 = vmatprep.subr.mxu0 0.0
  %6169 = vmatpush2.msra.mxu0 0.0
  %6170 = vmatprep.subr.mxu0 0.0
  %6171 = vmatpush2.msra.mxu0 0.0
  %6172 = vmatprep.subr.mxu0 0.0
  %6173 = vmatpush2.msra.mxu0 0.0
  %6174 = vmatprep.subr.mxu0 0.0
  %6175 = vmatpush2.msra.mxu0 0.0
  %6176 = vmatprep.subr.mxu0 0.0
  %6177 = vmatpush2.msra.mxu0 0.0
  %6178 = vmatprep.subr.mxu0 0.0
  %6179 = vmatpush2.msra.mxu0 0.0
  %6180 = vmatprep.subr.mxu0 0.0
  %6181 = vmatpush2.msra.mxu0 0.0
  %6182 = vmatprep.subr.mxu0 0.0
  %6183 = vmatpush2.msra.mxu0 0.0
  %6184 = vmatprep.subr.mxu0 0.0
  %6185 = vmatpush2.msra.mxu0 0.0
  %6186 = vmatprep.subr.mxu0 0.0
  %6187 = vmatpush2.msra.mxu0 0.0
  %6188 = vmatprep.subr.mxu0 0.0
  %6189 = vmatpush2.msra.mxu0 0.0
  %6190 = vmatprep.mubr.f32.mxu0 0.0
  %6191 = vmatmul.mubr.f32.gmra.mxu0 %v6124
  %v6192 = vpop.f32.mrf.mxu0
  %v6193 = vadd.f32 0.0, %v6192
  %v6194 = vpop.f32.mrf.mxu0
  %v6195 = vadd.f32 0.0, %v6194
  %6196 = vdwg.mxu0
  %v6197 = vadd.f32 %v5044, %v6193
  %v6198 = vadd.f32 %v5045, %v6195
  %s6199 = scalar_lea.vmem %s0, 250
  %v6200 = vld [vmem:[%s6199] sm:$0xff]
  %v6201 = vld [vmem:[%s6199 + $0x8] sm:$0xff]
  %v6202 = vld [vmem:[%s6199 + $0x10] sm:$0xff]
  %v6203 = vld [vmem:[%s6199 + $0x18] sm:$0xff]
  %v6204 = vld [vmem:[%s6199 + $0x20] sm:$0xff]
  %v6205 = vld [vmem:[%s6199 + $0x28] sm:$0xff]
  %v6206 = vld [vmem:[%s6199 + $0x30] sm:$0x3]
  %v6214 = vcombine.high %v6200, %v6200
  %v6216 = vunpack.c.l.s4 1983009808
  %v6217 = vunpack.c.0.s8 %v6216
  %v6218 = vlaneseq
  %v6219 = vshrl.u32 %v6218, 7
  %v6220 = vsub.s32 %v6217, %v6219
  %v6221 = vrot.slane %v6200, %v6220
  %v6223 = vunpack.c.l.s4 1983009808
  %v6224 = vunpack.c.0.s8 %v6223
  %v6225 = vlaneseq
  %v6226 = vshrl.u32 %v6225, 7
  %v6227 = vsub.s32 %v6224, %v6226
  %v6228 = vrot.slane %v6214, %v6227
  %v6229 = vcombine.high %v6221, %v6221
  %v6230 = vcombine.high %v6228, %v6228
  %v6231 = vcombine.high %v6201, %v6201
  %v6233 = vunpack.c.l.s4 1983009808
  %v6234 = vunpack.c.0.s8 %v6233
  %v6235 = vlaneseq
  %v6236 = vshrl.u32 %v6235, 7
  %v6237 = vsub.s32 %v6234, %v6236
  %v6238 = vrot.slane %v6201, %v6237
  %v6240 = vunpack.c.l.s4 1983009808
  %v6241 = vunpack.c.0.s8 %v6240
  %v6242 = vlaneseq
  %v6243 = vshrl.u32 %v6242, 7
  %v6244 = vsub.s32 %v6241, %v6243
  %v6245 = vrot.slane %v6231, %v6244
  %v6246 = vcombine.high %v6238, %v6238
  %v6247 = vcombine.high %v6245, %v6245
  %v6248 = vcombine.high %v6202, %v6202
  %v6250 = vunpack.c.l.s4 1983009808
  %v6251 = vunpack.c.0.s8 %v6250
  %v6252 = vlaneseq
  %v6253 = vshrl.u32 %v6252, 7
  %v6254 = vsub.s32 %v6251, %v6253
  %v6255 = vrot.slane %v6202, %v6254
  %v6257 = vunpack.c.l.s4 1983009808
  %v6258 = vunpack.c.0.s8 %v6257
  %v6259 = vlaneseq
  %v6260 = vshrl.u32 %v6259, 7
  %v6261 = vsub.s32 %v6258, %v6260
  %v6262 = vrot.slane %v6248, %v6261
  %v6263 = vcombine.high %v6255, %v6255
  %v6264 = vcombine.high %v6262, %v6262
  %v6265 = vcombine.high %v6203, %v6203
  %v6267 = vunpack.c.l.s4 1983009808
  %v6268 = vunpack.c.0.s8 %v6267
  %v6269 = vlaneseq
  %v6270 = vshrl.u32 %v6269, 7
  %v6271 = vsub.s32 %v6268, %v6270
  %v6272 = vrot.slane %v6203, %v6271
  %v6274 = vunpack.c.l.s4 1983009808
  %v6275 = vunpack.c.0.s8 %v6274
  %v6276 = vlaneseq
  %v6277 = vshrl.u32 %v6276, 7
  %v6278 = vsub.s32 %v6275, %v6277
  %v6279 = vrot.slane %v6265, %v6278
  %v6280 = vcombine.high %v6272, %v6272
  %v6281 = vcombine.high %v6279, %v6279
  %v6282 = vcombine.high %v6204, %v6204
  %v6284 = vunpack.c.l.s4 1983009808
  %v6285 = vunpack.c.0.s8 %v6284
  %v6286 = vlaneseq
  %v6287 = vshrl.u32 %v6286, 7
  %v6288 = vsub.s32 %v6285, %v6287
  %v6289 = vrot.slane %v6204, %v6288
  %v6291 = vunpack.c.l.s4 1983009808
  %v6292 = vunpack.c.0.s8 %v6291
  %v6293 = vlaneseq
  %v6294 = vshrl.u32 %v6293, 7
  %v6295 = vsub.s32 %v6292, %v6294
  %v6296 = vrot.slane %v6282, %v6295
  %v6297 = vcombine.high %v6289, %v6289
  %v6298 = vcombine.high %v6296, %v6296
  %v6299 = vcombine.high %v6205, %v6205
  %v6301 = vunpack.c.l.s4 1983009808
  %v6302 = vunpack.c.0.s8 %v6301
  %v6303 = vlaneseq
  %v6304 = vshrl.u32 %v6303, 7
  %v6305 = vsub.s32 %v6302, %v6304
  %v6306 = vrot.slane %v6205, %v6305
  %v6308 = vunpack.c.l.s4 1983009808
  %v6309 = vunpack.c.0.s8 %v6308
  %v6310 = vlaneseq
  %v6311 = vshrl.u32 %v6310, 7
  %v6312 = vsub.s32 %v6309, %v6311
  %v6313 = vrot.slane %v6299, %v6312
  %v6314 = vcombine.high %v6306, %v6306
  %v6315 = vcombine.high %v6313, %v6313
  %v6317 = vunpack.c.l.s4 1983009808
  %v6318 = vunpack.c.0.s8 %v6317
  %v6319 = vlaneseq
  %v6320 = vshrl.u32 %v6319, 7
  %v6321 = vsub.s32 %v6318, %v6320
  %v6322 = vrot.slane %v6206, %v6321
  %6348 = vmatprep.subr.mxu0 0.0
  %6349 = vmatpush1.msra.mxu0 %v54
  %6350 = vmatprep.subr.mxu0 0.0
  %6351 = vmatpush1.msra.mxu0 %v53
  %6352 = vmatprep.subr.mxu0 0.0
  %6353 = vmatpush1.msra.mxu0 %v52
  %6354 = vmatprep.subr.mxu0 0.0
  %6355 = vmatpush1.msra.mxu0 %v51
  %6356 = vmatprep.subr.mxu0 0.0
  %6357 = vmatpush1.msra.mxu0 %v50
  %6358 = vmatprep.subr.mxu0 0.0
  %6359 = vmatpush1.msra.mxu0 %v49
  %6360 = vmatprep.subr.mxu0 0.0
  %6361 = vmatpush1.msra.mxu0 %v48
  %6362 = vmatprep.subr.mxu0 0.0
  %6363 = vmatpush1.msra.mxu0 %v47
  %6364 = vmatprep.subr.mxu0 0.0
  %6365 = vmatpush1.msra.mxu0 %v46
  %6366 = vmatprep.subr.mxu0 0.0
  %6367 = vmatpush1.msra.mxu0 %v45
  %6368 = vmatprep.subr.mxu0 0.0
  %6369 = vmatpush1.msra.mxu0 %v44
  %6370 = vmatprep.subr.mxu0 0.0
  %6371 = vmatpush1.msra.mxu0 %v43
  %6372 = vmatprep.subr.mxu0 0.0
  %6373 = vmatpush1.msra.mxu0 %v42
  %6374 = vmatprep.subr.mxu0 0.0
  %6375 = vmatpush1.msra.mxu0 %v41
  %6376 = vmatprep.subr.mxu0 0.0
  %6377 = vmatpush1.msra.mxu0 %v40
  %6378 = vmatprep.subr.mxu0 0.0
  %6379 = vmatpush1.msra.mxu0 %v39
  %6380 = vmatprep.subr.mxu0 0.0
  %6381 = vmatpush2.msra.mxu0 %v70
  %6382 = vmatprep.subr.mxu0 0.0
  %6383 = vmatpush2.msra.mxu0 %v69
  %6384 = vmatprep.subr.mxu0 0.0
  %6385 = vmatpush2.msra.mxu0 %v68
  %6386 = vmatprep.subr.mxu0 0.0
  %6387 = vmatpush2.msra.mxu0 %v67
  %6388 = vmatprep.subr.mxu0 0.0
  %6389 = vmatpush2.msra.mxu0 %v66
  %6390 = vmatprep.subr.mxu0 0.0
  %6391 = vmatpush2.msra.mxu0 %v65
  %6392 = vmatprep.subr.mxu0 0.0
  %6393 = vmatpush2.msra.mxu0 %v64
  %6394 = vmatprep.subr.mxu0 0.0
  %6395 = vmatpush2.msra.mxu0 %v63
  %6396 = vmatprep.subr.mxu0 0.0
  %6397 = vmatpush2.msra.mxu0 %v62
  %6398 = vmatprep.subr.mxu0 0.0
  %6399 = vmatpush2.msra.mxu0 %v61
  %6400 = vmatprep.subr.mxu0 0.0
  %6401 = vmatpush2.msra.mxu0 %v60
  %6402 = vmatprep.subr.mxu0 0.0
  %6403 = vmatpush2.msra.mxu0 %v59
  %6404 = vmatprep.subr.mxu0 0.0
  %6405 = vmatpush2.msra.mxu0 %v58
  %6406 = vmatprep.subr.mxu0 0.0
  %6407 = vmatpush2.msra.mxu0 %v57
  %6408 = vmatprep.subr.mxu0 0.0
  %6409 = vmatpush2.msra.mxu0 %v56
  %6410 = vmatprep.subr.mxu0 0.0
  %6411 = vmatpush2.msra.mxu0 %v55
  %6412 = vmatprep.mubr.f32.mxu0 %v6229
  %6413 = vmatmul.mubr.f32.gmra.mxu0 %v6221
  %v6414 = vpop.f32.mrf.mxu0
  %v6415 = vadd.f32 %v444, %v6414
  %v6416 = vpop.f32.mrf.mxu0
  %6417 = vdwg.mxu0
  %6418 = vmatprep.subr.mxu0 0.0
  %6419 = vmatpush1.msra.mxu0 %v86
  %6420 = vmatprep.subr.mxu0 0.0
  %6421 = vmatpush1.msra.mxu0 %v85
  %6422 = vmatprep.subr.mxu0 0.0
  %6423 = vmatpush1.msra.mxu0 %v84
  %6424 = vmatprep.subr.mxu0 0.0
  %6425 = vmatpush1.msra.mxu0 %v83
  %6426 = vmatprep.subr.mxu0 0.0
  %6427 = vmatpush1.msra.mxu0 %v82
  %6428 = vmatprep.subr.mxu0 0.0
  %6429 = vmatpush1.msra.mxu0 %v81
  %6430 = vmatprep.subr.mxu0 0.0
  %6431 = vmatpush1.msra.mxu0 %v80
  %6432 = vmatprep.subr.mxu0 0.0
  %6433 = vmatpush1.msra.mxu0 %v79
  %6434 = vmatprep.subr.mxu0 0.0
  %6435 = vmatpush1.msra.mxu0 %v78
  %6436 = vmatprep.subr.mxu0 0.0
  %6437 = vmatpush1.msra.mxu0 %v77
  %6438 = vmatprep.subr.mxu0 0.0
  %6439 = vmatpush1.msra.mxu0 %v76
  %6440 = vmatprep.subr.mxu0 0.0
  %6441 = vmatpush1.msra.mxu0 %v75
  %6442 = vmatprep.subr.mxu0 0.0
  %6443 = vmatpush1.msra.mxu0 %v74
  %6444 = vmatprep.subr.mxu0 0.0
  %6445 = vmatpush1.msra.mxu0 %v73
  %6446 = vmatprep.subr.mxu0 0.0
  %6447 = vmatpush1.msra.mxu0 %v72
  %6448 = vmatprep.subr.mxu0 0.0
  %6449 = vmatpush1.msra.mxu0 %v71
  %6450 = vmatprep.subr.mxu0 0.0
  %6451 = vmatpush2.msra.mxu0 %v102
  %6452 = vmatprep.subr.mxu0 0.0
  %6453 = vmatpush2.msra.mxu0 %v101
  %6454 = vmatprep.subr.mxu0 0.0
  %6455 = vmatpush2.msra.mxu0 %v100
  %6456 = vmatprep.subr.mxu0 0.0
  %6457 = vmatpush2.msra.mxu0 %v99
  %6458 = vmatprep.subr.mxu0 0.0
  %6459 = vmatpush2.msra.mxu0 %v98
  %6460 = vmatprep.subr.mxu0 0.0
  %6461 = vmatpush2.msra.mxu0 %v97
  %6462 = vmatprep.subr.mxu0 0.0
  %6463 = vmatpush2.msra.mxu0 %v96
  %6464 = vmatprep.subr.mxu0 0.0
  %6465 = vmatpush2.msra.mxu0 %v95
  %6466 = vmatprep.subr.mxu0 0.0
  %6467 = vmatpush2.msra.mxu0 %v94
  %6468 = vmatprep.subr.mxu0 0.0
  %6469 = vmatpush2.msra.mxu0 %v93
  %6470 = vmatprep.subr.mxu0 0.0
  %6471 = vmatpush2.msra.mxu0 %v92
  %6472 = vmatprep.subr.mxu0 0.0
  %6473 = vmatpush2.msra.mxu0 %v91
  %6474 = vmatprep.subr.mxu0 0.0
  %6475 = vmatpush2.msra.mxu0 %v90
  %6476 = vmatprep.subr.mxu0 0.0
  %6477 = vmatpush2.msra.mxu0 %v89
  %6478 = vmatprep.subr.mxu0 0.0
  %6479 = vmatpush2.msra.mxu0 %v88
  %6480 = vmatprep.subr.mxu0 0.0
  %6481 = vmatpush2.msra.mxu0 %v87
  %6482 = vmatprep.mubr.f32.mxu0 %v6230
  %6483 = vmatmul.mubr.f32.gmra.mxu0 %v6228
  %v6484 = vpop.f32.mrf.mxu0
  %v6485 = vadd.f32 %v6415, %v6484
  %v6486 = vpop.f32.mrf.mxu0
  %6487 = vdwg.mxu0
  %6488 = vmatprep.subr.mxu0 0.0
  %6489 = vmatpush1.msra.mxu0 %v118
  %6490 = vmatprep.subr.mxu0 0.0
  %6491 = vmatpush1.msra.mxu0 %v117
  %6492 = vmatprep.subr.mxu0 0.0
  %6493 = vmatpush1.msra.mxu0 %v116
  %6494 = vmatprep.subr.mxu0 0.0
  %6495 = vmatpush1.msra.mxu0 %v115
  %6496 = vmatprep.subr.mxu0 0.0
  %6497 = vmatpush1.msra.mxu0 %v114
  %6498 = vmatprep.subr.mxu0 0.0
  %6499 = vmatpush1.msra.mxu0 %v113
  %6500 = vmatprep.subr.mxu0 0.0
  %6501 = vmatpush1.msra.mxu0 %v112
  %6502 = vmatprep.subr.mxu0 0.0
  %6503 = vmatpush1.msra.mxu0 %v111
  %6504 = vmatprep.subr.mxu0 0.0
  %6505 = vmatpush1.msra.mxu0 %v110
  %6506 = vmatprep.subr.mxu0 0.0
  %6507 = vmatpush1.msra.mxu0 %v109
  %6508 = vmatprep.subr.mxu0 0.0
  %6509 = vmatpush1.msra.mxu0 %v108
  %6510 = vmatprep.subr.mxu0 0.0
  %6511 = vmatpush1.msra.mxu0 %v107
  %6512 = vmatprep.subr.mxu0 0.0
  %6513 = vmatpush1.msra.mxu0 %v106
  %6514 = vmatprep.subr.mxu0 0.0
  %6515 = vmatpush1.msra.mxu0 %v105
  %6516 = vmatprep.subr.mxu0 0.0
  %6517 = vmatpush1.msra.mxu0 %v104
  %6518 = vmatprep.subr.mxu0 0.0
  %6519 = vmatpush1.msra.mxu0 %v103
  %6520 = vmatprep.subr.mxu0 0.0
  %6521 = vmatpush2.msra.mxu0 %v134
  %6522 = vmatprep.subr.mxu0 0.0
  %6523 = vmatpush2.msra.mxu0 %v133
  %6524 = vmatprep.subr.mxu0 0.0
  %6525 = vmatpush2.msra.mxu0 %v132
  %6526 = vmatprep.subr.mxu0 0.0
  %6527 = vmatpush2.msra.mxu0 %v131
  %6528 = vmatprep.subr.mxu0 0.0
  %6529 = vmatpush2.msra.mxu0 %v130
  %6530 = vmatprep.subr.mxu0 0.0
  %6531 = vmatpush2.msra.mxu0 %v129
  %6532 = vmatprep.subr.mxu0 0.0
  %6533 = vmatpush2.msra.mxu0 %v128
  %6534 = vmatprep.subr.mxu0 0.0
  %6535 = vmatpush2.msra.mxu0 %v127
  %6536 = vmatprep.subr.mxu0 0.0
  %6537 = vmatpush2.msra.mxu0 %v126
  %6538 = vmatprep.subr.mxu0 0.0
  %6539 = vmatpush2.msra.mxu0 %v125
  %6540 = vmatprep.subr.mxu0 0.0
  %6541 = vmatpush2.msra.mxu0 %v124
  %6542 = vmatprep.subr.mxu0 0.0
  %6543 = vmatpush2.msra.mxu0 %v123
  %6544 = vmatprep.subr.mxu0 0.0
  %6545 = vmatpush2.msra.mxu0 %v122
  %6546 = vmatprep.subr.mxu0 0.0
  %6547 = vmatpush2.msra.mxu0 %v121
  %6548 = vmatprep.subr.mxu0 0.0
  %6549 = vmatpush2.msra.mxu0 %v120
  %6550 = vmatprep.subr.mxu0 0.0
  %6551 = vmatpush2.msra.mxu0 %v119
  %6552 = vmatprep.mubr.f32.mxu0 %v6246
  %6553 = vmatmul.mubr.f32.gmra.mxu0 %v6238
  %v6554 = vpop.f32.mrf.mxu0
  %v6555 = vadd.f32 %v6485, %v6554
  %v6556 = vpop.f32.mrf.mxu0
  %6557 = vdwg.mxu0
  %6558 = vmatprep.subr.mxu0 0.0
  %6559 = vmatpush1.msra.mxu0 %v150
  %6560 = vmatprep.subr.mxu0 0.0
  %6561 = vmatpush1.msra.mxu0 %v149
  %6562 = vmatprep.subr.mxu0 0.0
  %6563 = vmatpush1.msra.mxu0 %v148
  %6564 = vmatprep.subr.mxu0 0.0
  %6565 = vmatpush1.msra.mxu0 %v147
  %6566 = vmatprep.subr.mxu0 0.0
  %6567 = vmatpush1.msra.mxu0 %v146
  %6568 = vmatprep.subr.mxu0 0.0
  %6569 = vmatpush1.msra.mxu0 %v145
  %6570 = vmatprep.subr.mxu0 0.0
  %6571 = vmatpush1.msra.mxu0 %v144
  %6572 = vmatprep.subr.mxu0 0.0
  %6573 = vmatpush1.msra.mxu0 %v143
  %6574 = vmatprep.subr.mxu0 0.0
  %6575 = vmatpush1.msra.mxu0 %v142
  %6576 = vmatprep.subr.mxu0 0.0
  %6577 = vmatpush1.msra.mxu0 %v141
  %6578 = vmatprep.subr.mxu0 0.0
  %6579 = vmatpush1.msra.mxu0 %v140
  %6580 = vmatprep.subr.mxu0 0.0
  %6581 = vmatpush1.msra.mxu0 %v139
  %6582 = vmatprep.subr.mxu0 0.0
  %6583 = vmatpush1.msra.mxu0 %v138
  %6584 = vmatprep.subr.mxu0 0.0
  %6585 = vmatpush1.msra.mxu0 %v137
  %6586 = vmatprep.subr.mxu0 0.0
  %6587 = vmatpush1.msra.mxu0 %v136
  %6588 = vmatprep.subr.mxu0 0.0
  %6589 = vmatpush1.msra.mxu0 %v135
  %6590 = vmatprep.subr.mxu0 0.0
  %6591 = vmatpush2.msra.mxu0 %v166
  %6592 = vmatprep.subr.mxu0 0.0
  %6593 = vmatpush2.msra.mxu0 %v165
  %6594 = vmatprep.subr.mxu0 0.0
  %6595 = vmatpush2.msra.mxu0 %v164
  %6596 = vmatprep.subr.mxu0 0.0
  %6597 = vmatpush2.msra.mxu0 %v163
  %6598 = vmatprep.subr.mxu0 0.0
  %6599 = vmatpush2.msra.mxu0 %v162
  %6600 = vmatprep.subr.mxu0 0.0
  %6601 = vmatpush2.msra.mxu0 %v161
  %6602 = vmatprep.subr.mxu0 0.0
  %6603 = vmatpush2.msra.mxu0 %v160
  %6604 = vmatprep.subr.mxu0 0.0
  %6605 = vmatpush2.msra.mxu0 %v159
  %6606 = vmatprep.subr.mxu0 0.0
  %6607 = vmatpush2.msra.mxu0 %v158
  %6608 = vmatprep.subr.mxu0 0.0
  %6609 = vmatpush2.msra.mxu0 %v157
  %6610 = vmatprep.subr.mxu0 0.0
  %6611 = vmatpush2.msra.mxu0 %v156
  %6612 = vmatprep.subr.mxu0 0.0
  %6613 = vmatpush2.msra.mxu0 %v155
  %6614 = vmatprep.subr.mxu0 0.0
  %6615 = vmatpush2.msra.mxu0 %v154
  %6616 = vmatprep.subr.mxu0 0.0
  %6617 = vmatpush2.msra.mxu0 %v153
  %6618 = vmatprep.subr.mxu0 0.0
  %6619 = vmatpush2.msra.mxu0 %v152
  %6620 = vmatprep.subr.mxu0 0.0
  %6621 = vmatpush2.msra.mxu0 %v151
  %6622 = vmatprep.mubr.f32.mxu0 %v6247
  %6623 = vmatmul.mubr.f32.gmra.mxu0 %v6245
  %v6624 = vpop.f32.mrf.mxu0
  %v6625 = vadd.f32 %v6555, %v6624
  %v6626 = vpop.f32.mrf.mxu0
  %6627 = vdwg.mxu0
  %6628 = vmatprep.subr.mxu0 0.0
  %6629 = vmatpush1.msra.mxu0 %v182
  %6630 = vmatprep.subr.mxu0 0.0
  %6631 = vmatpush1.msra.mxu0 %v181
  %6632 = vmatprep.subr.mxu0 0.0
  %6633 = vmatpush1.msra.mxu0 %v180
  %6634 = vmatprep.subr.mxu0 0.0
  %6635 = vmatpush1.msra.mxu0 %v179
  %6636 = vmatprep.subr.mxu0 0.0
  %6637 = vmatpush1.msra.mxu0 %v178
  %6638 = vmatprep.subr.mxu0 0.0
  %6639 = vmatpush1.msra.mxu0 %v177
  %6640 = vmatprep.subr.mxu0 0.0
  %6641 = vmatpush1.msra.mxu0 %v176
  %6642 = vmatprep.subr.mxu0 0.0
  %6643 = vmatpush1.msra.mxu0 %v175
  %6644 = vmatprep.subr.mxu0 0.0
  %6645 = vmatpush1.msra.mxu0 %v174
  %6646 = vmatprep.subr.mxu0 0.0
  %6647 = vmatpush1.msra.mxu0 %v173
  %6648 = vmatprep.subr.mxu0 0.0
  %6649 = vmatpush1.msra.mxu0 %v172
  %6650 = vmatprep.subr.mxu0 0.0
  %6651 = vmatpush1.msra.mxu0 %v171
  %6652 = vmatprep.subr.mxu0 0.0
  %6653 = vmatpush1.msra.mxu0 %v170
  %6654 = vmatprep.subr.mxu0 0.0
  %6655 = vmatpush1.msra.mxu0 %v169
  %6656 = vmatprep.subr.mxu0 0.0
  %6657 = vmatpush1.msra.mxu0 %v168
  %6658 = vmatprep.subr.mxu0 0.0
  %6659 = vmatpush1.msra.mxu0 %v167
  %6660 = vmatprep.subr.mxu0 0.0
  %6661 = vmatpush2.msra.mxu0 %v198
  %6662 = vmatprep.subr.mxu0 0.0
  %6663 = vmatpush2.msra.mxu0 %v197
  %6664 = vmatprep.subr.mxu0 0.0
  %6665 = vmatpush2.msra.mxu0 %v196
  %6666 = vmatprep.subr.mxu0 0.0
  %6667 = vmatpush2.msra.mxu0 %v195
  %6668 = vmatprep.subr.mxu0 0.0
  %6669 = vmatpush2.msra.mxu0 %v194
  %6670 = vmatprep.subr.mxu0 0.0
  %6671 = vmatpush2.msra.mxu0 %v193
  %6672 = vmatprep.subr.mxu0 0.0
  %6673 = vmatpush2.msra.mxu0 %v192
  %6674 = vmatprep.subr.mxu0 0.0
  %6675 = vmatpush2.msra.mxu0 %v191
  %6676 = vmatprep.subr.mxu0 0.0
  %6677 = vmatpush2.msra.mxu0 %v190
  %6678 = vmatprep.subr.mxu0 0.0
  %6679 = vmatpush2.msra.mxu0 %v189
  %6680 = vmatprep.subr.mxu0 0.0
  %6681 = vmatpush2.msra.mxu0 %v188
  %6682 = vmatprep.subr.mxu0 0.0
  %6683 = vmatpush2.msra.mxu0 %v187
  %6684 = vmatprep.subr.mxu0 0.0
  %6685 = vmatpush2.msra.mxu0 %v186
  %6686 = vmatprep.subr.mxu0 0.0
  %6687 = vmatpush2.msra.mxu0 %v185
  %6688 = vmatprep.subr.mxu0 0.0
  %6689 = vmatpush2.msra.mxu0 %v184
  %6690 = vmatprep.subr.mxu0 0.0
  %6691 = vmatpush2.msra.mxu0 %v183
  %6692 = vmatprep.mubr.f32.mxu0 %v6263
  %6693 = vmatmul.mubr.f32.gmra.mxu0 %v6255
  %v6694 = vpop.f32.mrf.mxu0
  %v6695 = vadd.f32 %v6625, %v6694
  %v6696 = vpop.f32.mrf.mxu0
  %6697 = vdwg.mxu0
  %6698 = vmatprep.subr.mxu0 0.0
  %6699 = vmatpush1.msra.mxu0 %v214
  %6700 = vmatprep.subr.mxu0 0.0
  %6701 = vmatpush1.msra.mxu0 %v213
  %6702 = vmatprep.subr.mxu0 0.0
  %6703 = vmatpush1.msra.mxu0 %v212
  %6704 = vmatprep.subr.mxu0 0.0
  %6705 = vmatpush1.msra.mxu0 %v211
  %6706 = vmatprep.subr.mxu0 0.0
  %6707 = vmatpush1.msra.mxu0 %v210
  %6708 = vmatprep.subr.mxu0 0.0
  %6709 = vmatpush1.msra.mxu0 %v209
  %6710 = vmatprep.subr.mxu0 0.0
  %6711 = vmatpush1.msra.mxu0 %v208
  %6712 = vmatprep.subr.mxu0 0.0
  %6713 = vmatpush1.msra.mxu0 %v207
  %6714 = vmatprep.subr.mxu0 0.0
  %6715 = vmatpush1.msra.mxu0 %v206
  %6716 = vmatprep.subr.mxu0 0.0
  %6717 = vmatpush1.msra.mxu0 %v205
  %6718 = vmatprep.subr.mxu0 0.0
  %6719 = vmatpush1.msra.mxu0 %v204
  %6720 = vmatprep.subr.mxu0 0.0
  %6721 = vmatpush1.msra.mxu0 %v203
  %6722 = vmatprep.subr.mxu0 0.0
  %6723 = vmatpush1.msra.mxu0 %v202
  %6724 = vmatprep.subr.mxu0 0.0
  %6725 = vmatpush1.msra.mxu0 %v201
  %6726 = vmatprep.subr.mxu0 0.0
  %6727 = vmatpush1.msra.mxu0 %v200
  %6728 = vmatprep.subr.mxu0 0.0
  %6729 = vmatpush1.msra.mxu0 %v199
  %6730 = vmatprep.subr.mxu0 0.0
  %6731 = vmatpush2.msra.mxu0 %v230
  %6732 = vmatprep.subr.mxu0 0.0
  %6733 = vmatpush2.msra.mxu0 %v229
  %6734 = vmatprep.subr.mxu0 0.0
  %6735 = vmatpush2.msra.mxu0 %v228
  %6736 = vmatprep.subr.mxu0 0.0
  %6737 = vmatpush2.msra.mxu0 %v227
  %6738 = vmatprep.subr.mxu0 0.0
  %6739 = vmatpush2.msra.mxu0 %v226
  %6740 = vmatprep.subr.mxu0 0.0
  %6741 = vmatpush2.msra.mxu0 %v225
  %6742 = vmatprep.subr.mxu0 0.0
  %6743 = vmatpush2.msra.mxu0 %v224
  %6744 = vmatprep.subr.mxu0 0.0
  %6745 = vmatpush2.msra.mxu0 %v223
  %6746 = vmatprep.subr.mxu0 0.0
  %6747 = vmatpush2.msra.mxu0 %v222
  %6748 = vmatprep.subr.mxu0 0.0
  %6749 = vmatpush2.msra.mxu0 %v221
  %6750 = vmatprep.subr.mxu0 0.0
  %6751 = vmatpush2.msra.mxu0 %v220
  %6752 = vmatprep.subr.mxu0 0.0
  %6753 = vmatpush2.msra.mxu0 %v219
  %6754 = vmatprep.subr.mxu0 0.0
  %6755 = vmatpush2.msra.mxu0 %v218
  %6756 = vmatprep.subr.mxu0 0.0
  %6757 = vmatpush2.msra.mxu0 %v217
  %6758 = vmatprep.subr.mxu0 0.0
  %6759 = vmatpush2.msra.mxu0 %v216
  %6760 = vmatprep.subr.mxu0 0.0
  %6761 = vmatpush2.msra.mxu0 %v215
  %6762 = vmatprep.mubr.f32.mxu0 %v6264
  %6763 = vmatmul.mubr.f32.gmra.mxu0 %v6262
  %v6764 = vpop.f32.mrf.mxu0
  %v6765 = vadd.f32 %v6695, %v6764
  %v6766 = vpop.f32.mrf.mxu0
  %6767 = vdwg.mxu0
  %6768 = vmatprep.subr.mxu0 0.0
  %6769 = vmatpush1.msra.mxu0 %v246
  %6770 = vmatprep.subr.mxu0 0.0
  %6771 = vmatpush1.msra.mxu0 %v245
  %6772 = vmatprep.subr.mxu0 0.0
  %6773 = vmatpush1.msra.mxu0 %v244
  %6774 = vmatprep.subr.mxu0 0.0
  %6775 = vmatpush1.msra.mxu0 %v243
  %6776 = vmatprep.subr.mxu0 0.0
  %6777 = vmatpush1.msra.mxu0 %v242
  %6778 = vmatprep.subr.mxu0 0.0
  %6779 = vmatpush1.msra.mxu0 %v241
  %6780 = vmatprep.subr.mxu0 0.0
  %6781 = vmatpush1.msra.mxu0 %v240
  %6782 = vmatprep.subr.mxu0 0.0
  %6783 = vmatpush1.msra.mxu0 %v239
  %6784 = vmatprep.subr.mxu0 0.0
  %6785 = vmatpush1.msra.mxu0 %v238
  %6786 = vmatprep.subr.mxu0 0.0
  %6787 = vmatpush1.msra.mxu0 %v237
  %6788 = vmatprep.subr.mxu0 0.0
  %6789 = vmatpush1.msra.mxu0 %v236
  %6790 = vmatprep.subr.mxu0 0.0
  %6791 = vmatpush1.msra.mxu0 %v235
  %6792 = vmatprep.subr.mxu0 0.0
  %6793 = vmatpush1.msra.mxu0 %v234
  %6794 = vmatprep.subr.mxu0 0.0
  %6795 = vmatpush1.msra.mxu0 %v233
  %6796 = vmatprep.subr.mxu0 0.0
  %6797 = vmatpush1.msra.mxu0 %v232
  %6798 = vmatprep.subr.mxu0 0.0
  %6799 = vmatpush1.msra.mxu0 %v231
  %6800 = vmatprep.subr.mxu0 0.0
  %6801 = vmatpush2.msra.mxu0 %v262
  %6802 = vmatprep.subr.mxu0 0.0
  %6803 = vmatpush2.msra.mxu0 %v261
  %6804 = vmatprep.subr.mxu0 0.0
  %6805 = vmatpush2.msra.mxu0 %v260
  %6806 = vmatprep.subr.mxu0 0.0
  %6807 = vmatpush2.msra.mxu0 %v259
  %6808 = vmatprep.subr.mxu0 0.0
  %6809 = vmatpush2.msra.mxu0 %v258
  %6810 = vmatprep.subr.mxu0 0.0
  %6811 = vmatpush2.msra.mxu0 %v257
  %6812 = vmatprep.subr.mxu0 0.0
  %6813 = vmatpush2.msra.mxu0 %v256
  %6814 = vmatprep.subr.mxu0 0.0
  %6815 = vmatpush2.msra.mxu0 %v255
  %6816 = vmatprep.subr.mxu0 0.0
  %6817 = vmatpush2.msra.mxu0 %v254
  %6818 = vmatprep.subr.mxu0 0.0
  %6819 = vmatpush2.msra.mxu0 %v253
  %6820 = vmatprep.subr.mxu0 0.0
  %6821 = vmatpush2.msra.mxu0 %v252
  %6822 = vmatprep.subr.mxu0 0.0
  %6823 = vmatpush2.msra.mxu0 %v251
  %6824 = vmatprep.subr.mxu0 0.0
  %6825 = vmatpush2.msra.mxu0 %v250
  %6826 = vmatprep.subr.mxu0 0.0
  %6827 = vmatpush2.msra.mxu0 %v249
  %6828 = vmatprep.subr.mxu0 0.0
  %6829 = vmatpush2.msra.mxu0 %v248
  %6830 = vmatprep.subr.mxu0 0.0
  %6831 = vmatpush2.msra.mxu0 %v247
  %6832 = vmatprep.mubr.f32.mxu0 %v6280
  %6833 = vmatmul.mubr.f32.gmra.mxu0 %v6272
  %v6834 = vpop.f32.mrf.mxu0
  %v6835 = vadd.f32 %v6765, %v6834
  %v6836 = vpop.f32.mrf.mxu0
  %6837 = vdwg.mxu0
  %6838 = vmatprep.subr.mxu0 0.0
  %6839 = vmatpush1.msra.mxu0 %v278
  %6840 = vmatprep.subr.mxu0 0.0
  %6841 = vmatpush1.msra.mxu0 %v277
  %6842 = vmatprep.subr.mxu0 0.0
  %6843 = vmatpush1.msra.mxu0 %v276
  %6844 = vmatprep.subr.mxu0 0.0
  %6845 = vmatpush1.msra.mxu0 %v275
  %6846 = vmatprep.subr.mxu0 0.0
  %6847 = vmatpush1.msra.mxu0 %v274
  %6848 = vmatprep.subr.mxu0 0.0
  %6849 = vmatpush1.msra.mxu0 %v273
  %6850 = vmatprep.subr.mxu0 0.0
  %6851 = vmatpush1.msra.mxu0 %v272
  %6852 = vmatprep.subr.mxu0 0.0
  %6853 = vmatpush1.msra.mxu0 %v271
  %6854 = vmatprep.subr.mxu0 0.0
  %6855 = vmatpush1.msra.mxu0 %v270
  %6856 = vmatprep.subr.mxu0 0.0
  %6857 = vmatpush1.msra.mxu0 %v269
  %6858 = vmatprep.subr.mxu0 0.0
  %6859 = vmatpush1.msra.mxu0 %v268
  %6860 = vmatprep.subr.mxu0 0.0
  %6861 = vmatpush1.msra.mxu0 %v267
  %6862 = vmatprep.subr.mxu0 0.0
  %6863 = vmatpush1.msra.mxu0 %v266
  %6864 = vmatprep.subr.mxu0 0.0
  %6865 = vmatpush1.msra.mxu0 %v265
  %6866 = vmatprep.subr.mxu0 0.0
  %6867 = vmatpush1.msra.mxu0 %v264
  %6868 = vmatprep.subr.mxu0 0.0
  %6869 = vmatpush1.msra.mxu0 %v263
  %6870 = vmatprep.subr.mxu0 0.0
  %6871 = vmatpush2.msra.mxu0 %v294
  %6872 = vmatprep.subr.mxu0 0.0
  %6873 = vmatpush2.msra.mxu0 %v293
  %6874 = vmatprep.subr.mxu0 0.0
  %6875 = vmatpush2.msra.mxu0 %v292
  %6876 = vmatprep.subr.mxu0 0.0
  %6877 = vmatpush2.msra.mxu0 %v291
  %6878 = vmatprep.subr.mxu0 0.0
  %6879 = vmatpush2.msra.mxu0 %v290
  %6880 = vmatprep.subr.mxu0 0.0
  %6881 = vmatpush2.msra.mxu0 %v289
  %6882 = vmatprep.subr.mxu0 0.0
  %6883 = vmatpush2.msra.mxu0 %v288
  %6884 = vmatprep.subr.mxu0 0.0
  %6885 = vmatpush2.msra.mxu0 %v287
  %6886 = vmatprep.subr.mxu0 0.0
  %6887 = vmatpush2.msra.mxu0 %v286
  %6888 = vmatprep.subr.mxu0 0.0
  %6889 = vmatpush2.msra.mxu0 %v285
  %6890 = vmatprep.subr.mxu0 0.0
  %6891 = vmatpush2.msra.mxu0 %v284
  %6892 = vmatprep.subr.mxu0 0.0
  %6893 = vmatpush2.msra.mxu0 %v283
  %6894 = vmatprep.subr.mxu0 0.0
  %6895 = vmatpush2.msra.mxu0 %v282
  %6896 = vmatprep.subr.mxu0 0.0
  %6897 = vmatpush2.msra.mxu0 %v281
  %6898 = vmatprep.subr.mxu0 0.0
  %6899 = vmatpush2.msra.mxu0 %v280
  %6900 = vmatprep.subr.mxu0 0.0
  %6901 = vmatpush2.msra.mxu0 %v279
  %6902 = vmatprep.mubr.f32.mxu0 %v6281
  %6903 = vmatmul.mubr.f32.gmra.mxu0 %v6279
  %v6904 = vpop.f32.mrf.mxu0
  %v6905 = vadd.f32 %v6835, %v6904
  %v6906 = vpop.f32.mrf.mxu0
  %6907 = vdwg.mxu0
  %6908 = vmatprep.subr.mxu0 0.0
  %6909 = vmatpush1.msra.mxu0 %v310
  %6910 = vmatprep.subr.mxu0 0.0
  %6911 = vmatpush1.msra.mxu0 %v309
  %6912 = vmatprep.subr.mxu0 0.0
  %6913 = vmatpush1.msra.mxu0 %v308
  %6914 = vmatprep.subr.mxu0 0.0
  %6915 = vmatpush1.msra.mxu0 %v307
  %6916 = vmatprep.subr.mxu0 0.0
  %6917 = vmatpush1.msra.mxu0 %v306
  %6918 = vmatprep.subr.mxu0 0.0
  %6919 = vmatpush1.msra.mxu0 %v305
  %6920 = vmatprep.subr.mxu0 0.0
  %6921 = vmatpush1.msra.mxu0 %v304
  %6922 = vmatprep.subr.mxu0 0.0
  %6923 = vmatpush1.msra.mxu0 %v303
  %6924 = vmatprep.subr.mxu0 0.0
  %6925 = vmatpush1.msra.mxu0 %v302
  %6926 = vmatprep.subr.mxu0 0.0
  %6927 = vmatpush1.msra.mxu0 %v301
  %6928 = vmatprep.subr.mxu0 0.0
  %6929 = vmatpush1.msra.mxu0 %v300
  %6930 = vmatprep.subr.mxu0 0.0
  %6931 = vmatpush1.msra.mxu0 %v299
  %6932 = vmatprep.subr.mxu0 0.0
  %6933 = vmatpush1.msra.mxu0 %v298
  %6934 = vmatprep.subr.mxu0 0.0
  %6935 = vmatpush1.msra.mxu0 %v297
  %6936 = vmatprep.subr.mxu0 0.0
  %6937 = vmatpush1.msra.mxu0 %v296
  %6938 = vmatprep.subr.mxu0 0.0
  %6939 = vmatpush1.msra.mxu0 %v295
  %6940 = vmatprep.subr.mxu0 0.0
  %6941 = vmatpush2.msra.mxu0 %v326
  %6942 = vmatprep.subr.mxu0 0.0
  %6943 = vmatpush2.msra.mxu0 %v325
  %6944 = vmatprep.subr.mxu0 0.0
  %6945 = vmatpush2.msra.mxu0 %v324
  %6946 = vmatprep.subr.mxu0 0.0
  %6947 = vmatpush2.msra.mxu0 %v323
  %6948 = vmatprep.subr.mxu0 0.0
  %6949 = vmatpush2.msra.mxu0 %v322
  %6950 = vmatprep.subr.mxu0 0.0
  %6951 = vmatpush2.msra.mxu0 %v321
  %6952 = vmatprep.subr.mxu0 0.0
  %6953 = vmatpush2.msra.mxu0 %v320
  %6954 = vmatprep.subr.mxu0 0.0
  %6955 = vmatpush2.msra.mxu0 %v319
  %6956 = vmatprep.subr.mxu0 0.0
  %6957 = vmatpush2.msra.mxu0 %v318
  %6958 = vmatprep.subr.mxu0 0.0
  %6959 = vmatpush2.msra.mxu0 %v317
  %6960 = vmatprep.subr.mxu0 0.0
  %6961 = vmatpush2.msra.mxu0 %v316
  %6962 = vmatprep.subr.mxu0 0.0
  %6963 = vmatpush2.msra.mxu0 %v315
  %6964 = vmatprep.subr.mxu0 0.0
  %6965 = vmatpush2.msra.mxu0 %v314
  %6966 = vmatprep.subr.mxu0 0.0
  %6967 = vmatpush2.msra.mxu0 %v313
  %6968 = vmatprep.subr.mxu0 0.0
  %6969 = vmatpush2.msra.mxu0 %v312
  %6970 = vmatprep.subr.mxu0 0.0
  %6971 = vmatpush2.msra.mxu0 %v311
  %6972 = vmatprep.mubr.f32.mxu0 %v6297
  %6973 = vmatmul.mubr.f32.gmra.mxu0 %v6289
  %v6974 = vpop.f32.mrf.mxu0
  %v6975 = vadd.f32 %v6905, %v6974
  %v6976 = vpop.f32.mrf.mxu0
  %6977 = vdwg.mxu0
  %6978 = vmatprep.subr.mxu0 0.0
  %6979 = vmatpush1.msra.mxu0 %v342
  %6980 = vmatprep.subr.mxu0 0.0
  %6981 = vmatpush1.msra.mxu0 %v341
  %6982 = vmatprep.subr.mxu0 0.0
  %6983 = vmatpush1.msra.mxu0 %v340
  %6984 = vmatprep.subr.mxu0 0.0
  %6985 = vmatpush1.msra.mxu0 %v339
  %6986 = vmatprep.subr.mxu0 0.0
  %6987 = vmatpush1.msra.mxu0 %v338
  %6988 = vmatprep.subr.mxu0 0.0
  %6989 = vmatpush1.msra.mxu0 %v337
  %6990 = vmatprep.subr.mxu0 0.0
  %6991 = vmatpush1.msra.mxu0 %v336
  %6992 = vmatprep.subr.mxu0 0.0
  %6993 = vmatpush1.msra.mxu0 %v335
  %6994 = vmatprep.subr.mxu0 0.0
  %6995 = vmatpush1.msra.mxu0 %v334
  %6996 = vmatprep.subr.mxu0 0.0
  %6997 = vmatpush1.msra.mxu0 %v333
  %6998 = vmatprep.subr.mxu0 0.0
  %6999 = vmatpush1.msra.mxu0 %v332
  %7000 = vmatprep.subr.mxu0 0.0
  %7001 = vmatpush1.msra.mxu0 %v331
  %7002 = vmatprep.subr.mxu0 0.0
  %7003 = vmatpush1.msra.mxu0 %v330
  %7004 = vmatprep.subr.mxu0 0.0
  %7005 = vmatpush1.msra.mxu0 %v329
  %7006 = vmatprep.subr.mxu0 0.0
  %7007 = vmatpush1.msra.mxu0 %v328
  %7008 = vmatprep.subr.mxu0 0.0
  %7009 = vmatpush1.msra.mxu0 %v327
  %7010 = vmatprep.subr.mxu0 0.0
  %7011 = vmatpush2.msra.mxu0 %v358
  %7012 = vmatprep.subr.mxu0 0.0
  %7013 = vmatpush2.msra.mxu0 %v357
  %7014 = vmatprep.subr.mxu0 0.0
  %7015 = vmatpush2.msra.mxu0 %v356
  %7016 = vmatprep.subr.mxu0 0.0
  %7017 = vmatpush2.msra.mxu0 %v355
  %7018 = vmatprep.subr.mxu0 0.0
  %7019 = vmatpush2.msra.mxu0 %v354
  %7020 = vmatprep.subr.mxu0 0.0
  %7021 = vmatpush2.msra.mxu0 %v353
  %7022 = vmatprep.subr.mxu0 0.0
  %7023 = vmatpush2.msra.mxu0 %v352
  %7024 = vmatprep.subr.mxu0 0.0
  %7025 = vmatpush2.msra.mxu0 %v351
  %7026 = vmatprep.subr.mxu0 0.0
  %7027 = vmatpush2.msra.mxu0 %v350
  %7028 = vmatprep.subr.mxu0 0.0
  %7029 = vmatpush2.msra.mxu0 %v349
  %7030 = vmatprep.subr.mxu0 0.0
  %7031 = vmatpush2.msra.mxu0 %v348
  %7032 = vmatprep.subr.mxu0 0.0
  %7033 = vmatpush2.msra.mxu0 %v347
  %7034 = vmatprep.subr.mxu0 0.0
  %7035 = vmatpush2.msra.mxu0 %v346
  %7036 = vmatprep.subr.mxu0 0.0
  %7037 = vmatpush2.msra.mxu0 %v345
  %7038 = vmatprep.subr.mxu0 0.0
  %7039 = vmatpush2.msra.mxu0 %v344
  %7040 = vmatprep.subr.mxu0 0.0
  %7041 = vmatpush2.msra.mxu0 %v343
  %7042 = vmatprep.mubr.f32.mxu0 %v6298
  %7043 = vmatmul.mubr.f32.gmra.mxu0 %v6296
  %v7044 = vpop.f32.mrf.mxu0
  %v7045 = vadd.f32 %v6975, %v7044
  %v7046 = vpop.f32.mrf.mxu0
  %7047 = vdwg.mxu0
  %7048 = vmatprep.subr.mxu0 0.0
  %7049 = vmatpush1.msra.mxu0 %v374
  %7050 = vmatprep.subr.mxu0 0.0
  %7051 = vmatpush1.msra.mxu0 %v373
  %7052 = vmatprep.subr.mxu0 0.0
  %7053 = vmatpush1.msra.mxu0 %v372
  %7054 = vmatprep.subr.mxu0 0.0
  %7055 = vmatpush1.msra.mxu0 %v371
  %7056 = vmatprep.subr.mxu0 0.0
  %7057 = vmatpush1.msra.mxu0 %v370
  %7058 = vmatprep.subr.mxu0 0.0
  %7059 = vmatpush1.msra.mxu0 %v369
  %7060 = vmatprep.subr.mxu0 0.0
  %7061 = vmatpush1.msra.mxu0 %v368
  %7062 = vmatprep.subr.mxu0 0.0
  %7063 = vmatpush1.msra.mxu0 %v367
  %7064 = vmatprep.subr.mxu0 0.0
  %7065 = vmatpush1.msra.mxu0 %v366
  %7066 = vmatprep.subr.mxu0 0.0
  %7067 = vmatpush1.msra.mxu0 %v365
  %7068 = vmatprep.subr.mxu0 0.0
  %7069 = vmatpush1.msra.mxu0 %v364
  %7070 = vmatprep.subr.mxu0 0.0
  %7071 = vmatpush1.msra.mxu0 %v363
  %7072 = vmatprep.subr.mxu0 0.0
  %7073 = vmatpush1.msra.mxu0 %v362
  %7074 = vmatprep.subr.mxu0 0.0
  %7075 = vmatpush1.msra.mxu0 %v361
  %7076 = vmatprep.subr.mxu0 0.0
  %7077 = vmatpush1.msra.mxu0 %v360
  %7078 = vmatprep.subr.mxu0 0.0
  %7079 = vmatpush1.msra.mxu0 %v359
  %7080 = vmatprep.subr.mxu0 0.0
  %7081 = vmatpush2.msra.mxu0 %v390
  %7082 = vmatprep.subr.mxu0 0.0
  %7083 = vmatpush2.msra.mxu0 %v389
  %7084 = vmatprep.subr.mxu0 0.0
  %7085 = vmatpush2.msra.mxu0 %v388
  %7086 = vmatprep.subr.mxu0 0.0
  %7087 = vmatpush2.msra.mxu0 %v387
  %7088 = vmatprep.subr.mxu0 0.0
  %7089 = vmatpush2.msra.mxu0 %v386
  %7090 = vmatprep.subr.mxu0 0.0
  %7091 = vmatpush2.msra.mxu0 %v385
  %7092 = vmatprep.subr.mxu0 0.0
  %7093 = vmatpush2.msra.mxu0 %v384
  %7094 = vmatprep.subr.mxu0 0.0
  %7095 = vmatpush2.msra.mxu0 %v383
  %7096 = vmatprep.subr.mxu0 0.0
  %7097 = vmatpush2.msra.mxu0 %v382
  %7098 = vmatprep.subr.mxu0 0.0
  %7099 = vmatpush2.msra.mxu0 %v381
  %7100 = vmatprep.subr.mxu0 0.0
  %7101 = vmatpush2.msra.mxu0 %v380
  %7102 = vmatprep.subr.mxu0 0.0
  %7103 = vmatpush2.msra.mxu0 %v379
  %7104 = vmatprep.subr.mxu0 0.0
  %7105 = vmatpush2.msra.mxu0 %v378
  %7106 = vmatprep.subr.mxu0 0.0
  %7107 = vmatpush2.msra.mxu0 %v377
  %7108 = vmatprep.subr.mxu0 0.0
  %7109 = vmatpush2.msra.mxu0 %v376
  %7110 = vmatprep.subr.mxu0 0.0
  %7111 = vmatpush2.msra.mxu0 %v375
  %7112 = vmatprep.mubr.f32.mxu0 %v6314
  %7113 = vmatmul.mubr.f32.gmra.mxu0 %v6306
  %v7114 = vpop.f32.mrf.mxu0
  %v7115 = vadd.f32 %v7045, %v7114
  %v7116 = vpop.f32.mrf.mxu0
  %7117 = vdwg.mxu0
  %7118 = vmatprep.subr.mxu0 0.0
  %7119 = vmatpush1.msra.mxu0 %v406
  %7120 = vmatprep.subr.mxu0 0.0
  %7121 = vmatpush1.msra.mxu0 %v405
  %7122 = vmatprep.subr.mxu0 0.0
  %7123 = vmatpush1.msra.mxu0 %v404
  %7124 = vmatprep.subr.mxu0 0.0
  %7125 = vmatpush1.msra.mxu0 %v403
  %7126 = vmatprep.subr.mxu0 0.0
  %7127 = vmatpush1.msra.mxu0 %v402
  %7128 = vmatprep.subr.mxu0 0.0
  %7129 = vmatpush1.msra.mxu0 %v401
  %7130 = vmatprep.subr.mxu0 0.0
  %7131 = vmatpush1.msra.mxu0 %v400
  %7132 = vmatprep.subr.mxu0 0.0
  %7133 = vmatpush1.msra.mxu0 %v399
  %7134 = vmatprep.subr.mxu0 0.0
  %7135 = vmatpush1.msra.mxu0 %v398
  %7136 = vmatprep.subr.mxu0 0.0
  %7137 = vmatpush1.msra.mxu0 %v397
  %7138 = vmatprep.subr.mxu0 0.0
  %7139 = vmatpush1.msra.mxu0 %v396
  %7140 = vmatprep.subr.mxu0 0.0
  %7141 = vmatpush1.msra.mxu0 %v395
  %7142 = vmatprep.subr.mxu0 0.0
  %7143 = vmatpush1.msra.mxu0 %v394
  %7144 = vmatprep.subr.mxu0 0.0
  %7145 = vmatpush1.msra.mxu0 %v393
  %7146 = vmatprep.subr.mxu0 0.0
  %7147 = vmatpush1.msra.mxu0 %v392
  %7148 = vmatprep.subr.mxu0 0.0
  %7149 = vmatpush1.msra.mxu0 %v391
  %7150 = vmatprep.subr.mxu0 0.0
  %7151 = vmatpush2.msra.mxu0 %v422
  %7152 = vmatprep.subr.mxu0 0.0
  %7153 = vmatpush2.msra.mxu0 %v421
  %7154 = vmatprep.subr.mxu0 0.0
  %7155 = vmatpush2.msra.mxu0 %v420
  %7156 = vmatprep.subr.mxu0 0.0
  %7157 = vmatpush2.msra.mxu0 %v419
  %7158 = vmatprep.subr.mxu0 0.0
  %7159 = vmatpush2.msra.mxu0 %v418
  %7160 = vmatprep.subr.mxu0 0.0
  %7161 = vmatpush2.msra.mxu0 %v417
  %7162 = vmatprep.subr.mxu0 0.0
  %7163 = vmatpush2.msra.mxu0 %v416
  %7164 = vmatprep.subr.mxu0 0.0
  %7165 = vmatpush2.msra.mxu0 %v415
  %7166 = vmatprep.subr.mxu0 0.0
  %7167 = vmatpush2.msra.mxu0 %v414
  %7168 = vmatprep.subr.mxu0 0.0
  %7169 = vmatpush2.msra.mxu0 %v413
  %7170 = vmatprep.subr.mxu0 0.0
  %7171 = vmatpush2.msra.mxu0 %v412
  %7172 = vmatprep.subr.mxu0 0.0
  %7173 = vmatpush2.msra.mxu0 %v411
  %7174 = vmatprep.subr.mxu0 0.0
  %7175 = vmatpush2.msra.mxu0 %v410
  %7176 = vmatprep.subr.mxu0 0.0
  %7177 = vmatpush2.msra.mxu0 %v409
  %7178 = vmatprep.subr.mxu0 0.0
  %7179 = vmatpush2.msra.mxu0 %v408
  %7180 = vmatprep.subr.mxu0 0.0
  %7181 = vmatpush2.msra.mxu0 %v407
  %7182 = vmatprep.mubr.f32.mxu0 %v6315
  %7183 = vmatmul.mubr.f32.gmra.mxu0 %v6313
  %v7184 = vpop.f32.mrf.mxu0
  %v7185 = vadd.f32 %v7115, %v7184
  %v7186 = vpop.f32.mrf.mxu0
  %7187 = vdwg.mxu0
  %7188 = vmatprep.subr.mxu0 0.0
  %7189 = vmatpush1.msra.mxu0 %v438
  %7190 = vmatprep.subr.mxu0 0.0
  %7191 = vmatpush1.msra.mxu0 %v437
  %7192 = vmatprep.subr.mxu0 0.0
  %7193 = vmatpush1.msra.mxu0 %v436
  %7194 = vmatprep.subr.mxu0 0.0
  %7195 = vmatpush1.msra.mxu0 %v435
  %7196 = vmatprep.subr.mxu0 0.0
  %7197 = vmatpush1.msra.mxu0 %v434
  %7198 = vmatprep.subr.mxu0 0.0
  %7199 = vmatpush1.msra.mxu0 %v433
  %7200 = vmatprep.subr.mxu0 0.0
  %7201 = vmatpush1.msra.mxu0 %v432
  %7202 = vmatprep.subr.mxu0 0.0
  %7203 = vmatpush1.msra.mxu0 %v431
  %7204 = vmatprep.subr.mxu0 0.0
  %7205 = vmatpush1.msra.mxu0 %v430
  %7206 = vmatprep.subr.mxu0 0.0
  %7207 = vmatpush1.msra.mxu0 %v429
  %7208 = vmatprep.subr.mxu0 0.0
  %7209 = vmatpush1.msra.mxu0 %v428
  %7210 = vmatprep.subr.mxu0 0.0
  %7211 = vmatpush1.msra.mxu0 %v427
  %7212 = vmatprep.subr.mxu0 0.0
  %7213 = vmatpush1.msra.mxu0 %v426
  %7214 = vmatprep.subr.mxu0 0.0
  %7215 = vmatpush1.msra.mxu0 %v425
  %7216 = vmatprep.subr.mxu0 0.0
  %7217 = vmatpush1.msra.mxu0 %v424
  %7218 = vmatprep.subr.mxu0 0.0
  %7219 = vmatpush1.msra.mxu0 %v423
  %7220 = vmatprep.subr.mxu0 0.0
  %7221 = vmatpush2.msra.mxu0 0.0
  %7222 = vmatprep.subr.mxu0 0.0
  %7223 = vmatpush2.msra.mxu0 0.0
  %7224 = vmatprep.subr.mxu0 0.0
  %7225 = vmatpush2.msra.mxu0 0.0
  %7226 = vmatprep.subr.mxu0 0.0
  %7227 = vmatpush2.msra.mxu0 0.0
  %7228 = vmatprep.subr.mxu0 0.0
  %7229 = vmatpush2.msra.mxu0 0.0
  %7230 = vmatprep.subr.mxu0 0.0
  %7231 = vmatpush2.msra.mxu0 0.0
  %7232 = vmatprep.subr.mxu0 0.0
  %7233 = vmatpush2.msra.mxu0 0.0
  %7234 = vmatprep.subr.mxu0 0.0
  %7235 = vmatpush2.msra.mxu0 0.0
  %7236 = vmatprep.subr.mxu0 0.0
  %7237 = vmatpush2.msra.mxu0 0.0
  %7238 = vmatprep.subr.mxu0 0.0
  %7239 = vmatpush2.msra.mxu0 0.0
  %7240 = vmatprep.subr.mxu0 0.0
  %7241 = vmatpush2.msra.mxu0 0.0
  %7242 = vmatprep.subr.mxu0 0.0
  %7243 = vmatpush2.msra.mxu0 0.0
  %7244 = vmatprep.subr.mxu0 0.0
  %7245 = vmatpush2.msra.mxu0 0.0
  %7246 = vmatprep.subr.mxu0 0.0
  %7247 = vmatpush2.msra.mxu0 0.0
  %7248 = vmatprep.subr.mxu0 0.0
  %7249 = vmatpush2.msra.mxu0 0.0
  %7250 = vmatprep.subr.mxu0 0.0
  %7251 = vmatpush2.msra.mxu0 0.0
  %7252 = vmatprep.mubr.f32.mxu0 0.0
  %7253 = vmatmul.mubr.f32.gmra.mxu0 %v6322
  %v7254 = vpop.f32.mrf.mxu0
  %v7255 = vadd.f32 %v7185, %v7254
  %v7256 = vpop.f32.mrf.mxu0
  %7257 = vdwg.mxu0
  %v7258 = vmax.f32 %v7255, 0.0
  %s7259 = scalar_lea.vmem %s3, 640
  %v7260 = vld [vmem:[%s7259] sm:$0xff]
  %v7261 = vld [vmem:[%s7259 + $0x8] sm:$0xff]
  %v7262 = vld [vmem:[%s7259 + $0x10] sm:$0xff]
  %v7263 = vld [vmem:[%s7259 + $0x18] sm:$0xff]
  %v7264 = vld [vmem:[%s7259 + $0x20] sm:$0xff]
  %v7265 = vld [vmem:[%s7259 + $0x28] sm:$0xff]
  %v7266 = vld [vmem:[%s7259 + $0x30] sm:$0xff]
  %v7267 = vld [vmem:[%s7259 + $0x38] sm:$0xff]
  %v7268 = vld [vmem:[%s7259 + $0x40] sm:$0xff]
  %v7269 = vld [vmem:[%s7259 + $0x48] sm:$0xff]
  %v7270 = vld [vmem:[%s7259 + $0x50] sm:$0xff]
  %v7271 = vld [vmem:[%s7259 + $0x58] sm:$0xff]
  %v7272 = vld [vmem:[%s7259 + $0x60] sm:$0xff]
  %v7273 = vld [vmem:[%s7259 + $0x68] sm:$0xff]
  %v7274 = vld [vmem:[%s7259 + $0x70] sm:$0xff]
  %v7275 = vld [vmem:[%s7259 + $0x78] sm:$0xff]
  %v7277 = vsel %vm2591, %v7258, 0
  %7279 = vmatprep.subr.mxu0 0.0
  %7280 = vmatpush1.msra.mxu0 0.0
  %7281 = vmatprep.subr.mxu0 0.0
  %7282 = vmatpush1.msra.mxu0 0.0
  %7283 = vmatprep.subr.mxu0 0.0
  %7284 = vmatpush1.msra.mxu0 0.0
  %7285 = vmatprep.subr.mxu0 0.0
  %7286 = vmatpush1.msra.mxu0 0.0
  %7287 = vmatprep.subr.mxu0 0.0
  %7288 = vmatpush1.msra.mxu0 0.0
  %7289 = vmatprep.subr.mxu0 0.0
  %7290 = vmatpush1.msra.mxu0 0.0
  %7291 = vmatprep.subr.mxu0 0.0
  %7292 = vmatpush1.msra.mxu0 0.0
  %7293 = vmatprep.subr.mxu0 0.0
  %7294 = vmatpush1.msra.mxu0 0.0
  %7295 = vmatprep.subr.mxu0 %v7275
  %7296 = vmatpush1.msra.mxu0 %v7274
  %7297 = vmatprep.subr.mxu0 %v7273
  %7298 = vmatpush1.msra.mxu0 %v7272
  %7299 = vmatprep.subr.mxu0 %v7271
  %7300 = vmatpush1.msra.mxu0 %v7270
  %7301 = vmatprep.subr.mxu0 %v7269
  %7302 = vmatpush1.msra.mxu0 %v7268
  %7303 = vmatprep.subr.mxu0 %v7267
  %7304 = vmatpush1.msra.mxu0 %v7266
  %7305 = vmatprep.subr.mxu0 %v7265
  %7306 = vmatpush1.msra.mxu0 %v7264
  %7307 = vmatprep.subr.mxu0 %v7263
  %7308 = vmatpush1.msra.mxu0 %v7262
  %7309 = vmatprep.subr.mxu0 %v7261
  %7310 = vmatpush1.msra.mxu0 %v7260
  %7311 = vmatprep.subr.mxu0 0.0
  %7312 = vmatpush2.msra.mxu0 0.0
  %7313 = vmatprep.subr.mxu0 0.0
  %7314 = vmatpush2.msra.mxu0 0.0
  %7315 = vmatprep.subr.mxu0 0.0
  %7316 = vmatpush2.msra.mxu0 0.0
  %7317 = vmatprep.subr.mxu0 0.0
  %7318 = vmatpush2.msra.mxu0 0.0
  %7319 = vmatprep.subr.mxu0 0.0
  %7320 = vmatpush2.msra.mxu0 0.0
  %7321 = vmatprep.subr.mxu0 0.0
  %7322 = vmatpush2.msra.mxu0 0.0
  %7323 = vmatprep.subr.mxu0 0.0
  %7324 = vmatpush2.msra.mxu0 0.0
  %7325 = vmatprep.subr.mxu0 0.0
  %7326 = vmatpush2.msra.mxu0 0.0
  %7327 = vmatprep.subr.mxu0 0.0
  %7328 = vmatpush2.msra.mxu0 0.0
  %7329 = vmatprep.subr.mxu0 0.0
  %7330 = vmatpush2.msra.mxu0 0.0
  %7331 = vmatprep.subr.mxu0 0.0
  %7332 = vmatpush2.msra.mxu0 0.0
  %7333 = vmatprep.subr.mxu0 0.0
  %7334 = vmatpush2.msra.mxu0 0.0
  %7335 = vmatprep.subr.mxu0 0.0
  %7336 = vmatpush2.msra.mxu0 0.0
  %7337 = vmatprep.subr.mxu0 0.0
  %7338 = vmatpush2.msra.mxu0 0.0
  %7339 = vmatprep.subr.mxu0 0.0
  %7340 = vmatpush2.msra.mxu0 0.0
  %7341 = vmatprep.subr.mxu0 0.0
  %7342 = vmatpush2.msra.mxu0 0.0
  %7343 = vmatprep.mubr.f32.mxu0 0.0
  %7344 = vmatmul.mubr.f32.gmra.mxu0 %v7277
  %v7345 = vpop.f32.mrf.mxu0
  %v7346 = vadd.f32 0.0, %v7345
  %v7347 = vpop.f32.mrf.mxu0
  %v7348 = vadd.f32 0.0, %v7347
  %7349 = vdwg.mxu0
  %v7350 = vadd.f32 %v6197, %v7346
  %v7351 = vadd.f32 %v6198, %v7348
  %s7352 = scalar_lea.vmem %s0, 300
  %v7353 = vld [vmem:[%s7352] sm:$0xff]
  %v7354 = vld [vmem:[%s7352 + $0x8] sm:$0xff]
  %v7355 = vld [vmem:[%s7352 + $0x10] sm:$0xff]
  %v7356 = vld [vmem:[%s7352 + $0x18] sm:$0xff]
  %v7357 = vld [vmem:[%s7352 + $0x20] sm:$0xff]
  %v7358 = vld [vmem:[%s7352 + $0x28] sm:$0xff]
  %v7359 = vld [vmem:[%s7352 + $0x30] sm:$0x3]
  %v7367 = vcombine.high %v7353, %v7353
  %v7369 = vunpack.c.l.s4 1983009808
  %v7370 = vunpack.c.0.s8 %v7369
  %v7371 = vlaneseq
  %v7372 = vshrl.u32 %v7371, 7
  %v7373 = vsub.s32 %v7370, %v7372
  %v7374 = vrot.slane %v7353, %v7373
  %v7376 = vunpack.c.l.s4 1983009808
  %v7377 = vunpack.c.0.s8 %v7376
  %v7378 = vlaneseq
  %v7379 = vshrl.u32 %v7378, 7
  %v7380 = vsub.s32 %v7377, %v7379
  %v7381 = vrot.slane %v7367, %v7380
  %v7382 = vcombine.high %v7374, %v7374
  %v7383 = vcombine.high %v7381, %v7381
  %v7384 = vcombine.high %v7354, %v7354
  %v7386 = vunpack.c.l.s4 1983009808
  %v7387 = vunpack.c.0.s8 %v7386
  %v7388 = vlaneseq
  %v7389 = vshrl.u32 %v7388, 7
  %v7390 = vsub.s32 %v7387, %v7389
  %v7391 = vrot.slane %v7354, %v7390
  %v7393 = vunpack.c.l.s4 1983009808
  %v7394 = vunpack.c.0.s8 %v7393
  %v7395 = vlaneseq
  %v7396 = vshrl.u32 %v7395, 7
  %v7397 = vsub.s32 %v7394, %v7396
  %v7398 = vrot.slane %v7384, %v7397
  %v7399 = vcombine.high %v7391, %v7391
  %v7400 = vcombine.high %v7398, %v7398
  %v7401 = vcombine.high %v7355, %v7355
  %v7403 = vunpack.c.l.s4 1983009808
  %v7404 = vunpack.c.0.s8 %v7403
  %v7405 = vlaneseq
  %v7406 = vshrl.u32 %v7405, 7
  %v7407 = vsub.s32 %v7404, %v7406
  %v7408 = vrot.slane %v7355, %v7407
  %v7410 = vunpack.c.l.s4 1983009808
  %v7411 = vunpack.c.0.s8 %v7410
  %v7412 = vlaneseq
  %v7413 = vshrl.u32 %v7412, 7
  %v7414 = vsub.s32 %v7411, %v7413
  %v7415 = vrot.slane %v7401, %v7414
  %v7416 = vcombine.high %v7408, %v7408
  %v7417 = vcombine.high %v7415, %v7415
  %v7418 = vcombine.high %v7356, %v7356
  %v7420 = vunpack.c.l.s4 1983009808
  %v7421 = vunpack.c.0.s8 %v7420
  %v7422 = vlaneseq
  %v7423 = vshrl.u32 %v7422, 7
  %v7424 = vsub.s32 %v7421, %v7423
  %v7425 = vrot.slane %v7356, %v7424
  %v7427 = vunpack.c.l.s4 1983009808
  %v7428 = vunpack.c.0.s8 %v7427
  %v7429 = vlaneseq
  %v7430 = vshrl.u32 %v7429, 7
  %v7431 = vsub.s32 %v7428, %v7430
  %v7432 = vrot.slane %v7418, %v7431
  %v7433 = vcombine.high %v7425, %v7425
  %v7434 = vcombine.high %v7432, %v7432
  %v7435 = vcombine.high %v7357, %v7357
  %v7437 = vunpack.c.l.s4 1983009808
  %v7438 = vunpack.c.0.s8 %v7437
  %v7439 = vlaneseq
  %v7440 = vshrl.u32 %v7439, 7
  %v7441 = vsub.s32 %v7438, %v7440
  %v7442 = vrot.slane %v7357, %v7441
  %v7444 = vunpack.c.l.s4 1983009808
  %v7445 = vunpack.c.0.s8 %v7444
  %v7446 = vlaneseq
  %v7447 = vshrl.u32 %v7446, 7
  %v7448 = vsub.s32 %v7445, %v7447
  %v7449 = vrot.slane %v7435, %v7448
  %v7450 = vcombine.high %v7442, %v7442
  %v7451 = vcombine.high %v7449, %v7449
  %v7452 = vcombine.high %v7358, %v7358
  %v7454 = vunpack.c.l.s4 1983009808
  %v7455 = vunpack.c.0.s8 %v7454
  %v7456 = vlaneseq
  %v7457 = vshrl.u32 %v7456, 7
  %v7458 = vsub.s32 %v7455, %v7457
  %v7459 = vrot.slane %v7358, %v7458
  %v7461 = vunpack.c.l.s4 1983009808
  %v7462 = vunpack.c.0.s8 %v7461
  %v7463 = vlaneseq
  %v7464 = vshrl.u32 %v7463, 7
  %v7465 = vsub.s32 %v7462, %v7464
  %v7466 = vrot.slane %v7452, %v7465
  %v7467 = vcombine.high %v7459, %v7459
  %v7468 = vcombine.high %v7466, %v7466
  %v7470 = vunpack.c.l.s4 1983009808
  %v7471 = vunpack.c.0.s8 %v7470
  %v7472 = vlaneseq
  %v7473 = vshrl.u32 %v7472, 7
  %v7474 = vsub.s32 %v7471, %v7473
  %v7475 = vrot.slane %v7359, %v7474
  %7501 = vmatprep.subr.mxu0 0.0
  %7502 = vmatpush1.msra.mxu0 %v54
  %7503 = vmatprep.subr.mxu0 0.0
  %7504 = vmatpush1.msra.mxu0 %v53
  %7505 = vmatprep.subr.mxu0 0.0
  %7506 = vmatpush1.msra.mxu0 %v52
  %7507 = vmatprep.subr.mxu0 0.0
  %7508 = vmatpush1.msra.mxu0 %v51
  %7509 = vmatprep.subr.mxu0 0.0
  %7510 = vmatpush1.msra.mxu0 %v50
  %7511 = vmatprep.subr.mxu0 0.0
  %7512 = vmatpush1.msra.mxu0 %v49
  %7513 = vmatprep.subr.mxu0 0.0
  %7514 = vmatpush1.msra.mxu0 %v48
  %7515 = vmatprep.subr.mxu0 0.0
  %7516 = vmatpush1.msra.mxu0 %v47
  %7517 = vmatprep.subr.mxu0 0.0
  %7518 = vmatpush1.msra.mxu0 %v46
  %7519 = vmatprep.subr.mxu0 0.0
  %7520 = vmatpush1.msra.mxu0 %v45
  %7521 = vmatprep.subr.mxu0 0.0
  %7522 = vmatpush1.msra.mxu0 %v44
  %7523 = vmatprep.subr.mxu0 0.0
  %7524 = vmatpush1.msra.mxu0 %v43
  %7525 = vmatprep.subr.mxu0 0.0
  %7526 = vmatpush1.msra.mxu0 %v42
  %7527 = vmatprep.subr.mxu0 0.0
  %7528 = vmatpush1.msra.mxu0 %v41
  %7529 = vmatprep.subr.mxu0 0.0
  %7530 = vmatpush1.msra.mxu0 %v40
  %7531 = vmatprep.subr.mxu0 0.0
  %7532 = vmatpush1.msra.mxu0 %v39
  %7533 = vmatprep.subr.mxu0 0.0
  %7534 = vmatpush2.msra.mxu0 %v70
  %7535 = vmatprep.subr.mxu0 0.0
  %7536 = vmatpush2.msra.mxu0 %v69
  %7537 = vmatprep.subr.mxu0 0.0
  %7538 = vmatpush2.msra.mxu0 %v68
  %7539 = vmatprep.subr.mxu0 0.0
  %7540 = vmatpush2.msra.mxu0 %v67
  %7541 = vmatprep.subr.mxu0 0.0
  %7542 = vmatpush2.msra.mxu0 %v66
  %7543 = vmatprep.subr.mxu0 0.0
  %7544 = vmatpush2.msra.mxu0 %v65
  %7545 = vmatprep.subr.mxu0 0.0
  %7546 = vmatpush2.msra.mxu0 %v64
  %7547 = vmatprep.subr.mxu0 0.0
  %7548 = vmatpush2.msra.mxu0 %v63
  %7549 = vmatprep.subr.mxu0 0.0
  %7550 = vmatpush2.msra.mxu0 %v62
  %7551 = vmatprep.subr.mxu0 0.0
  %7552 = vmatpush2.msra.mxu0 %v61
  %7553 = vmatprep.subr.mxu0 0.0
  %7554 = vmatpush2.msra.mxu0 %v60
  %7555 = vmatprep.subr.mxu0 0.0
  %7556 = vmatpush2.msra.mxu0 %v59
  %7557 = vmatprep.subr.mxu0 0.0
  %7558 = vmatpush2.msra.mxu0 %v58
  %7559 = vmatprep.subr.mxu0 0.0
  %7560 = vmatpush2.msra.mxu0 %v57
  %7561 = vmatprep.subr.mxu0 0.0
  %7562 = vmatpush2.msra.mxu0 %v56
  %7563 = vmatprep.subr.mxu0 0.0
  %7564 = vmatpush2.msra.mxu0 %v55
  %7565 = vmatprep.mubr.f32.mxu0 %v7382
  %7566 = vmatmul.mubr.f32.gmra.mxu0 %v7374
  %v7567 = vpop.f32.mrf.mxu0
  %v7568 = vadd.f32 %v444, %v7567
  %v7569 = vpop.f32.mrf.mxu0
  %7570 = vdwg.mxu0
  %7571 = vmatprep.subr.mxu0 0.0
  %7572 = vmatpush1.msra.mxu0 %v86
  %7573 = vmatprep.subr.mxu0 0.0
  %7574 = vmatpush1.msra.mxu0 %v85
  %7575 = vmatprep.subr.mxu0 0.0
  %7576 = vmatpush1.msra.mxu0 %v84
  %7577 = vmatprep.subr.mxu0 0.0
  %7578 = vmatpush1.msra.mxu0 %v83
  %7579 = vmatprep.subr.mxu0 0.0
  %7580 = vmatpush1.msra.mxu0 %v82
  %7581 = vmatprep.subr.mxu0 0.0
  %7582 = vmatpush1.msra.mxu0 %v81
  %7583 = vmatprep.subr.mxu0 0.0
  %7584 = vmatpush1.msra.mxu0 %v80
  %7585 = vmatprep.subr.mxu0 0.0
  %7586 = vmatpush1.msra.mxu0 %v79
  %7587 = vmatprep.subr.mxu0 0.0
  %7588 = vmatpush1.msra.mxu0 %v78
  %7589 = vmatprep.subr.mxu0 0.0
  %7590 = vmatpush1.msra.mxu0 %v77
  %7591 = vmatprep.subr.mxu0 0.0
  %7592 = vmatpush1.msra.mxu0 %v76
  %7593 = vmatprep.subr.mxu0 0.0
  %7594 = vmatpush1.msra.mxu0 %v75
  %7595 = vmatprep.subr.mxu0 0.0
  %7596 = vmatpush1.msra.mxu0 %v74
  %7597 = vmatprep.subr.mxu0 0.0
  %7598 = vmatpush1.msra.mxu0 %v73
  %7599 = vmatprep.subr.mxu0 0.0
  %7600 = vmatpush1.msra.mxu0 %v72
  %7601 = vmatprep.subr.mxu0 0.0
  %7602 = vmatpush1.msra.mxu0 %v71
  %7603 = vmatprep.subr.mxu0 0.0
  %7604 = vmatpush2.msra.mxu0 %v102
  %7605 = vmatprep.subr.mxu0 0.0
  %7606 = vmatpush2.msra.mxu0 %v101
  %7607 = vmatprep.subr.mxu0 0.0
  %7608 = vmatpush2.msra.mxu0 %v100
  %7609 = vmatprep.subr.mxu0 0.0
  %7610 = vmatpush2.msra.mxu0 %v99
  %7611 = vmatprep.subr.mxu0 0.0
  %7612 = vmatpush2.msra.mxu0 %v98
  %7613 = vmatprep.subr.mxu0 0.0
  %7614 = vmatpush2.msra.mxu0 %v97
  %7615 = vmatprep.subr.mxu0 0.0
  %7616 = vmatpush2.msra.mxu0 %v96
  %7617 = vmatprep.subr.mxu0 0.0
  %7618 = vmatpush2.msra.mxu0 %v95
  %7619 = vmatprep.subr.mxu0 0.0
  %7620 = vmatpush2.msra.mxu0 %v94
  %7621 = vmatprep.subr.mxu0 0.0
  %7622 = vmatpush2.msra.mxu0 %v93
  %7623 = vmatprep.subr.mxu0 0.0
  %7624 = vmatpush2.msra.mxu0 %v92
  %7625 = vmatprep.subr.mxu0 0.0
  %7626 = vmatpush2.msra.mxu0 %v91
  %7627 = vmatprep.subr.mxu0 0.0
  %7628 = vmatpush2.msra.mxu0 %v90
  %7629 = vmatprep.subr.mxu0 0.0
  %7630 = vmatpush2.msra.mxu0 %v89
  %7631 = vmatprep.subr.mxu0 0.0
  %7632 = vmatpush2.msra.mxu0 %v88
  %7633 = vmatprep.subr.mxu0 0.0
  %7634 = vmatpush2.msra.mxu0 %v87
  %7635 = vmatprep.mubr.f32.mxu0 %v7383
  %7636 = vmatmul.mubr.f32.gmra.mxu0 %v7381
  %v7637 = vpop.f32.mrf.mxu0
  %v7638 = vadd.f32 %v7568, %v7637
  %v7639 = vpop.f32.mrf.mxu0
  %7640 = vdwg.mxu0
  %7641 = vmatprep.subr.mxu0 0.0
  %7642 = vmatpush1.msra.mxu0 %v118
  %7643 = vmatprep.subr.mxu0 0.0
  %7644 = vmatpush1.msra.mxu0 %v117
  %7645 = vmatprep.subr.mxu0 0.0
  %7646 = vmatpush1.msra.mxu0 %v116
  %7647 = vmatprep.subr.mxu0 0.0
  %7648 = vmatpush1.msra.mxu0 %v115
  %7649 = vmatprep.subr.mxu0 0.0
  %7650 = vmatpush1.msra.mxu0 %v114
  %7651 = vmatprep.subr.mxu0 0.0
  %7652 = vmatpush1.msra.mxu0 %v113
  %7653 = vmatprep.subr.mxu0 0.0
  %7654 = vmatpush1.msra.mxu0 %v112
  %7655 = vmatprep.subr.mxu0 0.0
  %7656 = vmatpush1.msra.mxu0 %v111
  %7657 = vmatprep.subr.mxu0 0.0
  %7658 = vmatpush1.msra.mxu0 %v110
  %7659 = vmatprep.subr.mxu0 0.0
  %7660 = vmatpush1.msra.mxu0 %v109
  %7661 = vmatprep.subr.mxu0 0.0
  %7662 = vmatpush1.msra.mxu0 %v108
  %7663 = vmatprep.subr.mxu0 0.0
  %7664 = vmatpush1.msra.mxu0 %v107
  %7665 = vmatprep.subr.mxu0 0.0
  %7666 = vmatpush1.msra.mxu0 %v106
  %7667 = vmatprep.subr.mxu0 0.0
  %7668 = vmatpush1.msra.mxu0 %v105
  %7669 = vmatprep.subr.mxu0 0.0
  %7670 = vmatpush1.msra.mxu0 %v104
  %7671 = vmatprep.subr.mxu0 0.0
  %7672 = vmatpush1.msra.mxu0 %v103
  %7673 = vmatprep.subr.mxu0 0.0
  %7674 = vmatpush2.msra.mxu0 %v134
  %7675 = vmatprep.subr.mxu0 0.0
  %7676 = vmatpush2.msra.mxu0 %v133
  %7677 = vmatprep.subr.mxu0 0.0
  %7678 = vmatpush2.msra.mxu0 %v132
  %7679 = vmatprep.subr.mxu0 0.0
  %7680 = vmatpush2.msra.mxu0 %v131
  %7681 = vmatprep.subr.mxu0 0.0
  %7682 = vmatpush2.msra.mxu0 %v130
  %7683 = vmatprep.subr.mxu0 0.0
  %7684 = vmatpush2.msra.mxu0 %v129
  %7685 = vmatprep.subr.mxu0 0.0
  %7686 = vmatpush2.msra.mxu0 %v128
  %7687 = vmatprep.subr.mxu0 0.0
  %7688 = vmatpush2.msra.mxu0 %v127
  %7689 = vmatprep.subr.mxu0 0.0
  %7690 = vmatpush2.msra.mxu0 %v126
  %7691 = vmatprep.subr.mxu0 0.0
  %7692 = vmatpush2.msra.mxu0 %v125
  %7693 = vmatprep.subr.mxu0 0.0
  %7694 = vmatpush2.msra.mxu0 %v124
  %7695 = vmatprep.subr.mxu0 0.0
  %7696 = vmatpush2.msra.mxu0 %v123
  %7697 = vmatprep.subr.mxu0 0.0
  %7698 = vmatpush2.msra.mxu0 %v122
  %7699 = vmatprep.subr.mxu0 0.0
  %7700 = vmatpush2.msra.mxu0 %v121
  %7701 = vmatprep.subr.mxu0 0.0
  %7702 = vmatpush2.msra.mxu0 %v120
  %7703 = vmatprep.subr.mxu0 0.0
  %7704 = vmatpush2.msra.mxu0 %v119
  %7705 = vmatprep.mubr.f32.mxu0 %v7399
  %7706 = vmatmul.mubr.f32.gmra.mxu0 %v7391
  %v7707 = vpop.f32.mrf.mxu0
  %v7708 = vadd.f32 %v7638, %v7707
  %v7709 = vpop.f32.mrf.mxu0
  %7710 = vdwg.mxu0
  %7711 = vmatprep.subr.mxu0 0.0
  %7712 = vmatpush1.msra.mxu0 %v150
  %7713 = vmatprep.subr.mxu0 0.0
  %7714 = vmatpush1.msra.mxu0 %v149
  %7715 = vmatprep.subr.mxu0 0.0
  %7716 = vmatpush1.msra.mxu0 %v148
  %7717 = vmatprep.subr.mxu0 0.0
  %7718 = vmatpush1.msra.mxu0 %v147
  %7719 = vmatprep.subr.mxu0 0.0
  %7720 = vmatpush1.msra.mxu0 %v146
  %7721 = vmatprep.subr.mxu0 0.0
  %7722 = vmatpush1.msra.mxu0 %v145
  %7723 = vmatprep.subr.mxu0 0.0
  %7724 = vmatpush1.msra.mxu0 %v144
  %7725 = vmatprep.subr.mxu0 0.0
  %7726 = vmatpush1.msra.mxu0 %v143
  %7727 = vmatprep.subr.mxu0 0.0
  %7728 = vmatpush1.msra.mxu0 %v142
  %7729 = vmatprep.subr.mxu0 0.0
  %7730 = vmatpush1.msra.mxu0 %v141
  %7731 = vmatprep.subr.mxu0 0.0
  %7732 = vmatpush1.msra.mxu0 %v140
  %7733 = vmatprep.subr.mxu0 0.0
  %7734 = vmatpush1.msra.mxu0 %v139
  %7735 = vmatprep.subr.mxu0 0.0
  %7736 = vmatpush1.msra.mxu0 %v138
  %7737 = vmatprep.subr.mxu0 0.0
  %7738 = vmatpush1.msra.mxu0 %v137
  %7739 = vmatprep.subr.mxu0 0.0
  %7740 = vmatpush1.msra.mxu0 %v136
  %7741 = vmatprep.subr.mxu0 0.0
  %7742 = vmatpush1.msra.mxu0 %v135
  %7743 = vmatprep.subr.mxu0 0.0
  %7744 = vmatpush2.msra.mxu0 %v166
  %7745 = vmatprep.subr.mxu0 0.0
  %7746 = vmatpush2.msra.mxu0 %v165
  %7747 = vmatprep.subr.mxu0 0.0
  %7748 = vmatpush2.msra.mxu0 %v164
  %7749 = vmatprep.subr.mxu0 0.0
  %7750 = vmatpush2.msra.mxu0 %v163
  %7751 = vmatprep.subr.mxu0 0.0
  %7752 = vmatpush2.msra.mxu0 %v162
  %7753 = vmatprep.subr.mxu0 0.0
  %7754 = vmatpush2.msra.mxu0 %v161
  %7755 = vmatprep.subr.mxu0 0.0
  %7756 = vmatpush2.msra.mxu0 %v160
  %7757 = vmatprep.subr.mxu0 0.0
  %7758 = vmatpush2.msra.mxu0 %v159
  %7759 = vmatprep.subr.mxu0 0.0
  %7760 = vmatpush2.msra.mxu0 %v158
  %7761 = vmatprep.subr.mxu0 0.0
  %7762 = vmatpush2.msra.mxu0 %v157
  %7763 = vmatprep.subr.mxu0 0.0
  %7764 = vmatpush2.msra.mxu0 %v156
  %7765 = vmatprep.subr.mxu0 0.0
  %7766 = vmatpush2.msra.mxu0 %v155
  %7767 = vmatprep.subr.mxu0 0.0
  %7768 = vmatpush2.msra.mxu0 %v154
  %7769 = vmatprep.subr.mxu0 0.0
  %7770 = vmatpush2.msra.mxu0 %v153
  %7771 = vmatprep.subr.mxu0 0.0
  %7772 = vmatpush2.msra.mxu0 %v152
  %7773 = vmatprep.subr.mxu0 0.0
  %7774 = vmatpush2.msra.mxu0 %v151
  %7775 = vmatprep.mubr.f32.mxu0 %v7400
  %7776 = vmatmul.mubr.f32.gmra.mxu0 %v7398
  %v7777 = vpop.f32.mrf.mxu0
  %v7778 = vadd.f32 %v7708, %v7777
  %v7779 = vpop.f32.mrf.mxu0
  %7780 = vdwg.mxu0
  %7781 = vmatprep.subr.mxu0 0.0
  %7782 = vmatpush1.msra.mxu0 %v182
  %7783 = vmatprep.subr.mxu0 0.0
  %7784 = vmatpush1.msra.mxu0 %v181
  %7785 = vmatprep.subr.mxu0 0.0
  %7786 = vmatpush1.msra.mxu0 %v180
  %7787 = vmatprep.subr.mxu0 0.0
  %7788 = vmatpush1.msra.mxu0 %v179
  %7789 = vmatprep.subr.mxu0 0.0
  %7790 = vmatpush1.msra.mxu0 %v178
  %7791 = vmatprep.subr.mxu0 0.0
  %7792 = vmatpush1.msra.mxu0 %v177
  %7793 = vmatprep.subr.mxu0 0.0
  %7794 = vmatpush1.msra.mxu0 %v176
  %7795 = vmatprep.subr.mxu0 0.0
  %7796 = vmatpush1.msra.mxu0 %v175
  %7797 = vmatprep.subr.mxu0 0.0
  %7798 = vmatpush1.msra.mxu0 %v174
  %7799 = vmatprep.subr.mxu0 0.0
  %7800 = vmatpush1.msra.mxu0 %v173
  %7801 = vmatprep.subr.mxu0 0.0
  %7802 = vmatpush1.msra.mxu0 %v172
  %7803 = vmatprep.subr.mxu0 0.0
  %7804 = vmatpush1.msra.mxu0 %v171
  %7805 = vmatprep.subr.mxu0 0.0
  %7806 = vmatpush1.msra.mxu0 %v170
  %7807 = vmatprep.subr.mxu0 0.0
  %7808 = vmatpush1.msra.mxu0 %v169
  %7809 = vmatprep.subr.mxu0 0.0
  %7810 = vmatpush1.msra.mxu0 %v168
  %7811 = vmatprep.subr.mxu0 0.0
  %7812 = vmatpush1.msra.mxu0 %v167
  %7813 = vmatprep.subr.mxu0 0.0
  %7814 = vmatpush2.msra.mxu0 %v198
  %7815 = vmatprep.subr.mxu0 0.0
  %7816 = vmatpush2.msra.mxu0 %v197
  %7817 = vmatprep.subr.mxu0 0.0
  %7818 = vmatpush2.msra.mxu0 %v196
  %7819 = vmatprep.subr.mxu0 0.0
  %7820 = vmatpush2.msra.mxu0 %v195
  %7821 = vmatprep.subr.mxu0 0.0
  %7822 = vmatpush2.msra.mxu0 %v194
  %7823 = vmatprep.subr.mxu0 0.0
  %7824 = vmatpush2.msra.mxu0 %v193
  %7825 = vmatprep.subr.mxu0 0.0
  %7826 = vmatpush2.msra.mxu0 %v192
  %7827 = vmatprep.subr.mxu0 0.0
  %7828 = vmatpush2.msra.mxu0 %v191
  %7829 = vmatprep.subr.mxu0 0.0
  %7830 = vmatpush2.msra.mxu0 %v190
  %7831 = vmatprep.subr.mxu0 0.0
  %7832 = vmatpush2.msra.mxu0 %v189
  %7833 = vmatprep.subr.mxu0 0.0
  %7834 = vmatpush2.msra.mxu0 %v188
  %7835 = vmatprep.subr.mxu0 0.0
  %7836 = vmatpush2.msra.mxu0 %v187
  %7837 = vmatprep.subr.mxu0 0.0
  %7838 = vmatpush2.msra.mxu0 %v186
  %7839 = vmatprep.subr.mxu0 0.0
  %7840 = vmatpush2.msra.mxu0 %v185
  %7841 = vmatprep.subr.mxu0 0.0
  %7842 = vmatpush2.msra.mxu0 %v184
  %7843 = vmatprep.subr.mxu0 0.0
  %7844 = vmatpush2.msra.mxu0 %v183
  %7845 = vmatprep.mubr.f32.mxu0 %v7416
  %7846 = vmatmul.mubr.f32.gmra.mxu0 %v7408
  %v7847 = vpop.f32.mrf.mxu0
  %v7848 = vadd.f32 %v7778, %v7847
  %v7849 = vpop.f32.mrf.mxu0
  %7850 = vdwg.mxu0
  %7851 = vmatprep.subr.mxu0 0.0
  %7852 = vmatpush1.msra.mxu0 %v214
  %7853 = vmatprep.subr.mxu0 0.0
  %7854 = vmatpush1.msra.mxu0 %v213
  %7855 = vmatprep.subr.mxu0 0.0
  %7856 = vmatpush1.msra.mxu0 %v212
  %7857 = vmatprep.subr.mxu0 0.0
  %7858 = vmatpush1.msra.mxu0 %v211
  %7859 = vmatprep.subr.mxu0 0.0
  %7860 = vmatpush1.msra.mxu0 %v210
  %7861 = vmatprep.subr.mxu0 0.0
  %7862 = vmatpush1.msra.mxu0 %v209
  %7863 = vmatprep.subr.mxu0 0.0
  %7864 = vmatpush1.msra.mxu0 %v208
  %7865 = vmatprep.subr.mxu0 0.0
  %7866 = vmatpush1.msra.mxu0 %v207
  %7867 = vmatprep.subr.mxu0 0.0
  %7868 = vmatpush1.msra.mxu0 %v206
  %7869 = vmatprep.subr.mxu0 0.0
  %7870 = vmatpush1.msra.mxu0 %v205
  %7871 = vmatprep.subr.mxu0 0.0
  %7872 = vmatpush1.msra.mxu0 %v204
  %7873 = vmatprep.subr.mxu0 0.0
  %7874 = vmatpush1.msra.mxu0 %v203
  %7875 = vmatprep.subr.mxu0 0.0
  %7876 = vmatpush1.msra.mxu0 %v202
  %7877 = vmatprep.subr.mxu0 0.0
  %7878 = vmatpush1.msra.mxu0 %v201
  %7879 = vmatprep.subr.mxu0 0.0
  %7880 = vmatpush1.msra.mxu0 %v200
  %7881 = vmatprep.subr.mxu0 0.0
  %7882 = vmatpush1.msra.mxu0 %v199
  %7883 = vmatprep.subr.mxu0 0.0
  %7884 = vmatpush2.msra.mxu0 %v230
  %7885 = vmatprep.subr.mxu0 0.0
  %7886 = vmatpush2.msra.mxu0 %v229
  %7887 = vmatprep.subr.mxu0 0.0
  %7888 = vmatpush2.msra.mxu0 %v228
  %7889 = vmatprep.subr.mxu0 0.0
  %7890 = vmatpush2.msra.mxu0 %v227
  %7891 = vmatprep.subr.mxu0 0.0
  %7892 = vmatpush2.msra.mxu0 %v226
  %7893 = vmatprep.subr.mxu0 0.0
  %7894 = vmatpush2.msra.mxu0 %v225
  %7895 = vmatprep.subr.mxu0 0.0
  %7896 = vmatpush2.msra.mxu0 %v224
  %7897 = vmatprep.subr.mxu0 0.0
  %7898 = vmatpush2.msra.mxu0 %v223
  %7899 = vmatprep.subr.mxu0 0.0
  %7900 = vmatpush2.msra.mxu0 %v222
  %7901 = vmatprep.subr.mxu0 0.0
  %7902 = vmatpush2.msra.mxu0 %v221
  %7903 = vmatprep.subr.mxu0 0.0
  %7904 = vmatpush2.msra.mxu0 %v220
  %7905 = vmatprep.subr.mxu0 0.0
  %7906 = vmatpush2.msra.mxu0 %v219
  %7907 = vmatprep.subr.mxu0 0.0
  %7908 = vmatpush2.msra.mxu0 %v218
  %7909 = vmatprep.subr.mxu0 0.0
  %7910 = vmatpush2.msra.mxu0 %v217
  %7911 = vmatprep.subr.mxu0 0.0
  %7912 = vmatpush2.msra.mxu0 %v216
  %7913 = vmatprep.subr.mxu0 0.0
  %7914 = vmatpush2.msra.mxu0 %v215
  %7915 = vmatprep.mubr.f32.mxu0 %v7417
  %7916 = vmatmul.mubr.f32.gmra.mxu0 %v7415
  %v7917 = vpop.f32.mrf.mxu0
  %v7918 = vadd.f32 %v7848, %v7917
  %v7919 = vpop.f32.mrf.mxu0
  %7920 = vdwg.mxu0
  %7921 = vmatprep.subr.mxu0 0.0
  %7922 = vmatpush1.msra.mxu0 %v246
  %7923 = vmatprep.subr.mxu0 0.0
  %7924 = vmatpush1.msra.mxu0 %v245
  %7925 = vmatprep.subr.mxu0 0.0
  %7926 = vmatpush1.msra.mxu0 %v244
  %7927 = vmatprep.subr.mxu0 0.0
  %7928 = vmatpush1.msra.mxu0 %v243
  %7929 = vmatprep.subr.mxu0 0.0
  %7930 = vmatpush1.msra.mxu0 %v242
  %7931 = vmatprep.subr.mxu0 0.0
  %7932 = vmatpush1.msra.mxu0 %v241
  %7933 = vmatprep.subr.mxu0 0.0
  %7934 = vmatpush1.msra.mxu0 %v240
  %7935 = vmatprep.subr.mxu0 0.0
  %7936 = vmatpush1.msra.mxu0 %v239
  %7937 = vmatprep.subr.mxu0 0.0
  %7938 = vmatpush1.msra.mxu0 %v238
  %7939 = vmatprep.subr.mxu0 0.0
  %7940 = vmatpush1.msra.mxu0 %v237
  %7941 = vmatprep.subr.mxu0 0.0
  %7942 = vmatpush1.msra.mxu0 %v236
  %7943 = vmatprep.subr.mxu0 0.0
  %7944 = vmatpush1.msra.mxu0 %v235
  %7945 = vmatprep.subr.mxu0 0.0
  %7946 = vmatpush1.msra.mxu0 %v234
  %7947 = vmatprep.subr.mxu0 0.0
  %7948 = vmatpush1.msra.mxu0 %v233
  %7949 = vmatprep.subr.mxu0 0.0
  %7950 = vmatpush1.msra.mxu0 %v232
  %7951 = vmatprep.subr.mxu0 0.0
  %7952 = vmatpush1.msra.mxu0 %v231
  %7953 = vmatprep.subr.mxu0 0.0
  %7954 = vmatpush2.msra.mxu0 %v262
  %7955 = vmatprep.subr.mxu0 0.0
  %7956 = vmatpush2.msra.mxu0 %v261
  %7957 = vmatprep.subr.mxu0 0.0
  %7958 = vmatpush2.msra.mxu0 %v260
  %7959 = vmatprep.subr.mxu0 0.0
  %7960 = vmatpush2.msra.mxu0 %v259
  %7961 = vmatprep.subr.mxu0 0.0
  %7962 = vmatpush2.msra.mxu0 %v258
  %7963 = vmatprep.subr.mxu0 0.0
  %7964 = vmatpush2.msra.mxu0 %v257
  %7965 = vmatprep.subr.mxu0 0.0
  %7966 = vmatpush2.msra.mxu0 %v256
  %7967 = vmatprep.subr.mxu0 0.0
  %7968 = vmatpush2.msra.mxu0 %v255
  %7969 = vmatprep.subr.mxu0 0.0
  %7970 = vmatpush2.msra.mxu0 %v254
  %7971 = vmatprep.subr.mxu0 0.0
  %7972 = vmatpush2.msra.mxu0 %v253
  %7973 = vmatprep.subr.mxu0 0.0
  %7974 = vmatpush2.msra.mxu0 %v252
  %7975 = vmatprep.subr.mxu0 0.0
  %7976 = vmatpush2.msra.mxu0 %v251
  %7977 = vmatprep.subr.mxu0 0.0
  %7978 = vmatpush2.msra.mxu0 %v250
  %7979 = vmatprep.subr.mxu0 0.0
  %7980 = vmatpush2.msra.mxu0 %v249
  %7981 = vmatprep.subr.mxu0 0.0
  %7982 = vmatpush2.msra.mxu0 %v248
  %7983 = vmatprep.subr.mxu0 0.0
  %7984 = vmatpush2.msra.mxu0 %v247
  %7985 = vmatprep.mubr.f32.mxu0 %v7433
  %7986 = vmatmul.mubr.f32.gmra.mxu0 %v7425
  %v7987 = vpop.f32.mrf.mxu0
  %v7988 = vadd.f32 %v7918, %v7987
  %v7989 = vpop.f32.mrf.mxu0
  %7990 = vdwg.mxu0
  %7991 = vmatprep.subr.mxu0 0.0
  %7992 = vmatpush1.msra.mxu0 %v278
  %7993 = vmatprep.subr.mxu0 0.0
  %7994 = vmatpush1.msra.mxu0 %v277
  %7995 = vmatprep.subr.mxu0 0.0
  %7996 = vmatpush1.msra.mxu0 %v276
  %7997 = vmatprep.subr.mxu0 0.0
  %7998 = vmatpush1.msra.mxu0 %v275
  %7999 = vmatprep.subr.mxu0 0.0
  %8000 = vmatpush1.msra.mxu0 %v274
  %8001 = vmatprep.subr.mxu0 0.0
  %8002 = vmatpush1.msra.mxu0 %v273
  %8003 = vmatprep.subr.mxu0 0.0
  %8004 = vmatpush1.msra.mxu0 %v272
  %8005 = vmatprep.subr.mxu0 0.0
  %8006 = vmatpush1.msra.mxu0 %v271
  %8007 = vmatprep.subr.mxu0 0.0
  %8008 = vmatpush1.msra.mxu0 %v270
  %8009 = vmatprep.subr.mxu0 0.0
  %8010 = vmatpush1.msra.mxu0 %v269
  %8011 = vmatprep.subr.mxu0 0.0
  %8012 = vmatpush1.msra.mxu0 %v268
  %8013 = vmatprep.subr.mxu0 0.0
  %8014 = vmatpush1.msra.mxu0 %v267
  %8015 = vmatprep.subr.mxu0 0.0
  %8016 = vmatpush1.msra.mxu0 %v266
  %8017 = vmatprep.subr.mxu0 0.0
  %8018 = vmatpush1.msra.mxu0 %v265
  %8019 = vmatprep.subr.mxu0 0.0
  %8020 = vmatpush1.msra.mxu0 %v264
  %8021 = vmatprep.subr.mxu0 0.0
  %8022 = vmatpush1.msra.mxu0 %v263
  %8023 = vmatprep.subr.mxu0 0.0
  %8024 = vmatpush2.msra.mxu0 %v294
  %8025 = vmatprep.subr.mxu0 0.0
  %8026 = vmatpush2.msra.mxu0 %v293
  %8027 = vmatprep.subr.mxu0 0.0
  %8028 = vmatpush2.msra.mxu0 %v292
  %8029 = vmatprep.subr.mxu0 0.0
  %8030 = vmatpush2.msra.mxu0 %v291
  %8031 = vmatprep.subr.mxu0 0.0
  %8032 = vmatpush2.msra.mxu0 %v290
  %8033 = vmatprep.subr.mxu0 0.0
  %8034 = vmatpush2.msra.mxu0 %v289
  %8035 = vmatprep.subr.mxu0 0.0
  %8036 = vmatpush2.msra.mxu0 %v288
  %8037 = vmatprep.subr.mxu0 0.0
  %8038 = vmatpush2.msra.mxu0 %v287
  %8039 = vmatprep.subr.mxu0 0.0
  %8040 = vmatpush2.msra.mxu0 %v286
  %8041 = vmatprep.subr.mxu0 0.0
  %8042 = vmatpush2.msra.mxu0 %v285
  %8043 = vmatprep.subr.mxu0 0.0
  %8044 = vmatpush2.msra.mxu0 %v284
  %8045 = vmatprep.subr.mxu0 0.0
  %8046 = vmatpush2.msra.mxu0 %v283
  %8047 = vmatprep.subr.mxu0 0.0
  %8048 = vmatpush2.msra.mxu0 %v282
  %8049 = vmatprep.subr.mxu0 0.0
  %8050 = vmatpush2.msra.mxu0 %v281
  %8051 = vmatprep.subr.mxu0 0.0
  %8052 = vmatpush2.msra.mxu0 %v280
  %8053 = vmatprep.subr.mxu0 0.0
  %8054 = vmatpush2.msra.mxu0 %v279
  %8055 = vmatprep.mubr.f32.mxu0 %v7434
  %8056 = vmatmul.mubr.f32.gmra.mxu0 %v7432
  %v8057 = vpop.f32.mrf.mxu0
  %v8058 = vadd.f32 %v7988, %v8057
  %v8059 = vpop.f32.mrf.mxu0
  %8060 = vdwg.mxu0
  %8061 = vmatprep.subr.mxu0 0.0
  %8062 = vmatpush1.msra.mxu0 %v310
  %8063 = vmatprep.subr.mxu0 0.0
  %8064 = vmatpush1.msra.mxu0 %v309
  %8065 = vmatprep.subr.mxu0 0.0
  %8066 = vmatpush1.msra.mxu0 %v308
  %8067 = vmatprep.subr.mxu0 0.0
  %8068 = vmatpush1.msra.mxu0 %v307
  %8069 = vmatprep.subr.mxu0 0.0
  %8070 = vmatpush1.msra.mxu0 %v306
  %8071 = vmatprep.subr.mxu0 0.0
  %8072 = vmatpush1.msra.mxu0 %v305
  %8073 = vmatprep.subr.mxu0 0.0
  %8074 = vmatpush1.msra.mxu0 %v304
  %8075 = vmatprep.subr.mxu0 0.0
  %8076 = vmatpush1.msra.mxu0 %v303
  %8077 = vmatprep.subr.mxu0 0.0
  %8078 = vmatpush1.msra.mxu0 %v302
  %8079 = vmatprep.subr.mxu0 0.0
  %8080 = vmatpush1.msra.mxu0 %v301
  %8081 = vmatprep.subr.mxu0 0.0
  %8082 = vmatpush1.msra.mxu0 %v300
  %8083 = vmatprep.subr.mxu0 0.0
  %8084 = vmatpush1.msra.mxu0 %v299
  %8085 = vmatprep.subr.mxu0 0.0
  %8086 = vmatpush1.msra.mxu0 %v298
  %8087 = vmatprep.subr.mxu0 0.0
  %8088 = vmatpush1.msra.mxu0 %v297
  %8089 = vmatprep.subr.mxu0 0.0
  %8090 = vmatpush1.msra.mxu0 %v296
  %8091 = vmatprep.subr.mxu0 0.0
  %8092 = vmatpush1.msra.mxu0 %v295
  %8093 = vmatprep.subr.mxu0 0.0
  %8094 = vmatpush2.msra.mxu0 %v326
  %8095 = vmatprep.subr.mxu0 0.0
  %8096 = vmatpush2.msra.mxu0 %v325
  %8097 = vmatprep.subr.mxu0 0.0
  %8098 = vmatpush2.msra.mxu0 %v324
  %8099 = vmatprep.subr.mxu0 0.0
  %8100 = vmatpush2.msra.mxu0 %v323
  %8101 = vmatprep.subr.mxu0 0.0
  %8102 = vmatpush2.msra.mxu0 %v322
  %8103 = vmatprep.subr.mxu0 0.0
  %8104 = vmatpush2.msra.mxu0 %v321
  %8105 = vmatprep.subr.mxu0 0.0
  %8106 = vmatpush2.msra.mxu0 %v320
  %8107 = vmatprep.subr.mxu0 0.0
  %8108 = vmatpush2.msra.mxu0 %v319
  %8109 = vmatprep.subr.mxu0 0.0
  %8110 = vmatpush2.msra.mxu0 %v318
  %8111 = vmatprep.subr.mxu0 0.0
  %8112 = vmatpush2.msra.mxu0 %v317
  %8113 = vmatprep.subr.mxu0 0.0
  %8114 = vmatpush2.msra.mxu0 %v316
  %8115 = vmatprep.subr.mxu0 0.0
  %8116 = vmatpush2.msra.mxu0 %v315
  %8117 = vmatprep.subr.mxu0 0.0
  %8118 = vmatpush2.msra.mxu0 %v314
  %8119 = vmatprep.subr.mxu0 0.0
  %8120 = vmatpush2.msra.mxu0 %v313
  %8121 = vmatprep.subr.mxu0 0.0
  %8122 = vmatpush2.msra.mxu0 %v312
  %8123 = vmatprep.subr.mxu0 0.0
  %8124 = vmatpush2.msra.mxu0 %v311
  %8125 = vmatprep.mubr.f32.mxu0 %v7450
  %8126 = vmatmul.mubr.f32.gmra.mxu0 %v7442
  %v8127 = vpop.f32.mrf.mxu0
  %v8128 = vadd.f32 %v8058, %v8127
  %v8129 = vpop.f32.mrf.mxu0
  %8130 = vdwg.mxu0
  %8131 = vmatprep.subr.mxu0 0.0
  %8132 = vmatpush1.msra.mxu0 %v342
  %8133 = vmatprep.subr.mxu0 0.0
  %8134 = vmatpush1.msra.mxu0 %v341
  %8135 = vmatprep.subr.mxu0 0.0
  %8136 = vmatpush1.msra.mxu0 %v340
  %8137 = vmatprep.subr.mxu0 0.0
  %8138 = vmatpush1.msra.mxu0 %v339
  %8139 = vmatprep.subr.mxu0 0.0
  %8140 = vmatpush1.msra.mxu0 %v338
  %8141 = vmatprep.subr.mxu0 0.0
  %8142 = vmatpush1.msra.mxu0 %v337
  %8143 = vmatprep.subr.mxu0 0.0
  %8144 = vmatpush1.msra.mxu0 %v336
  %8145 = vmatprep.subr.mxu0 0.0
  %8146 = vmatpush1.msra.mxu0 %v335
  %8147 = vmatprep.subr.mxu0 0.0
  %8148 = vmatpush1.msra.mxu0 %v334
  %8149 = vmatprep.subr.mxu0 0.0
  %8150 = vmatpush1.msra.mxu0 %v333
  %8151 = vmatprep.subr.mxu0 0.0
  %8152 = vmatpush1.msra.mxu0 %v332
  %8153 = vmatprep.subr.mxu0 0.0
  %8154 = vmatpush1.msra.mxu0 %v331
  %8155 = vmatprep.subr.mxu0 0.0
  %8156 = vmatpush1.msra.mxu0 %v330
  %8157 = vmatprep.subr.mxu0 0.0
  %8158 = vmatpush1.msra.mxu0 %v329
  %8159 = vmatprep.subr.mxu0 0.0
  %8160 = vmatpush1.msra.mxu0 %v328
  %8161 = vmatprep.subr.mxu0 0.0
  %8162 = vmatpush1.msra.mxu0 %v327
  %8163 = vmatprep.subr.mxu0 0.0
  %8164 = vmatpush2.msra.mxu0 %v358
  %8165 = vmatprep.subr.mxu0 0.0
  %8166 = vmatpush2.msra.mxu0 %v357
  %8167 = vmatprep.subr.mxu0 0.0
  %8168 = vmatpush2.msra.mxu0 %v356
  %8169 = vmatprep.subr.mxu0 0.0
  %8170 = vmatpush2.msra.mxu0 %v355
  %8171 = vmatprep.subr.mxu0 0.0
  %8172 = vmatpush2.msra.mxu0 %v354
  %8173 = vmatprep.subr.mxu0 0.0
  %8174 = vmatpush2.msra.mxu0 %v353
  %8175 = vmatprep.subr.mxu0 0.0
  %8176 = vmatpush2.msra.mxu0 %v352
  %8177 = vmatprep.subr.mxu0 0.0
  %8178 = vmatpush2.msra.mxu0 %v351
  %8179 = vmatprep.subr.mxu0 0.0
  %8180 = vmatpush2.msra.mxu0 %v350
  %8181 = vmatprep.subr.mxu0 0.0
  %8182 = vmatpush2.msra.mxu0 %v349
  %8183 = vmatprep.subr.mxu0 0.0
  %8184 = vmatpush2.msra.mxu0 %v348
  %8185 = vmatprep.subr.mxu0 0.0
  %8186 = vmatpush2.msra.mxu0 %v347
  %8187 = vmatprep.subr.mxu0 0.0
  %8188 = vmatpush2.msra.mxu0 %v346
  %8189 = vmatprep.subr.mxu0 0.0
  %8190 = vmatpush2.msra.mxu0 %v345
  %8191 = vmatprep.subr.mxu0 0.0
  %8192 = vmatpush2.msra.mxu0 %v344
  %8193 = vmatprep.subr.mxu0 0.0
  %8194 = vmatpush2.msra.mxu0 %v343
  %8195 = vmatprep.mubr.f32.mxu0 %v7451
  %8196 = vmatmul.mubr.f32.gmra.mxu0 %v7449
  %v8197 = vpop.f32.mrf.mxu0
  %v8198 = vadd.f32 %v8128, %v8197
  %v8199 = vpop.f32.mrf.mxu0
  %8200 = vdwg.mxu0
  %8201 = vmatprep.subr.mxu0 0.0
  %8202 = vmatpush1.msra.mxu0 %v374
  %8203 = vmatprep.subr.mxu0 0.0
  %8204 = vmatpush1.msra.mxu0 %v373
  %8205 = vmatprep.subr.mxu0 0.0
  %8206 = vmatpush1.msra.mxu0 %v372
  %8207 = vmatprep.subr.mxu0 0.0
  %8208 = vmatpush1.msra.mxu0 %v371
  %8209 = vmatprep.subr.mxu0 0.0
  %8210 = vmatpush1.msra.mxu0 %v370
  %8211 = vmatprep.subr.mxu0 0.0
  %8212 = vmatpush1.msra.mxu0 %v369
  %8213 = vmatprep.subr.mxu0 0.0
  %8214 = vmatpush1.msra.mxu0 %v368
  %8215 = vmatprep.subr.mxu0 0.0
  %8216 = vmatpush1.msra.mxu0 %v367
  %8217 = vmatprep.subr.mxu0 0.0
  %8218 = vmatpush1.msra.mxu0 %v366
  %8219 = vmatprep.subr.mxu0 0.0
  %8220 = vmatpush1.msra.mxu0 %v365
  %8221 = vmatprep.subr.mxu0 0.0
  %8222 = vmatpush1.msra.mxu0 %v364
  %8223 = vmatprep.subr.mxu0 0.0
  %8224 = vmatpush1.msra.mxu0 %v363
  %8225 = vmatprep.subr.mxu0 0.0
  %8226 = vmatpush1.msra.mxu0 %v362
  %8227 = vmatprep.subr.mxu0 0.0
  %8228 = vmatpush1.msra.mxu0 %v361
  %8229 = vmatprep.subr.mxu0 0.0
  %8230 = vmatpush1.msra.mxu0 %v360
  %8231 = vmatprep.subr.mxu0 0.0
  %8232 = vmatpush1.msra.mxu0 %v359
  %8233 = vmatprep.subr.mxu0 0.0
  %8234 = vmatpush2.msra.mxu0 %v390
  %8235 = vmatprep.subr.mxu0 0.0
  %8236 = vmatpush2.msra.mxu0 %v389
  %8237 = vmatprep.subr.mxu0 0.0
  %8238 = vmatpush2.msra.mxu0 %v388
  %8239 = vmatprep.subr.mxu0 0.0
  %8240 = vmatpush2.msra.mxu0 %v387
  %8241 = vmatprep.subr.mxu0 0.0
  %8242 = vmatpush2.msra.mxu0 %v386
  %8243 = vmatprep.subr.mxu0 0.0
  %8244 = vmatpush2.msra.mxu0 %v385
  %8245 = vmatprep.subr.mxu0 0.0
  %8246 = vmatpush2.msra.mxu0 %v384
  %8247 = vmatprep.subr.mxu0 0.0
  %8248 = vmatpush2.msra.mxu0 %v383
  %8249 = vmatprep.subr.mxu0 0.0
  %8250 = vmatpush2.msra.mxu0 %v382
  %8251 = vmatprep.subr.mxu0 0.0
  %8252 = vmatpush2.msra.mxu0 %v381
  %8253 = vmatprep.subr.mxu0 0.0
  %8254 = vmatpush2.msra.mxu0 %v380
  %8255 = vmatprep.subr.mxu0 0.0
  %8256 = vmatpush2.msra.mxu0 %v379
  %8257 = vmatprep.subr.mxu0 0.0
  %8258 = vmatpush2.msra.mxu0 %v378
  %8259 = vmatprep.subr.mxu0 0.0
  %8260 = vmatpush2.msra.mxu0 %v377
  %8261 = vmatprep.subr.mxu0 0.0
  %8262 = vmatpush2.msra.mxu0 %v376
  %8263 = vmatprep.subr.mxu0 0.0
  %8264 = vmatpush2.msra.mxu0 %v375
  %8265 = vmatprep.mubr.f32.mxu0 %v7467
  %8266 = vmatmul.mubr.f32.gmra.mxu0 %v7459
  %v8267 = vpop.f32.mrf.mxu0
  %v8268 = vadd.f32 %v8198, %v8267
  %v8269 = vpop.f32.mrf.mxu0
  %8270 = vdwg.mxu0
  %8271 = vmatprep.subr.mxu0 0.0
  %8272 = vmatpush1.msra.mxu0 %v406
  %8273 = vmatprep.subr.mxu0 0.0
  %8274 = vmatpush1.msra.mxu0 %v405
  %8275 = vmatprep.subr.mxu0 0.0
  %8276 = vmatpush1.msra.mxu0 %v404
  %8277 = vmatprep.subr.mxu0 0.0
  %8278 = vmatpush1.msra.mxu0 %v403
  %8279 = vmatprep.subr.mxu0 0.0
  %8280 = vmatpush1.msra.mxu0 %v402
  %8281 = vmatprep.subr.mxu0 0.0
  %8282 = vmatpush1.msra.mxu0 %v401
  %8283 = vmatprep.subr.mxu0 0.0
  %8284 = vmatpush1.msra.mxu0 %v400
  %8285 = vmatprep.subr.mxu0 0.0
  %8286 = vmatpush1.msra.mxu0 %v399
  %8287 = vmatprep.subr.mxu0 0.0
  %8288 = vmatpush1.msra.mxu0 %v398
  %8289 = vmatprep.subr.mxu0 0.0
  %8290 = vmatpush1.msra.mxu0 %v397
  %8291 = vmatprep.subr.mxu0 0.0
  %8292 = vmatpush1.msra.mxu0 %v396
  %8293 = vmatprep.subr.mxu0 0.0
  %8294 = vmatpush1.msra.mxu0 %v395
  %8295 = vmatprep.subr.mxu0 0.0
  %8296 = vmatpush1.msra.mxu0 %v394
  %8297 = vmatprep.subr.mxu0 0.0
  %8298 = vmatpush1.msra.mxu0 %v393
  %8299 = vmatprep.subr.mxu0 0.0
  %8300 = vmatpush1.msra.mxu0 %v392
  %8301 = vmatprep.subr.mxu0 0.0
  %8302 = vmatpush1.msra.mxu0 %v391
  %8303 = vmatprep.subr.mxu0 0.0
  %8304 = vmatpush2.msra.mxu0 %v422
  %8305 = vmatprep.subr.mxu0 0.0
  %8306 = vmatpush2.msra.mxu0 %v421
  %8307 = vmatprep.subr.mxu0 0.0
  %8308 = vmatpush2.msra.mxu0 %v420
  %8309 = vmatprep.subr.mxu0 0.0
  %8310 = vmatpush2.msra.mxu0 %v419
  %8311 = vmatprep.subr.mxu0 0.0
  %8312 = vmatpush2.msra.mxu0 %v418
  %8313 = vmatprep.subr.mxu0 0.0
  %8314 = vmatpush2.msra.mxu0 %v417
  %8315 = vmatprep.subr.mxu0 0.0
  %8316 = vmatpush2.msra.mxu0 %v416
  %8317 = vmatprep.subr.mxu0 0.0
  %8318 = vmatpush2.msra.mxu0 %v415
  %8319 = vmatprep.subr.mxu0 0.0
  %8320 = vmatpush2.msra.mxu0 %v414
  %8321 = vmatprep.subr.mxu0 0.0
  %8322 = vmatpush2.msra.mxu0 %v413
  %8323 = vmatprep.subr.mxu0 0.0
  %8324 = vmatpush2.msra.mxu0 %v412
  %8325 = vmatprep.subr.mxu0 0.0
  %8326 = vmatpush2.msra.mxu0 %v411
  %8327 = vmatprep.subr.mxu0 0.0
  %8328 = vmatpush2.msra.mxu0 %v410
  %8329 = vmatprep.subr.mxu0 0.0
  %8330 = vmatpush2.msra.mxu0 %v409
  %8331 = vmatprep.subr.mxu0 0.0
  %8332 = vmatpush2.msra.mxu0 %v408
  %8333 = vmatprep.subr.mxu0 0.0
  %8334 = vmatpush2.msra.mxu0 %v407
  %8335 = vmatprep.mubr.f32.mxu0 %v7468
  %8336 = vmatmul.mubr.f32.gmra.mxu0 %v7466
  %v8337 = vpop.f32.mrf.mxu0
  %v8338 = vadd.f32 %v8268, %v8337
  %v8339 = vpop.f32.mrf.mxu0
  %8340 = vdwg.mxu0
  %8341 = vmatprep.subr.mxu0 0.0
  %8342 = vmatpush1.msra.mxu0 %v438
  %8343 = vmatprep.subr.mxu0 0.0
  %8344 = vmatpush1.msra.mxu0 %v437
  %8345 = vmatprep.subr.mxu0 0.0
  %8346 = vmatpush1.msra.mxu0 %v436
  %8347 = vmatprep.subr.mxu0 0.0
  %8348 = vmatpush1.msra.mxu0 %v435
  %8349 = vmatprep.subr.mxu0 0.0
  %8350 = vmatpush1.msra.mxu0 %v434
  %8351 = vmatprep.subr.mxu0 0.0
  %8352 = vmatpush1.msra.mxu0 %v433
  %8353 = vmatprep.subr.mxu0 0.0
  %8354 = vmatpush1.msra.mxu0 %v432
  %8355 = vmatprep.subr.mxu0 0.0
  %8356 = vmatpush1.msra.mxu0 %v431
  %8357 = vmatprep.subr.mxu0 0.0
  %8358 = vmatpush1.msra.mxu0 %v430
  %8359 = vmatprep.subr.mxu0 0.0
  %8360 = vmatpush1.msra.mxu0 %v429
  %8361 = vmatprep.subr.mxu0 0.0
  %8362 = vmatpush1.msra.mxu0 %v428
  %8363 = vmatprep.subr.mxu0 0.0
  %8364 = vmatpush1.msra.mxu0 %v427
  %8365 = vmatprep.subr.mxu0 0.0
  %8366 = vmatpush1.msra.mxu0 %v426
  %8367 = vmatprep.subr.mxu0 0.0
  %8368 = vmatpush1.msra.mxu0 %v425
  %8369 = vmatprep.subr.mxu0 0.0
  %8370 = vmatpush1.msra.mxu0 %v424
  %8371 = vmatprep.subr.mxu0 0.0
  %8372 = vmatpush1.msra.mxu0 %v423
  %8373 = vmatprep.subr.mxu0 0.0
  %8374 = vmatpush2.msra.mxu0 0.0
  %8375 = vmatprep.subr.mxu0 0.0
  %8376 = vmatpush2.msra.mxu0 0.0
  %8377 = vmatprep.subr.mxu0 0.0
  %8378 = vmatpush2.msra.mxu0 0.0
  %8379 = vmatprep.subr.mxu0 0.0
  %8380 = vmatpush2.msra.mxu0 0.0
  %8381 = vmatprep.subr.mxu0 0.0
  %8382 = vmatpush2.msra.mxu0 0.0
  %8383 = vmatprep.subr.mxu0 0.0
  %8384 = vmatpush2.msra.mxu0 0.0
  %8385 = vmatprep.subr.mxu0 0.0
  %8386 = vmatpush2.msra.mxu0 0.0
  %8387 = vmatprep.subr.mxu0 0.0
  %8388 = vmatpush2.msra.mxu0 0.0
  %8389 = vmatprep.subr.mxu0 0.0
  %8390 = vmatpush2.msra.mxu0 0.0
  %8391 = vmatprep.subr.mxu0 0.0
  %8392 = vmatpush2.msra.mxu0 0.0
  %8393 = vmatprep.subr.mxu0 0.0
  %8394 = vmatpush2.msra.mxu0 0.0
  %8395 = vmatprep.subr.mxu0 0.0
  %8396 = vmatpush2.msra.mxu0 0.0
  %8397 = vmatprep.subr.mxu0 0.0
  %8398 = vmatpush2.msra.mxu0 0.0
  %8399 = vmatprep.subr.mxu0 0.0
  %8400 = vmatpush2.msra.mxu0 0.0
  %8401 = vmatprep.subr.mxu0 0.0
  %8402 = vmatpush2.msra.mxu0 0.0
  %8403 = vmatprep.subr.mxu0 0.0
  %8404 = vmatpush2.msra.mxu0 0.0
  %8405 = vmatprep.mubr.f32.mxu0 0.0
  %8406 = vmatmul.mubr.f32.gmra.mxu0 %v7475
  %v8407 = vpop.f32.mrf.mxu0
  %v8408 = vadd.f32 %v8338, %v8407
  %v8409 = vpop.f32.mrf.mxu0
  %8410 = vdwg.mxu0
  %v8411 = vmax.f32 %v8408, 0.0
  %s8412 = scalar_lea.vmem %s3, 768
  %v8413 = vld [vmem:[%s8412] sm:$0xff]
  %v8414 = vld [vmem:[%s8412 + $0x8] sm:$0xff]
  %v8415 = vld [vmem:[%s8412 + $0x10] sm:$0xff]
  %v8416 = vld [vmem:[%s8412 + $0x18] sm:$0xff]
  %v8417 = vld [vmem:[%s8412 + $0x20] sm:$0xff]
  %v8418 = vld [vmem:[%s8412 + $0x28] sm:$0xff]
  %v8419 = vld [vmem:[%s8412 + $0x30] sm:$0xff]
  %v8420 = vld [vmem:[%s8412 + $0x38] sm:$0xff]
  %v8421 = vld [vmem:[%s8412 + $0x40] sm:$0xff]
  %v8422 = vld [vmem:[%s8412 + $0x48] sm:$0xff]
  %v8423 = vld [vmem:[%s8412 + $0x50] sm:$0xff]
  %v8424 = vld [vmem:[%s8412 + $0x58] sm:$0xff]
  %v8425 = vld [vmem:[%s8412 + $0x60] sm:$0xff]
  %v8426 = vld [vmem:[%s8412 + $0x68] sm:$0xff]
  %v8427 = vld [vmem:[%s8412 + $0x70] sm:$0xff]
  %v8428 = vld [vmem:[%s8412 + $0x78] sm:$0xff]
  %v8430 = vsel %vm2591, %v8411, 0
  %8432 = vmatprep.subr.mxu0 0.0
  %8433 = vmatpush1.msra.mxu0 0.0
  %8434 = vmatprep.subr.mxu0 0.0
  %8435 = vmatpush1.msra.mxu0 0.0
  %8436 = vmatprep.subr.mxu0 0.0
  %8437 = vmatpush1.msra.mxu0 0.0
  %8438 = vmatprep.subr.mxu0 0.0
  %8439 = vmatpush1.msra.mxu0 0.0
  %8440 = vmatprep.subr.mxu0 0.0
  %8441 = vmatpush1.msra.mxu0 0.0
  %8442 = vmatprep.subr.mxu0 0.0
  %8443 = vmatpush1.msra.mxu0 0.0
  %8444 = vmatprep.subr.mxu0 0.0
  %8445 = vmatpush1.msra.mxu0 0.0
  %8446 = vmatprep.subr.mxu0 0.0
  %8447 = vmatpush1.msra.mxu0 0.0
  %8448 = vmatprep.subr.mxu0 %v8428
  %8449 = vmatpush1.msra.mxu0 %v8427
  %8450 = vmatprep.subr.mxu0 %v8426
  %8451 = vmatpush1.msra.mxu0 %v8425
  %8452 = vmatprep.subr.mxu0 %v8424
  %8453 = vmatpush1.msra.mxu0 %v8423
  %8454 = vmatprep.subr.mxu0 %v8422
  %8455 = vmatpush1.msra.mxu0 %v8421
  %8456 = vmatprep.subr.mxu0 %v8420
  %8457 = vmatpush1.msra.mxu0 %v8419
  %8458 = vmatprep.subr.mxu0 %v8418
  %8459 = vmatpush1.msra.mxu0 %v8417
  %8460 = vmatprep.subr.mxu0 %v8416
  %8461 = vmatpush1.msra.mxu0 %v8415
  %8462 = vmatprep.subr.mxu0 %v8414
  %8463 = vmatpush1.msra.mxu0 %v8413
  %8464 = vmatprep.subr.mxu0 0.0
  %8465 = vmatpush2.msra.mxu0 0.0
  %8466 = vmatprep.subr.mxu0 0.0
  %8467 = vmatpush2.msra.mxu0 0.0
  %8468 = vmatprep.subr.mxu0 0.0
  %8469 = vmatpush2.msra.mxu0 0.0
  %8470 = vmatprep.subr.mxu0 0.0
  %8471 = vmatpush2.msra.mxu0 0.0
  %8472 = vmatprep.subr.mxu0 0.0
  %8473 = vmatpush2.msra.mxu0 0.0
  %8474 = vmatprep.subr.mxu0 0.0
  %8475 = vmatpush2.msra.mxu0 0.0
  %8476 = vmatprep.subr.mxu0 0.0
  %8477 = vmatpush2.msra.mxu0 0.0
  %8478 = vmatprep.subr.mxu0 0.0
  %8479 = vmatpush2.msra.mxu0 0.0
  %8480 = vmatprep.subr.mxu0 0.0
  %8481 = vmatpush2.msra.mxu0 0.0
  %8482 = vmatprep.subr.mxu0 0.0
  %8483 = vmatpush2.msra.mxu0 0.0
  %8484 = vmatprep.subr.mxu0 0.0
  %8485 = vmatpush2.msra.mxu0 0.0
  %8486 = vmatprep.subr.mxu0 0.0
  %8487 = vmatpush2.msra.mxu0 0.0
  %8488 = vmatprep.subr.mxu0 0.0
  %8489 = vmatpush2.msra.mxu0 0.0
  %8490 = vmatprep.subr.mxu0 0.0
  %8491 = vmatpush2.msra.mxu0 0.0
  %8492 = vmatprep.subr.mxu0 0.0
  %8493 = vmatpush2.msra.mxu0 0.0
  %8494 = vmatprep.subr.mxu0 0.0
  %8495 = vmatpush2.msra.mxu0 0.0
  %8496 = vmatprep.mubr.f32.mxu0 0.0
  %8497 = vmatmul.mubr.f32.gmra.mxu0 %v8430
  %v8498 = vpop.f32.mrf.mxu0
  %v8499 = vadd.f32 0.0, %v8498
  %v8500 = vpop.f32.mrf.mxu0
  %v8501 = vadd.f32 0.0, %v8500
  %8502 = vdwg.mxu0
  %v8503 = vadd.f32 %v7350, %v8499
  %v8504 = vadd.f32 %v7351, %v8501
  %s8505 = scalar_lea.vmem %s0, 350
  %v8506 = vld [vmem:[%s8505] sm:$0xff]
  %v8507 = vld [vmem:[%s8505 + $0x8] sm:$0xff]
  %v8508 = vld [vmem:[%s8505 + $0x10] sm:$0xff]
  %v8509 = vld [vmem:[%s8505 + $0x18] sm:$0xff]
  %v8510 = vld [vmem:[%s8505 + $0x20] sm:$0xff]
  %v8511 = vld [vmem:[%s8505 + $0x28] sm:$0xff]
  %v8512 = vld [vmem:[%s8505 + $0x30] sm:$0x3]
  %v8520 = vcombine.high %v8506, %v8506
  %v8522 = vunpack.c.l.s4 1983009808
  %v8523 = vunpack.c.0.s8 %v8522
  %v8524 = vlaneseq
  %v8525 = vshrl.u32 %v8524, 7
  %v8526 = vsub.s32 %v8523, %v8525
  %v8527 = vrot.slane %v8506, %v8526
  %v8529 = vunpack.c.l.s4 1983009808
  %v8530 = vunpack.c.0.s8 %v8529
  %v8531 = vlaneseq
  %v8532 = vshrl.u32 %v8531, 7
  %v8533 = vsub.s32 %v8530, %v8532
  %v8534 = vrot.slane %v8520, %v8533
  %v8535 = vcombine.high %v8527, %v8527
  %v8536 = vcombine.high %v8534, %v8534
  %v8537 = vcombine.high %v8507, %v8507
  %v8539 = vunpack.c.l.s4 1983009808
  %v8540 = vunpack.c.0.s8 %v8539
  %v8541 = vlaneseq
  %v8542 = vshrl.u32 %v8541, 7
  %v8543 = vsub.s32 %v8540, %v8542
  %v8544 = vrot.slane %v8507, %v8543
  %v8546 = vunpack.c.l.s4 1983009808
  %v8547 = vunpack.c.0.s8 %v8546
  %v8548 = vlaneseq
  %v8549 = vshrl.u32 %v8548, 7
  %v8550 = vsub.s32 %v8547, %v8549
  %v8551 = vrot.slane %v8537, %v8550
  %v8552 = vcombine.high %v8544, %v8544
  %v8553 = vcombine.high %v8551, %v8551
  %v8554 = vcombine.high %v8508, %v8508
  %v8556 = vunpack.c.l.s4 1983009808
  %v8557 = vunpack.c.0.s8 %v8556
  %v8558 = vlaneseq
  %v8559 = vshrl.u32 %v8558, 7
  %v8560 = vsub.s32 %v8557, %v8559
  %v8561 = vrot.slane %v8508, %v8560
  %v8563 = vunpack.c.l.s4 1983009808
  %v8564 = vunpack.c.0.s8 %v8563
  %v8565 = vlaneseq
  %v8566 = vshrl.u32 %v8565, 7
  %v8567 = vsub.s32 %v8564, %v8566
  %v8568 = vrot.slane %v8554, %v8567
  %v8569 = vcombine.high %v8561, %v8561
  %v8570 = vcombine.high %v8568, %v8568
  %v8571 = vcombine.high %v8509, %v8509
  %v8573 = vunpack.c.l.s4 1983009808
  %v8574 = vunpack.c.0.s8 %v8573
  %v8575 = vlaneseq
  %v8576 = vshrl.u32 %v8575, 7
  %v8577 = vsub.s32 %v8574, %v8576
  %v8578 = vrot.slane %v8509, %v8577
  %v8580 = vunpack.c.l.s4 1983009808
  %v8581 = vunpack.c.0.s8 %v8580
  %v8582 = vlaneseq
  %v8583 = vshrl.u32 %v8582, 7
  %v8584 = vsub.s32 %v8581, %v8583
  %v8585 = vrot.slane %v8571, %v8584
  %v8586 = vcombine.high %v8578, %v8578
  %v8587 = vcombine.high %v8585, %v8585
  %v8588 = vcombine.high %v8510, %v8510
  %v8590 = vunpack.c.l.s4 1983009808
  %v8591 = vunpack.c.0.s8 %v8590
  %v8592 = vlaneseq
  %v8593 = vshrl.u32 %v8592, 7
  %v8594 = vsub.s32 %v8591, %v8593
  %v8595 = vrot.slane %v8510, %v8594
  %v8597 = vunpack.c.l.s4 1983009808
  %v8598 = vunpack.c.0.s8 %v8597
  %v8599 = vlaneseq
  %v8600 = vshrl.u32 %v8599, 7
  %v8601 = vsub.s32 %v8598, %v8600
  %v8602 = vrot.slane %v8588, %v8601
  %v8603 = vcombine.high %v8595, %v8595
  %v8604 = vcombine.high %v8602, %v8602
  %v8605 = vcombine.high %v8511, %v8511
  %v8607 = vunpack.c.l.s4 1983009808
  %v8608 = vunpack.c.0.s8 %v8607
  %v8609 = vlaneseq
  %v8610 = vshrl.u32 %v8609, 7
  %v8611 = vsub.s32 %v8608, %v8610
  %v8612 = vrot.slane %v8511, %v8611
  %v8614 = vunpack.c.l.s4 1983009808
  %v8615 = vunpack.c.0.s8 %v8614
  %v8616 = vlaneseq
  %v8617 = vshrl.u32 %v8616, 7
  %v8618 = vsub.s32 %v8615, %v8617
  %v8619 = vrot.slane %v8605, %v8618
  %v8620 = vcombine.high %v8612, %v8612
  %v8621 = vcombine.high %v8619, %v8619
  %v8623 = vunpack.c.l.s4 1983009808
  %v8624 = vunpack.c.0.s8 %v8623
  %v8625 = vlaneseq
  %v8626 = vshrl.u32 %v8625, 7
  %v8627 = vsub.s32 %v8624, %v8626
  %v8628 = vrot.slane %v8512, %v8627
  %8654 = vmatprep.subr.mxu0 0.0
  %8655 = vmatpush1.msra.mxu0 %v54
  %8656 = vmatprep.subr.mxu0 0.0
  %8657 = vmatpush1.msra.mxu0 %v53
  %8658 = vmatprep.subr.mxu0 0.0
  %8659 = vmatpush1.msra.mxu0 %v52
  %8660 = vmatprep.subr.mxu0 0.0
  %8661 = vmatpush1.msra.mxu0 %v51
  %8662 = vmatprep.subr.mxu0 0.0
  %8663 = vmatpush1.msra.mxu0 %v50
  %8664 = vmatprep.subr.mxu0 0.0
  %8665 = vmatpush1.msra.mxu0 %v49
  %8666 = vmatprep.subr.mxu0 0.0
  %8667 = vmatpush1.msra.mxu0 %v48
  %8668 = vmatprep.subr.mxu0 0.0
  %8669 = vmatpush1.msra.mxu0 %v47
  %8670 = vmatprep.subr.mxu0 0.0
  %8671 = vmatpush1.msra.mxu0 %v46
  %8672 = vmatprep.subr.mxu0 0.0
  %8673 = vmatpush1.msra.mxu0 %v45
  %8674 = vmatprep.subr.mxu0 0.0
  %8675 = vmatpush1.msra.mxu0 %v44
  %8676 = vmatprep.subr.mxu0 0.0
  %8677 = vmatpush1.msra.mxu0 %v43
  %8678 = vmatprep.subr.mxu0 0.0
  %8679 = vmatpush1.msra.mxu0 %v42
  %8680 = vmatprep.subr.mxu0 0.0
  %8681 = vmatpush1.msra.mxu0 %v41
  %8682 = vmatprep.subr.mxu0 0.0
  %8683 = vmatpush1.msra.mxu0 %v40
  %8684 = vmatprep.subr.mxu0 0.0
  %8685 = vmatpush1.msra.mxu0 %v39
  %8686 = vmatprep.subr.mxu0 0.0
  %8687 = vmatpush2.msra.mxu0 %v70
  %8688 = vmatprep.subr.mxu0 0.0
  %8689 = vmatpush2.msra.mxu0 %v69
  %8690 = vmatprep.subr.mxu0 0.0
  %8691 = vmatpush2.msra.mxu0 %v68
  %8692 = vmatprep.subr.mxu0 0.0
  %8693 = vmatpush2.msra.mxu0 %v67
  %8694 = vmatprep.subr.mxu0 0.0
  %8695 = vmatpush2.msra.mxu0 %v66
  %8696 = vmatprep.subr.mxu0 0.0
  %8697 = vmatpush2.msra.mxu0 %v65
  %8698 = vmatprep.subr.mxu0 0.0
  %8699 = vmatpush2.msra.mxu0 %v64
  %8700 = vmatprep.subr.mxu0 0.0
  %8701 = vmatpush2.msra.mxu0 %v63
  %8702 = vmatprep.subr.mxu0 0.0
  %8703 = vmatpush2.msra.mxu0 %v62
  %8704 = vmatprep.subr.mxu0 0.0
  %8705 = vmatpush2.msra.mxu0 %v61
  %8706 = vmatprep.subr.mxu0 0.0
  %8707 = vmatpush2.msra.mxu0 %v60
  %8708 = vmatprep.subr.mxu0 0.0
  %8709 = vmatpush2.msra.mxu0 %v59
  %8710 = vmatprep.subr.mxu0 0.0
  %8711 = vmatpush2.msra.mxu0 %v58
  %8712 = vmatprep.subr.mxu0 0.0
  %8713 = vmatpush2.msra.mxu0 %v57
  %8714 = vmatprep.subr.mxu0 0.0
  %8715 = vmatpush2.msra.mxu0 %v56
  %8716 = vmatprep.subr.mxu0 0.0
  %8717 = vmatpush2.msra.mxu0 %v55
  %8718 = vmatprep.mubr.f32.mxu0 %v8535
  %8719 = vmatmul.mubr.f32.gmra.mxu0 %v8527
  %v8720 = vpop.f32.mrf.mxu0
  %v8721 = vadd.f32 %v444, %v8720
  %v8722 = vpop.f32.mrf.mxu0
  %8723 = vdwg.mxu0
  %8724 = vmatprep.subr.mxu0 0.0
  %8725 = vmatpush1.msra.mxu0 %v86
  %8726 = vmatprep.subr.mxu0 0.0
  %8727 = vmatpush1.msra.mxu0 %v85
  %8728 = vmatprep.subr.mxu0 0.0
  %8729 = vmatpush1.msra.mxu0 %v84
  %8730 = vmatprep.subr.mxu0 0.0
  %8731 = vmatpush1.msra.mxu0 %v83
  %8732 = vmatprep.subr.mxu0 0.0
  %8733 = vmatpush1.msra.mxu0 %v82
  %8734 = vmatprep.subr.mxu0 0.0
  %8735 = vmatpush1.msra.mxu0 %v81
  %8736 = vmatprep.subr.mxu0 0.0
  %8737 = vmatpush1.msra.mxu0 %v80
  %8738 = vmatprep.subr.mxu0 0.0
  %8739 = vmatpush1.msra.mxu0 %v79
  %8740 = vmatprep.subr.mxu0 0.0
  %8741 = vmatpush1.msra.mxu0 %v78
  %8742 = vmatprep.subr.mxu0 0.0
  %8743 = vmatpush1.msra.mxu0 %v77
  %8744 = vmatprep.subr.mxu0 0.0
  %8745 = vmatpush1.msra.mxu0 %v76
  %8746 = vmatprep.subr.mxu0 0.0
  %8747 = vmatpush1.msra.mxu0 %v75
  %8748 = vmatprep.subr.mxu0 0.0
  %8749 = vmatpush1.msra.mxu0 %v74
  %8750 = vmatprep.subr.mxu0 0.0
  %8751 = vmatpush1.msra.mxu0 %v73
  %8752 = vmatprep.subr.mxu0 0.0
  %8753 = vmatpush1.msra.mxu0 %v72
  %8754 = vmatprep.subr.mxu0 0.0
  %8755 = vmatpush1.msra.mxu0 %v71
  %8756 = vmatprep.subr.mxu0 0.0
  %8757 = vmatpush2.msra.mxu0 %v102
  %8758 = vmatprep.subr.mxu0 0.0
  %8759 = vmatpush2.msra.mxu0 %v101
  %8760 = vmatprep.subr.mxu0 0.0
  %8761 = vmatpush2.msra.mxu0 %v100
  %8762 = vmatprep.subr.mxu0 0.0
  %8763 = vmatpush2.msra.mxu0 %v99
  %8764 = vmatprep.subr.mxu0 0.0
  %8765 = vmatpush2.msra.mxu0 %v98
  %8766 = vmatprep.subr.mxu0 0.0
  %8767 = vmatpush2.msra.mxu0 %v97
  %8768 = vmatprep.subr.mxu0 0.0
  %8769 = vmatpush2.msra.mxu0 %v96
  %8770 = vmatprep.subr.mxu0 0.0
  %8771 = vmatpush2.msra.mxu0 %v95
  %8772 = vmatprep.subr.mxu0 0.0
  %8773 = vmatpush2.msra.mxu0 %v94
  %8774 = vmatprep.subr.mxu0 0.0
  %8775 = vmatpush2.msra.mxu0 %v93
  %8776 = vmatprep.subr.mxu0 0.0
  %8777 = vmatpush2.msra.mxu0 %v92
  %8778 = vmatprep.subr.mxu0 0.0
  %8779 = vmatpush2.msra.mxu0 %v91
  %8780 = vmatprep.subr.mxu0 0.0
  %8781 = vmatpush2.msra.mxu0 %v90
  %8782 = vmatprep.subr.mxu0 0.0
  %8783 = vmatpush2.msra.mxu0 %v89
  %8784 = vmatprep.subr.mxu0 0.0
  %8785 = vmatpush2.msra.mxu0 %v88
  %8786 = vmatprep.subr.mxu0 0.0
  %8787 = vmatpush2.msra.mxu0 %v87
  %8788 = vmatprep.mubr.f32.mxu0 %v8536
  %8789 = vmatmul.mubr.f32.gmra.mxu0 %v8534
  %v8790 = vpop.f32.mrf.mxu0
  %v8791 = vadd.f32 %v8721, %v8790
  %v8792 = vpop.f32.mrf.mxu0
  %8793 = vdwg.mxu0
  %8794 = vmatprep.subr.mxu0 0.0
  %8795 = vmatpush1.msra.mxu0 %v118
  %8796 = vmatprep.subr.mxu0 0.0
  %8797 = vmatpush1.msra.mxu0 %v117
  %8798 = vmatprep.subr.mxu0 0.0
  %8799 = vmatpush1.msra.mxu0 %v116
  %8800 = vmatprep.subr.mxu0 0.0
  %8801 = vmatpush1.msra.mxu0 %v115
  %8802 = vmatprep.subr.mxu0 0.0
  %8803 = vmatpush1.msra.mxu0 %v114
  %8804 = vmatprep.subr.mxu0 0.0
  %8805 = vmatpush1.msra.mxu0 %v113
  %8806 = vmatprep.subr.mxu0 0.0
  %8807 = vmatpush1.msra.mxu0 %v112
  %8808 = vmatprep.subr.mxu0 0.0
  %8809 = vmatpush1.msra.mxu0 %v111
  %8810 = vmatprep.subr.mxu0 0.0
  %8811 = vmatpush1.msra.mxu0 %v110
  %8812 = vmatprep.subr.mxu0 0.0
  %8813 = vmatpush1.msra.mxu0 %v109
  %8814 = vmatprep.subr.mxu0 0.0
  %8815 = vmatpush1.msra.mxu0 %v108
  %8816 = vmatprep.subr.mxu0 0.0
  %8817 = vmatpush1.msra.mxu0 %v107
  %8818 = vmatprep.subr.mxu0 0.0
  %8819 = vmatpush1.msra.mxu0 %v106
  %8820 = vmatprep.subr.mxu0 0.0
  %8821 = vmatpush1.msra.mxu0 %v105
  %8822 = vmatprep.subr.mxu0 0.0
  %8823 = vmatpush1.msra.mxu0 %v104
  %8824 = vmatprep.subr.mxu0 0.0
  %8825 = vmatpush1.msra.mxu0 %v103
  %8826 = vmatprep.subr.mxu0 0.0
  %8827 = vmatpush2.msra.mxu0 %v134
  %8828 = vmatprep.subr.mxu0 0.0
  %8829 = vmatpush2.msra.mxu0 %v133
  %8830 = vmatprep.subr.mxu0 0.0
  %8831 = vmatpush2.msra.mxu0 %v132
  %8832 = vmatprep.subr.mxu0 0.0
  %8833 = vmatpush2.msra.mxu0 %v131
  %8834 = vmatprep.subr.mxu0 0.0
  %8835 = vmatpush2.msra.mxu0 %v130
  %8836 = vmatprep.subr.mxu0 0.0
  %8837 = vmatpush2.msra.mxu0 %v129
  %8838 = vmatprep.subr.mxu0 0.0
  %8839 = vmatpush2.msra.mxu0 %v128
  %8840 = vmatprep.subr.mxu0 0.0
  %8841 = vmatpush2.msra.mxu0 %v127
  %8842 = vmatprep.subr.mxu0 0.0
  %8843 = vmatpush2.msra.mxu0 %v126
  %8844 = vmatprep.subr.mxu0 0.0
  %8845 = vmatpush2.msra.mxu0 %v125
  %8846 = vmatprep.subr.mxu0 0.0
  %8847 = vmatpush2.msra.mxu0 %v124
  %8848 = vmatprep.subr.mxu0 0.0
  %8849 = vmatpush2.msra.mxu0 %v123
  %8850 = vmatprep.subr.mxu0 0.0
  %8851 = vmatpush2.msra.mxu0 %v122
  %8852 = vmatprep.subr.mxu0 0.0
  %8853 = vmatpush2.msra.mxu0 %v121
  %8854 = vmatprep.subr.mxu0 0.0
  %8855 = vmatpush2.msra.mxu0 %v120
  %8856 = vmatprep.subr.mxu0 0.0
  %8857 = vmatpush2.msra.mxu0 %v119
  %8858 = vmatprep.mubr.f32.mxu0 %v8552
  %8859 = vmatmul.mubr.f32.gmra.mxu0 %v8544
  %v8860 = vpop.f32.mrf.mxu0
  %v8861 = vadd.f32 %v8791, %v8860
  %v8862 = vpop.f32.mrf.mxu0
  %8863 = vdwg.mxu0
  %8864 = vmatprep.subr.mxu0 0.0
  %8865 = vmatpush1.msra.mxu0 %v150
  %8866 = vmatprep.subr.mxu0 0.0
  %8867 = vmatpush1.msra.mxu0 %v149
  %8868 = vmatprep.subr.mxu0 0.0
  %8869 = vmatpush1.msra.mxu0 %v148
  %8870 = vmatprep.subr.mxu0 0.0
  %8871 = vmatpush1.msra.mxu0 %v147
  %8872 = vmatprep.subr.mxu0 0.0
  %8873 = vmatpush1.msra.mxu0 %v146
  %8874 = vmatprep.subr.mxu0 0.0
  %8875 = vmatpush1.msra.mxu0 %v145
  %8876 = vmatprep.subr.mxu0 0.0
  %8877 = vmatpush1.msra.mxu0 %v144
  %8878 = vmatprep.subr.mxu0 0.0
  %8879 = vmatpush1.msra.mxu0 %v143
  %8880 = vmatprep.subr.mxu0 0.0
  %8881 = vmatpush1.msra.mxu0 %v142
  %8882 = vmatprep.subr.mxu0 0.0
  %8883 = vmatpush1.msra.mxu0 %v141
  %8884 = vmatprep.subr.mxu0 0.0
  %8885 = vmatpush1.msra.mxu0 %v140
  %8886 = vmatprep.subr.mxu0 0.0
  %8887 = vmatpush1.msra.mxu0 %v139
  %8888 = vmatprep.subr.mxu0 0.0
  %8889 = vmatpush1.msra.mxu0 %v138
  %8890 = vmatprep.subr.mxu0 0.0
  %8891 = vmatpush1.msra.mxu0 %v137
  %8892 = vmatprep.subr.mxu0 0.0
  %8893 = vmatpush1.msra.mxu0 %v136
  %8894 = vmatprep.subr.mxu0 0.0
  %8895 = vmatpush1.msra.mxu0 %v135
  %8896 = vmatprep.subr.mxu0 0.0
  %8897 = vmatpush2.msra.mxu0 %v166
  %8898 = vmatprep.subr.mxu0 0.0
  %8899 = vmatpush2.msra.mxu0 %v165
  %8900 = vmatprep.subr.mxu0 0.0
  %8901 = vmatpush2.msra.mxu0 %v164
  %8902 = vmatprep.subr.mxu0 0.0
  %8903 = vmatpush2.msra.mxu0 %v163
  %8904 = vmatprep.subr.mxu0 0.0
  %8905 = vmatpush2.msra.mxu0 %v162
  %8906 = vmatprep.subr.mxu0 0.0
  %8907 = vmatpush2.msra.mxu0 %v161
  %8908 = vmatprep.subr.mxu0 0.0
  %8909 = vmatpush2.msra.mxu0 %v160
  %8910 = vmatprep.subr.mxu0 0.0
  %8911 = vmatpush2.msra.mxu0 %v159
  %8912 = vmatprep.subr.mxu0 0.0
  %8913 = vmatpush2.msra.mxu0 %v158
  %8914 = vmatprep.subr.mxu0 0.0
  %8915 = vmatpush2.msra.mxu0 %v157
  %8916 = vmatprep.subr.mxu0 0.0
  %8917 = vmatpush2.msra.mxu0 %v156
  %8918 = vmatprep.subr.mxu0 0.0
  %8919 = vmatpush2.msra.mxu0 %v155
  %8920 = vmatprep.subr.mxu0 0.0
  %8921 = vmatpush2.msra.mxu0 %v154
  %8922 = vmatprep.subr.mxu0 0.0
  %8923 = vmatpush2.msra.mxu0 %v153
  %8924 = vmatprep.subr.mxu0 0.0
  %8925 = vmatpush2.msra.mxu0 %v152
  %8926 = vmatprep.subr.mxu0 0.0
  %8927 = vmatpush2.msra.mxu0 %v151
  %8928 = vmatprep.mubr.f32.mxu0 %v8553
  %8929 = vmatmul.mubr.f32.gmra.mxu0 %v8551
  %v8930 = vpop.f32.mrf.mxu0
  %v8931 = vadd.f32 %v8861, %v8930
  %v8932 = vpop.f32.mrf.mxu0
  %8933 = vdwg.mxu0
  %8934 = vmatprep.subr.mxu0 0.0
  %8935 = vmatpush1.msra.mxu0 %v182
  %8936 = vmatprep.subr.mxu0 0.0
  %8937 = vmatpush1.msra.mxu0 %v181
  %8938 = vmatprep.subr.mxu0 0.0
  %8939 = vmatpush1.msra.mxu0 %v180
  %8940 = vmatprep.subr.mxu0 0.0
  %8941 = vmatpush1.msra.mxu0 %v179
  %8942 = vmatprep.subr.mxu0 0.0
  %8943 = vmatpush1.msra.mxu0 %v178
  %8944 = vmatprep.subr.mxu0 0.0
  %8945 = vmatpush1.msra.mxu0 %v177
  %8946 = vmatprep.subr.mxu0 0.0
  %8947 = vmatpush1.msra.mxu0 %v176
  %8948 = vmatprep.subr.mxu0 0.0
  %8949 = vmatpush1.msra.mxu0 %v175
  %8950 = vmatprep.subr.mxu0 0.0
  %8951 = vmatpush1.msra.mxu0 %v174
  %8952 = vmatprep.subr.mxu0 0.0
  %8953 = vmatpush1.msra.mxu0 %v173
  %8954 = vmatprep.subr.mxu0 0.0
  %8955 = vmatpush1.msra.mxu0 %v172
  %8956 = vmatprep.subr.mxu0 0.0
  %8957 = vmatpush1.msra.mxu0 %v171
  %8958 = vmatprep.subr.mxu0 0.0
  %8959 = vmatpush1.msra.mxu0 %v170
  %8960 = vmatprep.subr.mxu0 0.0
  %8961 = vmatpush1.msra.mxu0 %v169
  %8962 = vmatprep.subr.mxu0 0.0
  %8963 = vmatpush1.msra.mxu0 %v168
  %8964 = vmatprep.subr.mxu0 0.0
  %8965 = vmatpush1.msra.mxu0 %v167
  %8966 = vmatprep.subr.mxu0 0.0
  %8967 = vmatpush2.msra.mxu0 %v198
  %8968 = vmatprep.subr.mxu0 0.0
  %8969 = vmatpush2.msra.mxu0 %v197
  %8970 = vmatprep.subr.mxu0 0.0
  %8971 = vmatpush2.msra.mxu0 %v196
  %8972 = vmatprep.subr.mxu0 0.0
  %8973 = vmatpush2.msra.mxu0 %v195
  %8974 = vmatprep.subr.mxu0 0.0
  %8975 = vmatpush2.msra.mxu0 %v194
  %8976 = vmatprep.subr.mxu0 0.0
  %8977 = vmatpush2.msra.mxu0 %v193
  %8978 = vmatprep.subr.mxu0 0.0
  %8979 = vmatpush2.msra.mxu0 %v192
  %8980 = vmatprep.subr.mxu0 0.0
  %8981 = vmatpush2.msra.mxu0 %v191
  %8982 = vmatprep.subr.mxu0 0.0
  %8983 = vmatpush2.msra.mxu0 %v190
  %8984 = vmatprep.subr.mxu0 0.0
  %8985 = vmatpush2.msra.mxu0 %v189
  %8986 = vmatprep.subr.mxu0 0.0
  %8987 = vmatpush2.msra.mxu0 %v188
  %8988 = vmatprep.subr.mxu0 0.0
  %8989 = vmatpush2.msra.mxu0 %v187
  %8990 = vmatprep.subr.mxu0 0.0
  %8991 = vmatpush2.msra.mxu0 %v186
  %8992 = vmatprep.subr.mxu0 0.0
  %8993 = vmatpush2.msra.mxu0 %v185
  %8994 = vmatprep.subr.mxu0 0.0
  %8995 = vmatpush2.msra.mxu0 %v184
  %8996 = vmatprep.subr.mxu0 0.0
  %8997 = vmatpush2.msra.mxu0 %v183
  %8998 = vmatprep.mubr.f32.mxu0 %v8569
  %8999 = vmatmul.mubr.f32.gmra.mxu0 %v8561
  %v9000 = vpop.f32.mrf.mxu0
  %v9001 = vadd.f32 %v8931, %v9000
  %v9002 = vpop.f32.mrf.mxu0
  %9003 = vdwg.mxu0
  %9004 = vmatprep.subr.mxu0 0.0
  %9005 = vmatpush1.msra.mxu0 %v214
  %9006 = vmatprep.subr.mxu0 0.0
  %9007 = vmatpush1.msra.mxu0 %v213
  %9008 = vmatprep.subr.mxu0 0.0
  %9009 = vmatpush1.msra.mxu0 %v212
  %9010 = vmatprep.subr.mxu0 0.0
  %9011 = vmatpush1.msra.mxu0 %v211
  %9012 = vmatprep.subr.mxu0 0.0
  %9013 = vmatpush1.msra.mxu0 %v210
  %9014 = vmatprep.subr.mxu0 0.0
  %9015 = vmatpush1.msra.mxu0 %v209
  %9016 = vmatprep.subr.mxu0 0.0
  %9017 = vmatpush1.msra.mxu0 %v208
  %9018 = vmatprep.subr.mxu0 0.0
  %9019 = vmatpush1.msra.mxu0 %v207
  %9020 = vmatprep.subr.mxu0 0.0
  %9021 = vmatpush1.msra.mxu0 %v206
  %9022 = vmatprep.subr.mxu0 0.0
  %9023 = vmatpush1.msra.mxu0 %v205
  %9024 = vmatprep.subr.mxu0 0.0
  %9025 = vmatpush1.msra.mxu0 %v204
  %9026 = vmatprep.subr.mxu0 0.0
  %9027 = vmatpush1.msra.mxu0 %v203
  %9028 = vmatprep.subr.mxu0 0.0
  %9029 = vmatpush1.msra.mxu0 %v202
  %9030 = vmatprep.subr.mxu0 0.0
  %9031 = vmatpush1.msra.mxu0 %v201
  %9032 = vmatprep.subr.mxu0 0.0
  %9033 = vmatpush1.msra.mxu0 %v200
  %9034 = vmatprep.subr.mxu0 0.0
  %9035 = vmatpush1.msra.mxu0 %v199
  %9036 = vmatprep.subr.mxu0 0.0
  %9037 = vmatpush2.msra.mxu0 %v230
  %9038 = vmatprep.subr.mxu0 0.0
  %9039 = vmatpush2.msra.mxu0 %v229
  %9040 = vmatprep.subr.mxu0 0.0
  %9041 = vmatpush2.msra.mxu0 %v228
  %9042 = vmatprep.subr.mxu0 0.0
  %9043 = vmatpush2.msra.mxu0 %v227
  %9044 = vmatprep.subr.mxu0 0.0
  %9045 = vmatpush2.msra.mxu0 %v226
  %9046 = vmatprep.subr.mxu0 0.0
  %9047 = vmatpush2.msra.mxu0 %v225
  %9048 = vmatprep.subr.mxu0 0.0
  %9049 = vmatpush2.msra.mxu0 %v224
  %9050 = vmatprep.subr.mxu0 0.0
  %9051 = vmatpush2.msra.mxu0 %v223
  %9052 = vmatprep.subr.mxu0 0.0
  %9053 = vmatpush2.msra.mxu0 %v222
  %9054 = vmatprep.subr.mxu0 0.0
  %9055 = vmatpush2.msra.mxu0 %v221
  %9056 = vmatprep.subr.mxu0 0.0
  %9057 = vmatpush2.msra.mxu0 %v220
  %9058 = vmatprep.subr.mxu0 0.0
  %9059 = vmatpush2.msra.mxu0 %v219
  %9060 = vmatprep.subr.mxu0 0.0
  %9061 = vmatpush2.msra.mxu0 %v218
  %9062 = vmatprep.subr.mxu0 0.0
  %9063 = vmatpush2.msra.mxu0 %v217
  %9064 = vmatprep.subr.mxu0 0.0
  %9065 = vmatpush2.msra.mxu0 %v216
  %9066 = vmatprep.subr.mxu0 0.0
  %9067 = vmatpush2.msra.mxu0 %v215
  %9068 = vmatprep.mubr.f32.mxu0 %v8570
  %9069 = vmatmul.mubr.f32.gmra.mxu0 %v8568
  %v9070 = vpop.f32.mrf.mxu0
  %v9071 = vadd.f32 %v9001, %v9070
  %v9072 = vpop.f32.mrf.mxu0
  %9073 = vdwg.mxu0
  %9074 = vmatprep.subr.mxu0 0.0
  %9075 = vmatpush1.msra.mxu0 %v246
  %9076 = vmatprep.subr.mxu0 0.0
  %9077 = vmatpush1.msra.mxu0 %v245
  %9078 = vmatprep.subr.mxu0 0.0
  %9079 = vmatpush1.msra.mxu0 %v244
  %9080 = vmatprep.subr.mxu0 0.0
  %9081 = vmatpush1.msra.mxu0 %v243
  %9082 = vmatprep.subr.mxu0 0.0
  %9083 = vmatpush1.msra.mxu0 %v242
  %9084 = vmatprep.subr.mxu0 0.0
  %9085 = vmatpush1.msra.mxu0 %v241
  %9086 = vmatprep.subr.mxu0 0.0
  %9087 = vmatpush1.msra.mxu0 %v240
  %9088 = vmatprep.subr.mxu0 0.0
  %9089 = vmatpush1.msra.mxu0 %v239
  %9090 = vmatprep.subr.mxu0 0.0
  %9091 = vmatpush1.msra.mxu0 %v238
  %9092 = vmatprep.subr.mxu0 0.0
  %9093 = vmatpush1.msra.mxu0 %v237
  %9094 = vmatprep.subr.mxu0 0.0
  %9095 = vmatpush1.msra.mxu0 %v236
  %9096 = vmatprep.subr.mxu0 0.0
  %9097 = vmatpush1.msra.mxu0 %v235
  %9098 = vmatprep.subr.mxu0 0.0
  %9099 = vmatpush1.msra.mxu0 %v234
  %9100 = vmatprep.subr.mxu0 0.0
  %9101 = vmatpush1.msra.mxu0 %v233
  %9102 = vmatprep.subr.mxu0 0.0
  %9103 = vmatpush1.msra.mxu0 %v232
  %9104 = vmatprep.subr.mxu0 0.0
  %9105 = vmatpush1.msra.mxu0 %v231
  %9106 = vmatprep.subr.mxu0 0.0
  %9107 = vmatpush2.msra.mxu0 %v262
  %9108 = vmatprep.subr.mxu0 0.0
  %9109 = vmatpush2.msra.mxu0 %v261
  %9110 = vmatprep.subr.mxu0 0.0
  %9111 = vmatpush2.msra.mxu0 %v260
  %9112 = vmatprep.subr.mxu0 0.0
  %9113 = vmatpush2.msra.mxu0 %v259
  %9114 = vmatprep.subr.mxu0 0.0
  %9115 = vmatpush2.msra.mxu0 %v258
  %9116 = vmatprep.subr.mxu0 0.0
  %9117 = vmatpush2.msra.mxu0 %v257
  %9118 = vmatprep.subr.mxu0 0.0
  %9119 = vmatpush2.msra.mxu0 %v256
  %9120 = vmatprep.subr.mxu0 0.0
  %9121 = vmatpush2.msra.mxu0 %v255
  %9122 = vmatprep.subr.mxu0 0.0
  %9123 = vmatpush2.msra.mxu0 %v254
  %9124 = vmatprep.subr.mxu0 0.0
  %9125 = vmatpush2.msra.mxu0 %v253
  %9126 = vmatprep.subr.mxu0 0.0
  %9127 = vmatpush2.msra.mxu0 %v252
  %9128 = vmatprep.subr.mxu0 0.0
  %9129 = vmatpush2.msra.mxu0 %v251
  %9130 = vmatprep.subr.mxu0 0.0
  %9131 = vmatpush2.msra.mxu0 %v250
  %9132 = vmatprep.subr.mxu0 0.0
  %9133 = vmatpush2.msra.mxu0 %v249
  %9134 = vmatprep.subr.mxu0 0.0
  %9135 = vmatpush2.msra.mxu0 %v248
  %9136 = vmatprep.subr.mxu0 0.0
  %9137 = vmatpush2.msra.mxu0 %v247
  %9138 = vmatprep.mubr.f32.mxu0 %v8586
  %9139 = vmatmul.mubr.f32.gmra.mxu0 %v8578
  %v9140 = vpop.f32.mrf.mxu0
  %v9141 = vadd.f32 %v9071, %v9140
  %v9142 = vpop.f32.mrf.mxu0
  %9143 = vdwg.mxu0
  %9144 = vmatprep.subr.mxu0 0.0
  %9145 = vmatpush1.msra.mxu0 %v278
  %9146 = vmatprep.subr.mxu0 0.0
  %9147 = vmatpush1.msra.mxu0 %v277
  %9148 = vmatprep.subr.mxu0 0.0
  %9149 = vmatpush1.msra.mxu0 %v276
  %9150 = vmatprep.subr.mxu0 0.0
  %9151 = vmatpush1.msra.mxu0 %v275
  %9152 = vmatprep.subr.mxu0 0.0
  %9153 = vmatpush1.msra.mxu0 %v274
  %9154 = vmatprep.subr.mxu0 0.0
  %9155 = vmatpush1.msra.mxu0 %v273
  %9156 = vmatprep.subr.mxu0 0.0
  %9157 = vmatpush1.msra.mxu0 %v272
  %9158 = vmatprep.subr.mxu0 0.0
  %9159 = vmatpush1.msra.mxu0 %v271
  %9160 = vmatprep.subr.mxu0 0.0
  %9161 = vmatpush1.msra.mxu0 %v270
  %9162 = vmatprep.subr.mxu0 0.0
  %9163 = vmatpush1.msra.mxu0 %v269
  %9164 = vmatprep.subr.mxu0 0.0
  %9165 = vmatpush1.msra.mxu0 %v268
  %9166 = vmatprep.subr.mxu0 0.0
  %9167 = vmatpush1.msra.mxu0 %v267
  %9168 = vmatprep.subr.mxu0 0.0
  %9169 = vmatpush1.msra.mxu0 %v266
  %9170 = vmatprep.subr.mxu0 0.0
  %9171 = vmatpush1.msra.mxu0 %v265
  %9172 = vmatprep.subr.mxu0 0.0
  %9173 = vmatpush1.msra.mxu0 %v264
  %9174 = vmatprep.subr.mxu0 0.0
  %9175 = vmatpush1.msra.mxu0 %v263
  %9176 = vmatprep.subr.mxu0 0.0
  %9177 = vmatpush2.msra.mxu0 %v294
  %9178 = vmatprep.subr.mxu0 0.0
  %9179 = vmatpush2.msra.mxu0 %v293
  %9180 = vmatprep.subr.mxu0 0.0
  %9181 = vmatpush2.msra.mxu0 %v292
  %9182 = vmatprep.subr.mxu0 0.0
  %9183 = vmatpush2.msra.mxu0 %v291
  %9184 = vmatprep.subr.mxu0 0.0
  %9185 = vmatpush2.msra.mxu0 %v290
  %9186 = vmatprep.subr.mxu0 0.0
  %9187 = vmatpush2.msra.mxu0 %v289
  %9188 = vmatprep.subr.mxu0 0.0
  %9189 = vmatpush2.msra.mxu0 %v288
  %9190 = vmatprep.subr.mxu0 0.0
  %9191 = vmatpush2.msra.mxu0 %v287
  %9192 = vmatprep.subr.mxu0 0.0
  %9193 = vmatpush2.msra.mxu0 %v286
  %9194 = vmatprep.subr.mxu0 0.0
  %9195 = vmatpush2.msra.mxu0 %v285
  %9196 = vmatprep.subr.mxu0 0.0
  %9197 = vmatpush2.msra.mxu0 %v284
  %9198 = vmatprep.subr.mxu0 0.0
  %9199 = vmatpush2.msra.mxu0 %v283
  %9200 = vmatprep.subr.mxu0 0.0
  %9201 = vmatpush2.msra.mxu0 %v282
  %9202 = vmatprep.subr.mxu0 0.0
  %9203 = vmatpush2.msra.mxu0 %v281
  %9204 = vmatprep.subr.mxu0 0.0
  %9205 = vmatpush2.msra.mxu0 %v280
  %9206 = vmatprep.subr.mxu0 0.0
  %9207 = vmatpush2.msra.mxu0 %v279
  %9208 = vmatprep.mubr.f32.mxu0 %v8587
  %9209 = vmatmul.mubr.f32.gmra.mxu0 %v8585
  %v9210 = vpop.f32.mrf.mxu0
  %v9211 = vadd.f32 %v9141, %v9210
  %v9212 = vpop.f32.mrf.mxu0
  %9213 = vdwg.mxu0
  %9214 = vmatprep.subr.mxu0 0.0
  %9215 = vmatpush1.msra.mxu0 %v310
  %9216 = vmatprep.subr.mxu0 0.0
  %9217 = vmatpush1.msra.mxu0 %v309
  %9218 = vmatprep.subr.mxu0 0.0
  %9219 = vmatpush1.msra.mxu0 %v308
  %9220 = vmatprep.subr.mxu0 0.0
  %9221 = vmatpush1.msra.mxu0 %v307
  %9222 = vmatprep.subr.mxu0 0.0
  %9223 = vmatpush1.msra.mxu0 %v306
  %9224 = vmatprep.subr.mxu0 0.0
  %9225 = vmatpush1.msra.mxu0 %v305
  %9226 = vmatprep.subr.mxu0 0.0
  %9227 = vmatpush1.msra.mxu0 %v304
  %9228 = vmatprep.subr.mxu0 0.0
  %9229 = vmatpush1.msra.mxu0 %v303
  %9230 = vmatprep.subr.mxu0 0.0
  %9231 = vmatpush1.msra.mxu0 %v302
  %9232 = vmatprep.subr.mxu0 0.0
  %9233 = vmatpush1.msra.mxu0 %v301
  %9234 = vmatprep.subr.mxu0 0.0
  %9235 = vmatpush1.msra.mxu0 %v300
  %9236 = vmatprep.subr.mxu0 0.0
  %9237 = vmatpush1.msra.mxu0 %v299
  %9238 = vmatprep.subr.mxu0 0.0
  %9239 = vmatpush1.msra.mxu0 %v298
  %9240 = vmatprep.subr.mxu0 0.0
  %9241 = vmatpush1.msra.mxu0 %v297
  %9242 = vmatprep.subr.mxu0 0.0
  %9243 = vmatpush1.msra.mxu0 %v296
  %9244 = vmatprep.subr.mxu0 0.0
  %9245 = vmatpush1.msra.mxu0 %v295
  %9246 = vmatprep.subr.mxu0 0.0
  %9247 = vmatpush2.msra.mxu0 %v326
  %9248 = vmatprep.subr.mxu0 0.0
  %9249 = vmatpush2.msra.mxu0 %v325
  %9250 = vmatprep.subr.mxu0 0.0
  %9251 = vmatpush2.msra.mxu0 %v324
  %9252 = vmatprep.subr.mxu0 0.0
  %9253 = vmatpush2.msra.mxu0 %v323
  %9254 = vmatprep.subr.mxu0 0.0
  %9255 = vmatpush2.msra.mxu0 %v322
  %9256 = vmatprep.subr.mxu0 0.0
  %9257 = vmatpush2.msra.mxu0 %v321
  %9258 = vmatprep.subr.mxu0 0.0
  %9259 = vmatpush2.msra.mxu0 %v320
  %9260 = vmatprep.subr.mxu0 0.0
  %9261 = vmatpush2.msra.mxu0 %v319
  %9262 = vmatprep.subr.mxu0 0.0
  %9263 = vmatpush2.msra.mxu0 %v318
  %9264 = vmatprep.subr.mxu0 0.0
  %9265 = vmatpush2.msra.mxu0 %v317
  %9266 = vmatprep.subr.mxu0 0.0
  %9267 = vmatpush2.msra.mxu0 %v316
  %9268 = vmatprep.subr.mxu0 0.0
  %9269 = vmatpush2.msra.mxu0 %v315
  %9270 = vmatprep.subr.mxu0 0.0
  %9271 = vmatpush2.msra.mxu0 %v314
  %9272 = vmatprep.subr.mxu0 0.0
  %9273 = vmatpush2.msra.mxu0 %v313
  %9274 = vmatprep.subr.mxu0 0.0
  %9275 = vmatpush2.msra.mxu0 %v312
  %9276 = vmatprep.subr.mxu0 0.0
  %9277 = vmatpush2.msra.mxu0 %v311
  %9278 = vmatprep.mubr.f32.mxu0 %v8603
  %9279 = vmatmul.mubr.f32.gmra.mxu0 %v8595
  %v9280 = vpop.f32.mrf.mxu0
  %v9281 = vadd.f32 %v9211, %v9280
  %v9282 = vpop.f32.mrf.mxu0
  %9283 = vdwg.mxu0
  %9284 = vmatprep.subr.mxu0 0.0
  %9285 = vmatpush1.msra.mxu0 %v342
  %9286 = vmatprep.subr.mxu0 0.0
  %9287 = vmatpush1.msra.mxu0 %v341
  %9288 = vmatprep.subr.mxu0 0.0
  %9289 = vmatpush1.msra.mxu0 %v340
  %9290 = vmatprep.subr.mxu0 0.0
  %9291 = vmatpush1.msra.mxu0 %v339
  %9292 = vmatprep.subr.mxu0 0.0
  %9293 = vmatpush1.msra.mxu0 %v338
  %9294 = vmatprep.subr.mxu0 0.0
  %9295 = vmatpush1.msra.mxu0 %v337
  %9296 = vmatprep.subr.mxu0 0.0
  %9297 = vmatpush1.msra.mxu0 %v336
  %9298 = vmatprep.subr.mxu0 0.0
  %9299 = vmatpush1.msra.mxu0 %v335
  %9300 = vmatprep.subr.mxu0 0.0
  %9301 = vmatpush1.msra.mxu0 %v334
  %9302 = vmatprep.subr.mxu0 0.0
  %9303 = vmatpush1.msra.mxu0 %v333
  %9304 = vmatprep.subr.mxu0 0.0
  %9305 = vmatpush1.msra.mxu0 %v332
  %9306 = vmatprep.subr.mxu0 0.0
  %9307 = vmatpush1.msra.mxu0 %v331
  %9308 = vmatprep.subr.mxu0 0.0
  %9309 = vmatpush1.msra.mxu0 %v330
  %9310 = vmatprep.subr.mxu0 0.0
  %9311 = vmatpush1.msra.mxu0 %v329
  %9312 = vmatprep.subr.mxu0 0.0
  %9313 = vmatpush1.msra.mxu0 %v328
  %9314 = vmatprep.subr.mxu0 0.0
  %9315 = vmatpush1.msra.mxu0 %v327
  %9316 = vmatprep.subr.mxu0 0.0
  %9317 = vmatpush2.msra.mxu0 %v358
  %9318 = vmatprep.subr.mxu0 0.0
  %9319 = vmatpush2.msra.mxu0 %v357
  %9320 = vmatprep.subr.mxu0 0.0
  %9321 = vmatpush2.msra.mxu0 %v356
  %9322 = vmatprep.subr.mxu0 0.0
  %9323 = vmatpush2.msra.mxu0 %v355
  %9324 = vmatprep.subr.mxu0 0.0
  %9325 = vmatpush2.msra.mxu0 %v354
  %9326 = vmatprep.subr.mxu0 0.0
  %9327 = vmatpush2.msra.mxu0 %v353
  %9328 = vmatprep.subr.mxu0 0.0
  %9329 = vmatpush2.msra.mxu0 %v352
  %9330 = vmatprep.subr.mxu0 0.0
  %9331 = vmatpush2.msra.mxu0 %v351
  %9332 = vmatprep.subr.mxu0 0.0
  %9333 = vmatpush2.msra.mxu0 %v350
  %9334 = vmatprep.subr.mxu0 0.0
  %9335 = vmatpush2.msra.mxu0 %v349
  %9336 = vmatprep.subr.mxu0 0.0
  %9337 = vmatpush2.msra.mxu0 %v348
  %9338 = vmatprep.subr.mxu0 0.0
  %9339 = vmatpush2.msra.mxu0 %v347
  %9340 = vmatprep.subr.mxu0 0.0
  %9341 = vmatpush2.msra.mxu0 %v346
  %9342 = vmatprep.subr.mxu0 0.0
  %9343 = vmatpush2.msra.mxu0 %v345
  %9344 = vmatprep.subr.mxu0 0.0
  %9345 = vmatpush2.msra.mxu0 %v344
  %9346 = vmatprep.subr.mxu0 0.0
  %9347 = vmatpush2.msra.mxu0 %v343
  %9348 = vmatprep.mubr.f32.mxu0 %v8604
  %9349 = vmatmul.mubr.f32.gmra.mxu0 %v8602
  %v9350 = vpop.f32.mrf.mxu0
  %v9351 = vadd.f32 %v9281, %v9350
  %v9352 = vpop.f32.mrf.mxu0
  %9353 = vdwg.mxu0
  %9354 = vmatprep.subr.mxu0 0.0
  %9355 = vmatpush1.msra.mxu0 %v374
  %9356 = vmatprep.subr.mxu0 0.0
  %9357 = vmatpush1.msra.mxu0 %v373
  %9358 = vmatprep.subr.mxu0 0.0
  %9359 = vmatpush1.msra.mxu0 %v372
  %9360 = vmatprep.subr.mxu0 0.0
  %9361 = vmatpush1.msra.mxu0 %v371
  %9362 = vmatprep.subr.mxu0 0.0
  %9363 = vmatpush1.msra.mxu0 %v370
  %9364 = vmatprep.subr.mxu0 0.0
  %9365 = vmatpush1.msra.mxu0 %v369
  %9366 = vmatprep.subr.mxu0 0.0
  %9367 = vmatpush1.msra.mxu0 %v368
  %9368 = vmatprep.subr.mxu0 0.0
  %9369 = vmatpush1.msra.mxu0 %v367
  %9370 = vmatprep.subr.mxu0 0.0
  %9371 = vmatpush1.msra.mxu0 %v366
  %9372 = vmatprep.subr.mxu0 0.0
  %9373 = vmatpush1.msra.mxu0 %v365
  %9374 = vmatprep.subr.mxu0 0.0
  %9375 = vmatpush1.msra.mxu0 %v364
  %9376 = vmatprep.subr.mxu0 0.0
  %9377 = vmatpush1.msra.mxu0 %v363
  %9378 = vmatprep.subr.mxu0 0.0
  %9379 = vmatpush1.msra.mxu0 %v362
  %9380 = vmatprep.subr.mxu0 0.0
  %9381 = vmatpush1.msra.mxu0 %v361
  %9382 = vmatprep.subr.mxu0 0.0
  %9383 = vmatpush1.msra.mxu0 %v360
  %9384 = vmatprep.subr.mxu0 0.0
  %9385 = vmatpush1.msra.mxu0 %v359
  %9386 = vmatprep.subr.mxu0 0.0
  %9387 = vmatpush2.msra.mxu0 %v390
  %9388 = vmatprep.subr.mxu0 0.0
  %9389 = vmatpush2.msra.mxu0 %v389
  %9390 = vmatprep.subr.mxu0 0.0
  %9391 = vmatpush2.msra.mxu0 %v388
  %9392 = vmatprep.subr.mxu0 0.0
  %9393 = vmatpush2.msra.mxu0 %v387
  %9394 = vmatprep.subr.mxu0 0.0
  %9395 = vmatpush2.msra.mxu0 %v386
  %9396 = vmatprep.subr.mxu0 0.0
  %9397 = vmatpush2.msra.mxu0 %v385
  %9398 = vmatprep.subr.mxu0 0.0
  %9399 = vmatpush2.msra.mxu0 %v384
  %9400 = vmatprep.subr.mxu0 0.0
  %9401 = vmatpush2.msra.mxu0 %v383
  %9402 = vmatprep.subr.mxu0 0.0
  %9403 = vmatpush2.msra.mxu0 %v382
  %9404 = vmatprep.subr.mxu0 0.0
  %9405 = vmatpush2.msra.mxu0 %v381
  %9406 = vmatprep.subr.mxu0 0.0
  %9407 = vmatpush2.msra.mxu0 %v380
  %9408 = vmatprep.subr.mxu0 0.0
  %9409 = vmatpush2.msra.mxu0 %v379
  %9410 = vmatprep.subr.mxu0 0.0
  %9411 = vmatpush2.msra.mxu0 %v378
  %9412 = vmatprep.subr.mxu0 0.0
  %9413 = vmatpush2.msra.mxu0 %v377
  %9414 = vmatprep.subr.mxu0 0.0
  %9415 = vmatpush2.msra.mxu0 %v376
  %9416 = vmatprep.subr.mxu0 0.0
  %9417 = vmatpush2.msra.mxu0 %v375
  %9418 = vmatprep.mubr.f32.mxu0 %v8620
  %9419 = vmatmul.mubr.f32.gmra.mxu0 %v8612
  %v9420 = vpop.f32.mrf.mxu0
  %v9421 = vadd.f32 %v9351, %v9420
  %v9422 = vpop.f32.mrf.mxu0
  %9423 = vdwg.mxu0
  %9424 = vmatprep.subr.mxu0 0.0
  %9425 = vmatpush1.msra.mxu0 %v406
  %9426 = vmatprep.subr.mxu0 0.0
  %9427 = vmatpush1.msra.mxu0 %v405
  %9428 = vmatprep.subr.mxu0 0.0
  %9429 = vmatpush1.msra.mxu0 %v404
  %9430 = vmatprep.subr.mxu0 0.0
  %9431 = vmatpush1.msra.mxu0 %v403
  %9432 = vmatprep.subr.mxu0 0.0
  %9433 = vmatpush1.msra.mxu0 %v402
  %9434 = vmatprep.subr.mxu0 0.0
  %9435 = vmatpush1.msra.mxu0 %v401
  %9436 = vmatprep.subr.mxu0 0.0
  %9437 = vmatpush1.msra.mxu0 %v400
  %9438 = vmatprep.subr.mxu0 0.0
  %9439 = vmatpush1.msra.mxu0 %v399
  %9440 = vmatprep.subr.mxu0 0.0
  %9441 = vmatpush1.msra.mxu0 %v398
  %9442 = vmatprep.subr.mxu0 0.0
  %9443 = vmatpush1.msra.mxu0 %v397
  %9444 = vmatprep.subr.mxu0 0.0
  %9445 = vmatpush1.msra.mxu0 %v396
  %9446 = vmatprep.subr.mxu0 0.0
  %9447 = vmatpush1.msra.mxu0 %v395
  %9448 = vmatprep.subr.mxu0 0.0
  %9449 = vmatpush1.msra.mxu0 %v394
  %9450 = vmatprep.subr.mxu0 0.0
  %9451 = vmatpush1.msra.mxu0 %v393
  %9452 = vmatprep.subr.mxu0 0.0
  %9453 = vmatpush1.msra.mxu0 %v392
  %9454 = vmatprep.subr.mxu0 0.0
  %9455 = vmatpush1.msra.mxu0 %v391
  %9456 = vmatprep.subr.mxu0 0.0
  %9457 = vmatpush2.msra.mxu0 %v422
  %9458 = vmatprep.subr.mxu0 0.0
  %9459 = vmatpush2.msra.mxu0 %v421
  %9460 = vmatprep.subr.mxu0 0.0
  %9461 = vmatpush2.msra.mxu0 %v420
  %9462 = vmatprep.subr.mxu0 0.0
  %9463 = vmatpush2.msra.mxu0 %v419
  %9464 = vmatprep.subr.mxu0 0.0
  %9465 = vmatpush2.msra.mxu0 %v418
  %9466 = vmatprep.subr.mxu0 0.0
  %9467 = vmatpush2.msra.mxu0 %v417
  %9468 = vmatprep.subr.mxu0 0.0
  %9469 = vmatpush2.msra.mxu0 %v416
  %9470 = vmatprep.subr.mxu0 0.0
  %9471 = vmatpush2.msra.mxu0 %v415
  %9472 = vmatprep.subr.mxu0 0.0
  %9473 = vmatpush2.msra.mxu0 %v414
  %9474 = vmatprep.subr.mxu0 0.0
  %9475 = vmatpush2.msra.mxu0 %v413
  %9476 = vmatprep.subr.mxu0 0.0
  %9477 = vmatpush2.msra.mxu0 %v412
  %9478 = vmatprep.subr.mxu0 0.0
  %9479 = vmatpush2.msra.mxu0 %v411
  %9480 = vmatprep.subr.mxu0 0.0
  %9481 = vmatpush2.msra.mxu0 %v410
  %9482 = vmatprep.subr.mxu0 0.0
  %9483 = vmatpush2.msra.mxu0 %v409
  %9484 = vmatprep.subr.mxu0 0.0
  %9485 = vmatpush2.msra.mxu0 %v408
  %9486 = vmatprep.subr.mxu0 0.0
  %9487 = vmatpush2.msra.mxu0 %v407
  %9488 = vmatprep.mubr.f32.mxu0 %v8621
  %9489 = vmatmul.mubr.f32.gmra.mxu0 %v8619
  %v9490 = vpop.f32.mrf.mxu0
  %v9491 = vadd.f32 %v9421, %v9490
  %v9492 = vpop.f32.mrf.mxu0
  %9493 = vdwg.mxu0
  %9494 = vmatprep.subr.mxu0 0.0
  %9495 = vmatpush1.msra.mxu0 %v438
  %9496 = vmatprep.subr.mxu0 0.0
  %9497 = vmatpush1.msra.mxu0 %v437
  %9498 = vmatprep.subr.mxu0 0.0
  %9499 = vmatpush1.msra.mxu0 %v436
  %9500 = vmatprep.subr.mxu0 0.0
  %9501 = vmatpush1.msra.mxu0 %v435
  %9502 = vmatprep.subr.mxu0 0.0
  %9503 = vmatpush1.msra.mxu0 %v434
  %9504 = vmatprep.subr.mxu0 0.0
  %9505 = vmatpush1.msra.mxu0 %v433
  %9506 = vmatprep.subr.mxu0 0.0
  %9507 = vmatpush1.msra.mxu0 %v432
  %9508 = vmatprep.subr.mxu0 0.0
  %9509 = vmatpush1.msra.mxu0 %v431
  %9510 = vmatprep.subr.mxu0 0.0
  %9511 = vmatpush1.msra.mxu0 %v430
  %9512 = vmatprep.subr.mxu0 0.0
  %9513 = vmatpush1.msra.mxu0 %v429
  %9514 = vmatprep.subr.mxu0 0.0
  %9515 = vmatpush1.msra.mxu0 %v428
  %9516 = vmatprep.subr.mxu0 0.0
  %9517 = vmatpush1.msra.mxu0 %v427
  %9518 = vmatprep.subr.mxu0 0.0
  %9519 = vmatpush1.msra.mxu0 %v426
  %9520 = vmatprep.subr.mxu0 0.0
  %9521 = vmatpush1.msra.mxu0 %v425
  %9522 = vmatprep.subr.mxu0 0.0
  %9523 = vmatpush1.msra.mxu0 %v424
  %9524 = vmatprep.subr.mxu0 0.0
  %9525 = vmatpush1.msra.mxu0 %v423
  %9526 = vmatprep.subr.mxu0 0.0
  %9527 = vmatpush2.msra.mxu0 0.0
  %9528 = vmatprep.subr.mxu0 0.0
  %9529 = vmatpush2.msra.mxu0 0.0
  %9530 = vmatprep.subr.mxu0 0.0
  %9531 = vmatpush2.msra.mxu0 0.0
  %9532 = vmatprep.subr.mxu0 0.0
  %9533 = vmatpush2.msra.mxu0 0.0
  %9534 = vmatprep.subr.mxu0 0.0
  %9535 = vmatpush2.msra.mxu0 0.0
  %9536 = vmatprep.subr.mxu0 0.0
  %9537 = vmatpush2.msra.mxu0 0.0
  %9538 = vmatprep.subr.mxu0 0.0
  %9539 = vmatpush2.msra.mxu0 0.0
  %9540 = vmatprep.subr.mxu0 0.0
  %9541 = vmatpush2.msra.mxu0 0.0
  %9542 = vmatprep.subr.mxu0 0.0
  %9543 = vmatpush2.msra.mxu0 0.0
  %9544 = vmatprep.subr.mxu0 0.0
  %9545 = vmatpush2.msra.mxu0 0.0
  %9546 = vmatprep.subr.mxu0 0.0
  %9547 = vmatpush2.msra.mxu0 0.0
  %9548 = vmatprep.subr.mxu0 0.0
  %9549 = vmatpush2.msra.mxu0 0.0
  %9550 = vmatprep.subr.mxu0 0.0
  %9551 = vmatpush2.msra.mxu0 0.0
  %9552 = vmatprep.subr.mxu0 0.0
  %9553 = vmatpush2.msra.mxu0 0.0
  %9554 = vmatprep.subr.mxu0 0.0
  %9555 = vmatpush2.msra.mxu0 0.0
  %9556 = vmatprep.subr.mxu0 0.0
  %9557 = vmatpush2.msra.mxu0 0.0
  %9558 = vmatprep.mubr.f32.mxu0 0.0
  %9559 = vmatmul.mubr.f32.gmra.mxu0 %v8628
  %v9560 = vpop.f32.mrf.mxu0
  %v9561 = vadd.f32 %v9491, %v9560
  %v9562 = vpop.f32.mrf.mxu0
  %9563 = vdwg.mxu0
  %v9564 = vmax.f32 %v9561, 0.0
  %s9565 = scalar_lea.vmem %s3, 896
  %v9566 = vld [vmem:[%s9565] sm:$0xff]
  %v9567 = vld [vmem:[%s9565 + $0x8] sm:$0xff]
  %v9568 = vld [vmem:[%s9565 + $0x10] sm:$0xff]
  %v9569 = vld [vmem:[%s9565 + $0x18] sm:$0xff]
  %v9570 = vld [vmem:[%s9565 + $0x20] sm:$0xff]
  %v9571 = vld [vmem:[%s9565 + $0x28] sm:$0xff]
  %v9572 = vld [vmem:[%s9565 + $0x30] sm:$0xff]
  %v9573 = vld [vmem:[%s9565 + $0x38] sm:$0xff]
  %v9574 = vld [vmem:[%s9565 + $0x40] sm:$0xff]
  %v9575 = vld [vmem:[%s9565 + $0x48] sm:$0xff]
  %v9576 = vld [vmem:[%s9565 + $0x50] sm:$0xff]
  %v9577 = vld [vmem:[%s9565 + $0x58] sm:$0xff]
  %v9578 = vld [vmem:[%s9565 + $0x60] sm:$0xff]
  %v9579 = vld [vmem:[%s9565 + $0x68] sm:$0xff]
  %v9580 = vld [vmem:[%s9565 + $0x70] sm:$0xff]
  %v9581 = vld [vmem:[%s9565 + $0x78] sm:$0xff]
  %v9583 = vsel %vm2591, %v9564, 0
  %9585 = vmatprep.subr.mxu0 0.0
  %9586 = vmatpush1.msra.mxu0 0.0
  %9587 = vmatprep.subr.mxu0 0.0
  %9588 = vmatpush1.msra.mxu0 0.0
  %9589 = vmatprep.subr.mxu0 0.0
  %9590 = vmatpush1.msra.mxu0 0.0
  %9591 = vmatprep.subr.mxu0 0.0
  %9592 = vmatpush1.msra.mxu0 0.0
  %9593 = vmatprep.subr.mxu0 0.0
  %9594 = vmatpush1.msra.mxu0 0.0
  %9595 = vmatprep.subr.mxu0 0.0
  %9596 = vmatpush1.msra.mxu0 0.0
  %9597 = vmatprep.subr.mxu0 0.0
  %9598 = vmatpush1.msra.mxu0 0.0
  %9599 = vmatprep.subr.mxu0 0.0
  %9600 = vmatpush1.msra.mxu0 0.0
  %9601 = vmatprep.subr.mxu0 %v9581
  %9602 = vmatpush1.msra.mxu0 %v9580
  %9603 = vmatprep.subr.mxu0 %v9579
  %9604 = vmatpush1.msra.mxu0 %v9578
  %9605 = vmatprep.subr.mxu0 %v9577
  %9606 = vmatpush1.msra.mxu0 %v9576
  %9607 = vmatprep.subr.mxu0 %v9575
  %9608 = vmatpush1.msra.mxu0 %v9574
  %9609 = vmatprep.subr.mxu0 %v9573
  %9610 = vmatpush1.msra.mxu0 %v9572
  %9611 = vmatprep.subr.mxu0 %v9571
  %9612 = vmatpush1.msra.mxu0 %v9570
  %9613 = vmatprep.subr.mxu0 %v9569
  %9614 = vmatpush1.msra.mxu0 %v9568
  %9615 = vmatprep.subr.mxu0 %v9567
  %9616 = vmatpush1.msra.mxu0 %v9566
  %9617 = vmatprep.subr.mxu0 0.0
  %9618 = vmatpush2.msra.mxu0 0.0
  %9619 = vmatprep.subr.mxu0 0.0
  %9620 = vmatpush2.msra.mxu0 0.0
  %9621 = vmatprep.subr.mxu0 0.0
  %9622 = vmatpush2.msra.mxu0 0.0
  %9623 = vmatprep.subr.mxu0 0.0
  %9624 = vmatpush2.msra.mxu0 0.0
  %9625 = vmatprep.subr.mxu0 0.0
  %9626 = vmatpush2.msra.mxu0 0.0
  %9627 = vmatprep.subr.mxu0 0.0
  %9628 = vmatpush2.msra.mxu0 0.0
  %9629 = vmatprep.subr.mxu0 0.0
  %9630 = vmatpush2.msra.mxu0 0.0
  %9631 = vmatprep.subr.mxu0 0.0
  %9632 = vmatpush2.msra.mxu0 0.0
  %9633 = vmatprep.subr.mxu0 0.0
  %9634 = vmatpush2.msra.mxu0 0.0
  %9635 = vmatprep.subr.mxu0 0.0
  %9636 = vmatpush2.msra.mxu0 0.0
  %9637 = vmatprep.subr.mxu0 0.0
  %9638 = vmatpush2.msra.mxu0 0.0
  %9639 = vmatprep.subr.mxu0 0.0
  %9640 = vmatpush2.msra.mxu0 0.0
  %9641 = vmatprep.subr.mxu0 0.0
  %9642 = vmatpush2.msra.mxu0 0.0
  %9643 = vmatprep.subr.mxu0 0.0
  %9644 = vmatpush2.msra.mxu0 0.0
  %9645 = vmatprep.subr.mxu0 0.0
  %9646 = vmatpush2.msra.mxu0 0.0
  %9647 = vmatprep.subr.mxu0 0.0
  %9648 = vmatpush2.msra.mxu0 0.0
  %9649 = vmatprep.mubr.f32.mxu0 0.0
  %9650 = vmatmul.mubr.f32.gmra.mxu0 %v9583
  %v9651 = vpop.f32.mrf.mxu0
  %v9652 = vadd.f32 0.0, %v9651
  %v9653 = vpop.f32.mrf.mxu0
  %v9654 = vadd.f32 0.0, %v9653
  %9655 = vdwg.mxu0
  %v9656 = vadd.f32 %v8503, %v9652
  %v9657 = vadd.f32 %v8504, %v9654
  %s9658 = scalar_lea.vmem %s0, 400
  %v9659 = vld [vmem:[%s9658] sm:$0xff]
  %v9660 = vld [vmem:[%s9658 + $0x8] sm:$0xff]
  %v9661 = vld [vmem:[%s9658 + $0x10] sm:$0xff]
  %v9662 = vld [vmem:[%s9658 + $0x18] sm:$0xff]
  %v9663 = vld [vmem:[%s9658 + $0x20] sm:$0xff]
  %v9664 = vld [vmem:[%s9658 + $0x28] sm:$0xff]
  %v9665 = vld [vmem:[%s9658 + $0x30] sm:$0x3]
  %v9673 = vcombine.high %v9659, %v9659
  %v9675 = vunpack.c.l.s4 1983009808
  %v9676 = vunpack.c.0.s8 %v9675
  %v9677 = vlaneseq
  %v9678 = vshrl.u32 %v9677, 7
  %v9679 = vsub.s32 %v9676, %v9678
  %v9680 = vrot.slane %v9659, %v9679
  %v9682 = vunpack.c.l.s4 1983009808
  %v9683 = vunpack.c.0.s8 %v9682
  %v9684 = vlaneseq
  %v9685 = vshrl.u32 %v9684, 7
  %v9686 = vsub.s32 %v9683, %v9685
  %v9687 = vrot.slane %v9673, %v9686
  %v9688 = vcombine.high %v9680, %v9680
  %v9689 = vcombine.high %v9687, %v9687
  %v9690 = vcombine.high %v9660, %v9660
  %v9692 = vunpack.c.l.s4 1983009808
  %v9693 = vunpack.c.0.s8 %v9692
  %v9694 = vlaneseq
  %v9695 = vshrl.u32 %v9694, 7
  %v9696 = vsub.s32 %v9693, %v9695
  %v9697 = vrot.slane %v9660, %v9696
  %v9699 = vunpack.c.l.s4 1983009808
  %v9700 = vunpack.c.0.s8 %v9699
  %v9701 = vlaneseq
  %v9702 = vshrl.u32 %v9701, 7
  %v9703 = vsub.s32 %v9700, %v9702
  %v9704 = vrot.slane %v9690, %v9703
  %v9705 = vcombine.high %v9697, %v9697
  %v9706 = vcombine.high %v9704, %v9704
  %v9707 = vcombine.high %v9661, %v9661
  %v9709 = vunpack.c.l.s4 1983009808
  %v9710 = vunpack.c.0.s8 %v9709
  %v9711 = vlaneseq
  %v9712 = vshrl.u32 %v9711, 7
  %v9713 = vsub.s32 %v9710, %v9712
  %v9714 = vrot.slane %v9661, %v9713
  %v9716 = vunpack.c.l.s4 1983009808
  %v9717 = vunpack.c.0.s8 %v9716
  %v9718 = vlaneseq
  %v9719 = vshrl.u32 %v9718, 7
  %v9720 = vsub.s32 %v9717, %v9719
  %v9721 = vrot.slane %v9707, %v9720
  %v9722 = vcombine.high %v9714, %v9714
  %v9723 = vcombine.high %v9721, %v9721
  %v9724 = vcombine.high %v9662, %v9662
  %v9726 = vunpack.c.l.s4 1983009808
  %v9727 = vunpack.c.0.s8 %v9726
  %v9728 = vlaneseq
  %v9729 = vshrl.u32 %v9728, 7
  %v9730 = vsub.s32 %v9727, %v9729
  %v9731 = vrot.slane %v9662, %v9730
  %v9733 = vunpack.c.l.s4 1983009808
  %v9734 = vunpack.c.0.s8 %v9733
  %v9735 = vlaneseq
  %v9736 = vshrl.u32 %v9735, 7
  %v9737 = vsub.s32 %v9734, %v9736
  %v9738 = vrot.slane %v9724, %v9737
  %v9739 = vcombine.high %v9731, %v9731
  %v9740 = vcombine.high %v9738, %v9738
  %v9741 = vcombine.high %v9663, %v9663
  %v9743 = vunpack.c.l.s4 1983009808
  %v9744 = vunpack.c.0.s8 %v9743
  %v9745 = vlaneseq
  %v9746 = vshrl.u32 %v9745, 7
  %v9747 = vsub.s32 %v9744, %v9746
  %v9748 = vrot.slane %v9663, %v9747
  %v9750 = vunpack.c.l.s4 1983009808
  %v9751 = vunpack.c.0.s8 %v9750
  %v9752 = vlaneseq
  %v9753 = vshrl.u32 %v9752, 7
  %v9754 = vsub.s32 %v9751, %v9753
  %v9755 = vrot.slane %v9741, %v9754
  %v9756 = vcombine.high %v9748, %v9748
  %v9757 = vcombine.high %v9755, %v9755
  %v9758 = vcombine.high %v9664, %v9664
  %v9760 = vunpack.c.l.s4 1983009808
  %v9761 = vunpack.c.0.s8 %v9760
  %v9762 = vlaneseq
  %v9763 = vshrl.u32 %v9762, 7
  %v9764 = vsub.s32 %v9761, %v9763
  %v9765 = vrot.slane %v9664, %v9764
  %v9767 = vunpack.c.l.s4 1983009808
  %v9768 = vunpack.c.0.s8 %v9767
  %v9769 = vlaneseq
  %v9770 = vshrl.u32 %v9769, 7
  %v9771 = vsub.s32 %v9768, %v9770
  %v9772 = vrot.slane %v9758, %v9771
  %v9773 = vcombine.high %v9765, %v9765
  %v9774 = vcombine.high %v9772, %v9772
  %v9776 = vunpack.c.l.s4 1983009808
  %v9777 = vunpack.c.0.s8 %v9776
  %v9778 = vlaneseq
  %v9779 = vshrl.u32 %v9778, 7
  %v9780 = vsub.s32 %v9777, %v9779
  %v9781 = vrot.slane %v9665, %v9780
  %9807 = vmatprep.subr.mxu0 0.0
  %9808 = vmatpush1.msra.mxu0 %v54
  %9809 = vmatprep.subr.mxu0 0.0
  %9810 = vmatpush1.msra.mxu0 %v53
  %9811 = vmatprep.subr.mxu0 0.0
  %9812 = vmatpush1.msra.mxu0 %v52
  %9813 = vmatprep.subr.mxu0 0.0
  %9814 = vmatpush1.msra.mxu0 %v51
  %9815 = vmatprep.subr.mxu0 0.0
  %9816 = vmatpush1.msra.mxu0 %v50
  %9817 = vmatprep.subr.mxu0 0.0
  %9818 = vmatpush1.msra.mxu0 %v49
  %9819 = vmatprep.subr.mxu0 0.0
  %9820 = vmatpush1.msra.mxu0 %v48
  %9821 = vmatprep.subr.mxu0 0.0
  %9822 = vmatpush1.msra.mxu0 %v47
  %9823 = vmatprep.subr.mxu0 0.0
  %9824 = vmatpush1.msra.mxu0 %v46
  %9825 = vmatprep.subr.mxu0 0.0
  %9826 = vmatpush1.msra.mxu0 %v45
  %9827 = vmatprep.subr.mxu0 0.0
  %9828 = vmatpush1.msra.mxu0 %v44
  %9829 = vmatprep.subr.mxu0 0.0
  %9830 = vmatpush1.msra.mxu0 %v43
  %9831 = vmatprep.subr.mxu0 0.0
  %9832 = vmatpush1.msra.mxu0 %v42
  %9833 = vmatprep.subr.mxu0 0.0
  %9834 = vmatpush1.msra.mxu0 %v41
  %9835 = vmatprep.subr.mxu0 0.0
  %9836 = vmatpush1.msra.mxu0 %v40
  %9837 = vmatprep.subr.mxu0 0.0
  %9838 = vmatpush1.msra.mxu0 %v39
  %9839 = vmatprep.subr.mxu0 0.0
  %9840 = vmatpush2.msra.mxu0 %v70
  %9841 = vmatprep.subr.mxu0 0.0
  %9842 = vmatpush2.msra.mxu0 %v69
  %9843 = vmatprep.subr.mxu0 0.0
  %9844 = vmatpush2.msra.mxu0 %v68
  %9845 = vmatprep.subr.mxu0 0.0
  %9846 = vmatpush2.msra.mxu0 %v67
  %9847 = vmatprep.subr.mxu0 0.0
  %9848 = vmatpush2.msra.mxu0 %v66
  %9849 = vmatprep.subr.mxu0 0.0
  %9850 = vmatpush2.msra.mxu0 %v65
  %9851 = vmatprep.subr.mxu0 0.0
  %9852 = vmatpush2.msra.mxu0 %v64
  %9853 = vmatprep.subr.mxu0 0.0
  %9854 = vmatpush2.msra.mxu0 %v63
  %9855 = vmatprep.subr.mxu0 0.0
  %9856 = vmatpush2.msra.mxu0 %v62
  %9857 = vmatprep.subr.mxu0 0.0
  %9858 = vmatpush2.msra.mxu0 %v61
  %9859 = vmatprep.subr.mxu0 0.0
  %9860 = vmatpush2.msra.mxu0 %v60
  %9861 = vmatprep.subr.mxu0 0.0
  %9862 = vmatpush2.msra.mxu0 %v59
  %9863 = vmatprep.subr.mxu0 0.0
  %9864 = vmatpush2.msra.mxu0 %v58
  %9865 = vmatprep.subr.mxu0 0.0
  %9866 = vmatpush2.msra.mxu0 %v57
  %9867 = vmatprep.subr.mxu0 0.0
  %9868 = vmatpush2.msra.mxu0 %v56
  %9869 = vmatprep.subr.mxu0 0.0
  %9870 = vmatpush2.msra.mxu0 %v55
  %9871 = vmatprep.mubr.f32.mxu0 %v9688
  %9872 = vmatmul.mubr.f32.gmra.mxu0 %v9680
  %v9873 = vpop.f32.mrf.mxu0
  %v9874 = vadd.f32 %v444, %v9873
  %v9875 = vpop.f32.mrf.mxu0
  %9876 = vdwg.mxu0
  %9877 = vmatprep.subr.mxu0 0.0
  %9878 = vmatpush1.msra.mxu0 %v86
  %9879 = vmatprep.subr.mxu0 0.0
  %9880 = vmatpush1.msra.mxu0 %v85
  %9881 = vmatprep.subr.mxu0 0.0
  %9882 = vmatpush1.msra.mxu0 %v84
  %9883 = vmatprep.subr.mxu0 0.0
  %9884 = vmatpush1.msra.mxu0 %v83
  %9885 = vmatprep.subr.mxu0 0.0
  %9886 = vmatpush1.msra.mxu0 %v82
  %9887 = vmatprep.subr.mxu0 0.0
  %9888 = vmatpush1.msra.mxu0 %v81
  %9889 = vmatprep.subr.mxu0 0.0
  %9890 = vmatpush1.msra.mxu0 %v80
  %9891 = vmatprep.subr.mxu0 0.0
  %9892 = vmatpush1.msra.mxu0 %v79
  %9893 = vmatprep.subr.mxu0 0.0
  %9894 = vmatpush1.msra.mxu0 %v78
  %9895 = vmatprep.subr.mxu0 0.0
  %9896 = vmatpush1.msra.mxu0 %v77
  %9897 = vmatprep.subr.mxu0 0.0
  %9898 = vmatpush1.msra.mxu0 %v76
  %9899 = vmatprep.subr.mxu0 0.0
  %9900 = vmatpush1.msra.mxu0 %v75
  %9901 = vmatprep.subr.mxu0 0.0
  %9902 = vmatpush1.msra.mxu0 %v74
  %9903 = vmatprep.subr.mxu0 0.0
  %9904 = vmatpush1.msra.mxu0 %v73
  %9905 = vmatprep.subr.mxu0 0.0
  %9906 = vmatpush1.msra.mxu0 %v72
  %9907 = vmatprep.subr.mxu0 0.0
  %9908 = vmatpush1.msra.mxu0 %v71
  %9909 = vmatprep.subr.mxu0 0.0
  %9910 = vmatpush2.msra.mxu0 %v102
  %9911 = vmatprep.subr.mxu0 0.0
  %9912 = vmatpush2.msra.mxu0 %v101
  %9913 = vmatprep.subr.mxu0 0.0
  %9914 = vmatpush2.msra.mxu0 %v100
  %9915 = vmatprep.subr.mxu0 0.0
  %9916 = vmatpush2.msra.mxu0 %v99
  %9917 = vmatprep.subr.mxu0 0.0
  %9918 = vmatpush2.msra.mxu0 %v98
  %9919 = vmatprep.subr.mxu0 0.0
  %9920 = vmatpush2.msra.mxu0 %v97
  %9921 = vmatprep.subr.mxu0 0.0
  %9922 = vmatpush2.msra.mxu0 %v96
  %9923 = vmatprep.subr.mxu0 0.0
  %9924 = vmatpush2.msra.mxu0 %v95
  %9925 = vmatprep.subr.mxu0 0.0
  %9926 = vmatpush2.msra.mxu0 %v94
  %9927 = vmatprep.subr.mxu0 0.0
  %9928 = vmatpush2.msra.mxu0 %v93
  %9929 = vmatprep.subr.mxu0 0.0
  %9930 = vmatpush2.msra.mxu0 %v92
  %9931 = vmatprep.subr.mxu0 0.0
  %9932 = vmatpush2.msra.mxu0 %v91
  %9933 = vmatprep.subr.mxu0 0.0
  %9934 = vmatpush2.msra.mxu0 %v90
  %9935 = vmatprep.subr.mxu0 0.0
  %9936 = vmatpush2.msra.mxu0 %v89
  %9937 = vmatprep.subr.mxu0 0.0
  %9938 = vmatpush2.msra.mxu0 %v88
  %9939 = vmatprep.subr.mxu0 0.0
  %9940 = vmatpush2.msra.mxu0 %v87
  %9941 = vmatprep.mubr.f32.mxu0 %v9689
  %9942 = vmatmul.mubr.f32.gmra.mxu0 %v9687
  %v9943 = vpop.f32.mrf.mxu0
  %v9944 = vadd.f32 %v9874, %v9943
  %v9945 = vpop.f32.mrf.mxu0
  %9946 = vdwg.mxu0
  %9947 = vmatprep.subr.mxu0 0.0
  %9948 = vmatpush1.msra.mxu0 %v118
  %9949 = vmatprep.subr.mxu0 0.0
  %9950 = vmatpush1.msra.mxu0 %v117
  %9951 = vmatprep.subr.mxu0 0.0
  %9952 = vmatpush1.msra.mxu0 %v116
  %9953 = vmatprep.subr.mxu0 0.0
  %9954 = vmatpush1.msra.mxu0 %v115
  %9955 = vmatprep.subr.mxu0 0.0
  %9956 = vmatpush1.msra.mxu0 %v114
  %9957 = vmatprep.subr.mxu0 0.0
  %9958 = vmatpush1.msra.mxu0 %v113
  %9959 = vmatprep.subr.mxu0 0.0
  %9960 = vmatpush1.msra.mxu0 %v112
  %9961 = vmatprep.subr.mxu0 0.0
  %9962 = vmatpush1.msra.mxu0 %v111
  %9963 = vmatprep.subr.mxu0 0.0
  %9964 = vmatpush1.msra.mxu0 %v110
  %9965 = vmatprep.subr.mxu0 0.0
  %9966 = vmatpush1.msra.mxu0 %v109
  %9967 = vmatprep.subr.mxu0 0.0
  %9968 = vmatpush1.msra.mxu0 %v108
  %9969 = vmatprep.subr.mxu0 0.0
  %9970 = vmatpush1.msra.mxu0 %v107
  %9971 = vmatprep.subr.mxu0 0.0
  %9972 = vmatpush1.msra.mxu0 %v106
  %9973 = vmatprep.subr.mxu0 0.0
  %9974 = vmatpush1.msra.mxu0 %v105
  %9975 = vmatprep.subr.mxu0 0.0
  %9976 = vmatpush1.msra.mxu0 %v104
  %9977 = vmatprep.subr.mxu0 0.0
  %9978 = vmatpush1.msra.mxu0 %v103
  %9979 = vmatprep.subr.mxu0 0.0
  %9980 = vmatpush2.msra.mxu0 %v134
  %9981 = vmatprep.subr.mxu0 0.0
  %9982 = vmatpush2.msra.mxu0 %v133
  %9983 = vmatprep.subr.mxu0 0.0
  %9984 = vmatpush2.msra.mxu0 %v132
  %9985 = vmatprep.subr.mxu0 0.0
  %9986 = vmatpush2.msra.mxu0 %v131
  %9987 = vmatprep.subr.mxu0 0.0
  %9988 = vmatpush2.msra.mxu0 %v130
  %9989 = vmatprep.subr.mxu0 0.0
  %9990 = vmatpush2.msra.mxu0 %v129
  %9991 = vmatprep.subr.mxu0 0.0
  %9992 = vmatpush2.msra.mxu0 %v128
  %9993 = vmatprep.subr.mxu0 0.0
  %9994 = vmatpush2.msra.mxu0 %v127
  %9995 = vmatprep.subr.mxu0 0.0
  %9996 = vmatpush2.msra.mxu0 %v126
  %9997 = vmatprep.subr.mxu0 0.0
  %9998 = vmatpush2.msra.mxu0 %v125
  %9999 = vmatprep.subr.mxu0 0.0
  %10000 = vmatpush2.msra.mxu0 %v124
  %10001 = vmatprep.subr.mxu0 0.0
  %10002 = vmatpush2.msra.mxu0 %v123
  %10003 = vmatprep.subr.mxu0 0.0
  %10004 = vmatpush2.msra.mxu0 %v122
  %10005 = vmatprep.subr.mxu0 0.0
  %10006 = vmatpush2.msra.mxu0 %v121
  %10007 = vmatprep.subr.mxu0 0.0
  %10008 = vmatpush2.msra.mxu0 %v120
  %10009 = vmatprep.subr.mxu0 0.0
  %10010 = vmatpush2.msra.mxu0 %v119
  %10011 = vmatprep.mubr.f32.mxu0 %v9705
  %10012 = vmatmul.mubr.f32.gmra.mxu0 %v9697
  %v10013 = vpop.f32.mrf.mxu0
  %v10014 = vadd.f32 %v9944, %v10013
  %v10015 = vpop.f32.mrf.mxu0
  %10016 = vdwg.mxu0
  %10017 = vmatprep.subr.mxu0 0.0
  %10018 = vmatpush1.msra.mxu0 %v150
  %10019 = vmatprep.subr.mxu0 0.0
  %10020 = vmatpush1.msra.mxu0 %v149
  %10021 = vmatprep.subr.mxu0 0.0
  %10022 = vmatpush1.msra.mxu0 %v148
  %10023 = vmatprep.subr.mxu0 0.0
  %10024 = vmatpush1.msra.mxu0 %v147
  %10025 = vmatprep.subr.mxu0 0.0
  %10026 = vmatpush1.msra.mxu0 %v146
  %10027 = vmatprep.subr.mxu0 0.0
  %10028 = vmatpush1.msra.mxu0 %v145
  %10029 = vmatprep.subr.mxu0 0.0
  %10030 = vmatpush1.msra.mxu0 %v144
  %10031 = vmatprep.subr.mxu0 0.0
  %10032 = vmatpush1.msra.mxu0 %v143
  %10033 = vmatprep.subr.mxu0 0.0
  %10034 = vmatpush1.msra.mxu0 %v142
  %10035 = vmatprep.subr.mxu0 0.0
  %10036 = vmatpush1.msra.mxu0 %v141
  %10037 = vmatprep.subr.mxu0 0.0
  %10038 = vmatpush1.msra.mxu0 %v140
  %10039 = vmatprep.subr.mxu0 0.0
  %10040 = vmatpush1.msra.mxu0 %v139
  %10041 = vmatprep.subr.mxu0 0.0
  %10042 = vmatpush1.msra.mxu0 %v138
  %10043 = vmatprep.subr.mxu0 0.0
  %10044 = vmatpush1.msra.mxu0 %v137
  %10045 = vmatprep.subr.mxu0 0.0
  %10046 = vmatpush1.msra.mxu0 %v136
  %10047 = vmatprep.subr.mxu0 0.0
  %10048 = vmatpush1.msra.mxu0 %v135
  %10049 = vmatprep.subr.mxu0 0.0
  %10050 = vmatpush2.msra.mxu0 %v166
  %10051 = vmatprep.subr.mxu0 0.0
  %10052 = vmatpush2.msra.mxu0 %v165
  %10053 = vmatprep.subr.mxu0 0.0
  %10054 = vmatpush2.msra.mxu0 %v164
  %10055 = vmatprep.subr.mxu0 0.0
  %10056 = vmatpush2.msra.mxu0 %v163
  %10057 = vmatprep.subr.mxu0 0.0
  %10058 = vmatpush2.msra.mxu0 %v162
  %10059 = vmatprep.subr.mxu0 0.0
  %10060 = vmatpush2.msra.mxu0 %v161
  %10061 = vmatprep.subr.mxu0 0.0
  %10062 = vmatpush2.msra.mxu0 %v160
  %10063 = vmatprep.subr.mxu0 0.0
  %10064 = vmatpush2.msra.mxu0 %v159
  %10065 = vmatprep.subr.mxu0 0.0
  %10066 = vmatpush2.msra.mxu0 %v158
  %10067 = vmatprep.subr.mxu0 0.0
  %10068 = vmatpush2.msra.mxu0 %v157
  %10069 = vmatprep.subr.mxu0 0.0
  %10070 = vmatpush2.msra.mxu0 %v156
  %10071 = vmatprep.subr.mxu0 0.0
  %10072 = vmatpush2.msra.mxu0 %v155
  %10073 = vmatprep.subr.mxu0 0.0
  %10074 = vmatpush2.msra.mxu0 %v154
  %10075 = vmatprep.subr.mxu0 0.0
  %10076 = vmatpush2.msra.mxu0 %v153
  %10077 = vmatprep.subr.mxu0 0.0
  %10078 = vmatpush2.msra.mxu0 %v152
  %10079 = vmatprep.subr.mxu0 0.0
  %10080 = vmatpush2.msra.mxu0 %v151
  %10081 = vmatprep.mubr.f32.mxu0 %v9706
  %10082 = vmatmul.mubr.f32.gmra.mxu0 %v9704
  %v10083 = vpop.f32.mrf.mxu0
  %v10084 = vadd.f32 %v10014, %v10083
  %v10085 = vpop.f32.mrf.mxu0
  %10086 = vdwg.mxu0
  %10087 = vmatprep.subr.mxu0 0.0
  %10088 = vmatpush1.msra.mxu0 %v182
  %10089 = vmatprep.subr.mxu0 0.0
  %10090 = vmatpush1.msra.mxu0 %v181
  %10091 = vmatprep.subr.mxu0 0.0
  %10092 = vmatpush1.msra.mxu0 %v180
  %10093 = vmatprep.subr.mxu0 0.0
  %10094 = vmatpush1.msra.mxu0 %v179
  %10095 = vmatprep.subr.mxu0 0.0
  %10096 = vmatpush1.msra.mxu0 %v178
  %10097 = vmatprep.subr.mxu0 0.0
  %10098 = vmatpush1.msra.mxu0 %v177
  %10099 = vmatprep.subr.mxu0 0.0
  %10100 = vmatpush1.msra.mxu0 %v176
  %10101 = vmatprep.subr.mxu0 0.0
  %10102 = vmatpush1.msra.mxu0 %v175
  %10103 = vmatprep.subr.mxu0 0.0
  %10104 = vmatpush1.msra.mxu0 %v174
  %10105 = vmatprep.subr.mxu0 0.0
  %10106 = vmatpush1.msra.mxu0 %v173
  %10107 = vmatprep.subr.mxu0 0.0
  %10108 = vmatpush1.msra.mxu0 %v172
  %10109 = vmatprep.subr.mxu0 0.0
  %10110 = vmatpush1.msra.mxu0 %v171
  %10111 = vmatprep.subr.mxu0 0.0
  %10112 = vmatpush1.msra.mxu0 %v170
  %10113 = vmatprep.subr.mxu0 0.0
  %10114 = vmatpush1.msra.mxu0 %v169
  %10115 = vmatprep.subr.mxu0 0.0
  %10116 = vmatpush1.msra.mxu0 %v168
  %10117 = vmatprep.subr.mxu0 0.0
  %10118 = vmatpush1.msra.mxu0 %v167
  %10119 = vmatprep.subr.mxu0 0.0
  %10120 = vmatpush2.msra.mxu0 %v198
  %10121 = vmatprep.subr.mxu0 0.0
  %10122 = vmatpush2.msra.mxu0 %v197
  %10123 = vmatprep.subr.mxu0 0.0
  %10124 = vmatpush2.msra.mxu0 %v196
  %10125 = vmatprep.subr.mxu0 0.0
  %10126 = vmatpush2.msra.mxu0 %v195
  %10127 = vmatprep.subr.mxu0 0.0
  %10128 = vmatpush2.msra.mxu0 %v194
  %10129 = vmatprep.subr.mxu0 0.0
  %10130 = vmatpush2.msra.mxu0 %v193
  %10131 = vmatprep.subr.mxu0 0.0
  %10132 = vmatpush2.msra.mxu0 %v192
  %10133 = vmatprep.subr.mxu0 0.0
  %10134 = vmatpush2.msra.mxu0 %v191
  %10135 = vmatprep.subr.mxu0 0.0
  %10136 = vmatpush2.msra.mxu0 %v190
  %10137 = vmatprep.subr.mxu0 0.0
  %10138 = vmatpush2.msra.mxu0 %v189
  %10139 = vmatprep.subr.mxu0 0.0
  %10140 = vmatpush2.msra.mxu0 %v188
  %10141 = vmatprep.subr.mxu0 0.0
  %10142 = vmatpush2.msra.mxu0 %v187
  %10143 = vmatprep.subr.mxu0 0.0
  %10144 = vmatpush2.msra.mxu0 %v186
  %10145 = vmatprep.subr.mxu0 0.0
  %10146 = vmatpush2.msra.mxu0 %v185
  %10147 = vmatprep.subr.mxu0 0.0
  %10148 = vmatpush2.msra.mxu0 %v184
  %10149 = vmatprep.subr.mxu0 0.0
  %10150 = vmatpush2.msra.mxu0 %v183
  %10151 = vmatprep.mubr.f32.mxu0 %v9722
  %10152 = vmatmul.mubr.f32.gmra.mxu0 %v9714
  %v10153 = vpop.f32.mrf.mxu0
  %v10154 = vadd.f32 %v10084, %v10153
  %v10155 = vpop.f32.mrf.mxu0
  %10156 = vdwg.mxu0
  %10157 = vmatprep.subr.mxu0 0.0
  %10158 = vmatpush1.msra.mxu0 %v214
  %10159 = vmatprep.subr.mxu0 0.0
  %10160 = vmatpush1.msra.mxu0 %v213
  %10161 = vmatprep.subr.mxu0 0.0
  %10162 = vmatpush1.msra.mxu0 %v212
  %10163 = vmatprep.subr.mxu0 0.0
  %10164 = vmatpush1.msra.mxu0 %v211
  %10165 = vmatprep.subr.mxu0 0.0
  %10166 = vmatpush1.msra.mxu0 %v210
  %10167 = vmatprep.subr.mxu0 0.0
  %10168 = vmatpush1.msra.mxu0 %v209
  %10169 = vmatprep.subr.mxu0 0.0
  %10170 = vmatpush1.msra.mxu0 %v208
  %10171 = vmatprep.subr.mxu0 0.0
  %10172 = vmatpush1.msra.mxu0 %v207
  %10173 = vmatprep.subr.mxu0 0.0
  %10174 = vmatpush1.msra.mxu0 %v206
  %10175 = vmatprep.subr.mxu0 0.0
  %10176 = vmatpush1.msra.mxu0 %v205
  %10177 = vmatprep.subr.mxu0 0.0
  %10178 = vmatpush1.msra.mxu0 %v204
  %10179 = vmatprep.subr.mxu0 0.0
  %10180 = vmatpush1.msra.mxu0 %v203
  %10181 = vmatprep.subr.mxu0 0.0
  %10182 = vmatpush1.msra.mxu0 %v202
  %10183 = vmatprep.subr.mxu0 0.0
  %10184 = vmatpush1.msra.mxu0 %v201
  %10185 = vmatprep.subr.mxu0 0.0
  %10186 = vmatpush1.msra.mxu0 %v200
  %10187 = vmatprep.subr.mxu0 0.0
  %10188 = vmatpush1.msra.mxu0 %v199
  %10189 = vmatprep.subr.mxu0 0.0
  %10190 = vmatpush2.msra.mxu0 %v230
  %10191 = vmatprep.subr.mxu0 0.0
  %10192 = vmatpush2.msra.mxu0 %v229
  %10193 = vmatprep.subr.mxu0 0.0
  %10194 = vmatpush2.msra.mxu0 %v228
  %10195 = vmatprep.subr.mxu0 0.0
  %10196 = vmatpush2.msra.mxu0 %v227
  %10197 = vmatprep.subr.mxu0 0.0
  %10198 = vmatpush2.msra.mxu0 %v226
  %10199 = vmatprep.subr.mxu0 0.0
  %10200 = vmatpush2.msra.mxu0 %v225
  %10201 = vmatprep.subr.mxu0 0.0
  %10202 = vmatpush2.msra.mxu0 %v224
  %10203 = vmatprep.subr.mxu0 0.0
  %10204 = vmatpush2.msra.mxu0 %v223
  %10205 = vmatprep.subr.mxu0 0.0
  %10206 = vmatpush2.msra.mxu0 %v222
  %10207 = vmatprep.subr.mxu0 0.0
  %10208 = vmatpush2.msra.mxu0 %v221
  %10209 = vmatprep.subr.mxu0 0.0
  %10210 = vmatpush2.msra.mxu0 %v220
  %10211 = vmatprep.subr.mxu0 0.0
  %10212 = vmatpush2.msra.mxu0 %v219
  %10213 = vmatprep.subr.mxu0 0.0
  %10214 = vmatpush2.msra.mxu0 %v218
  %10215 = vmatprep.subr.mxu0 0.0
  %10216 = vmatpush2.msra.mxu0 %v217
  %10217 = vmatprep.subr.mxu0 0.0
  %10218 = vmatpush2.msra.mxu0 %v216
  %10219 = vmatprep.subr.mxu0 0.0
  %10220 = vmatpush2.msra.mxu0 %v215
  %10221 = vmatprep.mubr.f32.mxu0 %v9723
  %10222 = vmatmul.mubr.f32.gmra.mxu0 %v9721
  %v10223 = vpop.f32.mrf.mxu0
  %v10224 = vadd.f32 %v10154, %v10223
  %v10225 = vpop.f32.mrf.mxu0
  %10226 = vdwg.mxu0
  %10227 = vmatprep.subr.mxu0 0.0
  %10228 = vmatpush1.msra.mxu0 %v246
  %10229 = vmatprep.subr.mxu0 0.0
  %10230 = vmatpush1.msra.mxu0 %v245
  %10231 = vmatprep.subr.mxu0 0.0
  %10232 = vmatpush1.msra.mxu0 %v244
  %10233 = vmatprep.subr.mxu0 0.0
  %10234 = vmatpush1.msra.mxu0 %v243
  %10235 = vmatprep.subr.mxu0 0.0
  %10236 = vmatpush1.msra.mxu0 %v242
  %10237 = vmatprep.subr.mxu0 0.0
  %10238 = vmatpush1.msra.mxu0 %v241
  %10239 = vmatprep.subr.mxu0 0.0
  %10240 = vmatpush1.msra.mxu0 %v240
  %10241 = vmatprep.subr.mxu0 0.0
  %10242 = vmatpush1.msra.mxu0 %v239
  %10243 = vmatprep.subr.mxu0 0.0
  %10244 = vmatpush1.msra.mxu0 %v238
  %10245 = vmatprep.subr.mxu0 0.0
  %10246 = vmatpush1.msra.mxu0 %v237
  %10247 = vmatprep.subr.mxu0 0.0
  %10248 = vmatpush1.msra.mxu0 %v236
  %10249 = vmatprep.subr.mxu0 0.0
  %10250 = vmatpush1.msra.mxu0 %v235
  %10251 = vmatprep.subr.mxu0 0.0
  %10252 = vmatpush1.msra.mxu0 %v234
  %10253 = vmatprep.subr.mxu0 0.0
  %10254 = vmatpush1.msra.mxu0 %v233
  %10255 = vmatprep.subr.mxu0 0.0
  %10256 = vmatpush1.msra.mxu0 %v232
  %10257 = vmatprep.subr.mxu0 0.0
  %10258 = vmatpush1.msra.mxu0 %v231
  %10259 = vmatprep.subr.mxu0 0.0
  %10260 = vmatpush2.msra.mxu0 %v262
  %10261 = vmatprep.subr.mxu0 0.0
  %10262 = vmatpush2.msra.mxu0 %v261
  %10263 = vmatprep.subr.mxu0 0.0
  %10264 = vmatpush2.msra.mxu0 %v260
  %10265 = vmatprep.subr.mxu0 0.0
  %10266 = vmatpush2.msra.mxu0 %v259
  %10267 = vmatprep.subr.mxu0 0.0
  %10268 = vmatpush2.msra.mxu0 %v258
  %10269 = vmatprep.subr.mxu0 0.0
  %10270 = vmatpush2.msra.mxu0 %v257
  %10271 = vmatprep.subr.mxu0 0.0
  %10272 = vmatpush2.msra.mxu0 %v256
  %10273 = vmatprep.subr.mxu0 0.0
  %10274 = vmatpush2.msra.mxu0 %v255
  %10275 = vmatprep.subr.mxu0 0.0
  %10276 = vmatpush2.msra.mxu0 %v254
  %10277 = vmatprep.subr.mxu0 0.0
  %10278 = vmatpush2.msra.mxu0 %v253
  %10279 = vmatprep.subr.mxu0 0.0
  %10280 = vmatpush2.msra.mxu0 %v252
  %10281 = vmatprep.subr.mxu0 0.0
  %10282 = vmatpush2.msra.mxu0 %v251
  %10283 = vmatprep.subr.mxu0 0.0
  %10284 = vmatpush2.msra.mxu0 %v250
  %10285 = vmatprep.subr.mxu0 0.0
  %10286 = vmatpush2.msra.mxu0 %v249
  %10287 = vmatprep.subr.mxu0 0.0
  %10288 = vmatpush2.msra.mxu0 %v248
  %10289 = vmatprep.subr.mxu0 0.0
  %10290 = vmatpush2.msra.mxu0 %v247
  %10291 = vmatprep.mubr.f32.mxu0 %v9739
  %10292 = vmatmul.mubr.f32.gmra.mxu0 %v9731
  %v10293 = vpop.f32.mrf.mxu0
  %v10294 = vadd.f32 %v10224, %v10293
  %v10295 = vpop.f32.mrf.mxu0
  %10296 = vdwg.mxu0
  %10297 = vmatprep.subr.mxu0 0.0
  %10298 = vmatpush1.msra.mxu0 %v278
  %10299 = vmatprep.subr.mxu0 0.0
  %10300 = vmatpush1.msra.mxu0 %v277
  %10301 = vmatprep.subr.mxu0 0.0
  %10302 = vmatpush1.msra.mxu0 %v276
  %10303 = vmatprep.subr.mxu0 0.0
  %10304 = vmatpush1.msra.mxu0 %v275
  %10305 = vmatprep.subr.mxu0 0.0
  %10306 = vmatpush1.msra.mxu0 %v274
  %10307 = vmatprep.subr.mxu0 0.0
  %10308 = vmatpush1.msra.mxu0 %v273
  %10309 = vmatprep.subr.mxu0 0.0
  %10310 = vmatpush1.msra.mxu0 %v272
  %10311 = vmatprep.subr.mxu0 0.0
  %10312 = vmatpush1.msra.mxu0 %v271
  %10313 = vmatprep.subr.mxu0 0.0
  %10314 = vmatpush1.msra.mxu0 %v270
  %10315 = vmatprep.subr.mxu0 0.0
  %10316 = vmatpush1.msra.mxu0 %v269
  %10317 = vmatprep.subr.mxu0 0.0
  %10318 = vmatpush1.msra.mxu0 %v268
  %10319 = vmatprep.subr.mxu0 0.0
  %10320 = vmatpush1.msra.mxu0 %v267
  %10321 = vmatprep.subr.mxu0 0.0
  %10322 = vmatpush1.msra.mxu0 %v266
  %10323 = vmatprep.subr.mxu0 0.0
  %10324 = vmatpush1.msra.mxu0 %v265
  %10325 = vmatprep.subr.mxu0 0.0
  %10326 = vmatpush1.msra.mxu0 %v264
  %10327 = vmatprep.subr.mxu0 0.0
  %10328 = vmatpush1.msra.mxu0 %v263
  %10329 = vmatprep.subr.mxu0 0.0
  %10330 = vmatpush2.msra.mxu0 %v294
  %10331 = vmatprep.subr.mxu0 0.0
  %10332 = vmatpush2.msra.mxu0 %v293
  %10333 = vmatprep.subr.mxu0 0.0
  %10334 = vmatpush2.msra.mxu0 %v292
  %10335 = vmatprep.subr.mxu0 0.0
  %10336 = vmatpush2.msra.mxu0 %v291
  %10337 = vmatprep.subr.mxu0 0.0
  %10338 = vmatpush2.msra.mxu0 %v290
  %10339 = vmatprep.subr.mxu0 0.0
  %10340 = vmatpush2.msra.mxu0 %v289
  %10341 = vmatprep.subr.mxu0 0.0
  %10342 = vmatpush2.msra.mxu0 %v288
  %10343 = vmatprep.subr.mxu0 0.0
  %10344 = vmatpush2.msra.mxu0 %v287
  %10345 = vmatprep.subr.mxu0 0.0
  %10346 = vmatpush2.msra.mxu0 %v286
  %10347 = vmatprep.subr.mxu0 0.0
  %10348 = vmatpush2.msra.mxu0 %v285
  %10349 = vmatprep.subr.mxu0 0.0
  %10350 = vmatpush2.msra.mxu0 %v284
  %10351 = vmatprep.subr.mxu0 0.0
  %10352 = vmatpush2.msra.mxu0 %v283
  %10353 = vmatprep.subr.mxu0 0.0
  %10354 = vmatpush2.msra.mxu0 %v282
  %10355 = vmatprep.subr.mxu0 0.0
  %10356 = vmatpush2.msra.mxu0 %v281
  %10357 = vmatprep.subr.mxu0 0.0
  %10358 = vmatpush2.msra.mxu0 %v280
  %10359 = vmatprep.subr.mxu0 0.0
  %10360 = vmatpush2.msra.mxu0 %v279
  %10361 = vmatprep.mubr.f32.mxu0 %v9740
  %10362 = vmatmul.mubr.f32.gmra.mxu0 %v9738
  %v10363 = vpop.f32.mrf.mxu0
  %v10364 = vadd.f32 %v10294, %v10363
  %v10365 = vpop.f32.mrf.mxu0
  %10366 = vdwg.mxu0
  %10367 = vmatprep.subr.mxu0 0.0
  %10368 = vmatpush1.msra.mxu0 %v310
  %10369 = vmatprep.subr.mxu0 0.0
  %10370 = vmatpush1.msra.mxu0 %v309
  %10371 = vmatprep.subr.mxu0 0.0
  %10372 = vmatpush1.msra.mxu0 %v308
  %10373 = vmatprep.subr.mxu0 0.0
  %10374 = vmatpush1.msra.mxu0 %v307
  %10375 = vmatprep.subr.mxu0 0.0
  %10376 = vmatpush1.msra.mxu0 %v306
  %10377 = vmatprep.subr.mxu0 0.0
  %10378 = vmatpush1.msra.mxu0 %v305
  %10379 = vmatprep.subr.mxu0 0.0
  %10380 = vmatpush1.msra.mxu0 %v304
  %10381 = vmatprep.subr.mxu0 0.0
  %10382 = vmatpush1.msra.mxu0 %v303
  %10383 = vmatprep.subr.mxu0 0.0
  %10384 = vmatpush1.msra.mxu0 %v302
  %10385 = vmatprep.subr.mxu0 0.0
  %10386 = vmatpush1.msra.mxu0 %v301
  %10387 = vmatprep.subr.mxu0 0.0
  %10388 = vmatpush1.msra.mxu0 %v300
  %10389 = vmatprep.subr.mxu0 0.0
  %10390 = vmatpush1.msra.mxu0 %v299
  %10391 = vmatprep.subr.mxu0 0.0
  %10392 = vmatpush1.msra.mxu0 %v298
  %10393 = vmatprep.subr.mxu0 0.0
  %10394 = vmatpush1.msra.mxu0 %v297
  %10395 = vmatprep.subr.mxu0 0.0
  %10396 = vmatpush1.msra.mxu0 %v296
  %10397 = vmatprep.subr.mxu0 0.0
  %10398 = vmatpush1.msra.mxu0 %v295
  %10399 = vmatprep.subr.mxu0 0.0
  %10400 = vmatpush2.msra.mxu0 %v326
  %10401 = vmatprep.subr.mxu0 0.0
  %10402 = vmatpush2.msra.mxu0 %v325
  %10403 = vmatprep.subr.mxu0 0.0
  %10404 = vmatpush2.msra.mxu0 %v324
  %10405 = vmatprep.subr.mxu0 0.0
  %10406 = vmatpush2.msra.mxu0 %v323
  %10407 = vmatprep.subr.mxu0 0.0
  %10408 = vmatpush2.msra.mxu0 %v322
  %10409 = vmatprep.subr.mxu0 0.0
  %10410 = vmatpush2.msra.mxu0 %v321
  %10411 = vmatprep.subr.mxu0 0.0
  %10412 = vmatpush2.msra.mxu0 %v320
  %10413 = vmatprep.subr.mxu0 0.0
  %10414 = vmatpush2.msra.mxu0 %v319
  %10415 = vmatprep.subr.mxu0 0.0
  %10416 = vmatpush2.msra.mxu0 %v318
  %10417 = vmatprep.subr.mxu0 0.0
  %10418 = vmatpush2.msra.mxu0 %v317
  %10419 = vmatprep.subr.mxu0 0.0
  %10420 = vmatpush2.msra.mxu0 %v316
  %10421 = vmatprep.subr.mxu0 0.0
  %10422 = vmatpush2.msra.mxu0 %v315
  %10423 = vmatprep.subr.mxu0 0.0
  %10424 = vmatpush2.msra.mxu0 %v314
  %10425 = vmatprep.subr.mxu0 0.0
  %10426 = vmatpush2.msra.mxu0 %v313
  %10427 = vmatprep.subr.mxu0 0.0
  %10428 = vmatpush2.msra.mxu0 %v312
  %10429 = vmatprep.subr.mxu0 0.0
  %10430 = vmatpush2.msra.mxu0 %v311
  %10431 = vmatprep.mubr.f32.mxu0 %v9756
  %10432 = vmatmul.mubr.f32.gmra.mxu0 %v9748
  %v10433 = vpop.f32.mrf.mxu0
  %v10434 = vadd.f32 %v10364, %v10433
  %v10435 = vpop.f32.mrf.mxu0
  %10436 = vdwg.mxu0
  %10437 = vmatprep.subr.mxu0 0.0
  %10438 = vmatpush1.msra.mxu0 %v342
  %10439 = vmatprep.subr.mxu0 0.0
  %10440 = vmatpush1.msra.mxu0 %v341
  %10441 = vmatprep.subr.mxu0 0.0
  %10442 = vmatpush1.msra.mxu0 %v340
  %10443 = vmatprep.subr.mxu0 0.0
  %10444 = vmatpush1.msra.mxu0 %v339
  %10445 = vmatprep.subr.mxu0 0.0
  %10446 = vmatpush1.msra.mxu0 %v338
  %10447 = vmatprep.subr.mxu0 0.0
  %10448 = vmatpush1.msra.mxu0 %v337
  %10449 = vmatprep.subr.mxu0 0.0
  %10450 = vmatpush1.msra.mxu0 %v336
  %10451 = vmatprep.subr.mxu0 0.0
  %10452 = vmatpush1.msra.mxu0 %v335
  %10453 = vmatprep.subr.mxu0 0.0
  %10454 = vmatpush1.msra.mxu0 %v334
  %10455 = vmatprep.subr.mxu0 0.0
  %10456 = vmatpush1.msra.mxu0 %v333
  %10457 = vmatprep.subr.mxu0 0.0
  %10458 = vmatpush1.msra.mxu0 %v332
  %10459 = vmatprep.subr.mxu0 0.0
  %10460 = vmatpush1.msra.mxu0 %v331
  %10461 = vmatprep.subr.mxu0 0.0
  %10462 = vmatpush1.msra.mxu0 %v330
  %10463 = vmatprep.subr.mxu0 0.0
  %10464 = vmatpush1.msra.mxu0 %v329
  %10465 = vmatprep.subr.mxu0 0.0
  %10466 = vmatpush1.msra.mxu0 %v328
  %10467 = vmatprep.subr.mxu0 0.0
  %10468 = vmatpush1.msra.mxu0 %v327
  %10469 = vmatprep.subr.mxu0 0.0
  %10470 = vmatpush2.msra.mxu0 %v358
  %10471 = vmatprep.subr.mxu0 0.0
  %10472 = vmatpush2.msra.mxu0 %v357
  %10473 = vmatprep.subr.mxu0 0.0
  %10474 = vmatpush2.msra.mxu0 %v356
  %10475 = vmatprep.subr.mxu0 0.0
  %10476 = vmatpush2.msra.mxu0 %v355
  %10477 = vmatprep.subr.mxu0 0.0
  %10478 = vmatpush2.msra.mxu0 %v354
  %10479 = vmatprep.subr.mxu0 0.0
  %10480 = vmatpush2.msra.mxu0 %v353
  %10481 = vmatprep.subr.mxu0 0.0
  %10482 = vmatpush2.msra.mxu0 %v352
  %10483 = vmatprep.subr.mxu0 0.0
  %10484 = vmatpush2.msra.mxu0 %v351
  %10485 = vmatprep.subr.mxu0 0.0
  %10486 = vmatpush2.msra.mxu0 %v350
  %10487 = vmatprep.subr.mxu0 0.0
  %10488 = vmatpush2.msra.mxu0 %v349
  %10489 = vmatprep.subr.mxu0 0.0
  %10490 = vmatpush2.msra.mxu0 %v348
  %10491 = vmatprep.subr.mxu0 0.0
  %10492 = vmatpush2.msra.mxu0 %v347
  %10493 = vmatprep.subr.mxu0 0.0
  %10494 = vmatpush2.msra.mxu0 %v346
  %10495 = vmatprep.subr.mxu0 0.0
  %10496 = vmatpush2.msra.mxu0 %v345
  %10497 = vmatprep.subr.mxu0 0.0
  %10498 = vmatpush2.msra.mxu0 %v344
  %10499 = vmatprep.subr.mxu0 0.0
  %10500 = vmatpush2.msra.mxu0 %v343
  %10501 = vmatprep.mubr.f32.mxu0 %v9757
  %10502 = vmatmul.mubr.f32.gmra.mxu0 %v9755
  %v10503 = vpop.f32.mrf.mxu0
  %v10504 = vadd.f32 %v10434, %v10503
  %v10505 = vpop.f32.mrf.mxu0
  %10506 = vdwg.mxu0
  %10507 = vmatprep.subr.mxu0 0.0
  %10508 = vmatpush1.msra.mxu0 %v374
  %10509 = vmatprep.subr.mxu0 0.0
  %10510 = vmatpush1.msra.mxu0 %v373
  %10511 = vmatprep.subr.mxu0 0.0
  %10512 = vmatpush1.msra.mxu0 %v372
  %10513 = vmatprep.subr.mxu0 0.0
  %10514 = vmatpush1.msra.mxu0 %v371
  %10515 = vmatprep.subr.mxu0 0.0
  %10516 = vmatpush1.msra.mxu0 %v370
  %10517 = vmatprep.subr.mxu0 0.0
  %10518 = vmatpush1.msra.mxu0 %v369
  %10519 = vmatprep.subr.mxu0 0.0
  %10520 = vmatpush1.msra.mxu0 %v368
  %10521 = vmatprep.subr.mxu0 0.0
  %10522 = vmatpush1.msra.mxu0 %v367
  %10523 = vmatprep.subr.mxu0 0.0
  %10524 = vmatpush1.msra.mxu0 %v366
  %10525 = vmatprep.subr.mxu0 0.0
  %10526 = vmatpush1.msra.mxu0 %v365
  %10527 = vmatprep.subr.mxu0 0.0
  %10528 = vmatpush1.msra.mxu0 %v364
  %10529 = vmatprep.subr.mxu0 0.0
  %10530 = vmatpush1.msra.mxu0 %v363
  %10531 = vmatprep.subr.mxu0 0.0
  %10532 = vmatpush1.msra.mxu0 %v362
  %10533 = vmatprep.subr.mxu0 0.0
  %10534 = vmatpush1.msra.mxu0 %v361
  %10535 = vmatprep.subr.mxu0 0.0
  %10536 = vmatpush1.msra.mxu0 %v360
  %10537 = vmatprep.subr.mxu0 0.0
  %10538 = vmatpush1.msra.mxu0 %v359
  %10539 = vmatprep.subr.mxu0 0.0
  %10540 = vmatpush2.msra.mxu0 %v390
  %10541 = vmatprep.subr.mxu0 0.0
  %10542 = vmatpush2.msra.mxu0 %v389
  %10543 = vmatprep.subr.mxu0 0.0
  %10544 = vmatpush2.msra.mxu0 %v388
  %10545 = vmatprep.subr.mxu0 0.0
  %10546 = vmatpush2.msra.mxu0 %v387
  %10547 = vmatprep.subr.mxu0 0.0
  %10548 = vmatpush2.msra.mxu0 %v386
  %10549 = vmatprep.subr.mxu0 0.0
  %10550 = vmatpush2.msra.mxu0 %v385
  %10551 = vmatprep.subr.mxu0 0.0
  %10552 = vmatpush2.msra.mxu0 %v384
  %10553 = vmatprep.subr.mxu0 0.0
  %10554 = vmatpush2.msra.mxu0 %v383
  %10555 = vmatprep.subr.mxu0 0.0
  %10556 = vmatpush2.msra.mxu0 %v382
  %10557 = vmatprep.subr.mxu0 0.0
  %10558 = vmatpush2.msra.mxu0 %v381
  %10559 = vmatprep.subr.mxu0 0.0
  %10560 = vmatpush2.msra.mxu0 %v380
  %10561 = vmatprep.subr.mxu0 0.0
  %10562 = vmatpush2.msra.mxu0 %v379
  %10563 = vmatprep.subr.mxu0 0.0
  %10564 = vmatpush2.msra.mxu0 %v378
  %10565 = vmatprep.subr.mxu0 0.0
  %10566 = vmatpush2.msra.mxu0 %v377
  %10567 = vmatprep.subr.mxu0 0.0
  %10568 = vmatpush2.msra.mxu0 %v376
  %10569 = vmatprep.subr.mxu0 0.0
  %10570 = vmatpush2.msra.mxu0 %v375
  %10571 = vmatprep.mubr.f32.mxu0 %v9773
  %10572 = vmatmul.mubr.f32.gmra.mxu0 %v9765
  %v10573 = vpop.f32.mrf.mxu0
  %v10574 = vadd.f32 %v10504, %v10573
  %v10575 = vpop.f32.mrf.mxu0
  %10576 = vdwg.mxu0
  %10577 = vmatprep.subr.mxu0 0.0
  %10578 = vmatpush1.msra.mxu0 %v406
  %10579 = vmatprep.subr.mxu0 0.0
  %10580 = vmatpush1.msra.mxu0 %v405
  %10581 = vmatprep.subr.mxu0 0.0
  %10582 = vmatpush1.msra.mxu0 %v404
  %10583 = vmatprep.subr.mxu0 0.0
  %10584 = vmatpush1.msra.mxu0 %v403
  %10585 = vmatprep.subr.mxu0 0.0
  %10586 = vmatpush1.msra.mxu0 %v402
  %10587 = vmatprep.subr.mxu0 0.0
  %10588 = vmatpush1.msra.mxu0 %v401
  %10589 = vmatprep.subr.mxu0 0.0
  %10590 = vmatpush1.msra.mxu0 %v400
  %10591 = vmatprep.subr.mxu0 0.0
  %10592 = vmatpush1.msra.mxu0 %v399
  %10593 = vmatprep.subr.mxu0 0.0
  %10594 = vmatpush1.msra.mxu0 %v398
  %10595 = vmatprep.subr.mxu0 0.0
  %10596 = vmatpush1.msra.mxu0 %v397
  %10597 = vmatprep.subr.mxu0 0.0
  %10598 = vmatpush1.msra.mxu0 %v396
  %10599 = vmatprep.subr.mxu0 0.0
  %10600 = vmatpush1.msra.mxu0 %v395
  %10601 = vmatprep.subr.mxu0 0.0
  %10602 = vmatpush1.msra.mxu0 %v394
  %10603 = vmatprep.subr.mxu0 0.0
  %10604 = vmatpush1.msra.mxu0 %v393
  %10605 = vmatprep.subr.mxu0 0.0
  %10606 = vmatpush1.msra.mxu0 %v392
  %10607 = vmatprep.subr.mxu0 0.0
  %10608 = vmatpush1.msra.mxu0 %v391
  %10609 = vmatprep.subr.mxu0 0.0
  %10610 = vmatpush2.msra.mxu0 %v422
  %10611 = vmatprep.subr.mxu0 0.0
  %10612 = vmatpush2.msra.mxu0 %v421
  %10613 = vmatprep.subr.mxu0 0.0
  %10614 = vmatpush2.msra.mxu0 %v420
  %10615 = vmatprep.subr.mxu0 0.0
  %10616 = vmatpush2.msra.mxu0 %v419
  %10617 = vmatprep.subr.mxu0 0.0
  %10618 = vmatpush2.msra.mxu0 %v418
  %10619 = vmatprep.subr.mxu0 0.0
  %10620 = vmatpush2.msra.mxu0 %v417
  %10621 = vmatprep.subr.mxu0 0.0
  %10622 = vmatpush2.msra.mxu0 %v416
  %10623 = vmatprep.subr.mxu0 0.0
  %10624 = vmatpush2.msra.mxu0 %v415
  %10625 = vmatprep.subr.mxu0 0.0
  %10626 = vmatpush2.msra.mxu0 %v414
  %10627 = vmatprep.subr.mxu0 0.0
  %10628 = vmatpush2.msra.mxu0 %v413
  %10629 = vmatprep.subr.mxu0 0.0
  %10630 = vmatpush2.msra.mxu0 %v412
  %10631 = vmatprep.subr.mxu0 0.0
  %10632 = vmatpush2.msra.mxu0 %v411
  %10633 = vmatprep.subr.mxu0 0.0
  %10634 = vmatpush2.msra.mxu0 %v410
  %10635 = vmatprep.subr.mxu0 0.0
  %10636 = vmatpush2.msra.mxu0 %v409
  %10637 = vmatprep.subr.mxu0 0.0
  %10638 = vmatpush2.msra.mxu0 %v408
  %10639 = vmatprep.subr.mxu0 0.0
  %10640 = vmatpush2.msra.mxu0 %v407
  %10641 = vmatprep.mubr.f32.mxu0 %v9774
  %10642 = vmatmul.mubr.f32.gmra.mxu0 %v9772
  %v10643 = vpop.f32.mrf.mxu0
  %v10644 = vadd.f32 %v10574, %v10643
  %v10645 = vpop.f32.mrf.mxu0
  %10646 = vdwg.mxu0
  %10647 = vmatprep.subr.mxu0 0.0
  %10648 = vmatpush1.msra.mxu0 %v438
  %10649 = vmatprep.subr.mxu0 0.0
  %10650 = vmatpush1.msra.mxu0 %v437
  %10651 = vmatprep.subr.mxu0 0.0
  %10652 = vmatpush1.msra.mxu0 %v436
  %10653 = vmatprep.subr.mxu0 0.0
  %10654 = vmatpush1.msra.mxu0 %v435
  %10655 = vmatprep.subr.mxu0 0.0
  %10656 = vmatpush1.msra.mxu0 %v434
  %10657 = vmatprep.subr.mxu0 0.0
  %10658 = vmatpush1.msra.mxu0 %v433
  %10659 = vmatprep.subr.mxu0 0.0
  %10660 = vmatpush1.msra.mxu0 %v432
  %10661 = vmatprep.subr.mxu0 0.0
  %10662 = vmatpush1.msra.mxu0 %v431
  %10663 = vmatprep.subr.mxu0 0.0
  %10664 = vmatpush1.msra.mxu0 %v430
  %10665 = vmatprep.subr.mxu0 0.0
  %10666 = vmatpush1.msra.mxu0 %v429
  %10667 = vmatprep.subr.mxu0 0.0
  %10668 = vmatpush1.msra.mxu0 %v428
  %10669 = vmatprep.subr.mxu0 0.0
  %10670 = vmatpush1.msra.mxu0 %v427
  %10671 = vmatprep.subr.mxu0 0.0
  %10672 = vmatpush1.msra.mxu0 %v426
  %10673 = vmatprep.subr.mxu0 0.0
  %10674 = vmatpush1.msra.mxu0 %v425
  %10675 = vmatprep.subr.mxu0 0.0
  %10676 = vmatpush1.msra.mxu0 %v424
  %10677 = vmatprep.subr.mxu0 0.0
  %10678 = vmatpush1.msra.mxu0 %v423
  %10679 = vmatprep.subr.mxu0 0.0
  %10680 = vmatpush2.msra.mxu0 0.0
  %10681 = vmatprep.subr.mxu0 0.0
  %10682 = vmatpush2.msra.mxu0 0.0
  %10683 = vmatprep.subr.mxu0 0.0
  %10684 = vmatpush2.msra.mxu0 0.0
  %10685 = vmatprep.subr.mxu0 0.0
  %10686 = vmatpush2.msra.mxu0 0.0
  %10687 = vmatprep.subr.mxu0 0.0
  %10688 = vmatpush2.msra.mxu0 0.0
  %10689 = vmatprep.subr.mxu0 0.0
  %10690 = vmatpush2.msra.mxu0 0.0
  %10691 = vmatprep.subr.mxu0 0.0
  %10692 = vmatpush2.msra.mxu0 0.0
  %10693 = vmatprep.subr.mxu0 0.0
  %10694 = vmatpush2.msra.mxu0 0.0
  %10695 = vmatprep.subr.mxu0 0.0
  %10696 = vmatpush2.msra.mxu0 0.0
  %10697 = vmatprep.subr.mxu0 0.0
  %10698 = vmatpush2.msra.mxu0 0.0
  %10699 = vmatprep.subr.mxu0 0.0
  %10700 = vmatpush2.msra.mxu0 0.0
  %10701 = vmatprep.subr.mxu0 0.0
  %10702 = vmatpush2.msra.mxu0 0.0
  %10703 = vmatprep.subr.mxu0 0.0
  %10704 = vmatpush2.msra.mxu0 0.0
  %10705 = vmatprep.subr.mxu0 0.0
  %10706 = vmatpush2.msra.mxu0 0.0
  %10707 = vmatprep.subr.mxu0 0.0
  %10708 = vmatpush2.msra.mxu0 0.0
  %10709 = vmatprep.subr.mxu0 0.0
  %10710 = vmatpush2.msra.mxu0 0.0
  %10711 = vmatprep.mubr.f32.mxu0 0.0
  %10712 = vmatmul.mubr.f32.gmra.mxu0 %v9781
  %v10713 = vpop.f32.mrf.mxu0
  %v10714 = vadd.f32 %v10644, %v10713
  %v10715 = vpop.f32.mrf.mxu0
  %10716 = vdwg.mxu0
  %v10717 = vmax.f32 %v10714, 0.0
  %s10718 = scalar_lea.vmem %s3, 1024
  %v10719 = vld [vmem:[%s10718] sm:$0xff]
  %v10720 = vld [vmem:[%s10718 + $0x8] sm:$0xff]
  %v10721 = vld [vmem:[%s10718 + $0x10] sm:$0xff]
  %v10722 = vld [vmem:[%s10718 + $0x18] sm:$0xff]
  %v10723 = vld [vmem:[%s10718 + $0x20] sm:$0xff]
  %v10724 = vld [vmem:[%s10718 + $0x28] sm:$0xff]
  %v10725 = vld [vmem:[%s10718 + $0x30] sm:$0xff]
  %v10726 = vld [vmem:[%s10718 + $0x38] sm:$0xff]
  %v10727 = vld [vmem:[%s10718 + $0x40] sm:$0xff]
  %v10728 = vld [vmem:[%s10718 + $0x48] sm:$0xff]
  %v10729 = vld [vmem:[%s10718 + $0x50] sm:$0xff]
  %v10730 = vld [vmem:[%s10718 + $0x58] sm:$0xff]
  %v10731 = vld [vmem:[%s10718 + $0x60] sm:$0xff]
  %v10732 = vld [vmem:[%s10718 + $0x68] sm:$0xff]
  %v10733 = vld [vmem:[%s10718 + $0x70] sm:$0xff]
  %v10734 = vld [vmem:[%s10718 + $0x78] sm:$0xff]
  %v10736 = vsel %vm2591, %v10717, 0
  %10738 = vmatprep.subr.mxu0 0.0
  %10739 = vmatpush1.msra.mxu0 0.0
  %10740 = vmatprep.subr.mxu0 0.0
  %10741 = vmatpush1.msra.mxu0 0.0
  %10742 = vmatprep.subr.mxu0 0.0
  %10743 = vmatpush1.msra.mxu0 0.0
  %10744 = vmatprep.subr.mxu0 0.0
  %10745 = vmatpush1.msra.mxu0 0.0
  %10746 = vmatprep.subr.mxu0 0.0
  %10747 = vmatpush1.msra.mxu0 0.0
  %10748 = vmatprep.subr.mxu0 0.0
  %10749 = vmatpush1.msra.mxu0 0.0
  %10750 = vmatprep.subr.mxu0 0.0
  %10751 = vmatpush1.msra.mxu0 0.0
  %10752 = vmatprep.subr.mxu0 0.0
  %10753 = vmatpush1.msra.mxu0 0.0
  %10754 = vmatprep.subr.mxu0 %v10734
  %10755 = vmatpush1.msra.mxu0 %v10733
  %10756 = vmatprep.subr.mxu0 %v10732
  %10757 = vmatpush1.msra.mxu0 %v10731
  %10758 = vmatprep.subr.mxu0 %v10730
  %10759 = vmatpush1.msra.mxu0 %v10729
  %10760 = vmatprep.subr.mxu0 %v10728
  %10761 = vmatpush1.msra.mxu0 %v10727
  %10762 = vmatprep.subr.mxu0 %v10726
  %10763 = vmatpush1.msra.mxu0 %v10725
  %10764 = vmatprep.subr.mxu0 %v10724
  %10765 = vmatpush1.msra.mxu0 %v10723
  %10766 = vmatprep.subr.mxu0 %v10722
  %10767 = vmatpush1.msra.mxu0 %v10721
  %10768 = vmatprep.subr.mxu0 %v10720
  %10769 = vmatpush1.msra.mxu0 %v10719
  %10770 = vmatprep.subr.mxu0 0.0
  %10771 = vmatpush2.msra.mxu0 0.0
  %10772 = vmatprep.subr.mxu0 0.0
  %10773 = vmatpush2.msra.mxu0 0.0
  %10774 = vmatprep.subr.mxu0 0.0
  %10775 = vmatpush2.msra.mxu0 0.0
  %10776 = vmatprep.subr.mxu0 0.0
  %10777 = vmatpush2.msra.mxu0 0.0
  %10778 = vmatprep.subr.mxu0 0.0
  %10779 = vmatpush2.msra.mxu0 0.0
  %10780 = vmatprep.subr.mxu0 0.0
  %10781 = vmatpush2.msra.mxu0 0.0
  %10782 = vmatprep.subr.mxu0 0.0
  %10783 = vmatpush2.msra.mxu0 0.0
  %10784 = vmatprep.subr.mxu0 0.0
  %10785 = vmatpush2.msra.mxu0 0.0
  %10786 = vmatprep.subr.mxu0 0.0
  %10787 = vmatpush2.msra.mxu0 0.0
  %10788 = vmatprep.subr.mxu0 0.0
  %10789 = vmatpush2.msra.mxu0 0.0
  %10790 = vmatprep.subr.mxu0 0.0
  %10791 = vmatpush2.msra.mxu0 0.0
  %10792 = vmatprep.subr.mxu0 0.0
  %10793 = vmatpush2.msra.mxu0 0.0
  %10794 = vmatprep.subr.mxu0 0.0
  %10795 = vmatpush2.msra.mxu0 0.0
  %10796 = vmatprep.subr.mxu0 0.0
  %10797 = vmatpush2.msra.mxu0 0.0
  %10798 = vmatprep.subr.mxu0 0.0
  %10799 = vmatpush2.msra.mxu0 0.0
  %10800 = vmatprep.subr.mxu0 0.0
  %10801 = vmatpush2.msra.mxu0 0.0
  %10802 = vmatprep.mubr.f32.mxu0 0.0
  %10803 = vmatmul.mubr.f32.gmra.mxu0 %v10736
  %v10804 = vpop.f32.mrf.mxu0
  %v10805 = vadd.f32 0.0, %v10804
  %v10806 = vpop.f32.mrf.mxu0
  %v10807 = vadd.f32 0.0, %v10806
  %10808 = vdwg.mxu0
  %v10809 = vadd.f32 %v9656, %v10805
  %v10810 = vadd.f32 %v9657, %v10807
  %v10811 = vld [vmem:[%s4] sm:$0x3]
  %v10813 = vlaneseq
  %v10814 = vshrl.u32 %v10813, 7
  %v10815 = vsub.s32 0, %v10814
  %v10816 = vrot.slane %v10811, %v10815
  %v10817 = vlaneseq
  %v10818 = vshrl.u32 %v10817, 7
  %v10819 = vsub.s32 1, %v10818
  %v10820 = vrot.slane %v10811, %v10819
  %v10823 = vadd.f32 %v10809, %v10816
  %v10824 = vadd.f32 %v10810, %v10820
  %v10825 = vmax.f32 %v10823, 0.0
  %v10826 = vmax.f32 %v10824, 0.0
  %v10827 = vld [vmem:[%s5] sm:$0xff]
  %v10828 = vld [vmem:[%s5 + $0x8] sm:$0xff]
  %v10829 = vld [vmem:[%s5 + $0x10] sm:$0xff]
  %v10830 = vld [vmem:[%s5 + $0x18] sm:$0xff]
  %v10831 = vld [vmem:[%s5 + $0x20] sm:$0xff]
  %v10832 = vld [vmem:[%s5 + $0x28] sm:$0xff]
  %v10833 = vld [vmem:[%s5 + $0x30] sm:$0xff]
  %v10834 = vld [vmem:[%s5 + $0x38] sm:$0xff]
  %v10835 = vld [vmem:[%s5 + $0x40] sm:$0xff]
  %v10836 = vld [vmem:[%s5 + $0x48] sm:$0xff]
  %v10837 = vld [vmem:[%s5 + $0x50] sm:$0xff]
  %v10838 = vld [vmem:[%s5 + $0x58] sm:$0xff]
  %v10839 = vld [vmem:[%s5 + $0x60] sm:$0xff]
  %v10840 = vld [vmem:[%s5 + $0x68] sm:$0xff]
  %v10841 = vld [vmem:[%s5 + $0x70] sm:$0xff]
  %v10842 = vld [vmem:[%s5 + $0x78] sm:$0xff]
  %v10843 = vld [vmem:[%s6] sm:$0x1]
  %v10845 = vlaneseq
  %v10846 = vshrl.u32 %v10845, 7
  %v10847 = vsub.s32 0, %v10846
  %v10848 = vrot.slane %v10843, %v10847
  %10850 = vmatprep.subr.mxu0 0.0
  %10851 = vmatpush1.msra.mxu0 %v10842
  %10852 = vmatprep.subr.mxu0 0.0
  %10853 = vmatpush1.msra.mxu0 %v10841
  %10854 = vmatprep.subr.mxu0 0.0
  %10855 = vmatpush1.msra.mxu0 %v10840
  %10856 = vmatprep.subr.mxu0 0.0
  %10857 = vmatpush1.msra.mxu0 %v10839
  %10858 = vmatprep.subr.mxu0 0.0
  %10859 = vmatpush1.msra.mxu0 %v10838
  %10860 = vmatprep.subr.mxu0 0.0
  %10861 = vmatpush1.msra.mxu0 %v10837
  %10862 = vmatprep.subr.mxu0 0.0
  %10863 = vmatpush1.msra.mxu0 %v10836
  %10864 = vmatprep.subr.mxu0 0.0
  %10865 = vmatpush1.msra.mxu0 %v10835
  %10866 = vmatprep.subr.mxu0 0.0
  %10867 = vmatpush1.msra.mxu0 %v10834
  %10868 = vmatprep.subr.mxu0 0.0
  %10869 = vmatpush1.msra.mxu0 %v10833
  %10870 = vmatprep.subr.mxu0 0.0
  %10871 = vmatpush1.msra.mxu0 %v10832
  %10872 = vmatprep.subr.mxu0 0.0
  %10873 = vmatpush1.msra.mxu0 %v10831
  %10874 = vmatprep.subr.mxu0 0.0
  %10875 = vmatpush1.msra.mxu0 %v10830
  %10876 = vmatprep.subr.mxu0 0.0
  %10877 = vmatpush1.msra.mxu0 %v10829
  %10878 = vmatprep.subr.mxu0 0.0
  %10879 = vmatpush1.msra.mxu0 %v10828
  %10880 = vmatprep.subr.mxu0 0.0
  %10881 = vmatpush1.msra.mxu0 %v10827
  %10882 = vmatprep.subr.mxu0 0.0
  %10883 = vmatpush2.msra.mxu0 0.0
  %10884 = vmatprep.subr.mxu0 0.0
  %10885 = vmatpush2.msra.mxu0 0.0
  %10886 = vmatprep.subr.mxu0 0.0
  %10887 = vmatpush2.msra.mxu0 0.0
  %10888 = vmatprep.subr.mxu0 0.0
  %10889 = vmatpush2.msra.mxu0 0.0
  %10890 = vmatprep.subr.mxu0 0.0
  %10891 = vmatpush2.msra.mxu0 0.0
  %10892 = vmatprep.subr.mxu0 0.0
  %10893 = vmatpush2.msra.mxu0 0.0
  %10894 = vmatprep.subr.mxu0 0.0
  %10895 = vmatpush2.msra.mxu0 0.0
  %10896 = vmatprep.subr.mxu0 0.0
  %10897 = vmatpush2.msra.mxu0 0.0
  %10898 = vmatprep.subr.mxu0 0.0
  %10899 = vmatpush2.msra.mxu0 0.0
  %10900 = vmatprep.subr.mxu0 0.0
  %10901 = vmatpush2.msra.mxu0 0.0
  %10902 = vmatprep.subr.mxu0 0.0
  %10903 = vmatpush2.msra.mxu0 0.0
  %10904 = vmatprep.subr.mxu0 0.0
  %10905 = vmatpush2.msra.mxu0 0.0
  %10906 = vmatprep.subr.mxu0 0.0
  %10907 = vmatpush2.msra.mxu0 0.0
  %10908 = vmatprep.subr.mxu0 0.0
  %10909 = vmatpush2.msra.mxu0 0.0
  %10910 = vmatprep.subr.mxu0 0.0
  %10911 = vmatpush2.msra.mxu0 0.0
  %10912 = vmatprep.subr.mxu0 0.0
  %10913 = vmatpush2.msra.mxu0 0.0
  %10914 = vmatprep.mubr.f32.mxu0 0.0
  %10915 = vmatmul.mubr.f32.gmra.mxu0 %v10825
  %v10916 = vpop.f32.mrf.mxu0
  %v10917 = vadd.f32 %v10848, %v10916
  %v10918 = vpop.f32.mrf.mxu0
  %10919 = vdwg.mxu0
  %v10920 = vmax.f32 %v10917, 0.0
  %v10921 = vld [vmem:[%s7] sm:$0xff]
  %v10922 = vld [vmem:[%s7 + $0x8] sm:$0xff]
  %v10923 = vld [vmem:[%s7 + $0x10] sm:$0xff]
  %v10924 = vld [vmem:[%s7 + $0x18] sm:$0xff]
  %v10925 = vld [vmem:[%s7 + $0x20] sm:$0xff]
  %v10926 = vld [vmem:[%s7 + $0x28] sm:$0xff]
  %v10927 = vld [vmem:[%s7 + $0x30] sm:$0xff]
  %v10928 = vld [vmem:[%s7 + $0x38] sm:$0xff]
  %v10929 = vld [vmem:[%s7 + $0x40] sm:$0xff]
  %v10930 = vld [vmem:[%s7 + $0x48] sm:$0xff]
  %v10931 = vld [vmem:[%s7 + $0x50] sm:$0xff]
  %v10932 = vld [vmem:[%s7 + $0x58] sm:$0xff]
  %v10933 = vld [vmem:[%s7 + $0x60] sm:$0xff]
  %v10934 = vld [vmem:[%s7 + $0x68] sm:$0xff]
  %v10935 = vld [vmem:[%s7 + $0x70] sm:$0xff]
  %v10936 = vld [vmem:[%s7 + $0x78] sm:$0xff]
  %v10937 = vld [vmem:[%s8] sm:$0x1]
  %v10939 = vlaneseq
  %v10940 = vshrl.u32 %v10939, 7
  %v10941 = vsub.s32 0, %v10940
  %v10942 = vrot.slane %v10937, %v10941
  %10944 = vmatprep.subr.mxu0 0.0
  %10945 = vmatpush1.msra.mxu0 %v10936
  %10946 = vmatprep.subr.mxu0 0.0
  %10947 = vmatpush1.msra.mxu0 %v10935
  %10948 = vmatprep.subr.mxu0 0.0
  %10949 = vmatpush1.msra.mxu0 %v10934
  %10950 = vmatprep.subr.mxu0 0.0
  %10951 = vmatpush1.msra.mxu0 %v10933
  %10952 = vmatprep.subr.mxu0 0.0
  %10953 = vmatpush1.msra.mxu0 %v10932
  %10954 = vmatprep.subr.mxu0 0.0
  %10955 = vmatpush1.msra.mxu0 %v10931
  %10956 = vmatprep.subr.mxu0 0.0
  %10957 = vmatpush1.msra.mxu0 %v10930
  %10958 = vmatprep.subr.mxu0 0.0
  %10959 = vmatpush1.msra.mxu0 %v10929
  %10960 = vmatprep.subr.mxu0 0.0
  %10961 = vmatpush1.msra.mxu0 %v10928
  %10962 = vmatprep.subr.mxu0 0.0
  %10963 = vmatpush1.msra.mxu0 %v10927
  %10964 = vmatprep.subr.mxu0 0.0
  %10965 = vmatpush1.msra.mxu0 %v10926
  %10966 = vmatprep.subr.mxu0 0.0
  %10967 = vmatpush1.msra.mxu0 %v10925
  %10968 = vmatprep.subr.mxu0 0.0
  %10969 = vmatpush1.msra.mxu0 %v10924
  %10970 = vmatprep.subr.mxu0 0.0
  %10971 = vmatpush1.msra.mxu0 %v10923
  %10972 = vmatprep.subr.mxu0 0.0
  %10973 = vmatpush1.msra.mxu0 %v10922
  %10974 = vmatprep.subr.mxu0 0.0
  %10975 = vmatpush1.msra.mxu0 %v10921
  %10976 = vmatprep.subr.mxu0 0.0
  %10977 = vmatpush2.msra.mxu0 0.0
  %10978 = vmatprep.subr.mxu0 0.0
  %10979 = vmatpush2.msra.mxu0 0.0
  %10980 = vmatprep.subr.mxu0 0.0
  %10981 = vmatpush2.msra.mxu0 0.0
  %10982 = vmatprep.subr.mxu0 0.0
  %10983 = vmatpush2.msra.mxu0 0.0
  %10984 = vmatprep.subr.mxu0 0.0
  %10985 = vmatpush2.msra.mxu0 0.0
  %10986 = vmatprep.subr.mxu0 0.0
  %10987 = vmatpush2.msra.mxu0 0.0
  %10988 = vmatprep.subr.mxu0 0.0
  %10989 = vmatpush2.msra.mxu0 0.0
  %10990 = vmatprep.subr.mxu0 0.0
  %10991 = vmatpush2.msra.mxu0 0.0
  %10992 = vmatprep.subr.mxu0 0.0
  %10993 = vmatpush2.msra.mxu0 0.0
  %10994 = vmatprep.subr.mxu0 0.0
  %10995 = vmatpush2.msra.mxu0 0.0
  %10996 = vmatprep.subr.mxu0 0.0
  %10997 = vmatpush2.msra.mxu0 0.0
  %10998 = vmatprep.subr.mxu0 0.0
  %10999 = vmatpush2.msra.mxu0 0.0
  %11000 = vmatprep.subr.mxu0 0.0
  %11001 = vmatpush2.msra.mxu0 0.0
  %11002 = vmatprep.subr.mxu0 0.0
  %11003 = vmatpush2.msra.mxu0 0.0
  %11004 = vmatprep.subr.mxu0 0.0
  %11005 = vmatpush2.msra.mxu0 0.0
  %11006 = vmatprep.subr.mxu0 0.0
  %11007 = vmatpush2.msra.mxu0 0.0
  %11008 = vmatprep.mubr.f32.mxu0 0.0
  %11009 = vmatmul.mubr.f32.gmra.mxu0 %v10826
  %v11010 = vpop.f32.mrf.mxu0
  %v11011 = vadd.f32 %v10942, %v11010
  %v11012 = vpop.f32.mrf.mxu0
  %11013 = vdwg.mxu0
  %v11014 = vmax.f32 %v11011, 0.0
  %s11015 = scalar_lea.vmem %s7, 128
  %v11016 = vld [vmem:[%s11015] sm:$0xff]
  %v11017 = vld [vmem:[%s11015 + $0x8] sm:$0xff]
  %v11018 = vld [vmem:[%s11015 + $0x10] sm:$0xff]
  %v11019 = vld [vmem:[%s11015 + $0x18] sm:$0xff]
  %v11020 = vld [vmem:[%s11015 + $0x20] sm:$0xff]
  %v11021 = vld [vmem:[%s11015 + $0x28] sm:$0xff]
  %v11022 = vld [vmem:[%s11015 + $0x30] sm:$0xff]
  %v11023 = vld [vmem:[%s11015 + $0x38] sm:$0xff]
  %v11024 = vld [vmem:[%s11015 + $0x40] sm:$0xff]
  %v11025 = vld [vmem:[%s11015 + $0x48] sm:$0xff]
  %v11026 = vld [vmem:[%s11015 + $0x50] sm:$0xff]
  %v11027 = vld [vmem:[%s11015 + $0x58] sm:$0xff]
  %v11028 = vld [vmem:[%s11015 + $0x60] sm:$0xff]
  %v11029 = vld [vmem:[%s11015 + $0x68] sm:$0xff]
  %v11030 = vld [vmem:[%s11015 + $0x70] sm:$0xff]
  %v11031 = vld [vmem:[%s11015 + $0x78] sm:$0xff]
  %s11032 = scalar_lea.vmem %s8, 1
  %v11033 = vld [vmem:[%s11032] sm:$0x1]
  %v11035 = vlaneseq
  %v11036 = vshrl.u32 %v11035, 7
  %v11037 = vsub.s32 0, %v11036
  %v11038 = vrot.slane %v11033, %v11037
  %11040 = vmatprep.subr.mxu0 0.0
  %11041 = vmatpush1.msra.mxu0 %v11031
  %11042 = vmatprep.subr.mxu0 0.0
  %11043 = vmatpush1.msra.mxu0 %v11030
  %11044 = vmatprep.subr.mxu0 0.0
  %11045 = vmatpush1.msra.mxu0 %v11029
  %11046 = vmatprep.subr.mxu0 0.0
  %11047 = vmatpush1.msra.mxu0 %v11028
  %11048 = vmatprep.subr.mxu0 0.0
  %11049 = vmatpush1.msra.mxu0 %v11027
  %11050 = vmatprep.subr.mxu0 0.0
  %11051 = vmatpush1.msra.mxu0 %v11026
  %11052 = vmatprep.subr.mxu0 0.0
  %11053 = vmatpush1.msra.mxu0 %v11025
  %11054 = vmatprep.subr.mxu0 0.0
  %11055 = vmatpush1.msra.mxu0 %v11024
  %11056 = vmatprep.subr.mxu0 0.0
  %11057 = vmatpush1.msra.mxu0 %v11023
  %11058 = vmatprep.subr.mxu0 0.0
  %11059 = vmatpush1.msra.mxu0 %v11022
  %11060 = vmatprep.subr.mxu0 0.0
  %11061 = vmatpush1.msra.mxu0 %v11021
  %11062 = vmatprep.subr.mxu0 0.0
  %11063 = vmatpush1.msra.mxu0 %v11020
  %11064 = vmatprep.subr.mxu0 0.0
  %11065 = vmatpush1.msra.mxu0 %v11019
  %11066 = vmatprep.subr.mxu0 0.0
  %11067 = vmatpush1.msra.mxu0 %v11018
  %11068 = vmatprep.subr.mxu0 0.0
  %11069 = vmatpush1.msra.mxu0 %v11017
  %11070 = vmatprep.subr.mxu0 0.0
  %11071 = vmatpush1.msra.mxu0 %v11016
  %11072 = vmatprep.subr.mxu0 0.0
  %11073 = vmatpush2.msra.mxu0 0.0
  %11074 = vmatprep.subr.mxu0 0.0
  %11075 = vmatpush2.msra.mxu0 0.0
  %11076 = vmatprep.subr.mxu0 0.0
  %11077 = vmatpush2.msra.mxu0 0.0
  %11078 = vmatprep.subr.mxu0 0.0
  %11079 = vmatpush2.msra.mxu0 0.0
  %11080 = vmatprep.subr.mxu0 0.0
  %11081 = vmatpush2.msra.mxu0 0.0
  %11082 = vmatprep.subr.mxu0 0.0
  %11083 = vmatpush2.msra.mxu0 0.0
  %11084 = vmatprep.subr.mxu0 0.0
  %11085 = vmatpush2.msra.mxu0 0.0
  %11086 = vmatprep.subr.mxu0 0.0
  %11087 = vmatpush2.msra.mxu0 0.0
  %11088 = vmatprep.subr.mxu0 0.0
  %11089 = vmatpush2.msra.mxu0 0.0
  %11090 = vmatprep.subr.mxu0 0.0
  %11091 = vmatpush2.msra.mxu0 0.0
  %11092 = vmatprep.subr.mxu0 0.0
  %11093 = vmatpush2.msra.mxu0 0.0
  %11094 = vmatprep.subr.mxu0 0.0
  %11095 = vmatpush2.msra.mxu0 0.0
  %11096 = vmatprep.subr.mxu0 0.0
  %11097 = vmatpush2.msra.mxu0 0.0
  %11098 = vmatprep.subr.mxu0 0.0
  %11099 = vmatpush2.msra.mxu0 0.0
  %11100 = vmatprep.subr.mxu0 0.0
  %11101 = vmatpush2.msra.mxu0 0.0
  %11102 = vmatprep.subr.mxu0 0.0
  %11103 = vmatpush2.msra.mxu0 0.0
  %11104 = vmatprep.mubr.f32.mxu0 0.0
  %11105 = vmatmul.mubr.f32.gmra.mxu0 %v10826
  %v11106 = vpop.f32.mrf.mxu0
  %v11107 = vadd.f32 %v11038, %v11106
  %v11108 = vpop.f32.mrf.mxu0
  %11109 = vdwg.mxu0
  %v11110 = vmax.f32 %v11107, 0.0
  %s11111 = scalar_lea.vmem %s7, 256
  %v11112 = vld [vmem:[%s11111] sm:$0xff]
  %v11113 = vld [vmem:[%s11111 + $0x8] sm:$0xff]
  %v11114 = vld [vmem:[%s11111 + $0x10] sm:$0xff]
  %v11115 = vld [vmem:[%s11111 + $0x18] sm:$0xff]
  %v11116 = vld [vmem:[%s11111 + $0x20] sm:$0xff]
  %v11117 = vld [vmem:[%s11111 + $0x28] sm:$0xff]
  %v11118 = vld [vmem:[%s11111 + $0x30] sm:$0xff]
  %v11119 = vld [vmem:[%s11111 + $0x38] sm:$0xff]
  %v11120 = vld [vmem:[%s11111 + $0x40] sm:$0xff]
  %v11121 = vld [vmem:[%s11111 + $0x48] sm:$0xff]
  %v11122 = vld [vmem:[%s11111 + $0x50] sm:$0xff]
  %v11123 = vld [vmem:[%s11111 + $0x58] sm:$0xff]
  %v11124 = vld [vmem:[%s11111 + $0x60] sm:$0xff]
  %v11125 = vld [vmem:[%s11111 + $0x68] sm:$0xff]
  %v11126 = vld [vmem:[%s11111 + $0x70] sm:$0xff]
  %v11127 = vld [vmem:[%s11111 + $0x78] sm:$0xff]
  %s11128 = scalar_lea.vmem %s8, 2
  %v11129 = vld [vmem:[%s11128] sm:$0x1]
  %v11131 = vlaneseq
  %v11132 = vshrl.u32 %v11131, 7
  %v11133 = vsub.s32 0, %v11132
  %v11134 = vrot.slane %v11129, %v11133
  %11136 = vmatprep.subr.mxu0 0.0
  %11137 = vmatpush1.msra.mxu0 %v11127
  %11138 = vmatprep.subr.mxu0 0.0
  %11139 = vmatpush1.msra.mxu0 %v11126
  %11140 = vmatprep.subr.mxu0 0.0
  %11141 = vmatpush1.msra.mxu0 %v11125
  %11142 = vmatprep.subr.mxu0 0.0
  %11143 = vmatpush1.msra.mxu0 %v11124
  %11144 = vmatprep.subr.mxu0 0.0
  %11145 = vmatpush1.msra.mxu0 %v11123
  %11146 = vmatprep.subr.mxu0 0.0
  %11147 = vmatpush1.msra.mxu0 %v11122
  %11148 = vmatprep.subr.mxu0 0.0
  %11149 = vmatpush1.msra.mxu0 %v11121
  %11150 = vmatprep.subr.mxu0 0.0
  %11151 = vmatpush1.msra.mxu0 %v11120
  %11152 = vmatprep.subr.mxu0 0.0
  %11153 = vmatpush1.msra.mxu0 %v11119
  %11154 = vmatprep.subr.mxu0 0.0
  %11155 = vmatpush1.msra.mxu0 %v11118
  %11156 = vmatprep.subr.mxu0 0.0
  %11157 = vmatpush1.msra.mxu0 %v11117
  %11158 = vmatprep.subr.mxu0 0.0
  %11159 = vmatpush1.msra.mxu0 %v11116
  %11160 = vmatprep.subr.mxu0 0.0
  %11161 = vmatpush1.msra.mxu0 %v11115
  %11162 = vmatprep.subr.mxu0 0.0
  %11163 = vmatpush1.msra.mxu0 %v11114
  %11164 = vmatprep.subr.mxu0 0.0
  %11165 = vmatpush1.msra.mxu0 %v11113
  %11166 = vmatprep.subr.mxu0 0.0
  %11167 = vmatpush1.msra.mxu0 %v11112
  %11168 = vmatprep.subr.mxu0 0.0
  %11169 = vmatpush2.msra.mxu0 0.0
  %11170 = vmatprep.subr.mxu0 0.0
  %11171 = vmatpush2.msra.mxu0 0.0
  %11172 = vmatprep.subr.mxu0 0.0
  %11173 = vmatpush2.msra.mxu0 0.0
  %11174 = vmatprep.subr.mxu0 0.0
  %11175 = vmatpush2.msra.mxu0 0.0
  %11176 = vmatprep.subr.mxu0 0.0
  %11177 = vmatpush2.msra.mxu0 0.0
  %11178 = vmatprep.subr.mxu0 0.0
  %11179 = vmatpush2.msra.mxu0 0.0
  %11180 = vmatprep.subr.mxu0 0.0
  %11181 = vmatpush2.msra.mxu0 0.0
  %11182 = vmatprep.subr.mxu0 0.0
  %11183 = vmatpush2.msra.mxu0 0.0
  %11184 = vmatprep.subr.mxu0 0.0
  %11185 = vmatpush2.msra.mxu0 0.0
  %11186 = vmatprep.subr.mxu0 0.0
  %11187 = vmatpush2.msra.mxu0 0.0
  %11188 = vmatprep.subr.mxu0 0.0
  %11189 = vmatpush2.msra.mxu0 0.0
  %11190 = vmatprep.subr.mxu0 0.0
  %11191 = vmatpush2.msra.mxu0 0.0
  %11192 = vmatprep.subr.mxu0 0.0
  %11193 = vmatpush2.msra.mxu0 0.0
  %11194 = vmatprep.subr.mxu0 0.0
  %11195 = vmatpush2.msra.mxu0 0.0
  %11196 = vmatprep.subr.mxu0 0.0
  %11197 = vmatpush2.msra.mxu0 0.0
  %11198 = vmatprep.subr.mxu0 0.0
  %11199 = vmatpush2.msra.mxu0 0.0
  %11200 = vmatprep.mubr.f32.mxu0 0.0
  %11201 = vmatmul.mubr.f32.gmra.mxu0 %v10826
  %v11202 = vpop.f32.mrf.mxu0
  %v11203 = vadd.f32 %v11134, %v11202
  %v11204 = vpop.f32.mrf.mxu0
  %11205 = vdwg.mxu0
  %v11206 = vmax.f32 %v11203, 0.0
  %s11207 = scalar_lea.vmem %s7, 384
  %v11208 = vld [vmem:[%s11207] sm:$0xff]
  %v11209 = vld [vmem:[%s11207 + $0x8] sm:$0xff]
  %v11210 = vld [vmem:[%s11207 + $0x10] sm:$0xff]
  %v11211 = vld [vmem:[%s11207 + $0x18] sm:$0xff]
  %v11212 = vld [vmem:[%s11207 + $0x20] sm:$0xff]
  %v11213 = vld [vmem:[%s11207 + $0x28] sm:$0xff]
  %v11214 = vld [vmem:[%s11207 + $0x30] sm:$0xff]
  %v11215 = vld [vmem:[%s11207 + $0x38] sm:$0xff]
  %v11216 = vld [vmem:[%s11207 + $0x40] sm:$0xff]
  %v11217 = vld [vmem:[%s11207 + $0x48] sm:$0xff]
  %v11218 = vld [vmem:[%s11207 + $0x50] sm:$0xff]
  %v11219 = vld [vmem:[%s11207 + $0x58] sm:$0xff]
  %v11220 = vld [vmem:[%s11207 + $0x60] sm:$0xff]
  %v11221 = vld [vmem:[%s11207 + $0x68] sm:$0xff]
  %v11222 = vld [vmem:[%s11207 + $0x70] sm:$0xff]
  %v11223 = vld [vmem:[%s11207 + $0x78] sm:$0xff]
  %s11224 = scalar_lea.vmem %s8, 3
  %v11225 = vld [vmem:[%s11224] sm:$0x1]
  %v11227 = vlaneseq
  %v11228 = vshrl.u32 %v11227, 7
  %v11229 = vsub.s32 0, %v11228
  %v11230 = vrot.slane %v11225, %v11229
  %11232 = vmatprep.subr.mxu0 0.0
  %11233 = vmatpush1.msra.mxu0 %v11223
  %11234 = vmatprep.subr.mxu0 0.0
  %11235 = vmatpush1.msra.mxu0 %v11222
  %11236 = vmatprep.subr.mxu0 0.0
  %11237 = vmatpush1.msra.mxu0 %v11221
  %11238 = vmatprep.subr.mxu0 0.0
  %11239 = vmatpush1.msra.mxu0 %v11220
  %11240 = vmatprep.subr.mxu0 0.0
  %11241 = vmatpush1.msra.mxu0 %v11219
  %11242 = vmatprep.subr.mxu0 0.0
  %11243 = vmatpush1.msra.mxu0 %v11218
  %11244 = vmatprep.subr.mxu0 0.0
  %11245 = vmatpush1.msra.mxu0 %v11217
  %11246 = vmatprep.subr.mxu0 0.0
  %11247 = vmatpush1.msra.mxu0 %v11216
  %11248 = vmatprep.subr.mxu0 0.0
  %11249 = vmatpush1.msra.mxu0 %v11215
  %11250 = vmatprep.subr.mxu0 0.0
  %11251 = vmatpush1.msra.mxu0 %v11214
  %11252 = vmatprep.subr.mxu0 0.0
  %11253 = vmatpush1.msra.mxu0 %v11213
  %11254 = vmatprep.subr.mxu0 0.0
  %11255 = vmatpush1.msra.mxu0 %v11212
  %11256 = vmatprep.subr.mxu0 0.0
  %11257 = vmatpush1.msra.mxu0 %v11211
  %11258 = vmatprep.subr.mxu0 0.0
  %11259 = vmatpush1.msra.mxu0 %v11210
  %11260 = vmatprep.subr.mxu0 0.0
  %11261 = vmatpush1.msra.mxu0 %v11209
  %11262 = vmatprep.subr.mxu0 0.0
  %11263 = vmatpush1.msra.mxu0 %v11208
  %11264 = vmatprep.subr.mxu0 0.0
  %11265 = vmatpush2.msra.mxu0 0.0
  %11266 = vmatprep.subr.mxu0 0.0
  %11267 = vmatpush2.msra.mxu0 0.0
  %11268 = vmatprep.subr.mxu0 0.0
  %11269 = vmatpush2.msra.mxu0 0.0
  %11270 = vmatprep.subr.mxu0 0.0
  %11271 = vmatpush2.msra.mxu0 0.0
  %11272 = vmatprep.subr.mxu0 0.0
  %11273 = vmatpush2.msra.mxu0 0.0
  %11274 = vmatprep.subr.mxu0 0.0
  %11275 = vmatpush2.msra.mxu0 0.0
  %11276 = vmatprep.subr.mxu0 0.0
  %11277 = vmatpush2.msra.mxu0 0.0
  %11278 = vmatprep.subr.mxu0 0.0
  %11279 = vmatpush2.msra.mxu0 0.0
  %11280 = vmatprep.subr.mxu0 0.0
  %11281 = vmatpush2.msra.mxu0 0.0
  %11282 = vmatprep.subr.mxu0 0.0
  %11283 = vmatpush2.msra.mxu0 0.0
  %11284 = vmatprep.subr.mxu0 0.0
  %11285 = vmatpush2.msra.mxu0 0.0
  %11286 = vmatprep.subr.mxu0 0.0
  %11287 = vmatpush2.msra.mxu0 0.0
  %11288 = vmatprep.subr.mxu0 0.0
  %11289 = vmatpush2.msra.mxu0 0.0
  %11290 = vmatprep.subr.mxu0 0.0
  %11291 = vmatpush2.msra.mxu0 0.0
  %11292 = vmatprep.subr.mxu0 0.0
  %11293 = vmatpush2.msra.mxu0 0.0
  %11294 = vmatprep.subr.mxu0 0.0
  %11295 = vmatpush2.msra.mxu0 0.0
  %11296 = vmatprep.mubr.f32.mxu0 0.0
  %11297 = vmatmul.mubr.f32.gmra.mxu0 %v10826
  %v11298 = vpop.f32.mrf.mxu0
  %v11299 = vadd.f32 %v11230, %v11298
  %v11300 = vpop.f32.mrf.mxu0
  %11301 = vdwg.mxu0
  %v11302 = vmax.f32 %v11299, 0.0
  %v11303 = vadd.f32 %v11014, 0.0
  %v11304 = vadd.f32 %v11303, %v11110
  %v11305 = vadd.f32 %v11304, %v11206
  %v11306 = vadd.f32 %v11305, %v11302
  %v11307 = vmul.f32 %v11306, 0.25
  %v11308 = vadd.f32 %v10920, %v11014
  %v11309 = vsub.f32 %v11308, %v11307
  %vm11310 = vcmask 410624
  %v11311 = vsel %vm11310, %v11309, -inf
  %11312 = vmax.xlane.f32.xlu0 %v11311
  %v11313 = vpop.xlane.xlu0 %11312
  %v11314 = vsub.f32 %v11309, %v11313
  %v11315 = vmul.f32 %v11314, 1.442695
  %v11316 = vpow.pop %v11315
  %v11317 = vsel %vm11310, %v11316, 0.0
  %11318 = vadd.xlane.f32.xlu0 %v11317
  %v11319 = vpop.xlane.xlu0 %11318
  %v11320 = vrcp.pop %v11319
  %v11321 = vmul.f32 %v11316, %v11320
  %11322 = vst.msk [vmem:[%s9] sm:$0x3] %vm11310, %v11321
  %v11323 = vadd.f32 %v10920, %v11110
  %v11324 = vsub.f32 %v11323, %v11307
  %v11325 = vsel %vm11310, %v11324, -inf
  %11326 = vmax.xlane.f32.xlu0 %v11325
  %v11327 = vpop.xlane.xlu0 %11326
  %v11328 = vsub.f32 %v11324, %v11327
  %v11329 = vmul.f32 %v11328, 1.442695
  %v11330 = vpow.pop %v11329
  %v11331 = vsel %vm11310, %v11330, 0.0
  %11332 = vadd.xlane.f32.xlu0 %v11331
  %v11333 = vpop.xlane.xlu0 %11332
  %v11334 = vrcp.pop %v11333
  %v11335 = vmul.f32 %v11330, %v11334
  %s11336 = scalar_lea.vmem %s9, 2
  %11337 = vst.msk [vmem:[%s11336] sm:$0x3] %vm11310, %v11335
  %v11338 = vadd.f32 %v10920, %v11206
  %v11339 = vsub.f32 %v11338, %v11307
  %v11340 = vsel %vm11310, %v11339, -inf
  %11341 = vmax.xlane.f32.xlu0 %v11340
  %v11342 = vpop.xlane.xlu0 %11341
  %v11343 = vsub.f32 %v11339, %v11342
  %v11344 = vmul.f32 %v11343, 1.442695
  %v11345 = vpow.pop %v11344
  %v11346 = vsel %vm11310, %v11345, 0.0
  %11347 = vadd.xlane.f32.xlu0 %v11346
  %v11348 = vpop.xlane.xlu0 %11347
  %v11349 = vrcp.pop %v11348
  %v11350 = vmul.f32 %v11345, %v11349
  %s11351 = scalar_lea.vmem %s9, 4
  %11352 = vst.msk [vmem:[%s11351] sm:$0x3] %vm11310, %v11350
  %v11353 = vadd.f32 %v10920, %v11302
  %v11354 = vsub.f32 %v11353, %v11307
  %v11355 = vsel %vm11310, %v11354, -inf
  %11356 = vmax.xlane.f32.xlu0 %v11355
  %v11357 = vpop.xlane.xlu0 %11356
  %v11358 = vsub.f32 %v11354, %v11357
  %v11359 = vmul.f32 %v11358, 1.442695
  %v11360 = vpow.pop %v11359
  %v11361 = vsel %vm11310, %v11360, 0.0
  %11362 = vadd.xlane.f32.xlu0 %v11361
  %v11363 = vpop.xlane.xlu0 %11362
  %v11364 = vrcp.pop %v11363
  %v11365 = vmul.f32 %v11360, %v11364
  %s11366 = scalar_lea.vmem %s9, 6
  %11367 = vst.msk [vmem:[%s11366] sm:$0x3] %vm11310, %v11365
  // Predicated region
  $region38: #{dqn_forward.3} parent=0 // pred_check
    _
  $region39: #{dqn_forward.3} parent=0 // pred_check_branch
    %11369 = sbr.rel (0) target = $region41
  $region40: #{dqn_forward.3} parent=0 // pred_region
    _
  $region41: #{dqn_forward.3} parent=0 // pred_fallthru
    _
  // Predicated region
  $region42: #{dqn_forward.3} parent=0 // pred_check
    _
  $region43: #{dqn_forward.3} parent=0 // pred_check_branch
    %11371 = sbr.rel (0) target = $region45
  $region44: #{dqn_forward.3} parent=0 // pred_region
    _
  $region45: #{dqn_forward.3} parent=0 // pred_fallthru
    _

</llo_original>
